<compile_context>
chip_gen: v7x
topology: tpu7x:2x2x1
jax: 0.10.0
libtpu: 0.0.40
codegen_flags: <defaults>
</compile_context>

<pallas_src>
import jax
import jax.numpy as jnp
from jax import lax
from jax.experimental import pallas as pl
from jax.experimental.pallas import tpu as pltpu


# ----------------------------------------------------------------------------
# Problem constants (Linear(400*16, 100) implies a 20x20 spatial grid)
# ----------------------------------------------------------------------------
H = W = 20
HP, WP = H + 2, W + 2          # zero-padded spatial grid
P = HP * WP                    # 484 padded positions (lane dim of activations)
PAD = 24                       # lane slack (>= WP + 1 = 23) so shifted windows are in-bounds
NPAD = P + 2 * PAD             # 532
CIN, C1, C2 = 3, 8, 16
HID = 128                      # fc1 hidden padded 100 -> 128 (lane-dense)

# flat-lane offset of conv tap (dy, dx); tap index t = dy*3 + dx
_TAP_OFFSETS = tuple((dy - 1) * WP + (dx - 1) for dy in range(3) for dx in range(3))


# ----------------------------------------------------------------------------
# Pallas kernel (whole forward pass, one image per grid step)
# ----------------------------------------------------------------------------
def _conv3x3(act_ref, w_ref):
    """3x3 'same' conv as 9 accumulated matmuls.

    act_ref: (Cin, NPAD) bf16 ref  (interior lanes [PAD, PAD+P) hold the image,
             slack/border lanes are zero)
    w_ref:   (9, Cout, Cin) bf16 ref
    returns: (Cout, P) f32 — interior positions exact, border positions garbage
             (finite) and must be masked by the caller.
    """
    acc = None
    for t, off in enumerate(_TAP_OFFSETS):
        a = act_ref[:, pl.ds(PAD + off, P)]                 # (Cin, P) bf16
        part = jnp.dot(w_ref[t], a, preferred_element_type=jnp.float32)
        acc = part if acc is None else acc + part
    return acc


def _cnn_fused_kernel(x_ref, mask_ref,
                      w1_ref, b1_ref, s1_ref, t1_ref,
                      w2_ref, b2_ref, s2_ref, t2_ref,
                      wf1_ref, bf1_ref, wf2_ref, bf2_ref,
                      o_ref, a2_ref):
    mask = mask_ref[...]                                    # (1, P) f32, interior = 1

    # ---- conv1 (3 -> 8) + bias + ReLU + BN(eval), border zeroed -------------
    acc1 = _conv3x3(x_ref, w1_ref)                          # (C1, P) f32
    y1 = (jnp.maximum(acc1 + b1_ref[...], 0.0) * s1_ref[...] + t1_ref[...]) * mask

    # Stage conv1 output (bf16) in a padded VMEM scratch so conv2 can read its
    # 9 shifted lane windows.  Slack lanes must be (finite) zeros.
    a2_ref[...] = jnp.zeros(a2_ref.shape, a2_ref.dtype)
    a2_ref[:, pl.ds(PAD, P)] = y1.astype(jnp.bfloat16)

    # ---- conv2 (8 -> 16) + bias + ReLU + BN(eval), border zeroed ------------
    acc2 = _conv3x3(a2_ref, w2_ref)                         # (C2, P) f32
    y2 = (jnp.maximum(acc2 + b2_ref[...], 0.0) * s2_ref[...] + t2_ref[...]) * mask
    y2 = y2.astype(jnp.bfloat16)                            # (C2, P)

    # ---- fc1: NCHW flatten folded into wf1 row order; hidden padded to 128 --
    h = None
    for c in range(C2):
        part = jnp.dot(y2[c:c + 1, :], wf1_ref[c],
                       preferred_element_type=jnp.float32)  # (1, HID)
        h = part if h is None else h + part
    h = jnp.maximum(h + bf1_ref[...], 0.0)                  # (1, HID) f32 (ReLU)

    # ---- fc2 -----------------------------------------------------------------
    out = jnp.dot(h.astype(jnp.bfloat16), wf2_ref[...],
                  preferred_element_type=jnp.float32) + bf2_ref[...]
    o_ref[...] = out.astype(o_ref.dtype)                    # (1, n_actions)


# ----------------------------------------------------------------------------
# Wrappers
# ----------------------------------------------------------------------------
def cnn_forward(x_nchw, kp):
    """x_nchw: (B, 3, 20, 20) f32 -> (B, n_actions) f32."""
    B = x_nchw.shape[0]
    n_actions = kp["wf2"].shape[1]

    # NCHW -> zero-pad spatial to 22x22 -> flatten positions into the lane dim
    # with PAD lanes of slack on each side.  (No NCHW->NHWC transpose needed.)
    xp = jnp.pad(x_nchw, ((0, 0), (0, 0), (1, 1), (1, 1))).reshape(B, CIN, P)
    xp = jnp.pad(xp, ((0, 0), (0, 0), (PAD, PAD))).astype(jnp.bfloat16)

    out = pl.pallas_call(
        _cnn_fused_kernel,
        out_shape=jax.ShapeDtypeStruct((B, 1, n_actions), jnp.float32),
        grid=(B,),
        in_specs=[
            pl.BlockSpec((None, CIN, NPAD), lambda b: (b, 0, 0)),   # x (bf16)
            pl.BlockSpec((1, P), lambda b: (0, 0)),                 # interior mask
            pl.BlockSpec((9, C1, CIN), lambda b: (0, 0, 0)),        # conv1 w (bf16)
            pl.BlockSpec((C1, 1), lambda b: (0, 0)),                # conv1 bias
            pl.BlockSpec((C1, 1), lambda b: (0, 0)),                # bn1 scale
            pl.BlockSpec((C1, 1), lambda b: (0, 0)),                # bn1 shift
            pl.BlockSpec((9, C2, C1), lambda b: (0, 0, 0)),         # conv2 w (bf16)
            pl.BlockSpec((C2, 1), lambda b: (0, 0)),                # conv2 bias
            pl.BlockSpec((C2, 1), lambda b: (0, 0)),                # bn2 scale
            pl.BlockSpec((C2, 1), lambda b: (0, 0)),                # bn2 shift
            pl.BlockSpec((C2, P, HID), lambda b: (0, 0, 0)),        # fc1 w (bf16)
            pl.BlockSpec((1, HID), lambda b: (0, 0)),               # fc1 bias
            pl.BlockSpec((HID, n_actions), lambda b: (0, 0)),       # fc2 w (bf16)
            pl.BlockSpec((1, n_actions), lambda b: (0, 0)),         # fc2 bias
        ],
        out_specs=pl.BlockSpec((None, 1, n_actions), lambda b: (b, 0, 0)),
        scratch_shapes=[pltpu.VMEM((C1, NPAD), jnp.bfloat16)],      # padded conv1 out
        compiler_params=pltpu.CompilerParams(
            dimension_semantics=("parallel",)),                      # v7x: 1 image / core
    )(xp, kp["mask"],
      kp["w1"], kp["b1"], kp["s1"], kp["t1"],
      kp["w2"], kp["b2"], kp["s2"], kp["t2"],
      kp["wf1"], kp["bf1"], kp["wf2"], kp["bf2"])
    return out.reshape(B, n_actions)


def prepare_kernel_params(params, n_actions):
    """One-time re-layout of PyTorch-style params into kernel-friendly form."""
    f32, bf16 = jnp.float32, jnp.bfloat16

    def conv_w(w_oihw):
        # (Cout, Cin, 3, 3) -> (tap = dy*3 + dx, Cout, Cin)
        cout, cin = w_oihw.shape[0], w_oihw.shape[1]
        return jnp.transpose(w_oihw, (2, 3, 0, 1)).reshape(9, cout, cin).astype(bf16)

    # fc1: PyTorch row order (NCHW flatten) c*H*W + h*W + w  ->  kernel row
    # order (c, padded position p = r*WP + s).  Border rows and hidden columns
    # 100..127 are zero, so conv2's (masked) border garbage contributes nothing.
    wf1 = params["w_fc1"].reshape(C2, H, W, -1)             # (16, 20, 20, 100)
    n_hid = wf1.shape[-1]
    wf1_k = jnp.zeros((C2, HP, WP, HID), f32)
    wf1_k = wf1_k.at[:, 1:1 + H, 1:1 + W, :n_hid].set(wf1)
    wf1_k = wf1_k.reshape(C2, P, HID).astype(bf16)

    bf1_k = jnp.zeros((1, HID), f32).at[0, :n_hid].set(params["b_fc1"])
    wf2_k = jnp.zeros((HID, n_actions), f32).at[:n_hid, :].set(params["w_fc2"]).astype(bf16)
    bf2_k = params["b_fc2"].reshape(1, n_actions).astype(f32)

    # interior mask over padded positions (1 inside the 20x20 image, 0 on border)
    rr = (jnp.arange(HP) >= 1) & (jnp.arange(HP) <= H)
    ss = (jnp.arange(WP) >= 1) & (jnp.arange(WP) <= W)
    mask = (rr[:, None] & ss[None, :]).astype(f32).reshape(1, P)

    return dict(
        mask=mask,
        w1=conv_w(params["w_conv1"]),
        b1=params["b_conv1"].reshape(C1, 1).astype(f32),
        s1=params["bn1_scale"].reshape(C1, 1).astype(f32),
        t1=params["bn1_shift"].reshape(C1, 1).astype(f32),
        w2=conv_w(params["w_conv2"]),
        b2=params["b_conv2"].reshape(C2, 1).astype(f32),
        s2=params["bn2_scale"].reshape(C2, 1).astype(f32),
        t2=params["bn2_shift"].reshape(C2, 1).astype(f32),
        wf1=wf1_k, bf1=bf1_k, wf2=wf2_k, bf2=bf2_k,
    )


# ----------------------------------------------------------------------------
# Pure-JAX reference (PyTorch semantics; matmul_dtype=bf16 emulates the kernel)
# ----------------------------------------------------------------------------
def reference_forward(x_nchw, params, matmul_dtype=jnp.float32):
    md = matmul_dtype

    def conv(x, w, b):
        y = lax.conv_general_dilated(
            x.astype(md), w.astype(md), window_strides=(1, 1),
            padding=((1, 1), (1, 1)),
            dimension_numbers=("NCHW", "OIHW", "NCHW"),
            preferred_element_type=jnp.float32)
        return y + b.reshape(1, -1, 1, 1)

    y = conv(x_nchw, params["w_conv1"], params["b_conv1"])
    y = jnp.maximum(y, 0.0)
    y = y * params["bn1_scale"].reshape(1, -1, 1, 1) + params["bn1_shift"].reshape(1, -1, 1, 1)
    y = conv(y, params["w_conv2"], params["b_conv2"])
    y = jnp.maximum(y, 0.0)
    y = y * params["bn2_scale"].reshape(1, -1, 1, 1) + params["bn2_shift"].reshape(1, -1, 1, 1)
    flat = y.reshape(y.shape[0], -1)                         # NCHW flatten: (B, 6400)
    h = jnp.dot(flat.astype(md), params["w_fc1"].astype(md),
                preferred_element_type=jnp.float32) + params["b_fc1"]
    h = jnp.maximum(h, 0.0)
    return jnp.dot(h.astype(md), params["w_fc2"].astype(md),
                   preferred_element_type=jnp.float32) + params["b_fc2"]


# ----------------------------------------------------------------------------
# Deterministic parameter construction + run
# ----------------------------------------------------------------------------
def make_params(key, n_actions):
    eps = 1e-5
    ks = jax.random.split(key, 10)

    def bn_fold(gamma, beta):
        # fresh BatchNorm2d running stats: mean = 0, var = 1 (eval mode)
        scale = gamma / jnp.sqrt(1.0 + eps)
        shift = beta
        return scale, shift

    bn1_scale, bn1_shift = bn_fold(
        1.0 + 0.1 * jax.random.normal(ks[2], (C1,), jnp.float32),
        0.1 * jax.random.normal(ks[3], (C1,), jnp.float32))
    bn2_scale, bn2_shift = bn_fold(
        1.0 + 0.1 * jax.random.normal(ks[6], (C2,), jnp.float32),
        0.1 * jax.random.normal(ks[7], (C2,), jnp.float32))

    return dict(
        w_conv1=0.1 * jax.random.normal(ks[0], (C1, CIN, 3, 3), jnp.float32),
        b_conv1=0.1 * jax.random.normal(ks[1], (C1,), jnp.float32),
        bn1_scale=bn1_scale, bn1_shift=bn1_shift,
        w_conv2=0.1 * jax.random.normal(ks[4], (C2, C1, 3, 3), jnp.float32),
        b_conv2=0.1 * jax.random.normal(ks[5], (C2,), jnp.float32),
        bn2_scale=bn2_scale, bn2_shift=bn2_shift,
        # Linear weights stored transposed vs. PyTorch: (in_features, out_features)
        w_fc1=0.02 * jax.random.normal(ks[8], (H * W * C2, 100), jnp.float32),
        b_fc1=jnp.zeros((100,), jnp.float32),
        w_fc2=0.1 * jax.random.normal(ks[9], (100, n_actions), jnp.float32),
        b_fc2=jnp.zeros((n_actions,), jnp.float32),
    )


if __name__ == "__main__":
    key = jax.random.PRNGKey(0)
    k_x, k_p = jax.random.split(key)

    n_actions = 5
    # Linear(400*16, 100) implies a 20x20 spatial grid after two padded 3x3 convs.
    x = jax.random.normal(k_x, (2, 3, H, W), jnp.float32)
    params = make_params(k_p, n_actions)
    kparams = prepare_kernel_params(params, n_actions)

    out = jax.jit(cnn_forward)(x, kparams)
    out = jax.block_until_ready(out)
    assert out.shape == (2, n_actions), out.shape

    # Tight check vs. a bf16-matmul-emulating reference (same rounding as kernel).
    ref_bf16 = reference_forward(x, params, matmul_dtype=jnp.bfloat16)
    assert jnp.allclose(out, ref_bf16, rtol=5e-3, atol=5e-3), \
        f"bf16-ref max abs diff = {jnp.max(jnp.abs(out - ref_bf16))}"

    # Looser check vs. full-f32 PyTorch-semantics reference (bf16 matmul error budget).
    ref_f32 = reference_forward(x, params, matmul_dtype=jnp.float32)
    assert jnp.allclose(out, ref_f32, rtol=5e-2, atol=5e-2), \
        f"f32-ref max abs diff = {jnp.max(jnp.abs(out - ref_f32))}"

    print("KERNEL_OK")
</pallas_src>

<mosaic_0001>
module attributes {stable_mosaic.version = 11 : i64} {
  func.func @_cnn_fused_kernel(%arg0: i32, %arg1: memref<1x3x532xbf16, #tpu.memory_space<vmem>>, %arg2: memref<1x484xf32, #tpu.memory_space<vmem>>, %arg3: memref<9x8x3xbf16, #tpu.memory_space<vmem>>, %arg4: memref<8x1xf32, #tpu.memory_space<vmem>>, %arg5: memref<8x1xf32, #tpu.memory_space<vmem>>, %arg6: memref<8x1xf32, #tpu.memory_space<vmem>>, %arg7: memref<9x16x8xbf16, #tpu.memory_space<vmem>>, %arg8: memref<16x1xf32, #tpu.memory_space<vmem>>, %arg9: memref<16x1xf32, #tpu.memory_space<vmem>>, %arg10: memref<16x1xf32, #tpu.memory_space<vmem>>, %arg11: memref<16x484x128xbf16, #tpu.memory_space<vmem>>, %arg12: memref<1x128xf32, #tpu.memory_space<vmem>>, %arg13: memref<128x5xbf16, #tpu.memory_space<vmem>>, %arg14: memref<1x5xf32, #tpu.memory_space<vmem>>, %arg15: memref<1x1x5xf32, #tpu.memory_space<vmem>>, %arg16: memref<8x532xbf16, #tpu.memory_space<vmem>>) attributes {dimension_semantics = [#tpu.dimension_semantics<parallel>], iteration_bounds = array<i64: 2>, scalar_prefetch = 0 : i64, scratch_operands = 1 : i64, tpu.core_type = #tpu.core_type<tc>, window_params = [{transform_indices = @transform_0, window_bounds = array<i64: 1, 3, 532>}, {pipeline_mode = #tpu.pipeline_mode<synchronous>, transform_indices = @transform_1, window_bounds = array<i64: 1, 484>}, {pipeline_mode = #tpu.pipeline_mode<synchronous>, transform_indices = @transform_2, window_bounds = array<i64: 9, 8, 3>}, {pipeline_mode = #tpu.pipeline_mode<synchronous>, transform_indices = @transform_3, window_bounds = array<i64: 8, 1>}, {pipeline_mode = #tpu.pipeline_mode<synchronous>, transform_indices = @transform_4, window_bounds = array<i64: 8, 1>}, {pipeline_mode = #tpu.pipeline_mode<synchronous>, transform_indices = @transform_5, window_bounds = array<i64: 8, 1>}, {pipeline_mode = #tpu.pipeline_mode<synchronous>, transform_indices = @transform_6, window_bounds = array<i64: 9, 16, 8>}, {pipeline_mode = #tpu.pipeline_mode<synchronous>, transform_indices = @transform_7, window_bounds = array<i64: 16, 1>}, {pipeline_mode = #tpu.pipeline_mode<synchronous>, transform_indices = @transform_8, window_bounds = array<i64: 16, 1>}, {pipeline_mode = #tpu.pipeline_mode<synchronous>, transform_indices = @transform_9, window_bounds = array<i64: 16, 1>}, {pipeline_mode = #tpu.pipeline_mode<synchronous>, transform_indices = @transform_10, window_bounds = array<i64: 16, 484, 128>}, {pipeline_mode = #tpu.pipeline_mode<synchronous>, transform_indices = @transform_11, window_bounds = array<i64: 1, 128>}, {pipeline_mode = #tpu.pipeline_mode<synchronous>, transform_indices = @transform_12, window_bounds = array<i64: 128, 5>}, {pipeline_mode = #tpu.pipeline_mode<synchronous>, transform_indices = @transform_13, window_bounds = array<i64: 1, 5>}, {transform_indices = @transform_14, window_bounds = array<i64: 1, 1, 5>}]} {
    %c0 = arith.constant 0 : index
    %c0_0 = arith.constant 0 : index
    %0 = vector.load %arg2[%c0, %c0_0] : memref<1x484xf32, #tpu.memory_space<vmem>>, vector<1x484xf32>
    %c0_1 = arith.constant 0 : index
    %c0_2 = arith.constant 0 : index
    %c1 = arith.constant 1 : index
    %1 = vector.load %arg1[%c0_1, %c0_2, %c1] : memref<1x3x532xbf16, #tpu.memory_space<vmem>>, vector<1x3x484xbf16>
    %2 = vector.shape_cast %1 : vector<1x3x484xbf16> to vector<3x484xbf16>
    %c0_3 = arith.constant 0 : index
    %c0_4 = arith.constant 0 : index
    %c0_5 = arith.constant 0 : index
    %3 = vector.load %arg3[%c0_3, %c0_4, %c0_5] : memref<9x8x3xbf16, #tpu.memory_space<vmem>>, vector<1x8x3xbf16>
    %4 = vector.shape_cast %3 : vector<1x8x3xbf16> to vector<8x3xbf16>
    %cst = arith.constant dense<0.000000e+00> : vector<8x484xf32>
    %5 = tpu.matmul %4, %2, %cst {dimension_numbers = #tpu.dot_dimension_numbers<[1], [0], [0], [1], [0, 0, 1, 1], [], []>} : vector<8x3xbf16>, vector<3x484xbf16>, vector<8x484xf32> -> vector<8x484xf32>
    %c0_6 = arith.constant 0 : index
    %c0_7 = arith.constant 0 : index
    %c2 = arith.constant 2 : index
    %6 = vector.load %arg1[%c0_6, %c0_7, %c2] : memref<1x3x532xbf16, #tpu.memory_space<vmem>>, vector<1x3x484xbf16>
    %7 = vector.shape_cast %6 : vector<1x3x484xbf16> to vector<3x484xbf16>
    %c1_8 = arith.constant 1 : index
    %c0_9 = arith.constant 0 : index
    %c0_10 = arith.constant 0 : index
    %8 = vector.load %arg3[%c1_8, %c0_9, %c0_10] : memref<9x8x3xbf16, #tpu.memory_space<vmem>>, vector<1x8x3xbf16>
    %9 = vector.shape_cast %8 : vector<1x8x3xbf16> to vector<8x3xbf16>
    %cst_11 = arith.constant dense<0.000000e+00> : vector<8x484xf32>
    %10 = tpu.matmul %9, %7, %cst_11 {dimension_numbers = #tpu.dot_dimension_numbers<[1], [0], [0], [1], [0, 0, 1, 1], [], []>} : vector<8x3xbf16>, vector<3x484xbf16>, vector<8x484xf32> -> vector<8x484xf32>
    %11 = arith.addf %5, %10 : vector<8x484xf32>
    %c0_12 = arith.constant 0 : index
    %c0_13 = arith.constant 0 : index
    %c3 = arith.constant 3 : index
    %12 = vector.load %arg1[%c0_12, %c0_13, %c3] : memref<1x3x532xbf16, #tpu.memory_space<vmem>>, vector<1x3x484xbf16>
    %13 = vector.shape_cast %12 : vector<1x3x484xbf16> to vector<3x484xbf16>
    %c2_14 = arith.constant 2 : index
    %c0_15 = arith.constant 0 : index
    %c0_16 = arith.constant 0 : index
    %14 = vector.load %arg3[%c2_14, %c0_15, %c0_16] : memref<9x8x3xbf16, #tpu.memory_space<vmem>>, vector<1x8x3xbf16>
    %15 = vector.shape_cast %14 : vector<1x8x3xbf16> to vector<8x3xbf16>
    %cst_17 = arith.constant dense<0.000000e+00> : vector<8x484xf32>
    %16 = tpu.matmul %15, %13, %cst_17 {dimension_numbers = #tpu.dot_dimension_numbers<[1], [0], [0], [1], [0, 0, 1, 1], [], []>} : vector<8x3xbf16>, vector<3x484xbf16>, vector<8x484xf32> -> vector<8x484xf32>
    %17 = arith.addf %11, %16 : vector<8x484xf32>
    %c0_18 = arith.constant 0 : index
    %c0_19 = arith.constant 0 : index
    %c23 = arith.constant 23 : index
    %18 = vector.load %arg1[%c0_18, %c0_19, %c23] : memref<1x3x532xbf16, #tpu.memory_space<vmem>>, vector<1x3x484xbf16>
    %19 = vector.shape_cast %18 : vector<1x3x484xbf16> to vector<3x484xbf16>
    %c3_20 = arith.constant 3 : index
    %c0_21 = arith.constant 0 : index
    %c0_22 = arith.constant 0 : index
    %20 = vector.load %arg3[%c3_20, %c0_21, %c0_22] : memref<9x8x3xbf16, #tpu.memory_space<vmem>>, vector<1x8x3xbf16>
    %21 = vector.shape_cast %20 : vector<1x8x3xbf16> to vector<8x3xbf16>
    %cst_23 = arith.constant dense<0.000000e+00> : vector<8x484xf32>
    %22 = tpu.matmul %21, %19, %cst_23 {dimension_numbers = #tpu.dot_dimension_numbers<[1], [0], [0], [1], [0, 0, 1, 1], [], []>} : vector<8x3xbf16>, vector<3x484xbf16>, vector<8x484xf32> -> vector<8x484xf32>
    %23 = arith.addf %17, %22 : vector<8x484xf32>
    %c0_24 = arith.constant 0 : index
    %c0_25 = arith.constant 0 : index
    %c24 = arith.constant 24 : index
    %24 = vector.load %arg1[%c0_24, %c0_25, %c24] : memref<1x3x532xbf16, #tpu.memory_space<vmem>>, vector<1x3x484xbf16>
    %25 = vector.shape_cast %24 : vector<1x3x484xbf16> to vector<3x484xbf16>
    %c4 = arith.constant 4 : index
    %c0_26 = arith.constant 0 : index
    %c0_27 = arith.constant 0 : index
    %26 = vector.load %arg3[%c4, %c0_26, %c0_27] : memref<9x8x3xbf16, #tpu.memory_space<vmem>>, vector<1x8x3xbf16>
    %27 = vector.shape_cast %26 : vector<1x8x3xbf16> to vector<8x3xbf16>
    %cst_28 = arith.constant dense<0.000000e+00> : vector<8x484xf32>
    %28 = tpu.matmul %27, %25, %cst_28 {dimension_numbers = #tpu.dot_dimension_numbers<[1], [0], [0], [1], [0, 0, 1, 1], [], []>} : vector<8x3xbf16>, vector<3x484xbf16>, vector<8x484xf32> -> vector<8x484xf32>
    %29 = arith.addf %23, %28 : vector<8x484xf32>
    %c0_29 = arith.constant 0 : index
    %c0_30 = arith.constant 0 : index
    %c25 = arith.constant 25 : index
    %30 = vector.load %arg1[%c0_29, %c0_30, %c25] : memref<1x3x532xbf16, #tpu.memory_space<vmem>>, vector<1x3x484xbf16>
    %31 = vector.shape_cast %30 : vector<1x3x484xbf16> to vector<3x484xbf16>
    %c5 = arith.constant 5 : index
    %c0_31 = arith.constant 0 : index
    %c0_32 = arith.constant 0 : index
    %32 = vector.load %arg3[%c5, %c0_31, %c0_32] : memref<9x8x3xbf16, #tpu.memory_space<vmem>>, vector<1x8x3xbf16>
    %33 = vector.shape_cast %32 : vector<1x8x3xbf16> to vector<8x3xbf16>
    %cst_33 = arith.constant dense<0.000000e+00> : vector<8x484xf32>
    %34 = tpu.matmul %33, %31, %cst_33 {dimension_numbers = #tpu.dot_dimension_numbers<[1], [0], [0], [1], [0, 0, 1, 1], [], []>} : vector<8x3xbf16>, vector<3x484xbf16>, vector<8x484xf32> -> vector<8x484xf32>
    %35 = arith.addf %29, %34 : vector<8x484xf32>
    %c0_34 = arith.constant 0 : index
    %c0_35 = arith.constant 0 : index
    %c45 = arith.constant 45 : index
    %36 = vector.load %arg1[%c0_34, %c0_35, %c45] : memref<1x3x532xbf16, #tpu.memory_space<vmem>>, vector<1x3x484xbf16>
    %37 = vector.shape_cast %36 : vector<1x3x484xbf16> to vector<3x484xbf16>
    %c6 = arith.constant 6 : index
    %c0_36 = arith.constant 0 : index
    %c0_37 = arith.constant 0 : index
    %38 = vector.load %arg3[%c6, %c0_36, %c0_37] : memref<9x8x3xbf16, #tpu.memory_space<vmem>>, vector<1x8x3xbf16>
    %39 = vector.shape_cast %38 : vector<1x8x3xbf16> to vector<8x3xbf16>
    %cst_38 = arith.constant dense<0.000000e+00> : vector<8x484xf32>
    %40 = tpu.matmul %39, %37, %cst_38 {dimension_numbers = #tpu.dot_dimension_numbers<[1], [0], [0], [1], [0, 0, 1, 1], [], []>} : vector<8x3xbf16>, vector<3x484xbf16>, vector<8x484xf32> -> vector<8x484xf32>
    %41 = arith.addf %35, %40 : vector<8x484xf32>
    %c0_39 = arith.constant 0 : index
    %c0_40 = arith.constant 0 : index
    %c46 = arith.constant 46 : index
    %42 = vector.load %arg1[%c0_39, %c0_40, %c46] : memref<1x3x532xbf16, #tpu.memory_space<vmem>>, vector<1x3x484xbf16>
    %43 = vector.shape_cast %42 : vector<1x3x484xbf16> to vector<3x484xbf16>
    %c7 = arith.constant 7 : index
    %c0_41 = arith.constant 0 : index
    %c0_42 = arith.constant 0 : index
    %44 = vector.load %arg3[%c7, %c0_41, %c0_42] : memref<9x8x3xbf16, #tpu.memory_space<vmem>>, vector<1x8x3xbf16>
    %45 = vector.shape_cast %44 : vector<1x8x3xbf16> to vector<8x3xbf16>
    %cst_43 = arith.constant dense<0.000000e+00> : vector<8x484xf32>
    %46 = tpu.matmul %45, %43, %cst_43 {dimension_numbers = #tpu.dot_dimension_numbers<[1], [0], [0], [1], [0, 0, 1, 1], [], []>} : vector<8x3xbf16>, vector<3x484xbf16>, vector<8x484xf32> -> vector<8x484xf32>
    %47 = arith.addf %41, %46 : vector<8x484xf32>
    %c0_44 = arith.constant 0 : index
    %c0_45 = arith.constant 0 : index
    %c47 = arith.constant 47 : index
    %48 = vector.load %arg1[%c0_44, %c0_45, %c47] : memref<1x3x532xbf16, #tpu.memory_space<vmem>>, vector<1x3x484xbf16>
    %49 = vector.shape_cast %48 : vector<1x3x484xbf16> to vector<3x484xbf16>
    %c8 = arith.constant 8 : index
    %c0_46 = arith.constant 0 : index
    %c0_47 = arith.constant 0 : index
    %50 = vector.load %arg3[%c8, %c0_46, %c0_47] : memref<9x8x3xbf16, #tpu.memory_space<vmem>>, vector<1x8x3xbf16>
    %51 = vector.shape_cast %50 : vector<1x8x3xbf16> to vector<8x3xbf16>
    %cst_48 = arith.constant dense<0.000000e+00> : vector<8x484xf32>
    %52 = tpu.matmul %51, %49, %cst_48 {dimension_numbers = #tpu.dot_dimension_numbers<[1], [0], [0], [1], [0, 0, 1, 1], [], []>} : vector<8x3xbf16>, vector<3x484xbf16>, vector<8x484xf32> -> vector<8x484xf32>
    %53 = arith.addf %47, %52 : vector<8x484xf32>
    %c0_49 = arith.constant 0 : index
    %c0_50 = arith.constant 0 : index
    %54 = vector.load %arg4[%c0_49, %c0_50] : memref<8x1xf32, #tpu.memory_space<vmem>>, vector<8x1xf32>
    %55 = vector.broadcast %54 : vector<8x1xf32> to vector<8x484xf32>
    %56 = arith.addf %53, %55 : vector<8x484xf32>
    %cst_51 = arith.constant 0.000000e+00 : f32
    %57 = vector.broadcast %cst_51 : f32 to vector<8x484xf32>
    %58 = arith.maximumf %56, %57 : vector<8x484xf32>
    %c0_52 = arith.constant 0 : index
    %c0_53 = arith.constant 0 : index
    %59 = vector.load %arg5[%c0_52, %c0_53] : memref<8x1xf32, #tpu.memory_space<vmem>>, vector<8x1xf32>
    %60 = vector.broadcast %59 : vector<8x1xf32> to vector<8x484xf32>
    %61 = arith.mulf %58, %60 : vector<8x484xf32>
    %c0_54 = arith.constant 0 : index
    %c0_55 = arith.constant 0 : index
    %62 = vector.load %arg6[%c0_54, %c0_55] : memref<8x1xf32, #tpu.memory_space<vmem>>, vector<8x1xf32>
    %63 = vector.broadcast %62 : vector<8x1xf32> to vector<8x484xf32>
    %64 = arith.addf %61, %63 : vector<8x484xf32>
    %65 = vector.broadcast %0 : vector<1x484xf32> to vector<8x484xf32>
    %66 = arith.mulf %64, %65 : vector<8x484xf32>
    %cst_56 = arith.constant 0.000000e+00 : bf16
    %67 = vector.broadcast %cst_56 : bf16 to vector<8x532xbf16>
    %c0_57 = arith.constant 0 : index
    %c0_58 = arith.constant 0 : index
    %68 = vector.load %arg16[%c0_57, %c0_58] : memref<8x532xbf16, #tpu.memory_space<vmem>>, vector<8x532xbf16>
    tpu.vector_store %arg16[%c0_57, %c0_58], %67 {strides = array<i32>} : memref<8x532xbf16, #tpu.memory_space<vmem>>, vector<8x532xbf16>,
    %69 = arith.truncf %66 : vector<8x484xf32> to vector<8x484xbf16>
    %c0_59 = arith.constant 0 : index
    %c24_60 = arith.constant 24 : index
    %70 = vector.load %arg16[%c0_59, %c24_60] : memref<8x532xbf16, #tpu.memory_space<vmem>>, vector<8x484xbf16>
    tpu.vector_store %arg16[%c0_59, %c24_60], %69 {strides = array<i32>} : memref<8x532xbf16, #tpu.memory_space<vmem>>, vector<8x484xbf16>,
    %c0_61 = arith.constant 0 : index
    %c1_62 = arith.constant 1 : index
    %71 = vector.load %arg16[%c0_61, %c1_62] : memref<8x532xbf16, #tpu.memory_space<vmem>>, vector<8x484xbf16>
    %c0_63 = arith.constant 0 : index
    %c0_64 = arith.constant 0 : index
    %c0_65 = arith.constant 0 : index
    %72 = vector.load %arg7[%c0_63, %c0_64, %c0_65] : memref<9x16x8xbf16, #tpu.memory_space<vmem>>, vector<1x16x8xbf16>
    %73 = vector.shape_cast %72 : vector<1x16x8xbf16> to vector<16x8xbf16>
    %cst_66 = arith.constant dense<0.000000e+00> : vector<16x484xf32>
    %74 = tpu.matmul %73, %71, %cst_66 {dimension_numbers = #tpu.dot_dimension_numbers<[1], [0], [0], [1], [0, 0, 1, 1], [], []>} : vector<16x8xbf16>, vector<8x484xbf16>, vector<16x484xf32> -> vector<16x484xf32>
    %c0_67 = arith.constant 0 : index
    %c2_68 = arith.constant 2 : index
    %75 = vector.load %arg16[%c0_67, %c2_68] : memref<8x532xbf16, #tpu.memory_space<vmem>>, vector<8x484xbf16>
    %c1_69 = arith.constant 1 : index
    %c0_70 = arith.constant 0 : index
    %c0_71 = arith.constant 0 : index
    %76 = vector.load %arg7[%c1_69, %c0_70, %c0_71] : memref<9x16x8xbf16, #tpu.memory_space<vmem>>, vector<1x16x8xbf16>
    %77 = vector.shape_cast %76 : vector<1x16x8xbf16> to vector<16x8xbf16>
    %cst_72 = arith.constant dense<0.000000e+00> : vector<16x484xf32>
    %78 = tpu.matmul %77, %75, %cst_72 {dimension_numbers = #tpu.dot_dimension_numbers<[1], [0], [0], [1], [0, 0, 1, 1], [], []>} : vector<16x8xbf16>, vector<8x484xbf16>, vector<16x484xf32> -> vector<16x484xf32>
    %79 = arith.addf %74, %78 : vector<16x484xf32>
    %c0_73 = arith.constant 0 : index
    %c3_74 = arith.constant 3 : index
    %80 = vector.load %arg16[%c0_73, %c3_74] : memref<8x532xbf16, #tpu.memory_space<vmem>>, vector<8x484xbf16>
    %c2_75 = arith.constant 2 : index
    %c0_76 = arith.constant 0 : index
    %c0_77 = arith.constant 0 : index
    %81 = vector.load %arg7[%c2_75, %c0_76, %c0_77] : memref<9x16x8xbf16, #tpu.memory_space<vmem>>, vector<1x16x8xbf16>
    %82 = vector.shape_cast %81 : vector<1x16x8xbf16> to vector<16x8xbf16>
    %cst_78 = arith.constant dense<0.000000e+00> : vector<16x484xf32>
    %83 = tpu.matmul %82, %80, %cst_78 {dimension_numbers = #tpu.dot_dimension_numbers<[1], [0], [0], [1], [0, 0, 1, 1], [], []>} : vector<16x8xbf16>, vector<8x484xbf16>, vector<16x484xf32> -> vector<16x484xf32>
    %84 = arith.addf %79, %83 : vector<16x484xf32>
    %c0_79 = arith.constant 0 : index
    %c23_80 = arith.constant 23 : index
    %85 = vector.load %arg16[%c0_79, %c23_80] : memref<8x532xbf16, #tpu.memory_space<vmem>>, vector<8x484xbf16>
    %c3_81 = arith.constant 3 : index
    %c0_82 = arith.constant 0 : index
    %c0_83 = arith.constant 0 : index
    %86 = vector.load %arg7[%c3_81, %c0_82, %c0_83] : memref<9x16x8xbf16, #tpu.memory_space<vmem>>, vector<1x16x8xbf16>
    %87 = vector.shape_cast %86 : vector<1x16x8xbf16> to vector<16x8xbf16>
    %cst_84 = arith.constant dense<0.000000e+00> : vector<16x484xf32>
    %88 = tpu.matmul %87, %85, %cst_84 {dimension_numbers = #tpu.dot_dimension_numbers<[1], [0], [0], [1], [0, 0, 1, 1], [], []>} : vector<16x8xbf16>, vector<8x484xbf16>, vector<16x484xf32> -> vector<16x484xf32>
    %89 = arith.addf %84, %88 : vector<16x484xf32>
    %c0_85 = arith.constant 0 : index
    %c24_86 = arith.constant 24 : index
    %90 = vector.load %arg16[%c0_85, %c24_86] : memref<8x532xbf16, #tpu.memory_space<vmem>>, vector<8x484xbf16>
    %c4_87 = arith.constant 4 : index
    %c0_88 = arith.constant 0 : index
    %c0_89 = arith.constant 0 : index
    %91 = vector.load %arg7[%c4_87, %c0_88, %c0_89] : memref<9x16x8xbf16, #tpu.memory_space<vmem>>, vector<1x16x8xbf16>
    %92 = vector.shape_cast %91 : vector<1x16x8xbf16> to vector<16x8xbf16>
    %cst_90 = arith.constant dense<0.000000e+00> : vector<16x484xf32>
    %93 = tpu.matmul %92, %90, %cst_90 {dimension_numbers = #tpu.dot_dimension_numbers<[1], [0], [0], [1], [0, 0, 1, 1], [], []>} : vector<16x8xbf16>, vector<8x484xbf16>, vector<16x484xf32> -> vector<16x484xf32>
    %94 = arith.addf %89, %93 : vector<16x484xf32>
    %c0_91 = arith.constant 0 : index
    %c25_92 = arith.constant 25 : index
    %95 = vector.load %arg16[%c0_91, %c25_92] : memref<8x532xbf16, #tpu.memory_space<vmem>>, vector<8x484xbf16>
    %c5_93 = arith.constant 5 : index
    %c0_94 = arith.constant 0 : index
    %c0_95 = arith.constant 0 : index
    %96 = vector.load %arg7[%c5_93, %c0_94, %c0_95] : memref<9x16x8xbf16, #tpu.memory_space<vmem>>, vector<1x16x8xbf16>
    %97 = vector.shape_cast %96 : vector<1x16x8xbf16> to vector<16x8xbf16>
    %cst_96 = arith.constant dense<0.000000e+00> : vector<16x484xf32>
    %98 = tpu.matmul %97, %95, %cst_96 {dimension_numbers = #tpu.dot_dimension_numbers<[1], [0], [0], [1], [0, 0, 1, 1], [], []>} : vector<16x8xbf16>, vector<8x484xbf16>, vector<16x484xf32> -> vector<16x484xf32>
    %99 = arith.addf %94, %98 : vector<16x484xf32>
    %c0_97 = arith.constant 0 : index
    %c45_98 = arith.constant 45 : index
    %100 = vector.load %arg16[%c0_97, %c45_98] : memref<8x532xbf16, #tpu.memory_space<vmem>>, vector<8x484xbf16>
    %c6_99 = arith.constant 6 : index
    %c0_100 = arith.constant 0 : index
    %c0_101 = arith.constant 0 : index
    %101 = vector.load %arg7[%c6_99, %c0_100, %c0_101] : memref<9x16x8xbf16, #tpu.memory_space<vmem>>, vector<1x16x8xbf16>
    %102 = vector.shape_cast %101 : vector<1x16x8xbf16> to vector<16x8xbf16>
    %cst_102 = arith.constant dense<0.000000e+00> : vector<16x484xf32>
    %103 = tpu.matmul %102, %100, %cst_102 {dimension_numbers = #tpu.dot_dimension_numbers<[1], [0], [0], [1], [0, 0, 1, 1], [], []>} : vector<16x8xbf16>, vector<8x484xbf16>, vector<16x484xf32> -> vector<16x484xf32>
    %104 = arith.addf %99, %103 : vector<16x484xf32>
    %c0_103 = arith.constant 0 : index
    %c46_104 = arith.constant 46 : index
    %105 = vector.load %arg16[%c0_103, %c46_104] : memref<8x532xbf16, #tpu.memory_space<vmem>>, vector<8x484xbf16>
    %c7_105 = arith.constant 7 : index
    %c0_106 = arith.constant 0 : index
    %c0_107 = arith.constant 0 : index
    %106 = vector.load %arg7[%c7_105, %c0_106, %c0_107] : memref<9x16x8xbf16, #tpu.memory_space<vmem>>, vector<1x16x8xbf16>
    %107 = vector.shape_cast %106 : vector<1x16x8xbf16> to vector<16x8xbf16>
    %cst_108 = arith.constant dense<0.000000e+00> : vector<16x484xf32>
    %108 = tpu.matmul %107, %105, %cst_108 {dimension_numbers = #tpu.dot_dimension_numbers<[1], [0], [0], [1], [0, 0, 1, 1], [], []>} : vector<16x8xbf16>, vector<8x484xbf16>, vector<16x484xf32> -> vector<16x484xf32>
    %109 = arith.addf %104, %108 : vector<16x484xf32>
    %c0_109 = arith.constant 0 : index
    %c47_110 = arith.constant 47 : index
    %110 = vector.load %arg16[%c0_109, %c47_110] : memref<8x532xbf16, #tpu.memory_space<vmem>>, vector<8x484xbf16>
    %c8_111 = arith.constant 8 : index
    %c0_112 = arith.constant 0 : index
    %c0_113 = arith.constant 0 : index
    %111 = vector.load %arg7[%c8_111, %c0_112, %c0_113] : memref<9x16x8xbf16, #tpu.memory_space<vmem>>, vector<1x16x8xbf16>
    %112 = vector.shape_cast %111 : vector<1x16x8xbf16> to vector<16x8xbf16>
    %cst_114 = arith.constant dense<0.000000e+00> : vector<16x484xf32>
    %113 = tpu.matmul %112, %110, %cst_114 {dimension_numbers = #tpu.dot_dimension_numbers<[1], [0], [0], [1], [0, 0, 1, 1], [], []>} : vector<16x8xbf16>, vector<8x484xbf16>, vector<16x484xf32> -> vector<16x484xf32>
    %114 = arith.addf %109, %113 : vector<16x484xf32>
    %c0_115 = arith.constant 0 : index
    %c0_116 = arith.constant 0 : index
    %115 = vector.load %arg8[%c0_115, %c0_116] : memref<16x1xf32, #tpu.memory_space<vmem>>, vector<16x1xf32>
    %116 = vector.broadcast %115 : vector<16x1xf32> to vector<16x484xf32>
    %117 = arith.addf %114, %116 : vector<16x484xf32>
    %cst_117 = arith.constant 0.000000e+00 : f32
    %118 = vector.broadcast %cst_117 : f32 to vector<16x484xf32>
    %119 = arith.maximumf %117, %118 : vector<16x484xf32>
    %c0_118 = arith.constant 0 : index
    %c0_119 = arith.constant 0 : index
    %120 = vector.load %arg9[%c0_118, %c0_119] : memref<16x1xf32, #tpu.memory_space<vmem>>, vector<16x1xf32>
    %121 = vector.broadcast %120 : vector<16x1xf32> to vector<16x484xf32>
    %122 = arith.mulf %119, %121 : vector<16x484xf32>
    %c0_120 = arith.constant 0 : index
    %c0_121 = arith.constant 0 : index
    %123 = vector.load %arg10[%c0_120, %c0_121] : memref<16x1xf32, #tpu.memory_space<vmem>>, vector<16x1xf32>
    %124 = vector.broadcast %123 : vector<16x1xf32> to vector<16x484xf32>
    %125 = arith.addf %122, %124 : vector<16x484xf32>
    %126 = vector.broadcast %0 : vector<1x484xf32> to vector<16x484xf32>
    %127 = arith.mulf %125, %126 : vector<16x484xf32>
    %128 = arith.truncf %127 : vector<16x484xf32> to vector<16x484xbf16>
    %129 = vector.extract_strided_slice %128 {offsets = [0, 0], sizes = [1, 484], strides = [1, 1]} : vector<16x484xbf16> to vector<1x484xbf16>
    %c0_122 = arith.constant 0 : index
    %c0_123 = arith.constant 0 : index
    %c0_124 = arith.constant 0 : index
    %130 = vector.load %arg11[%c0_122, %c0_123, %c0_124] : memref<16x484x128xbf16, #tpu.memory_space<vmem>>, vector<1x484x128xbf16>
    %131 = vector.shape_cast %130 : vector<1x484x128xbf16> to vector<484x128xbf16>
    %cst_125 = arith.constant dense<0.000000e+00> : vector<1x128xf32>
    %132 = tpu.matmul %129, %131, %cst_125 {dimension_numbers = #tpu.dot_dimension_numbers<[1], [0], [0], [1], [0, 0, 1, 1], [], []>} : vector<1x484xbf16>, vector<484x128xbf16>, vector<1x128xf32> -> vector<1x128xf32>
    %133 = vector.extract_strided_slice %128 {offsets = [1, 0], sizes = [1, 484], strides = [1, 1]} : vector<16x484xbf16> to vector<1x484xbf16>
    %c1_126 = arith.constant 1 : index
    %c0_127 = arith.constant 0 : index
    %c0_128 = arith.constant 0 : index
    %134 = vector.load %arg11[%c1_126, %c0_127, %c0_128] : memref<16x484x128xbf16, #tpu.memory_space<vmem>>, vector<1x484x128xbf16>
    %135 = vector.shape_cast %134 : vector<1x484x128xbf16> to vector<484x128xbf16>
    %cst_129 = arith.constant dense<0.000000e+00> : vector<1x128xf32>
    %136 = tpu.matmul %133, %135, %cst_129 {dimension_numbers = #tpu.dot_dimension_numbers<[1], [0], [0], [1], [0, 0, 1, 1], [], []>} : vector<1x484xbf16>, vector<484x128xbf16>, vector<1x128xf32> -> vector<1x128xf32>
    %137 = arith.addf %132, %136 : vector<1x128xf32>
    %138 = vector.extract_strided_slice %128 {offsets = [2, 0], sizes = [1, 484], strides = [1, 1]} : vector<16x484xbf16> to vector<1x484xbf16>
    %c2_130 = arith.constant 2 : index
    %c0_131 = arith.constant 0 : index
    %c0_132 = arith.constant 0 : index
    %139 = vector.load %arg11[%c2_130, %c0_131, %c0_132] : memref<16x484x128xbf16, #tpu.memory_space<vmem>>, vector<1x484x128xbf16>
    %140 = vector.shape_cast %139 : vector<1x484x128xbf16> to vector<484x128xbf16>
    %cst_133 = arith.constant dense<0.000000e+00> : vector<1x128xf32>
    %141 = tpu.matmul %138, %140, %cst_133 {dimension_numbers = #tpu.dot_dimension_numbers<[1], [0], [0], [1], [0, 0, 1, 1], [], []>} : vector<1x484xbf16>, vector<484x128xbf16>, vector<1x128xf32> -> vector<1x128xf32>
    %142 = arith.addf %137, %141 : vector<1x128xf32>
    %143 = vector.extract_strided_slice %128 {offsets = [3, 0], sizes = [1, 484], strides = [1, 1]} : vector<16x484xbf16> to vector<1x484xbf16>
    %c3_134 = arith.constant 3 : index
    %c0_135 = arith.constant 0 : index
    %c0_136 = arith.constant 0 : index
    %144 = vector.load %arg11[%c3_134, %c0_135, %c0_136] : memref<16x484x128xbf16, #tpu.memory_space<vmem>>, vector<1x484x128xbf16>
    %145 = vector.shape_cast %144 : vector<1x484x128xbf16> to vector<484x128xbf16>
    %cst_137 = arith.constant dense<0.000000e+00> : vector<1x128xf32>
    %146 = tpu.matmul %143, %145, %cst_137 {dimension_numbers = #tpu.dot_dimension_numbers<[1], [0], [0], [1], [0, 0, 1, 1], [], []>} : vector<1x484xbf16>, vector<484x128xbf16>, vector<1x128xf32> -> vector<1x128xf32>
    %147 = arith.addf %142, %146 : vector<1x128xf32>
    %148 = vector.extract_strided_slice %128 {offsets = [4, 0], sizes = [1, 484], strides = [1, 1]} : vector<16x484xbf16> to vector<1x484xbf16>
    %c4_138 = arith.constant 4 : index
    %c0_139 = arith.constant 0 : index
    %c0_140 = arith.constant 0 : index
    %149 = vector.load %arg11[%c4_138, %c0_139, %c0_140] : memref<16x484x128xbf16, #tpu.memory_space<vmem>>, vector<1x484x128xbf16>
    %150 = vector.shape_cast %149 : vector<1x484x128xbf16> to vector<484x128xbf16>
    %cst_141 = arith.constant dense<0.000000e+00> : vector<1x128xf32>
    %151 = tpu.matmul %148, %150, %cst_141 {dimension_numbers = #tpu.dot_dimension_numbers<[1], [0], [0], [1], [0, 0, 1, 1], [], []>} : vector<1x484xbf16>, vector<484x128xbf16>, vector<1x128xf32> -> vector<1x128xf32>
    %152 = arith.addf %147, %151 : vector<1x128xf32>
    %153 = vector.extract_strided_slice %128 {offsets = [5, 0], sizes = [1, 484], strides = [1, 1]} : vector<16x484xbf16> to vector<1x484xbf16>
    %c5_142 = arith.constant 5 : index
    %c0_143 = arith.constant 0 : index
    %c0_144 = arith.constant 0 : index
    %154 = vector.load %arg11[%c5_142, %c0_143, %c0_144] : memref<16x484x128xbf16, #tpu.memory_space<vmem>>, vector<1x484x128xbf16>
    %155 = vector.shape_cast %154 : vector<1x484x128xbf16> to vector<484x128xbf16>
    %cst_145 = arith.constant dense<0.000000e+00> : vector<1x128xf32>
    %156 = tpu.matmul %153, %155, %cst_145 {dimension_numbers = #tpu.dot_dimension_numbers<[1], [0], [0], [1], [0, 0, 1, 1], [], []>} : vector<1x484xbf16>, vector<484x128xbf16>, vector<1x128xf32> -> vector<1x128xf32>
    %157 = arith.addf %152, %156 : vector<1x128xf32>
    %158 = vector.extract_strided_slice %128 {offsets = [6, 0], sizes = [1, 484], strides = [1, 1]} : vector<16x484xbf16> to vector<1x484xbf16>
    %c6_146 = arith.constant 6 : index
    %c0_147 = arith.constant 0 : index
    %c0_148 = arith.constant 0 : index
    %159 = vector.load %arg11[%c6_146, %c0_147, %c0_148] : memref<16x484x128xbf16, #tpu.memory_space<vmem>>, vector<1x484x128xbf16>
    %160 = vector.shape_cast %159 : vector<1x484x128xbf16> to vector<484x128xbf16>
    %cst_149 = arith.constant dense<0.000000e+00> : vector<1x128xf32>
    %161 = tpu.matmul %158, %160, %cst_149 {dimension_numbers = #tpu.dot_dimension_numbers<[1], [0], [0], [1], [0, 0, 1, 1], [], []>} : vector<1x484xbf16>, vector<484x128xbf16>, vector<1x128xf32> -> vector<1x128xf32>
    %162 = arith.addf %157, %161 : vector<1x128xf32>
    %163 = vector.extract_strided_slice %128 {offsets = [7, 0], sizes = [1, 484], strides = [1, 1]} : vector<16x484xbf16> to vector<1x484xbf16>
    %c7_150 = arith.constant 7 : index
    %c0_151 = arith.constant 0 : index
    %c0_152 = arith.constant 0 : index
    %164 = vector.load %arg11[%c7_150, %c0_151, %c0_152] : memref<16x484x128xbf16, #tpu.memory_space<vmem>>, vector<1x484x128xbf16>
    %165 = vector.shape_cast %164 : vector<1x484x128xbf16> to vector<484x128xbf16>
    %cst_153 = arith.constant dense<0.000000e+00> : vector<1x128xf32>
    %166 = tpu.matmul %163, %165, %cst_153 {dimension_numbers = #tpu.dot_dimension_numbers<[1], [0], [0], [1], [0, 0, 1, 1], [], []>} : vector<1x484xbf16>, vector<484x128xbf16>, vector<1x128xf32> -> vector<1x128xf32>
    %167 = arith.addf %162, %166 : vector<1x128xf32>
    %168 = vector.extract_strided_slice %128 {offsets = [8, 0], sizes = [1, 484], strides = [1, 1]} : vector<16x484xbf16> to vector<1x484xbf16>
    %c8_154 = arith.constant 8 : index
    %c0_155 = arith.constant 0 : index
    %c0_156 = arith.constant 0 : index
    %169 = vector.load %arg11[%c8_154, %c0_155, %c0_156] : memref<16x484x128xbf16, #tpu.memory_space<vmem>>, vector<1x484x128xbf16>
    %170 = vector.shape_cast %169 : vector<1x484x128xbf16> to vector<484x128xbf16>
    %cst_157 = arith.constant dense<0.000000e+00> : vector<1x128xf32>
    %171 = tpu.matmul %168, %170, %cst_157 {dimension_numbers = #tpu.dot_dimension_numbers<[1], [0], [0], [1], [0, 0, 1, 1], [], []>} : vector<1x484xbf16>, vector<484x128xbf16>, vector<1x128xf32> -> vector<1x128xf32>
    %172 = arith.addf %167, %171 : vector<1x128xf32>
    %173 = vector.extract_strided_slice %128 {offsets = [9, 0], sizes = [1, 484], strides = [1, 1]} : vector<16x484xbf16> to vector<1x484xbf16>
    %c9 = arith.constant 9 : index
    %c0_158 = arith.constant 0 : index
    %c0_159 = arith.constant 0 : index
    %174 = vector.load %arg11[%c9, %c0_158, %c0_159] : memref<16x484x128xbf16, #tpu.memory_space<vmem>>, vector<1x484x128xbf16>
    %175 = vector.shape_cast %174 : vector<1x484x128xbf16> to vector<484x128xbf16>
    %cst_160 = arith.constant dense<0.000000e+00> : vector<1x128xf32>
    %176 = tpu.matmul %173, %175, %cst_160 {dimension_numbers = #tpu.dot_dimension_numbers<[1], [0], [0], [1], [0, 0, 1, 1], [], []>} : vector<1x484xbf16>, vector<484x128xbf16>, vector<1x128xf32> -> vector<1x128xf32>
    %177 = arith.addf %172, %176 : vector<1x128xf32>
    %178 = vector.extract_strided_slice %128 {offsets = [10, 0], sizes = [1, 484], strides = [1, 1]} : vector<16x484xbf16> to vector<1x484xbf16>
    %c10 = arith.constant 10 : index
    %c0_161 = arith.constant 0 : index
    %c0_162 = arith.constant 0 : index
    %179 = vector.load %arg11[%c10, %c0_161, %c0_162] : memref<16x484x128xbf16, #tpu.memory_space<vmem>>, vector<1x484x128xbf16>
    %180 = vector.shape_cast %179 : vector<1x484x128xbf16> to vector<484x128xbf16>
    %cst_163 = arith.constant dense<0.000000e+00> : vector<1x128xf32>
    %181 = tpu.matmul %178, %180, %cst_163 {dimension_numbers = #tpu.dot_dimension_numbers<[1], [0], [0], [1], [0, 0, 1, 1], [], []>} : vector<1x484xbf16>, vector<484x128xbf16>, vector<1x128xf32> -> vector<1x128xf32>
    %182 = arith.addf %177, %181 : vector<1x128xf32>
    %183 = vector.extract_strided_slice %128 {offsets = [11, 0], sizes = [1, 484], strides = [1, 1]} : vector<16x484xbf16> to vector<1x484xbf16>
    %c11 = arith.constant 11 : index
    %c0_164 = arith.constant 0 : index
    %c0_165 = arith.constant 0 : index
    %184 = vector.load %arg11[%c11, %c0_164, %c0_165] : memref<16x484x128xbf16, #tpu.memory_space<vmem>>, vector<1x484x128xbf16>
    %185 = vector.shape_cast %184 : vector<1x484x128xbf16> to vector<484x128xbf16>
    %cst_166 = arith.constant dense<0.000000e+00> : vector<1x128xf32>
    %186 = tpu.matmul %183, %185, %cst_166 {dimension_numbers = #tpu.dot_dimension_numbers<[1], [0], [0], [1], [0, 0, 1, 1], [], []>} : vector<1x484xbf16>, vector<484x128xbf16>, vector<1x128xf32> -> vector<1x128xf32>
    %187 = arith.addf %182, %186 : vector<1x128xf32>
    %188 = vector.extract_strided_slice %128 {offsets = [12, 0], sizes = [1, 484], strides = [1, 1]} : vector<16x484xbf16> to vector<1x484xbf16>
    %c12 = arith.constant 12 : index
    %c0_167 = arith.constant 0 : index
    %c0_168 = arith.constant 0 : index
    %189 = vector.load %arg11[%c12, %c0_167, %c0_168] : memref<16x484x128xbf16, #tpu.memory_space<vmem>>, vector<1x484x128xbf16>
    %190 = vector.shape_cast %189 : vector<1x484x128xbf16> to vector<484x128xbf16>
    %cst_169 = arith.constant dense<0.000000e+00> : vector<1x128xf32>
    %191 = tpu.matmul %188, %190, %cst_169 {dimension_numbers = #tpu.dot_dimension_numbers<[1], [0], [0], [1], [0, 0, 1, 1], [], []>} : vector<1x484xbf16>, vector<484x128xbf16>, vector<1x128xf32> -> vector<1x128xf32>
    %192 = arith.addf %187, %191 : vector<1x128xf32>
    %193 = vector.extract_strided_slice %128 {offsets = [13, 0], sizes = [1, 484], strides = [1, 1]} : vector<16x484xbf16> to vector<1x484xbf16>
    %c13 = arith.constant 13 : index
    %c0_170 = arith.constant 0 : index
    %c0_171 = arith.constant 0 : index
    %194 = vector.load %arg11[%c13, %c0_170, %c0_171] : memref<16x484x128xbf16, #tpu.memory_space<vmem>>, vector<1x484x128xbf16>
    %195 = vector.shape_cast %194 : vector<1x484x128xbf16> to vector<484x128xbf16>
    %cst_172 = arith.constant dense<0.000000e+00> : vector<1x128xf32>
    %196 = tpu.matmul %193, %195, %cst_172 {dimension_numbers = #tpu.dot_dimension_numbers<[1], [0], [0], [1], [0, 0, 1, 1], [], []>} : vector<1x484xbf16>, vector<484x128xbf16>, vector<1x128xf32> -> vector<1x128xf32>
    %197 = arith.addf %192, %196 : vector<1x128xf32>
    %198 = vector.extract_strided_slice %128 {offsets = [14, 0], sizes = [1, 484], strides = [1, 1]} : vector<16x484xbf16> to vector<1x484xbf16>
    %c14 = arith.constant 14 : index
    %c0_173 = arith.constant 0 : index
    %c0_174 = arith.constant 0 : index
    %199 = vector.load %arg11[%c14, %c0_173, %c0_174] : memref<16x484x128xbf16, #tpu.memory_space<vmem>>, vector<1x484x128xbf16>
    %200 = vector.shape_cast %199 : vector<1x484x128xbf16> to vector<484x128xbf16>
    %cst_175 = arith.constant dense<0.000000e+00> : vector<1x128xf32>
    %201 = tpu.matmul %198, %200, %cst_175 {dimension_numbers = #tpu.dot_dimension_numbers<[1], [0], [0], [1], [0, 0, 1, 1], [], []>} : vector<1x484xbf16>, vector<484x128xbf16>, vector<1x128xf32> -> vector<1x128xf32>
    %202 = arith.addf %197, %201 : vector<1x128xf32>
    %203 = vector.extract_strided_slice %128 {offsets = [15, 0], sizes = [1, 484], strides = [1, 1]} : vector<16x484xbf16> to vector<1x484xbf16>
    %c15 = arith.constant 15 : index
    %c0_176 = arith.constant 0 : index
    %c0_177 = arith.constant 0 : index
    %204 = vector.load %arg11[%c15, %c0_176, %c0_177] : memref<16x484x128xbf16, #tpu.memory_space<vmem>>, vector<1x484x128xbf16>
    %205 = vector.shape_cast %204 : vector<1x484x128xbf16> to vector<484x128xbf16>
    %cst_178 = arith.constant dense<0.000000e+00> : vector<1x128xf32>
    %206 = tpu.matmul %203, %205, %cst_178 {dimension_numbers = #tpu.dot_dimension_numbers<[1], [0], [0], [1], [0, 0, 1, 1], [], []>} : vector<1x484xbf16>, vector<484x128xbf16>, vector<1x128xf32> -> vector<1x128xf32>
    %207 = arith.addf %202, %206 : vector<1x128xf32>
    %c0_179 = arith.constant 0 : index
    %c0_180 = arith.constant 0 : index
    %208 = vector.load %arg12[%c0_179, %c0_180] : memref<1x128xf32, #tpu.memory_space<vmem>>, vector<1x128xf32>
    %209 = arith.addf %207, %208 : vector<1x128xf32>
    %cst_181 = arith.constant 0.000000e+00 : f32
    %210 = vector.broadcast %cst_181 : f32 to vector<1x128xf32>
    %211 = arith.maximumf %209, %210 : vector<1x128xf32>
    %212 = arith.truncf %211 : vector<1x128xf32> to vector<1x128xbf16>
    %c0_182 = arith.constant 0 : index
    %c0_183 = arith.constant 0 : index
    %213 = vector.load %arg13[%c0_182, %c0_183] : memref<128x5xbf16, #tpu.memory_space<vmem>>, vector<128x5xbf16>
    %cst_184 = arith.constant dense<0.000000e+00> : vector<1x5xf32>
    %214 = tpu.matmul %212, %213, %cst_184 {dimension_numbers = #tpu.dot_dimension_numbers<[1], [0], [0], [1], [0, 0, 1, 1], [], []>} : vector<1x128xbf16>, vector<128x5xbf16>, vector<1x5xf32> -> vector<1x5xf32>
    %c0_185 = arith.constant 0 : index
    %c0_186 = arith.constant 0 : index
    %215 = vector.load %arg14[%c0_185, %c0_186] : memref<1x5xf32, #tpu.memory_space<vmem>>, vector<1x5xf32>
    %216 = arith.addf %214, %215 : vector<1x5xf32>
    %c0_187 = arith.constant 0 : index
    %c0_188 = arith.constant 0 : index
    %c0_189 = arith.constant 0 : index
    %217 = vector.load %arg15[%c0_187, %c0_188, %c0_189] : memref<1x1x5xf32, #tpu.memory_space<vmem>>, vector<1x1x5xf32>
    %218 = vector.shape_cast %217 : vector<1x1x5xf32> to vector<1x5xf32>
    %219 = vector.shape_cast %216 : vector<1x5xf32> to vector<1x1x5xf32>
    tpu.vector_store %arg15[%c0_187, %c0_188, %c0_189], %219 {strides = array<i32>} : memref<1x1x5xf32, #tpu.memory_space<vmem>>, vector<1x1x5xf32>,
    return
  }
  func.func @transform_0(%arg0: i32) -> (i32, i32, i32) {
    %c0_i32 = arith.constant 0 : i32
    %c0_i32_0 = arith.constant 0 : i32
    %c0_i32_1 = arith.constant 0 : i32
    return %arg0, %c0_i32, %c0_i32_0 : i32, i32, i32
  }
  func.func @transform_1(%arg0: i32) -> (i32, i32) {
    %c0_i32 = arith.constant 0 : i32
    %c0_i32_0 = arith.constant 0 : i32
    %c0_i32_1 = arith.constant 0 : i32
    return %c0_i32, %c0_i32_0 : i32, i32
  }
  func.func @transform_2(%arg0: i32) -> (i32, i32, i32) {
    %c0_i32 = arith.constant 0 : i32
    %c0_i32_0 = arith.constant 0 : i32
    %c0_i32_1 = arith.constant 0 : i32
    %c0_i32_2 = arith.constant 0 : i32
    return %c0_i32, %c0_i32_0, %c0_i32_1 : i32, i32, i32
  }
  func.func @transform_3(%arg0: i32) -> (i32, i32) {
    %c0_i32 = arith.constant 0 : i32
    %c0_i32_0 = arith.constant 0 : i32
    %c0_i32_1 = arith.constant 0 : i32
    return %c0_i32, %c0_i32_0 : i32, i32
  }
  func.func @transform_4(%arg0: i32) -> (i32, i32) {
    %c0_i32 = arith.constant 0 : i32
    %c0_i32_0 = arith.constant 0 : i32
    %c0_i32_1 = arith.constant 0 : i32
    return %c0_i32, %c0_i32_0 : i32, i32
  }
  func.func @transform_5(%arg0: i32) -> (i32, i32) {
    %c0_i32 = arith.constant 0 : i32
    %c0_i32_0 = arith.constant 0 : i32
    %c0_i32_1 = arith.constant 0 : i32
    return %c0_i32, %c0_i32_0 : i32, i32
  }
  func.func @transform_6(%arg0: i32) -> (i32, i32, i32) {
    %c0_i32 = arith.constant 0 : i32
    %c0_i32_0 = arith.constant 0 : i32
    %c0_i32_1 = arith.constant 0 : i32
    %c0_i32_2 = arith.constant 0 : i32
    return %c0_i32, %c0_i32_0, %c0_i32_1 : i32, i32, i32
  }
  func.func @transform_7(%arg0: i32) -> (i32, i32) {
    %c0_i32 = arith.constant 0 : i32
    %c0_i32_0 = arith.constant 0 : i32
    %c0_i32_1 = arith.constant 0 : i32
    return %c0_i32, %c0_i32_0 : i32, i32
  }
  func.func @transform_8(%arg0: i32) -> (i32, i32) {
    %c0_i32 = arith.constant 0 : i32
    %c0_i32_0 = arith.constant 0 : i32
    %c0_i32_1 = arith.constant 0 : i32
    return %c0_i32, %c0_i32_0 : i32, i32
  }
  func.func @transform_9(%arg0: i32) -> (i32, i32) {
    %c0_i32 = arith.constant 0 : i32
    %c0_i32_0 = arith.constant 0 : i32
    %c0_i32_1 = arith.constant 0 : i32
    return %c0_i32, %c0_i32_0 : i32, i32
  }
  func.func @transform_10(%arg0: i32) -> (i32, i32, i32) {
    %c0_i32 = arith.constant 0 : i32
    %c0_i32_0 = arith.constant 0 : i32
    %c0_i32_1 = arith.constant 0 : i32
    %c0_i32_2 = arith.constant 0 : i32
    return %c0_i32, %c0_i32_0, %c0_i32_1 : i32, i32, i32
  }
  func.func @transform_11(%arg0: i32) -> (i32, i32) {
    %c0_i32 = arith.constant 0 : i32
    %c0_i32_0 = arith.constant 0 : i32
    %c0_i32_1 = arith.constant 0 : i32
    return %c0_i32, %c0_i32_0 : i32, i32
  }
  func.func @transform_12(%arg0: i32) -> (i32, i32) {
    %c0_i32 = arith.constant 0 : i32
    %c0_i32_0 = arith.constant 0 : i32
    %c0_i32_1 = arith.constant 0 : i32
    return %c0_i32, %c0_i32_0 : i32, i32
  }
  func.func @transform_13(%arg0: i32) -> (i32, i32) {
    %c0_i32 = arith.constant 0 : i32
    %c0_i32_0 = arith.constant 0 : i32
    %c0_i32_1 = arith.constant 0 : i32
    return %c0_i32, %c0_i32_0 : i32, i32
  }
  func.func @transform_14(%arg0: i32) -> (i32, i32, i32) {
    %c0_i32 = arith.constant 0 : i32
    %c0_i32_0 = arith.constant 0 : i32
    %c0_i32_1 = arith.constant 0 : i32
    return %arg0, %c0_i32, %c0_i32_0 : i32, i32, i32
  }
}

</mosaic_0001>

<llo_original>
// kernel: cnn_forward.1
$region0: #{cnn_forward.1}
  #allocation0 [shape = 'u32[]', space=smem, size = 0x4, offset = 0x4, fixed_abs, tag = 'smem constant byte address 0x4 - core index']
  #allocation1 [shape = 'u32[144,128]{1,0:T(1,128)}', space=vmem, size = 0x12000, scoped, tag = 'internal scratch']
  #allocation2 [shape = 'bf16[8,532]{1,0:T(8,128)(2,1)}', space=vmem, size = 0x2800, scoped, tag = 'scratch operand']
  %s0 = inlined_call_operand.vmem [shape: bf16[2,3,532], index: 0, kind: input, shape index: {}]
  %s1 = inlined_call_operand.vmem [shape: f32[1,484], index: 1, kind: input, shape index: {}]
  %s2 = inlined_call_operand.vmem [shape: bf16[9,8,3], index: 2, kind: input, shape index: {}]
  %s3 = inlined_call_operand.vmem [shape: f32[8,1], index: 3, kind: input, shape index: {}]
  %s4 = inlined_call_operand.vmem [shape: f32[8,1], index: 4, kind: input, shape index: {}]
  %s5 = inlined_call_operand.vmem [shape: f32[8,1], index: 5, kind: input, shape index: {}]
  %s6 = inlined_call_operand.vmem [shape: bf16[9,16,8], index: 6, kind: input, shape index: {}]
  %s7 = inlined_call_operand.vmem [shape: f32[16,1], index: 7, kind: input, shape index: {}]
  %s8 = inlined_call_operand.vmem [shape: f32[16,1], index: 8, kind: input, shape index: {}]
  %s9 = inlined_call_operand.vmem [shape: f32[16,1], index: 9, kind: input, shape index: {}]
  %s10 = inlined_call_operand.vmem [shape: bf16[16,484,128], index: 10, kind: input, shape index: {}]
  %s11 = inlined_call_operand.vmem [shape: f32[1,128], index: 11, kind: input, shape index: {}]
  %s12 = inlined_call_operand.vmem [shape: bf16[128,5], index: 12, kind: input, shape index: {}]
  %s13 = inlined_call_operand.vmem [shape: f32[1,5], index: 13, kind: input, shape index: {}]
  %s14 = inlined_call_operand.hbm [shape: f32[2,1,5], index: 14, kind: output, shape index: {}]
  %s15 = sld [smem:[#allocation0]]
  $region89: #{cnn_forward.1} parent=0
    _
  %s17 = ssub.s32 1, %s15
  %s18 = scalar_select 0, %s17, %s15
  $region1: #{cnn_forward.1} parent=0
    #allocation3 [shape = 'u8[1024]{0}', space=vmem, size = 0x400, scoped, tag = 'output window, operand 0']
    #allocation4 [shape = 's32[2]{0}', space=sflag, size = 0x8, scoped, tag = 'scoped memory for cnn_forward.1']
    %19 = vsyncpa [#allocation4], 0
    %s20 = scalar_lea.sflag [#allocation4], 1
    %21 = vsyncpa %s20, 0
    loop: start=0, step=1, limit=4
    $region2: #{cnn_forward.1} parent=1 // loop_pre_header
      _
    $region3: #{cnn_forward.1} parent=1 // loop_header
      %s23 = sphi 0, %s27
      %p24 = scmp.ge.s32.totalorder %s23, 4
      %s33 = sphi 0, %s35
      %s36 = sphi 0, %s33
      %s37 = sphi 0, %s36
      %s53 = sphi 0, %s37
      %s57 = sphi 0, %s57
      %s59 = sphi 0, %s57
      %s60 = sphi 0, %s59
      %s74 = sphi 0, %s60
      %s78 = sphi 0, %s78
      %s80 = sphi 0, %s78
      %s81 = sphi 0, %s80
      %s95 = sphi 0, %s81
      %s99 = sphi 0, %s99
      %s101 = sphi 0, %s99
      %s102 = sphi 0, %s101
      %s116 = sphi 0, %s102
      %s120 = sphi 0, %s120
      %s122 = sphi 0, %s120
      %s123 = sphi 0, %s122
      %s137 = sphi 0, %s123
      %s141 = sphi 0, %s141
      %s143 = sphi 0, %s141
      %s144 = sphi 0, %s143
      %s158 = sphi 0, %s144
      %s162 = sphi 0, %s162
      %s164 = sphi 0, %s162
      %s165 = sphi 0, %s164
      %s179 = sphi 0, %s165
      %s183 = sphi 0, %s183
      %s185 = sphi 0, %s183
      %s186 = sphi 0, %s185
      %s200 = sphi 0, %s186
      %s204 = sphi 0, %s204
      %s206 = sphi 0, %s204
      %s207 = sphi 0, %s206
      %s221 = sphi 0, %s207
      %s225 = sphi 0, %s225
      %s227 = sphi 0, %s225
      %s228 = sphi 0, %s227
      %s242 = sphi 0, %s228
      %s246 = sphi 0, %s246
      %s248 = sphi 0, %s246
      %s249 = sphi 0, %s248
      %s263 = sphi 0, %s249
      %s267 = sphi 0, %s267
      %s269 = sphi 0, %s267
      %s270 = sphi 0, %s269
      %s284 = sphi 0, %s270
      %s288 = sphi 0, %s288
      %s290 = sphi 0, %s288
      %s291 = sphi 0, %s290
      %s305 = sphi 0, %s291
      %s309 = sphi 0, %s309
      %s311 = sphi 0, %s309
      %s312 = sphi 0, %s311
      %s326 = sphi 0, %s312
      %s332 = sphi 0, %s334
      %s335 = sphi 0, %s332
      %s336 = sphi 0, %s335
      %s352 = sphi 0, %s336
    $region4: #{cnn_forward.1} parent=1 // loop_header_branch
      %26 = sbr.rel (%p24) target = $region8
    $region5: #{cnn_forward.1} parent=1 // loop_body
      %s28 = ssub.s32 %s23, 1
      %s29 = ssub.s32 %s23, 2
      %s30 = sadd.s32 %s23, 1
      %s31 = ssub.s32 %s23, %s30
      %p32 = scmp.eq.s32.totalorder %s31, 0
      %s34 = sadd.s32 %s33, 1
      %s35 = scalar_select %p32, %s33, %s34
      %p38 = pneg %p32
      %p39 = scmp.eq.s32.totalorder %s23, 1
      %p40 = por %p38, %p39
      %p41 = scmp.ne.s32.totalorder %s33, %s36
      %p42 = scmp.eq.s32.totalorder %s23, 0
      %p43 = por %p41, %p42
      %p44 = scmp.ne.s32.totalorder %s33, %s36
      %p45 = scmp.eq.s32.totalorder %s28, 1
      %p46 = por %p44, %p45
      %p47 = scmp.ne.s32.totalorder %s36, %s37
      %p48 = scmp.eq.s32.totalorder %s28, 0
      %p49 = por %p47, %p48
      %p50 = scmp.ne.s32.totalorder %s36, %s37
      %p51 = scmp.eq.s32.totalorder %s29, 1
      %p52 = por %p50, %p51
      %p54 = scmp.ne.s32.totalorder %s37, %s53
      %p55 = scmp.eq.s32.totalorder %s29, 0
      %p56 = por %p54, %p55
      %s58 = sadd.s32 %s57, 1
      %p61 = scmp.eq.s32.totalorder %s23, 1
      %p62 = scmp.ne.s32.totalorder %s57, %s59
      %p63 = scmp.eq.s32.totalorder %s23, 0
      %p64 = por %p62, %p63
      %p65 = scmp.ne.s32.totalorder %s57, %s59
      %p66 = scmp.eq.s32.totalorder %s28, 1
      %p67 = por %p65, %p66
      %p68 = scmp.ne.s32.totalorder %s59, %s60
      %p69 = scmp.eq.s32.totalorder %s28, 0
      %p70 = por %p68, %p69
      %p71 = scmp.ne.s32.totalorder %s59, %s60
      %p72 = scmp.eq.s32.totalorder %s29, 1
      %p73 = por %p71, %p72
      %p75 = scmp.ne.s32.totalorder %s60, %s74
      %p76 = scmp.eq.s32.totalorder %s29, 0
      %p77 = por %p75, %p76
      %s79 = sadd.s32 %s78, 1
      %p82 = scmp.eq.s32.totalorder %s23, 1
      %p83 = scmp.ne.s32.totalorder %s78, %s80
      %p84 = scmp.eq.s32.totalorder %s23, 0
      %p85 = por %p83, %p84
      %p86 = scmp.ne.s32.totalorder %s78, %s80
      %p87 = scmp.eq.s32.totalorder %s28, 1
      %p88 = por %p86, %p87
      %p89 = scmp.ne.s32.totalorder %s80, %s81
      %p90 = scmp.eq.s32.totalorder %s28, 0
      %p91 = por %p89, %p90
      %p92 = scmp.ne.s32.totalorder %s80, %s81
      %p93 = scmp.eq.s32.totalorder %s29, 1
      %p94 = por %p92, %p93
      %p96 = scmp.ne.s32.totalorder %s81, %s95
      %p97 = scmp.eq.s32.totalorder %s29, 0
      %p98 = por %p96, %p97
      %s100 = sadd.s32 %s99, 1
      %p103 = scmp.eq.s32.totalorder %s23, 1
      %p104 = scmp.ne.s32.totalorder %s99, %s101
      %p105 = scmp.eq.s32.totalorder %s23, 0
      %p106 = por %p104, %p105
      %p107 = scmp.ne.s32.totalorder %s99, %s101
      %p108 = scmp.eq.s32.totalorder %s28, 1
      %p109 = por %p107, %p108
      %p110 = scmp.ne.s32.totalorder %s101, %s102
      %p111 = scmp.eq.s32.totalorder %s28, 0
      %p112 = por %p110, %p111
      %p113 = scmp.ne.s32.totalorder %s101, %s102
      %p114 = scmp.eq.s32.totalorder %s29, 1
      %p115 = por %p113, %p114
      %p117 = scmp.ne.s32.totalorder %s102, %s116
      %p118 = scmp.eq.s32.totalorder %s29, 0
      %p119 = por %p117, %p118
      %s121 = sadd.s32 %s120, 1
      %p124 = scmp.eq.s32.totalorder %s23, 1
      %p125 = scmp.ne.s32.totalorder %s120, %s122
      %p126 = scmp.eq.s32.totalorder %s23, 0
      %p127 = por %p125, %p126
      %p128 = scmp.ne.s32.totalorder %s120, %s122
      %p129 = scmp.eq.s32.totalorder %s28, 1
      %p130 = por %p128, %p129
      %p131 = scmp.ne.s32.totalorder %s122, %s123
      %p132 = scmp.eq.s32.totalorder %s28, 0
      %p133 = por %p131, %p132
      %p134 = scmp.ne.s32.totalorder %s122, %s123
      %p135 = scmp.eq.s32.totalorder %s29, 1
      %p136 = por %p134, %p135
      %p138 = scmp.ne.s32.totalorder %s123, %s137
      %p139 = scmp.eq.s32.totalorder %s29, 0
      %p140 = por %p138, %p139
      %s142 = sadd.s32 %s141, 1
      %p145 = scmp.eq.s32.totalorder %s23, 1
      %p146 = scmp.ne.s32.totalorder %s141, %s143
      %p147 = scmp.eq.s32.totalorder %s23, 0
      %p148 = por %p146, %p147
      %p149 = scmp.ne.s32.totalorder %s141, %s143
      %p150 = scmp.eq.s32.totalorder %s28, 1
      %p151 = por %p149, %p150
      %p152 = scmp.ne.s32.totalorder %s143, %s144
      %p153 = scmp.eq.s32.totalorder %s28, 0
      %p154 = por %p152, %p153
      %p155 = scmp.ne.s32.totalorder %s143, %s144
      %p156 = scmp.eq.s32.totalorder %s29, 1
      %p157 = por %p155, %p156
      %p159 = scmp.ne.s32.totalorder %s144, %s158
      %p160 = scmp.eq.s32.totalorder %s29, 0
      %p161 = por %p159, %p160
      %s163 = sadd.s32 %s162, 1
      %p166 = scmp.eq.s32.totalorder %s23, 1
      %p167 = scmp.ne.s32.totalorder %s162, %s164
      %p168 = scmp.eq.s32.totalorder %s23, 0
      %p169 = por %p167, %p168
      %p170 = scmp.ne.s32.totalorder %s162, %s164
      %p171 = scmp.eq.s32.totalorder %s28, 1
      %p172 = por %p170, %p171
      %p173 = scmp.ne.s32.totalorder %s164, %s165
      %p174 = scmp.eq.s32.totalorder %s28, 0
      %p175 = por %p173, %p174
      %p176 = scmp.ne.s32.totalorder %s164, %s165
      %p177 = scmp.eq.s32.totalorder %s29, 1
      %p178 = por %p176, %p177
      %p180 = scmp.ne.s32.totalorder %s165, %s179
      %p181 = scmp.eq.s32.totalorder %s29, 0
      %p182 = por %p180, %p181
      %s184 = sadd.s32 %s183, 1
      %p187 = scmp.eq.s32.totalorder %s23, 1
      %p188 = scmp.ne.s32.totalorder %s183, %s185
      %p189 = scmp.eq.s32.totalorder %s23, 0
      %p190 = por %p188, %p189
      %p191 = scmp.ne.s32.totalorder %s183, %s185
      %p192 = scmp.eq.s32.totalorder %s28, 1
      %p193 = por %p191, %p192
      %p194 = scmp.ne.s32.totalorder %s185, %s186
      %p195 = scmp.eq.s32.totalorder %s28, 0
      %p196 = por %p194, %p195
      %p197 = scmp.ne.s32.totalorder %s185, %s186
      %p198 = scmp.eq.s32.totalorder %s29, 1
      %p199 = por %p197, %p198
      %p201 = scmp.ne.s32.totalorder %s186, %s200
      %p202 = scmp.eq.s32.totalorder %s29, 0
      %p203 = por %p201, %p202
      %s205 = sadd.s32 %s204, 1
      %p208 = scmp.eq.s32.totalorder %s23, 1
      %p209 = scmp.ne.s32.totalorder %s204, %s206
      %p210 = scmp.eq.s32.totalorder %s23, 0
      %p211 = por %p209, %p210
      %p212 = scmp.ne.s32.totalorder %s204, %s206
      %p213 = scmp.eq.s32.totalorder %s28, 1
      %p214 = por %p212, %p213
      %p215 = scmp.ne.s32.totalorder %s206, %s207
      %p216 = scmp.eq.s32.totalorder %s28, 0
      %p217 = por %p215, %p216
      %p218 = scmp.ne.s32.totalorder %s206, %s207
      %p219 = scmp.eq.s32.totalorder %s29, 1
      %p220 = por %p218, %p219
      %p222 = scmp.ne.s32.totalorder %s207, %s221
      %p223 = scmp.eq.s32.totalorder %s29, 0
      %p224 = por %p222, %p223
      %s226 = sadd.s32 %s225, 1
      %p229 = scmp.eq.s32.totalorder %s23, 1
      %p230 = scmp.ne.s32.totalorder %s225, %s227
      %p231 = scmp.eq.s32.totalorder %s23, 0
      %p232 = por %p230, %p231
      %p233 = scmp.ne.s32.totalorder %s225, %s227
      %p234 = scmp.eq.s32.totalorder %s28, 1
      %p235 = por %p233, %p234
      %p236 = scmp.ne.s32.totalorder %s227, %s228
      %p237 = scmp.eq.s32.totalorder %s28, 0
      %p238 = por %p236, %p237
      %p239 = scmp.ne.s32.totalorder %s227, %s228
      %p240 = scmp.eq.s32.totalorder %s29, 1
      %p241 = por %p239, %p240
      %p243 = scmp.ne.s32.totalorder %s228, %s242
      %p244 = scmp.eq.s32.totalorder %s29, 0
      %p245 = por %p243, %p244
      %s247 = sadd.s32 %s246, 1
      %p250 = scmp.eq.s32.totalorder %s23, 1
      %p251 = scmp.ne.s32.totalorder %s246, %s248
      %p252 = scmp.eq.s32.totalorder %s23, 0
      %p253 = por %p251, %p252
      %p254 = scmp.ne.s32.totalorder %s246, %s248
      %p255 = scmp.eq.s32.totalorder %s28, 1
      %p256 = por %p254, %p255
      %p257 = scmp.ne.s32.totalorder %s248, %s249
      %p258 = scmp.eq.s32.totalorder %s28, 0
      %p259 = por %p257, %p258
      %p260 = scmp.ne.s32.totalorder %s248, %s249
      %p261 = scmp.eq.s32.totalorder %s29, 1
      %p262 = por %p260, %p261
      %p264 = scmp.ne.s32.totalorder %s249, %s263
      %p265 = scmp.eq.s32.totalorder %s29, 0
      %p266 = por %p264, %p265
      %s268 = sadd.s32 %s267, 1
      %p271 = scmp.eq.s32.totalorder %s23, 1
      %p272 = scmp.ne.s32.totalorder %s267, %s269
      %p273 = scmp.eq.s32.totalorder %s23, 0
      %p274 = por %p272, %p273
      %p275 = scmp.ne.s32.totalorder %s267, %s269
      %p276 = scmp.eq.s32.totalorder %s28, 1
      %p277 = por %p275, %p276
      %p278 = scmp.ne.s32.totalorder %s269, %s270
      %p279 = scmp.eq.s32.totalorder %s28, 0
      %p280 = por %p278, %p279
      %p281 = scmp.ne.s32.totalorder %s269, %s270
      %p282 = scmp.eq.s32.totalorder %s29, 1
      %p283 = por %p281, %p282
      %p285 = scmp.ne.s32.totalorder %s270, %s284
      %p286 = scmp.eq.s32.totalorder %s29, 0
      %p287 = por %p285, %p286
      %s289 = sadd.s32 %s288, 1
      %p292 = scmp.eq.s32.totalorder %s23, 1
      %p293 = scmp.ne.s32.totalorder %s288, %s290
      %p294 = scmp.eq.s32.totalorder %s23, 0
      %p295 = por %p293, %p294
      %p296 = scmp.ne.s32.totalorder %s288, %s290
      %p297 = scmp.eq.s32.totalorder %s28, 1
      %p298 = por %p296, %p297
      %p299 = scmp.ne.s32.totalorder %s290, %s291
      %p300 = scmp.eq.s32.totalorder %s28, 0
      %p301 = por %p299, %p300
      %p302 = scmp.ne.s32.totalorder %s290, %s291
      %p303 = scmp.eq.s32.totalorder %s29, 1
      %p304 = por %p302, %p303
      %p306 = scmp.ne.s32.totalorder %s291, %s305
      %p307 = scmp.eq.s32.totalorder %s29, 0
      %p308 = por %p306, %p307
      %s310 = sadd.s32 %s309, 1
      %p313 = scmp.eq.s32.totalorder %s23, 1
      %p314 = scmp.ne.s32.totalorder %s309, %s311
      %p315 = scmp.eq.s32.totalorder %s23, 0
      %p316 = por %p314, %p315
      %p317 = scmp.ne.s32.totalorder %s309, %s311
      %p318 = scmp.eq.s32.totalorder %s28, 1
      %p319 = por %p317, %p318
      %p320 = scmp.ne.s32.totalorder %s311, %s312
      %p321 = scmp.eq.s32.totalorder %s28, 0
      %p322 = por %p320, %p321
      %p323 = scmp.ne.s32.totalorder %s311, %s312
      %p324 = scmp.eq.s32.totalorder %s29, 1
      %p325 = por %p323, %p324
      %p327 = scmp.ne.s32.totalorder %s312, %s326
      %p328 = scmp.eq.s32.totalorder %s29, 0
      %p329 = por %p327, %p328
      %s330 = ssub.s32 %s23, %s30
      %p331 = scmp.eq.s32.totalorder %s330, 0
      %s333 = sadd.s32 %s332, 1
      %s334 = scalar_select %p331, %s332, %s333
      %p337 = pneg %p331
      %p338 = scmp.eq.s32.totalorder %s23, 1
      %p339 = por %p337, %p338
      %p340 = scmp.ne.s32.totalorder %s332, %s335
      %p341 = scmp.eq.s32.totalorder %s23, 0
      %p342 = por %p340, %p341
      %p343 = scmp.ne.s32.totalorder %s332, %s335
      %p344 = scmp.eq.s32.totalorder %s28, 1
      %p345 = por %p343, %p344
      %p346 = scmp.ne.s32.totalorder %s335, %s336
      %p347 = scmp.eq.s32.totalorder %s28, 0
      %p348 = por %p346, %p347
      %p349 = scmp.ne.s32.totalorder %s335, %s336
      %p350 = scmp.eq.s32.totalorder %s29, 1
      %p351 = por %p349, %p350
      %p353 = scmp.ne.s32.totalorder %s336, %s352
      %p354 = scmp.eq.s32.totalorder %s29, 0
      %p355 = por %p353, %p354
      %p356 = scmp.le.s32.totalorder 1, %s23
      %p357 = scmp.lt.s32.totalorder %s23, 3
      %p358 = pnand %p356, %p357
      %p359 = pneg %p358
      // Predicated region
      $region9: #{cnn_forward.1} parent=5 // pred_check
        _
      $region10: #{cnn_forward.1} parent=5 // pred_check_branch
        %361 = sbr.rel (%p358) target = $region12
      $region11: #{cnn_forward.1} parent=5 // pred_region
        %s362 = ssub.s32 %s23, 1
        // Predicated region
        $region13: #{cnn_forward.1} parent=11 // pred_check
          %p363 = pneg %p70
        $region14: #{cnn_forward.1} parent=11 // pred_check_branch
          %365 = sbr.rel (%p363) target = $region16
        $region15: #{cnn_forward.1} parent=11 // pred_region
          _
        $region16: #{cnn_forward.1} parent=11 // pred_fallthru
          _
        // Predicated region
        $region17: #{cnn_forward.1} parent=11 // pred_check
          %p366 = pneg %p91
        $region18: #{cnn_forward.1} parent=11 // pred_check_branch
          %368 = sbr.rel (%p366) target = $region20
        $region19: #{cnn_forward.1} parent=11 // pred_region
          _
        $region20: #{cnn_forward.1} parent=11 // pred_fallthru
          _
        // Predicated region
        $region21: #{cnn_forward.1} parent=11 // pred_check
          %p369 = pneg %p112
        $region22: #{cnn_forward.1} parent=11 // pred_check_branch
          %371 = sbr.rel (%p369) target = $region24
        $region23: #{cnn_forward.1} parent=11 // pred_region
          _
        $region24: #{cnn_forward.1} parent=11 // pred_fallthru
          _
        // Predicated region
        $region25: #{cnn_forward.1} parent=11 // pred_check
          %p372 = pneg %p133
        $region26: #{cnn_forward.1} parent=11 // pred_check_branch
          %374 = sbr.rel (%p372) target = $region28
        $region27: #{cnn_forward.1} parent=11 // pred_region
          _
        $region28: #{cnn_forward.1} parent=11 // pred_fallthru
          _
        // Predicated region
        $region29: #{cnn_forward.1} parent=11 // pred_check
          %p375 = pneg %p154
        $region30: #{cnn_forward.1} parent=11 // pred_check_branch
          %377 = sbr.rel (%p375) target = $region32
        $region31: #{cnn_forward.1} parent=11 // pred_region
          _
        $region32: #{cnn_forward.1} parent=11 // pred_fallthru
          _
        // Predicated region
        $region33: #{cnn_forward.1} parent=11 // pred_check
          %p378 = pneg %p175
        $region34: #{cnn_forward.1} parent=11 // pred_check_branch
          %380 = sbr.rel (%p378) target = $region36
        $region35: #{cnn_forward.1} parent=11 // pred_region
          _
        $region36: #{cnn_forward.1} parent=11 // pred_fallthru
          _
        // Predicated region
        $region37: #{cnn_forward.1} parent=11 // pred_check
          %p381 = pneg %p196
        $region38: #{cnn_forward.1} parent=11 // pred_check_branch
          %383 = sbr.rel (%p381) target = $region40
        $region39: #{cnn_forward.1} parent=11 // pred_region
          _
        $region40: #{cnn_forward.1} parent=11 // pred_fallthru
          _
        // Predicated region
        $region41: #{cnn_forward.1} parent=11 // pred_check
          %p384 = pneg %p217
        $region42: #{cnn_forward.1} parent=11 // pred_check_branch
          %386 = sbr.rel (%p384) target = $region44
        $region43: #{cnn_forward.1} parent=11 // pred_region
          _
        $region44: #{cnn_forward.1} parent=11 // pred_fallthru
          _
        // Predicated region
        $region45: #{cnn_forward.1} parent=11 // pred_check
          %p387 = pneg %p238
        $region46: #{cnn_forward.1} parent=11 // pred_check_branch
          %389 = sbr.rel (%p387) target = $region48
        $region47: #{cnn_forward.1} parent=11 // pred_region
          _
        $region48: #{cnn_forward.1} parent=11 // pred_fallthru
          _
        // Predicated region
        $region49: #{cnn_forward.1} parent=11 // pred_check
          %p390 = pneg %p259
        $region50: #{cnn_forward.1} parent=11 // pred_check_branch
          %392 = sbr.rel (%p390) target = $region52
        $region51: #{cnn_forward.1} parent=11 // pred_region
          _
        $region52: #{cnn_forward.1} parent=11 // pred_fallthru
          _
        // Predicated region
        $region53: #{cnn_forward.1} parent=11 // pred_check
          %p393 = pneg %p280
        $region54: #{cnn_forward.1} parent=11 // pred_check_branch
          %395 = sbr.rel (%p393) target = $region56
        $region55: #{cnn_forward.1} parent=11 // pred_region
          _
        $region56: #{cnn_forward.1} parent=11 // pred_fallthru
          _
        // Predicated region
        $region57: #{cnn_forward.1} parent=11 // pred_check
          %p396 = pneg %p301
        $region58: #{cnn_forward.1} parent=11 // pred_check_branch
          %398 = sbr.rel (%p396) target = $region60
        $region59: #{cnn_forward.1} parent=11 // pred_region
          _
        $region60: #{cnn_forward.1} parent=11 // pred_fallthru
          _
        // Predicated region
        $region61: #{cnn_forward.1} parent=11 // pred_check
          %p399 = pneg %p322
        $region62: #{cnn_forward.1} parent=11 // pred_check_branch
          %401 = sbr.rel (%p399) target = $region64
        $region63: #{cnn_forward.1} parent=11 // pred_region
          _
        $region64: #{cnn_forward.1} parent=11 // pred_fallthru
          _
      $region12: #{cnn_forward.1} parent=5 // pred_fallthru
        _
      %p402 = scmp.lt.s32.totalorder %s23, 2
      // Predicated region
      $region65: #{cnn_forward.1} parent=5 // pred_check
        %p403 = pneg %p402
      $region66: #{cnn_forward.1} parent=5 // pred_check_branch
        %405 = sbr.rel (%p403) target = $region68
      $region67: #{cnn_forward.1} parent=5 // pred_region
        // Predicated region
        $region69: #{cnn_forward.1} parent=67 // pred_check
          %p406 = pneg %p43
        $region70: #{cnn_forward.1} parent=67 // pred_check_branch
          %408 = sbr.rel (%p406) target = $region72
        $region71: #{cnn_forward.1} parent=67 // pred_region
          %p409 = scmp.lt.s32.totalorder %s23, 1
          %s410 = scalar_select %p409, %s23, 1
          %s411 = smul.addr %s410, 5
          %s412 = smul.addr %s411, 2
          %s413 = scalar_lea.vmem %s0, %s412
        $region72: #{cnn_forward.1} parent=67 // pred_fallthru
          _
      $region68: #{cnn_forward.1} parent=5 // pred_fallthru
        _
      %p414 = scmp.le.s32.totalorder 1, %s23
      %p415 = scmp.lt.s32.totalorder %s23, 3
      %p416 = pnand %p414, %p415
      %p417 = pneg %p416
      // Predicated region
      $region73: #{cnn_forward.1} parent=5 // pred_check
        _
      $region74: #{cnn_forward.1} parent=5 // pred_check_branch
        %419 = sbr.rel (%p416) target = $region76
      $region75: #{cnn_forward.1} parent=5 // pred_region
        %s420 = ssub.s32 %s23, 1
        %p421 = scmp.lt.s32.totalorder %s28, 1
        %s422 = scalar_select %p421, %s28, 1
        %s423 = smul.addr %s422, 5
        %s424 = smul.addr %s423, 2
        %s425 = scalar_lea.vmem %s0, %s424
        %p426 = pneg %p49
        %p427 = pneg %p46
        %p428 = pneg %p70
        %p429 = pneg %p67
        %p430 = pneg %p91
        %p431 = pneg %p88
        %p432 = pneg %p112
        %p433 = pneg %p109
        %p434 = pneg %p133
        %p435 = pneg %p130
        %p436 = pneg %p154
        %p437 = pneg %p151
        %p438 = pneg %p175
        %p439 = pneg %p172
        %p440 = pneg %p196
        %p441 = pneg %p193
        %p442 = pneg %p217
        %p443 = pneg %p214
        %p444 = pneg %p238
        %p445 = pneg %p235
        %p446 = pneg %p259
        %p447 = pneg %p256
        %p448 = pneg %p280
        %p449 = pneg %p277
        %p450 = pneg %p301
        %p451 = pneg %p298
        %p452 = pneg %p322
        %p453 = pneg %p319
        %p454 = pneg %p348
        %p455 = pneg %p345
        %s456 = sand.u32 %s335, 1
        %s457 = scalar_lea.sflag [#allocation4], %s456
        %s458 = sand.u32 %s335, 1
        %s459 = scalar_lea.vmem [#allocation3], %s458
        %p460 = scmp.lt.s32.totalorder %s28, 1
        %s461 = scalar_select %p460, %s28, 1
        %s462 = smul.addr %s461, 5
        %s463 = smul.addr %s462, 2
        %s464 = scalar_lea.vmem %s0, %s463
        %v466 = vld [vmem:[%s1] sm:$0xf]
        %v467 = vld [vmem:[%s464] sm:$0xff]
        %v468 = vld [vmem:[%s2] sm:$0xf]
        %s469 = scalar_lea.vmem %s2, 4
        %v470 = vld [vmem:[%s469] sm:$0xf]
        %v472 = vcombine.high %v467, %v467
        %v474 = vunpack.c.l.s4 1983009808
        %v475 = vunpack.c.0.s8 %v474
        %v476 = vlaneseq
        %v477 = vshrl.u32 %v476, 7
        %v478 = vsub.s32 %v475, %v477
        %v479 = vrot.slane %v467, %v478
        %v481 = vunpack.c.l.s4 1983009808
        %v482 = vunpack.c.0.s8 %v481
        %v483 = vlaneseq
        %v484 = vshrl.u32 %v483, 7
        %v485 = vsub.s32 %v482, %v484
        %v486 = vrot.slane %v472, %v485
        %v487 = vcombine.high %v479, %v479
        %v488 = vcombine.high %v486, %v486
        %489 = vrot.lane.b32.xlu0 %v479, 126
        %v490 = vpop.permute.xlu0 %489
        %491 = vrot.lane.b32.xlu0 %v487, 126
        %v492 = vpop.permute.xlu0 %491
        %493 = vrot.lane.b32.xlu0 %v486, 126
        %v494 = vpop.permute.xlu0 %493
        %495 = vrot.lane.b32.xlu0 %v488, 126
        %v496 = vpop.permute.xlu0 %495
        %vm497 = vcmask 1031168
        %v498 = vsel %vm497, %v490, %v492
        %v499 = vsel %vm497, %v492, %v494
        %v500 = vsel %vm497, %v494, %v496
        %vm501 = vcmask 23552
        %v503 = vsel %vm501, %v470, 0
        %vm505 = vcmask 1040384
        %vm506 = vcmask 1041408
        %v507 = vsel %vm505, 4294967295, 65535
        %v508 = vsel %vm506, %v507, 0
        %v510 = vand.u32 %v498, %v508
        %v513 = vand.u32 %v499, %v508
        %v516 = vand.u32 %v500, %v508
        %v519 = vand.u32 %v496, %v508
        %521 = vmatprep.subr.bf16.mxu0 %v513
        %522 = vmatpush1.bf16.msra.mxu0 %v510
        %523 = vmatprep.subr.bf16.mxu0 0
        %524 = vmatpush1.bf16.msra.mxu0 0
        %525 = vmatprep.subr.bf16.mxu0 0
        %526 = vmatpush1.bf16.msra.mxu0 0
        %527 = vmatprep.subr.bf16.mxu0 0
        %528 = vmatpush1.bf16.msra.mxu0 0
        %529 = vmatprep.subr.bf16.mxu0 0
        %530 = vmatpush1.bf16.msra.mxu0 0
        %531 = vmatprep.subr.bf16.mxu0 0
        %532 = vmatpush1.bf16.msra.mxu0 0
        %533 = vmatprep.subr.bf16.mxu0 0
        %534 = vmatpush1.bf16.msra.mxu0 0
        %535 = vmatprep.subr.bf16.mxu0 0
        %536 = vmatpush1.bf16.msra.mxu0 0
        %537 = vmatprep.subr.bf16.mxu0 0
        %538 = vmatpush1.bf16.msra.mxu0 0
        %539 = vmatprep.subr.bf16.mxu0 0
        %540 = vmatpush1.bf16.msra.mxu0 0
        %541 = vmatprep.subr.bf16.mxu0 0
        %542 = vmatpush1.bf16.msra.mxu0 0
        %543 = vmatprep.subr.bf16.mxu0 0
        %544 = vmatpush1.bf16.msra.mxu0 0
        %545 = vmatprep.subr.bf16.mxu0 0
        %546 = vmatpush1.bf16.msra.mxu0 0
        %547 = vmatprep.subr.bf16.mxu0 0
        %548 = vmatpush1.bf16.msra.mxu0 0
        %549 = vmatprep.subr.bf16.mxu0 0
        %550 = vmatpush1.bf16.msra.mxu0 0
        %551 = vmatprep.subr.bf16.mxu0 0
        %552 = vmatpush1.bf16.msra.mxu0 0
        %553 = vmatprep.mubr.bf16.mxu0 0
        %554 = vmatmul.mubr.bf16.gmra.mrb[0].mxu0 %v503
        %v555 = vpop.f32.mrb[0].mxu0
        %v556 = vadd.f32 0.0, %v555
        %v557 = vpop.f32.mrb[0].mxu0
        %v558 = vadd.f32 0.0, %v557
        %v559 = vpop.f32.mrb[0].mxu0
        %v560 = vpop.f32.mrb[0].mxu0
        %561 = vdwg.mxu0
        %562 = vmatprep.subr.bf16.mxu0 %v519
        %563 = vmatpush1.bf16.msra.mxu0 %v516
        %564 = vmatprep.subr.bf16.mxu0 0
        %565 = vmatpush1.bf16.msra.mxu0 0
        %566 = vmatprep.subr.bf16.mxu0 0
        %567 = vmatpush1.bf16.msra.mxu0 0
        %568 = vmatprep.subr.bf16.mxu0 0
        %569 = vmatpush1.bf16.msra.mxu0 0
        %570 = vmatprep.subr.bf16.mxu0 0
        %571 = vmatpush1.bf16.msra.mxu0 0
        %572 = vmatprep.subr.bf16.mxu0 0
        %573 = vmatpush1.bf16.msra.mxu0 0
        %574 = vmatprep.subr.bf16.mxu0 0
        %575 = vmatpush1.bf16.msra.mxu0 0
        %576 = vmatprep.subr.bf16.mxu0 0
        %577 = vmatpush1.bf16.msra.mxu0 0
        %578 = vmatprep.subr.bf16.mxu0 0
        %579 = vmatpush1.bf16.msra.mxu0 0
        %580 = vmatprep.subr.bf16.mxu0 0
        %581 = vmatpush1.bf16.msra.mxu0 0
        %582 = vmatprep.subr.bf16.mxu0 0
        %583 = vmatpush1.bf16.msra.mxu0 0
        %584 = vmatprep.subr.bf16.mxu0 0
        %585 = vmatpush1.bf16.msra.mxu0 0
        %586 = vmatprep.subr.bf16.mxu0 0
        %587 = vmatpush1.bf16.msra.mxu0 0
        %588 = vmatprep.subr.bf16.mxu0 0
        %589 = vmatpush1.bf16.msra.mxu0 0
        %590 = vmatprep.subr.bf16.mxu0 0
        %591 = vmatpush1.bf16.msra.mxu0 0
        %592 = vmatprep.subr.bf16.mxu0 0
        %593 = vmatpush1.bf16.msra.mxu0 0
        %594 = vmatprep.mubr.bf16.mxu0 0
        %595 = vmatmul.mubr.bf16.gmra.mrb[0].mxu0 %v503
        %v596 = vpop.f32.mrb[0].mxu0
        %v597 = vadd.f32 0.0, %v596
        %v598 = vpop.f32.mrb[0].mxu0
        %v599 = vadd.f32 0.0, %v598
        %v600 = vpop.f32.mrb[0].mxu0
        %v601 = vpop.f32.mrb[0].mxu0
        %602 = vdwg.mxu0
        %603 = vrot.lane.b32.xlu0 %v479, 127
        %v604 = vpop.permute.xlu0 %603
        %605 = vrot.lane.b32.xlu0 %v487, 127
        %v606 = vpop.permute.xlu0 %605
        %607 = vrot.lane.b32.xlu0 %v486, 127
        %v608 = vpop.permute.xlu0 %607
        %609 = vrot.lane.b32.xlu0 %v488, 127
        %v610 = vpop.permute.xlu0 %609
        %vm611 = vcmask 1039360
        %v612 = vsel %vm611, %v604, %v606
        %v613 = vsel %vm611, %v606, %v608
        %v614 = vsel %vm611, %v608, %v610
        %v616 = vsel %vm501, %v468, 0
        %v619 = vand.u32 %v612, %v508
        %v622 = vand.u32 %v613, %v508
        %v625 = vand.u32 %v614, %v508
        %v628 = vand.u32 %v610, %v508
        %630 = vmatprep.subr.bf16.mxu0 %v622
        %631 = vmatpush1.bf16.msra.mxu0 %v619
        %632 = vmatprep.subr.bf16.mxu0 0
        %633 = vmatpush1.bf16.msra.mxu0 0
        %634 = vmatprep.subr.bf16.mxu0 0
        %635 = vmatpush1.bf16.msra.mxu0 0
        %636 = vmatprep.subr.bf16.mxu0 0
        %637 = vmatpush1.bf16.msra.mxu0 0
        %638 = vmatprep.subr.bf16.mxu0 0
        %639 = vmatpush1.bf16.msra.mxu0 0
        %640 = vmatprep.subr.bf16.mxu0 0
        %641 = vmatpush1.bf16.msra.mxu0 0
        %642 = vmatprep.subr.bf16.mxu0 0
        %643 = vmatpush1.bf16.msra.mxu0 0
        %644 = vmatprep.subr.bf16.mxu0 0
        %645 = vmatpush1.bf16.msra.mxu0 0
        %646 = vmatprep.subr.bf16.mxu0 0
        %647 = vmatpush1.bf16.msra.mxu0 0
        %648 = vmatprep.subr.bf16.mxu0 0
        %649 = vmatpush1.bf16.msra.mxu0 0
        %650 = vmatprep.subr.bf16.mxu0 0
        %651 = vmatpush1.bf16.msra.mxu0 0
        %652 = vmatprep.subr.bf16.mxu0 0
        %653 = vmatpush1.bf16.msra.mxu0 0
        %654 = vmatprep.subr.bf16.mxu0 0
        %655 = vmatpush1.bf16.msra.mxu0 0
        %656 = vmatprep.subr.bf16.mxu0 0
        %657 = vmatpush1.bf16.msra.mxu0 0
        %658 = vmatprep.subr.bf16.mxu0 0
        %659 = vmatpush1.bf16.msra.mxu0 0
        %660 = vmatprep.subr.bf16.mxu0 0
        %661 = vmatpush1.bf16.msra.mxu0 0
        %662 = vmatprep.mubr.bf16.mxu0 0
        %663 = vmatmul.mubr.bf16.gmra.mrb[0].mxu0 %v616
        %v664 = vpop.f32.mrb[0].mxu0
        %v665 = vadd.f32 %v556, %v664
        %v666 = vpop.f32.mrb[0].mxu0
        %v667 = vadd.f32 %v558, %v666
        %v668 = vpop.f32.mrb[0].mxu0
        %v669 = vpop.f32.mrb[0].mxu0
        %670 = vdwg.mxu0
        %671 = vmatprep.subr.bf16.mxu0 %v628
        %672 = vmatpush1.bf16.msra.mxu0 %v625
        %673 = vmatprep.subr.bf16.mxu0 0
        %674 = vmatpush1.bf16.msra.mxu0 0
        %675 = vmatprep.subr.bf16.mxu0 0
        %676 = vmatpush1.bf16.msra.mxu0 0
        %677 = vmatprep.subr.bf16.mxu0 0
        %678 = vmatpush1.bf16.msra.mxu0 0
        %679 = vmatprep.subr.bf16.mxu0 0
        %680 = vmatpush1.bf16.msra.mxu0 0
        %681 = vmatprep.subr.bf16.mxu0 0
        %682 = vmatpush1.bf16.msra.mxu0 0
        %683 = vmatprep.subr.bf16.mxu0 0
        %684 = vmatpush1.bf16.msra.mxu0 0
        %685 = vmatprep.subr.bf16.mxu0 0
        %686 = vmatpush1.bf16.msra.mxu0 0
        %687 = vmatprep.subr.bf16.mxu0 0
        %688 = vmatpush1.bf16.msra.mxu0 0
        %689 = vmatprep.subr.bf16.mxu0 0
        %690 = vmatpush1.bf16.msra.mxu0 0
        %691 = vmatprep.subr.bf16.mxu0 0
        %692 = vmatpush1.bf16.msra.mxu0 0
        %693 = vmatprep.subr.bf16.mxu0 0
        %694 = vmatpush1.bf16.msra.mxu0 0
        %695 = vmatprep.subr.bf16.mxu0 0
        %696 = vmatpush1.bf16.msra.mxu0 0
        %697 = vmatprep.subr.bf16.mxu0 0
        %698 = vmatpush1.bf16.msra.mxu0 0
        %699 = vmatprep.subr.bf16.mxu0 0
        %700 = vmatpush1.bf16.msra.mxu0 0
        %701 = vmatprep.subr.bf16.mxu0 0
        %702 = vmatpush1.bf16.msra.mxu0 0
        %703 = vmatprep.mubr.bf16.mxu0 0
        %704 = vmatmul.mubr.bf16.gmra.mrb[0].mxu0 %v616
        %v705 = vpop.f32.mrb[0].mxu0
        %v706 = vadd.f32 %v597, %v705
        %v707 = vpop.f32.mrb[0].mxu0
        %v708 = vadd.f32 %v599, %v707
        %v709 = vpop.f32.mrb[0].mxu0
        %v710 = vpop.f32.mrb[0].mxu0
        %711 = vdwg.mxu0
        %v712 = vld [vmem:[%s464] sm:$0xff]
        %s713 = scalar_lea.vmem %s2, 8
        %v714 = vld [vmem:[%s713] sm:$0xf]
        %v716 = vcombine.high %v712, %v712
        %v718 = vunpack.c.l.s4 1983009808
        %v719 = vunpack.c.0.s8 %v718
        %v720 = vlaneseq
        %v721 = vshrl.u32 %v720, 7
        %v722 = vsub.s32 %v719, %v721
        %v723 = vrot.slane %v712, %v722
        %v725 = vunpack.c.l.s4 1983009808
        %v726 = vunpack.c.0.s8 %v725
        %v727 = vlaneseq
        %v728 = vshrl.u32 %v727, 7
        %v729 = vsub.s32 %v726, %v728
        %v730 = vrot.slane %v716, %v729
        %v731 = vcombine.high %v723, %v723
        %v732 = vcombine.high %v730, %v730
        %733 = vrot.lane.b32.xlu0 %v723, 125
        %v734 = vpop.permute.xlu0 %733
        %735 = vrot.lane.b32.xlu0 %v731, 125
        %v736 = vpop.permute.xlu0 %735
        %737 = vrot.lane.b32.xlu0 %v730, 125
        %v738 = vpop.permute.xlu0 %737
        %739 = vrot.lane.b32.xlu0 %v732, 125
        %v740 = vpop.permute.xlu0 %739
        %vm741 = vcmask 1022976
        %v742 = vsel %vm741, %v734, %v736
        %v743 = vsel %vm741, %v736, %v738
        %v744 = vsel %vm741, %v738, %v740
        %v746 = vsel %vm501, %v714, 0
        %v749 = vand.u32 %v742, %v508
        %v752 = vand.u32 %v743, %v508
        %v755 = vand.u32 %v744, %v508
        %v758 = vand.u32 %v740, %v508
        %760 = vmatprep.subr.bf16.mxu0 %v752
        %761 = vmatpush1.bf16.msra.mxu0 %v749
        %762 = vmatprep.subr.bf16.mxu0 0
        %763 = vmatpush1.bf16.msra.mxu0 0
        %764 = vmatprep.subr.bf16.mxu0 0
        %765 = vmatpush1.bf16.msra.mxu0 0
        %766 = vmatprep.subr.bf16.mxu0 0
        %767 = vmatpush1.bf16.msra.mxu0 0
        %768 = vmatprep.subr.bf16.mxu0 0
        %769 = vmatpush1.bf16.msra.mxu0 0
        %770 = vmatprep.subr.bf16.mxu0 0
        %771 = vmatpush1.bf16.msra.mxu0 0
        %772 = vmatprep.subr.bf16.mxu0 0
        %773 = vmatpush1.bf16.msra.mxu0 0
        %774 = vmatprep.subr.bf16.mxu0 0
        %775 = vmatpush1.bf16.msra.mxu0 0
        %776 = vmatprep.subr.bf16.mxu0 0
        %777 = vmatpush1.bf16.msra.mxu0 0
        %778 = vmatprep.subr.bf16.mxu0 0
        %779 = vmatpush1.bf16.msra.mxu0 0
        %780 = vmatprep.subr.bf16.mxu0 0
        %781 = vmatpush1.bf16.msra.mxu0 0
        %782 = vmatprep.subr.bf16.mxu0 0
        %783 = vmatpush1.bf16.msra.mxu0 0
        %784 = vmatprep.subr.bf16.mxu0 0
        %785 = vmatpush1.bf16.msra.mxu0 0
        %786 = vmatprep.subr.bf16.mxu0 0
        %787 = vmatpush1.bf16.msra.mxu0 0
        %788 = vmatprep.subr.bf16.mxu0 0
        %789 = vmatpush1.bf16.msra.mxu0 0
        %790 = vmatprep.subr.bf16.mxu0 0
        %791 = vmatpush1.bf16.msra.mxu0 0
        %792 = vmatprep.mubr.bf16.mxu0 0
        %793 = vmatmul.mubr.bf16.gmra.mrb[0].mxu0 %v746
        %v794 = vpop.f32.mrb[0].mxu0
        %v795 = vadd.f32 0.0, %v794
        %v796 = vpop.f32.mrb[0].mxu0
        %v797 = vadd.f32 0.0, %v796
        %v798 = vpop.f32.mrb[0].mxu0
        %v799 = vpop.f32.mrb[0].mxu0
        %800 = vdwg.mxu0
        %801 = vmatprep.subr.bf16.mxu0 %v758
        %802 = vmatpush1.bf16.msra.mxu0 %v755
        %803 = vmatprep.subr.bf16.mxu0 0
        %804 = vmatpush1.bf16.msra.mxu0 0
        %805 = vmatprep.subr.bf16.mxu0 0
        %806 = vmatpush1.bf16.msra.mxu0 0
        %807 = vmatprep.subr.bf16.mxu0 0
        %808 = vmatpush1.bf16.msra.mxu0 0
        %809 = vmatprep.subr.bf16.mxu0 0
        %810 = vmatpush1.bf16.msra.mxu0 0
        %811 = vmatprep.subr.bf16.mxu0 0
        %812 = vmatpush1.bf16.msra.mxu0 0
        %813 = vmatprep.subr.bf16.mxu0 0
        %814 = vmatpush1.bf16.msra.mxu0 0
        %815 = vmatprep.subr.bf16.mxu0 0
        %816 = vmatpush1.bf16.msra.mxu0 0
        %817 = vmatprep.subr.bf16.mxu0 0
        %818 = vmatpush1.bf16.msra.mxu0 0
        %819 = vmatprep.subr.bf16.mxu0 0
        %820 = vmatpush1.bf16.msra.mxu0 0
        %821 = vmatprep.subr.bf16.mxu0 0
        %822 = vmatpush1.bf16.msra.mxu0 0
        %823 = vmatprep.subr.bf16.mxu0 0
        %824 = vmatpush1.bf16.msra.mxu0 0
        %825 = vmatprep.subr.bf16.mxu0 0
        %826 = vmatpush1.bf16.msra.mxu0 0
        %827 = vmatprep.subr.bf16.mxu0 0
        %828 = vmatpush1.bf16.msra.mxu0 0
        %829 = vmatprep.subr.bf16.mxu0 0
        %830 = vmatpush1.bf16.msra.mxu0 0
        %831 = vmatprep.subr.bf16.mxu0 0
        %832 = vmatpush1.bf16.msra.mxu0 0
        %833 = vmatprep.mubr.bf16.mxu0 0
        %834 = vmatmul.mubr.bf16.gmra.mrb[0].mxu0 %v746
        %v835 = vpop.f32.mrb[0].mxu0
        %v836 = vadd.f32 0.0, %v835
        %v837 = vpop.f32.mrb[0].mxu0
        %v838 = vadd.f32 0.0, %v837
        %v839 = vpop.f32.mrb[0].mxu0
        %v840 = vpop.f32.mrb[0].mxu0
        %841 = vdwg.mxu0
        %v842 = vadd.f32 %v665, %v795
        %v843 = vadd.f32 %v667, %v797
        %v844 = vadd.f32 %v706, %v836
        %v845 = vadd.f32 %v708, %v838
        %v846 = vld [vmem:[%s464] sm:$0xff]
        %s847 = scalar_lea.vmem %s2, 12
        %v848 = vld [vmem:[%s847] sm:$0xf]
        %v850 = vcombine.high %v846, %v846
        %v852 = vunpack.c.l.s4 1983009808
        %v853 = vunpack.c.0.s8 %v852
        %v854 = vlaneseq
        %v855 = vshrl.u32 %v854, 7
        %v856 = vsub.s32 %v853, %v855
        %v857 = vrot.slane %v846, %v856
        %v859 = vunpack.c.l.s4 1983009808
        %v860 = vunpack.c.0.s8 %v859
        %v861 = vlaneseq
        %v862 = vshrl.u32 %v861, 7
        %v863 = vsub.s32 %v860, %v862
        %v864 = vrot.slane %v850, %v863
        %v865 = vcombine.high %v857, %v857
        %v866 = vcombine.high %v864, %v864
        %867 = vrot.lane.b32.xlu0 %v857, 105
        %v868 = vpop.permute.xlu0 %867
        %869 = vrot.lane.b32.xlu0 %v865, 105
        %v870 = vpop.permute.xlu0 %869
        %871 = vrot.lane.b32.xlu0 %v864, 105
        %v872 = vpop.permute.xlu0 %871
        %873 = vrot.lane.b32.xlu0 %v866, 105
        %v874 = vpop.permute.xlu0 %873
        %vm875 = vcmask 859136
        %v876 = vsel %vm875, %v868, %v870
        %v877 = vsel %vm875, %v870, %v872
        %v878 = vsel %vm875, %v872, %v874
        %v880 = vsel %vm501, %v848, 0
        %v883 = vand.u32 %v876, %v508
        %v886 = vand.u32 %v877, %v508
        %v889 = vand.u32 %v878, %v508
        %v892 = vand.u32 %v874, %v508
        %894 = vmatprep.subr.bf16.mxu0 %v886
        %895 = vmatpush1.bf16.msra.mxu0 %v883
        %896 = vmatprep.subr.bf16.mxu0 0
        %897 = vmatpush1.bf16.msra.mxu0 0
        %898 = vmatprep.subr.bf16.mxu0 0
        %899 = vmatpush1.bf16.msra.mxu0 0
        %900 = vmatprep.subr.bf16.mxu0 0
        %901 = vmatpush1.bf16.msra.mxu0 0
        %902 = vmatprep.subr.bf16.mxu0 0
        %903 = vmatpush1.bf16.msra.mxu0 0
        %904 = vmatprep.subr.bf16.mxu0 0
        %905 = vmatpush1.bf16.msra.mxu0 0
        %906 = vmatprep.subr.bf16.mxu0 0
        %907 = vmatpush1.bf16.msra.mxu0 0
        %908 = vmatprep.subr.bf16.mxu0 0
        %909 = vmatpush1.bf16.msra.mxu0 0
        %910 = vmatprep.subr.bf16.mxu0 0
        %911 = vmatpush1.bf16.msra.mxu0 0
        %912 = vmatprep.subr.bf16.mxu0 0
        %913 = vmatpush1.bf16.msra.mxu0 0
        %914 = vmatprep.subr.bf16.mxu0 0
        %915 = vmatpush1.bf16.msra.mxu0 0
        %916 = vmatprep.subr.bf16.mxu0 0
        %917 = vmatpush1.bf16.msra.mxu0 0
        %918 = vmatprep.subr.bf16.mxu0 0
        %919 = vmatpush1.bf16.msra.mxu0 0
        %920 = vmatprep.subr.bf16.mxu0 0
        %921 = vmatpush1.bf16.msra.mxu0 0
        %922 = vmatprep.subr.bf16.mxu0 0
        %923 = vmatpush1.bf16.msra.mxu0 0
        %924 = vmatprep.subr.bf16.mxu0 0
        %925 = vmatpush1.bf16.msra.mxu0 0
        %926 = vmatprep.mubr.bf16.mxu0 0
        %927 = vmatmul.mubr.bf16.gmra.mrb[0].mxu0 %v880
        %v928 = vpop.f32.mrb[0].mxu0
        %v929 = vadd.f32 0.0, %v928
        %v930 = vpop.f32.mrb[0].mxu0
        %v931 = vadd.f32 0.0, %v930
        %v932 = vpop.f32.mrb[0].mxu0
        %v933 = vpop.f32.mrb[0].mxu0
        %934 = vdwg.mxu0
        %935 = vmatprep.subr.bf16.mxu0 %v892
        %936 = vmatpush1.bf16.msra.mxu0 %v889
        %937 = vmatprep.subr.bf16.mxu0 0
        %938 = vmatpush1.bf16.msra.mxu0 0
        %939 = vmatprep.subr.bf16.mxu0 0
        %940 = vmatpush1.bf16.msra.mxu0 0
        %941 = vmatprep.subr.bf16.mxu0 0
        %942 = vmatpush1.bf16.msra.mxu0 0
        %943 = vmatprep.subr.bf16.mxu0 0
        %944 = vmatpush1.bf16.msra.mxu0 0
        %945 = vmatprep.subr.bf16.mxu0 0
        %946 = vmatpush1.bf16.msra.mxu0 0
        %947 = vmatprep.subr.bf16.mxu0 0
        %948 = vmatpush1.bf16.msra.mxu0 0
        %949 = vmatprep.subr.bf16.mxu0 0
        %950 = vmatpush1.bf16.msra.mxu0 0
        %951 = vmatprep.subr.bf16.mxu0 0
        %952 = vmatpush1.bf16.msra.mxu0 0
        %953 = vmatprep.subr.bf16.mxu0 0
        %954 = vmatpush1.bf16.msra.mxu0 0
        %955 = vmatprep.subr.bf16.mxu0 0
        %956 = vmatpush1.bf16.msra.mxu0 0
        %957 = vmatprep.subr.bf16.mxu0 0
        %958 = vmatpush1.bf16.msra.mxu0 0
        %959 = vmatprep.subr.bf16.mxu0 0
        %960 = vmatpush1.bf16.msra.mxu0 0
        %961 = vmatprep.subr.bf16.mxu0 0
        %962 = vmatpush1.bf16.msra.mxu0 0
        %963 = vmatprep.subr.bf16.mxu0 0
        %964 = vmatpush1.bf16.msra.mxu0 0
        %965 = vmatprep.subr.bf16.mxu0 0
        %966 = vmatpush1.bf16.msra.mxu0 0
        %967 = vmatprep.mubr.bf16.mxu0 0
        %968 = vmatmul.mubr.bf16.gmra.mrb[0].mxu0 %v880
        %v969 = vpop.f32.mrb[0].mxu0
        %v970 = vadd.f32 0.0, %v969
        %v971 = vpop.f32.mrb[0].mxu0
        %v972 = vadd.f32 0.0, %v971
        %v973 = vpop.f32.mrb[0].mxu0
        %v974 = vpop.f32.mrb[0].mxu0
        %975 = vdwg.mxu0
        %v976 = vadd.f32 %v842, %v929
        %v977 = vadd.f32 %v843, %v931
        %v978 = vadd.f32 %v844, %v970
        %v979 = vadd.f32 %v845, %v972
        %v980 = vld [vmem:[%s464] sm:$0xff]
        %s981 = scalar_lea.vmem %s2, 16
        %v982 = vld [vmem:[%s981] sm:$0xf]
        %v984 = vcombine.high %v980, %v980
        %v986 = vunpack.c.l.s4 1983009808
        %v987 = vunpack.c.0.s8 %v986
        %v988 = vlaneseq
        %v989 = vshrl.u32 %v988, 7
        %v990 = vsub.s32 %v987, %v989
        %v991 = vrot.slane %v980, %v990
        %v993 = vunpack.c.l.s4 1983009808
        %v994 = vunpack.c.0.s8 %v993
        %v995 = vlaneseq
        %v996 = vshrl.u32 %v995, 7
        %v997 = vsub.s32 %v994, %v996
        %v998 = vrot.slane %v984, %v997
        %v999 = vcombine.high %v991, %v991
        %v1000 = vcombine.high %v998, %v998
        %1001 = vrot.lane.b32.xlu0 %v991, 104
        %v1002 = vpop.permute.xlu0 %1001
        %1003 = vrot.lane.b32.xlu0 %v999, 104
        %v1004 = vpop.permute.xlu0 %1003
        %1005 = vrot.lane.b32.xlu0 %v998, 104
        %v1006 = vpop.permute.xlu0 %1005
        %1007 = vrot.lane.b32.xlu0 %v1000, 104
        %v1008 = vpop.permute.xlu0 %1007
        %vm1009 = vcmask 850944
        %v1010 = vsel %vm1009, %v1002, %v1004
        %v1011 = vsel %vm1009, %v1004, %v1006
        %v1012 = vsel %vm1009, %v1006, %v1008
        %v1014 = vsel %vm501, %v982, 0
        %v1017 = vand.u32 %v1010, %v508
        %v1020 = vand.u32 %v1011, %v508
        %v1023 = vand.u32 %v1012, %v508
        %v1026 = vand.u32 %v1008, %v508
        %1028 = vmatprep.subr.bf16.mxu0 %v1020
        %1029 = vmatpush1.bf16.msra.mxu0 %v1017
        %1030 = vmatprep.subr.bf16.mxu0 0
        %1031 = vmatpush1.bf16.msra.mxu0 0
        %1032 = vmatprep.subr.bf16.mxu0 0
        %1033 = vmatpush1.bf16.msra.mxu0 0
        %1034 = vmatprep.subr.bf16.mxu0 0
        %1035 = vmatpush1.bf16.msra.mxu0 0
        %1036 = vmatprep.subr.bf16.mxu0 0
        %1037 = vmatpush1.bf16.msra.mxu0 0
        %1038 = vmatprep.subr.bf16.mxu0 0
        %1039 = vmatpush1.bf16.msra.mxu0 0
        %1040 = vmatprep.subr.bf16.mxu0 0
        %1041 = vmatpush1.bf16.msra.mxu0 0
        %1042 = vmatprep.subr.bf16.mxu0 0
        %1043 = vmatpush1.bf16.msra.mxu0 0
        %1044 = vmatprep.subr.bf16.mxu0 0
        %1045 = vmatpush1.bf16.msra.mxu0 0
        %1046 = vmatprep.subr.bf16.mxu0 0
        %1047 = vmatpush1.bf16.msra.mxu0 0
        %1048 = vmatprep.subr.bf16.mxu0 0
        %1049 = vmatpush1.bf16.msra.mxu0 0
        %1050 = vmatprep.subr.bf16.mxu0 0
        %1051 = vmatpush1.bf16.msra.mxu0 0
        %1052 = vmatprep.subr.bf16.mxu0 0
        %1053 = vmatpush1.bf16.msra.mxu0 0
        %1054 = vmatprep.subr.bf16.mxu0 0
        %1055 = vmatpush1.bf16.msra.mxu0 0
        %1056 = vmatprep.subr.bf16.mxu0 0
        %1057 = vmatpush1.bf16.msra.mxu0 0
        %1058 = vmatprep.subr.bf16.mxu0 0
        %1059 = vmatpush1.bf16.msra.mxu0 0
        %1060 = vmatprep.mubr.bf16.mxu0 0
        %1061 = vmatmul.mubr.bf16.gmra.mrb[0].mxu0 %v1014
        %v1062 = vpop.f32.mrb[0].mxu0
        %v1063 = vadd.f32 0.0, %v1062
        %v1064 = vpop.f32.mrb[0].mxu0
        %v1065 = vadd.f32 0.0, %v1064
        %v1066 = vpop.f32.mrb[0].mxu0
        %v1067 = vpop.f32.mrb[0].mxu0
        %1068 = vdwg.mxu0
        %1069 = vmatprep.subr.bf16.mxu0 %v1026
        %1070 = vmatpush1.bf16.msra.mxu0 %v1023
        %1071 = vmatprep.subr.bf16.mxu0 0
        %1072 = vmatpush1.bf16.msra.mxu0 0
        %1073 = vmatprep.subr.bf16.mxu0 0
        %1074 = vmatpush1.bf16.msra.mxu0 0
        %1075 = vmatprep.subr.bf16.mxu0 0
        %1076 = vmatpush1.bf16.msra.mxu0 0
        %1077 = vmatprep.subr.bf16.mxu0 0
        %1078 = vmatpush1.bf16.msra.mxu0 0
        %1079 = vmatprep.subr.bf16.mxu0 0
        %1080 = vmatpush1.bf16.msra.mxu0 0
        %1081 = vmatprep.subr.bf16.mxu0 0
        %1082 = vmatpush1.bf16.msra.mxu0 0
        %1083 = vmatprep.subr.bf16.mxu0 0
        %1084 = vmatpush1.bf16.msra.mxu0 0
        %1085 = vmatprep.subr.bf16.mxu0 0
        %1086 = vmatpush1.bf16.msra.mxu0 0
        %1087 = vmatprep.subr.bf16.mxu0 0
        %1088 = vmatpush1.bf16.msra.mxu0 0
        %1089 = vmatprep.subr.bf16.mxu0 0
        %1090 = vmatpush1.bf16.msra.mxu0 0
        %1091 = vmatprep.subr.bf16.mxu0 0
        %1092 = vmatpush1.bf16.msra.mxu0 0
        %1093 = vmatprep.subr.bf16.mxu0 0
        %1094 = vmatpush1.bf16.msra.mxu0 0
        %1095 = vmatprep.subr.bf16.mxu0 0
        %1096 = vmatpush1.bf16.msra.mxu0 0
        %1097 = vmatprep.subr.bf16.mxu0 0
        %1098 = vmatpush1.bf16.msra.mxu0 0
        %1099 = vmatprep.subr.bf16.mxu0 0
        %1100 = vmatpush1.bf16.msra.mxu0 0
        %1101 = vmatprep.mubr.bf16.mxu0 0
        %1102 = vmatmul.mubr.bf16.gmra.mrb[0].mxu0 %v1014
        %v1103 = vpop.f32.mrb[0].mxu0
        %v1104 = vadd.f32 0.0, %v1103
        %v1105 = vpop.f32.mrb[0].mxu0
        %v1106 = vadd.f32 0.0, %v1105
        %v1107 = vpop.f32.mrb[0].mxu0
        %v1108 = vpop.f32.mrb[0].mxu0
        %1109 = vdwg.mxu0
        %v1110 = vadd.f32 %v976, %v1063
        %v1111 = vadd.f32 %v977, %v1065
        %v1112 = vadd.f32 %v978, %v1104
        %v1113 = vadd.f32 %v979, %v1106
        %v1114 = vld [vmem:[%s464] sm:$0xff]
        %s1115 = scalar_lea.vmem %s2, 20
        %v1116 = vld [vmem:[%s1115] sm:$0xf]
        %v1118 = vcombine.high %v1114, %v1114
        %v1120 = vunpack.c.l.s4 1983009808
        %v1121 = vunpack.c.0.s8 %v1120
        %v1122 = vlaneseq
        %v1123 = vshrl.u32 %v1122, 7
        %v1124 = vsub.s32 %v1121, %v1123
        %v1125 = vrot.slane %v1114, %v1124
        %v1127 = vunpack.c.l.s4 1983009808
        %v1128 = vunpack.c.0.s8 %v1127
        %v1129 = vlaneseq
        %v1130 = vshrl.u32 %v1129, 7
        %v1131 = vsub.s32 %v1128, %v1130
        %v1132 = vrot.slane %v1118, %v1131
        %v1133 = vcombine.high %v1125, %v1125
        %v1134 = vcombine.high %v1132, %v1132
        %1135 = vrot.lane.b32.xlu0 %v1125, 103
        %v1136 = vpop.permute.xlu0 %1135
        %1137 = vrot.lane.b32.xlu0 %v1133, 103
        %v1138 = vpop.permute.xlu0 %1137
        %1139 = vrot.lane.b32.xlu0 %v1132, 103
        %v1140 = vpop.permute.xlu0 %1139
        %1141 = vrot.lane.b32.xlu0 %v1134, 103
        %v1142 = vpop.permute.xlu0 %1141
        %vm1143 = vcmask 842752
        %v1144 = vsel %vm1143, %v1136, %v1138
        %v1145 = vsel %vm1143, %v1138, %v1140
        %v1146 = vsel %vm1143, %v1140, %v1142
        %v1148 = vsel %vm501, %v1116, 0
        %v1151 = vand.u32 %v1144, %v508
        %v1154 = vand.u32 %v1145, %v508
        %v1157 = vand.u32 %v1146, %v508
        %v1160 = vand.u32 %v1142, %v508
        %1162 = vmatprep.subr.bf16.mxu0 %v1154
        %1163 = vmatpush1.bf16.msra.mxu0 %v1151
        %1164 = vmatprep.subr.bf16.mxu0 0
        %1165 = vmatpush1.bf16.msra.mxu0 0
        %1166 = vmatprep.subr.bf16.mxu0 0
        %1167 = vmatpush1.bf16.msra.mxu0 0
        %1168 = vmatprep.subr.bf16.mxu0 0
        %1169 = vmatpush1.bf16.msra.mxu0 0
        %1170 = vmatprep.subr.bf16.mxu0 0
        %1171 = vmatpush1.bf16.msra.mxu0 0
        %1172 = vmatprep.subr.bf16.mxu0 0
        %1173 = vmatpush1.bf16.msra.mxu0 0
        %1174 = vmatprep.subr.bf16.mxu0 0
        %1175 = vmatpush1.bf16.msra.mxu0 0
        %1176 = vmatprep.subr.bf16.mxu0 0
        %1177 = vmatpush1.bf16.msra.mxu0 0
        %1178 = vmatprep.subr.bf16.mxu0 0
        %1179 = vmatpush1.bf16.msra.mxu0 0
        %1180 = vmatprep.subr.bf16.mxu0 0
        %1181 = vmatpush1.bf16.msra.mxu0 0
        %1182 = vmatprep.subr.bf16.mxu0 0
        %1183 = vmatpush1.bf16.msra.mxu0 0
        %1184 = vmatprep.subr.bf16.mxu0 0
        %1185 = vmatpush1.bf16.msra.mxu0 0
        %1186 = vmatprep.subr.bf16.mxu0 0
        %1187 = vmatpush1.bf16.msra.mxu0 0
        %1188 = vmatprep.subr.bf16.mxu0 0
        %1189 = vmatpush1.bf16.msra.mxu0 0
        %1190 = vmatprep.subr.bf16.mxu0 0
        %1191 = vmatpush1.bf16.msra.mxu0 0
        %1192 = vmatprep.subr.bf16.mxu0 0
        %1193 = vmatpush1.bf16.msra.mxu0 0
        %1194 = vmatprep.mubr.bf16.mxu0 0
        %1195 = vmatmul.mubr.bf16.gmra.mrb[0].mxu0 %v1148
        %v1196 = vpop.f32.mrb[0].mxu0
        %v1197 = vadd.f32 0.0, %v1196
        %v1198 = vpop.f32.mrb[0].mxu0
        %v1199 = vadd.f32 0.0, %v1198
        %v1200 = vpop.f32.mrb[0].mxu0
        %v1201 = vpop.f32.mrb[0].mxu0
        %1202 = vdwg.mxu0
        %1203 = vmatprep.subr.bf16.mxu0 %v1160
        %1204 = vmatpush1.bf16.msra.mxu0 %v1157
        %1205 = vmatprep.subr.bf16.mxu0 0
        %1206 = vmatpush1.bf16.msra.mxu0 0
        %1207 = vmatprep.subr.bf16.mxu0 0
        %1208 = vmatpush1.bf16.msra.mxu0 0
        %1209 = vmatprep.subr.bf16.mxu0 0
        %1210 = vmatpush1.bf16.msra.mxu0 0
        %1211 = vmatprep.subr.bf16.mxu0 0
        %1212 = vmatpush1.bf16.msra.mxu0 0
        %1213 = vmatprep.subr.bf16.mxu0 0
        %1214 = vmatpush1.bf16.msra.mxu0 0
        %1215 = vmatprep.subr.bf16.mxu0 0
        %1216 = vmatpush1.bf16.msra.mxu0 0
        %1217 = vmatprep.subr.bf16.mxu0 0
        %1218 = vmatpush1.bf16.msra.mxu0 0
        %1219 = vmatprep.subr.bf16.mxu0 0
        %1220 = vmatpush1.bf16.msra.mxu0 0
        %1221 = vmatprep.subr.bf16.mxu0 0
        %1222 = vmatpush1.bf16.msra.mxu0 0
        %1223 = vmatprep.subr.bf16.mxu0 0
        %1224 = vmatpush1.bf16.msra.mxu0 0
        %1225 = vmatprep.subr.bf16.mxu0 0
        %1226 = vmatpush1.bf16.msra.mxu0 0
        %1227 = vmatprep.subr.bf16.mxu0 0
        %1228 = vmatpush1.bf16.msra.mxu0 0
        %1229 = vmatprep.subr.bf16.mxu0 0
        %1230 = vmatpush1.bf16.msra.mxu0 0
        %1231 = vmatprep.subr.bf16.mxu0 0
        %1232 = vmatpush1.bf16.msra.mxu0 0
        %1233 = vmatprep.subr.bf16.mxu0 0
        %1234 = vmatpush1.bf16.msra.mxu0 0
        %1235 = vmatprep.mubr.bf16.mxu0 0
        %1236 = vmatmul.mubr.bf16.gmra.mrb[0].mxu0 %v1148
        %v1237 = vpop.f32.mrb[0].mxu0
        %v1238 = vadd.f32 0.0, %v1237
        %v1239 = vpop.f32.mrb[0].mxu0
        %v1240 = vadd.f32 0.0, %v1239
        %v1241 = vpop.f32.mrb[0].mxu0
        %v1242 = vpop.f32.mrb[0].mxu0
        %1243 = vdwg.mxu0
        %v1244 = vadd.f32 %v1110, %v1197
        %v1245 = vadd.f32 %v1111, %v1199
        %v1246 = vadd.f32 %v1112, %v1238
        %v1247 = vadd.f32 %v1113, %v1240
        %v1248 = vld [vmem:[%s464] sm:$0xff]
        %v1249 = vld [vmem:[%s464 + $0x8] sm:$0x3]
        %s1250 = scalar_lea.vmem %s2, 24
        %v1251 = vld [vmem:[%s1250] sm:$0xf]
        %v1254 = vcombine.high %v1248, %v1248
        %v1256 = vunpack.c.l.s4 1983009808
        %v1257 = vunpack.c.0.s8 %v1256
        %v1258 = vlaneseq
        %v1259 = vshrl.u32 %v1258, 7
        %v1260 = vsub.s32 %v1257, %v1259
        %v1261 = vrot.slane %v1248, %v1260
        %v1263 = vunpack.c.l.s4 1983009808
        %v1264 = vunpack.c.0.s8 %v1263
        %v1265 = vlaneseq
        %v1266 = vshrl.u32 %v1265, 7
        %v1267 = vsub.s32 %v1264, %v1266
        %v1268 = vrot.slane %v1254, %v1267
        %v1269 = vcombine.high %v1261, %v1261
        %v1270 = vcombine.high %v1268, %v1268
        %v1272 = vunpack.c.l.s4 1983009808
        %v1273 = vunpack.c.0.s8 %v1272
        %v1274 = vlaneseq
        %v1275 = vshrl.u32 %v1274, 7
        %v1276 = vsub.s32 %v1273, %v1275
        %v1277 = vrot.slane %v1249, %v1276
        %1278 = vrot.lane.b32.xlu0 %v1261, 83
        %v1279 = vpop.permute.xlu0 %1278
        %1280 = vrot.lane.b32.xlu0 %v1269, 83
        %v1281 = vpop.permute.xlu0 %1280
        %1282 = vrot.lane.b32.xlu0 %v1268, 83
        %v1283 = vpop.permute.xlu0 %1282
        %1284 = vrot.lane.b32.xlu0 %v1270, 83
        %v1285 = vpop.permute.xlu0 %1284
        %1286 = vrot.lane.b32.xlu0 %v1277, 83
        %v1287 = vpop.permute.xlu0 %1286
        %vm1288 = vcmask 678912
        %v1289 = vsel %vm1288, %v1279, %v1281
        %v1290 = vsel %vm1288, %v1281, %v1283
        %v1291 = vsel %vm1288, %v1283, %v1285
        %v1292 = vsel %vm1288, %v1285, %v1287
        %v1294 = vsel %vm501, %v1251, 0
        %v1297 = vand.u32 %v1289, %v508
        %v1300 = vand.u32 %v1290, %v508
        %v1303 = vand.u32 %v1291, %v508
        %v1306 = vand.u32 %v1292, %v508
        %1308 = vmatprep.subr.bf16.mxu0 %v1300
        %1309 = vmatpush1.bf16.msra.mxu0 %v1297
        %1310 = vmatprep.subr.bf16.mxu0 0
        %1311 = vmatpush1.bf16.msra.mxu0 0
        %1312 = vmatprep.subr.bf16.mxu0 0
        %1313 = vmatpush1.bf16.msra.mxu0 0
        %1314 = vmatprep.subr.bf16.mxu0 0
        %1315 = vmatpush1.bf16.msra.mxu0 0
        %1316 = vmatprep.subr.bf16.mxu0 0
        %1317 = vmatpush1.bf16.msra.mxu0 0
        %1318 = vmatprep.subr.bf16.mxu0 0
        %1319 = vmatpush1.bf16.msra.mxu0 0
        %1320 = vmatprep.subr.bf16.mxu0 0
        %1321 = vmatpush1.bf16.msra.mxu0 0
        %1322 = vmatprep.subr.bf16.mxu0 0
        %1323 = vmatpush1.bf16.msra.mxu0 0
        %1324 = vmatprep.subr.bf16.mxu0 0
        %1325 = vmatpush1.bf16.msra.mxu0 0
        %1326 = vmatprep.subr.bf16.mxu0 0
        %1327 = vmatpush1.bf16.msra.mxu0 0
        %1328 = vmatprep.subr.bf16.mxu0 0
        %1329 = vmatpush1.bf16.msra.mxu0 0
        %1330 = vmatprep.subr.bf16.mxu0 0
        %1331 = vmatpush1.bf16.msra.mxu0 0
        %1332 = vmatprep.subr.bf16.mxu0 0
        %1333 = vmatpush1.bf16.msra.mxu0 0
        %1334 = vmatprep.subr.bf16.mxu0 0
        %1335 = vmatpush1.bf16.msra.mxu0 0
        %1336 = vmatprep.subr.bf16.mxu0 0
        %1337 = vmatpush1.bf16.msra.mxu0 0
        %1338 = vmatprep.subr.bf16.mxu0 0
        %1339 = vmatpush1.bf16.msra.mxu0 0
        %1340 = vmatprep.mubr.bf16.mxu0 0
        %1341 = vmatmul.mubr.bf16.gmra.mrb[0].mxu0 %v1294
        %v1342 = vpop.f32.mrb[0].mxu0
        %v1343 = vadd.f32 0.0, %v1342
        %v1344 = vpop.f32.mrb[0].mxu0
        %v1345 = vadd.f32 0.0, %v1344
        %v1346 = vpop.f32.mrb[0].mxu0
        %v1347 = vpop.f32.mrb[0].mxu0
        %1348 = vdwg.mxu0
        %1349 = vmatprep.subr.bf16.mxu0 %v1306
        %1350 = vmatpush1.bf16.msra.mxu0 %v1303
        %1351 = vmatprep.subr.bf16.mxu0 0
        %1352 = vmatpush1.bf16.msra.mxu0 0
        %1353 = vmatprep.subr.bf16.mxu0 0
        %1354 = vmatpush1.bf16.msra.mxu0 0
        %1355 = vmatprep.subr.bf16.mxu0 0
        %1356 = vmatpush1.bf16.msra.mxu0 0
        %1357 = vmatprep.subr.bf16.mxu0 0
        %1358 = vmatpush1.bf16.msra.mxu0 0
        %1359 = vmatprep.subr.bf16.mxu0 0
        %1360 = vmatpush1.bf16.msra.mxu0 0
        %1361 = vmatprep.subr.bf16.mxu0 0
        %1362 = vmatpush1.bf16.msra.mxu0 0
        %1363 = vmatprep.subr.bf16.mxu0 0
        %1364 = vmatpush1.bf16.msra.mxu0 0
        %1365 = vmatprep.subr.bf16.mxu0 0
        %1366 = vmatpush1.bf16.msra.mxu0 0
        %1367 = vmatprep.subr.bf16.mxu0 0
        %1368 = vmatpush1.bf16.msra.mxu0 0
        %1369 = vmatprep.subr.bf16.mxu0 0
        %1370 = vmatpush1.bf16.msra.mxu0 0
        %1371 = vmatprep.subr.bf16.mxu0 0
        %1372 = vmatpush1.bf16.msra.mxu0 0
        %1373 = vmatprep.subr.bf16.mxu0 0
        %1374 = vmatpush1.bf16.msra.mxu0 0
        %1375 = vmatprep.subr.bf16.mxu0 0
        %1376 = vmatpush1.bf16.msra.mxu0 0
        %1377 = vmatprep.subr.bf16.mxu0 0
        %1378 = vmatpush1.bf16.msra.mxu0 0
        %1379 = vmatprep.subr.bf16.mxu0 0
        %1380 = vmatpush1.bf16.msra.mxu0 0
        %1381 = vmatprep.mubr.bf16.mxu0 0
        %1382 = vmatmul.mubr.bf16.gmra.mrb[0].mxu0 %v1294
        %v1383 = vpop.f32.mrb[0].mxu0
        %v1384 = vadd.f32 0.0, %v1383
        %v1385 = vpop.f32.mrb[0].mxu0
        %v1386 = vadd.f32 0.0, %v1385
        %v1387 = vpop.f32.mrb[0].mxu0
        %v1388 = vpop.f32.mrb[0].mxu0
        %1389 = vdwg.mxu0
        %v1390 = vadd.f32 %v1244, %v1343
        %v1391 = vadd.f32 %v1245, %v1345
        %v1392 = vadd.f32 %v1246, %v1384
        %v1393 = vadd.f32 %v1247, %v1386
        %v1394 = vld [vmem:[%s464] sm:$0xff]
        %v1395 = vld [vmem:[%s464 + $0x8] sm:$0x3]
        %s1396 = scalar_lea.vmem %s2, 28
        %v1397 = vld [vmem:[%s1396] sm:$0xf]
        %v1400 = vcombine.high %v1394, %v1394
        %v1402 = vunpack.c.l.s4 1983009808
        %v1403 = vunpack.c.0.s8 %v1402
        %v1404 = vlaneseq
        %v1405 = vshrl.u32 %v1404, 7
        %v1406 = vsub.s32 %v1403, %v1405
        %v1407 = vrot.slane %v1394, %v1406
        %v1409 = vunpack.c.l.s4 1983009808
        %v1410 = vunpack.c.0.s8 %v1409
        %v1411 = vlaneseq
        %v1412 = vshrl.u32 %v1411, 7
        %v1413 = vsub.s32 %v1410, %v1412
        %v1414 = vrot.slane %v1400, %v1413
        %v1415 = vcombine.high %v1407, %v1407
        %v1416 = vcombine.high %v1414, %v1414
        %v1418 = vunpack.c.l.s4 1983009808
        %v1419 = vunpack.c.0.s8 %v1418
        %v1420 = vlaneseq
        %v1421 = vshrl.u32 %v1420, 7
        %v1422 = vsub.s32 %v1419, %v1421
        %v1423 = vrot.slane %v1395, %v1422
        %1424 = vrot.lane.b32.xlu0 %v1407, 82
        %v1425 = vpop.permute.xlu0 %1424
        %1426 = vrot.lane.b32.xlu0 %v1415, 82
        %v1427 = vpop.permute.xlu0 %1426
        %1428 = vrot.lane.b32.xlu0 %v1414, 82
        %v1429 = vpop.permute.xlu0 %1428
        %1430 = vrot.lane.b32.xlu0 %v1416, 82
        %v1431 = vpop.permute.xlu0 %1430
        %1432 = vrot.lane.b32.xlu0 %v1423, 82
        %v1433 = vpop.permute.xlu0 %1432
        %vm1434 = vcmask 670720
        %v1435 = vsel %vm1434, %v1425, %v1427
        %v1436 = vsel %vm1434, %v1427, %v1429
        %v1437 = vsel %vm1434, %v1429, %v1431
        %v1438 = vsel %vm1434, %v1431, %v1433
        %v1440 = vsel %vm501, %v1397, 0
        %v1443 = vand.u32 %v1435, %v508
        %v1446 = vand.u32 %v1436, %v508
        %v1449 = vand.u32 %v1437, %v508
        %v1452 = vand.u32 %v1438, %v508
        %1454 = vmatprep.subr.bf16.mxu0 %v1446
        %1455 = vmatpush1.bf16.msra.mxu0 %v1443
        %1456 = vmatprep.subr.bf16.mxu0 0
        %1457 = vmatpush1.bf16.msra.mxu0 0
        %1458 = vmatprep.subr.bf16.mxu0 0
        %1459 = vmatpush1.bf16.msra.mxu0 0
        %1460 = vmatprep.subr.bf16.mxu0 0
        %1461 = vmatpush1.bf16.msra.mxu0 0
        %1462 = vmatprep.subr.bf16.mxu0 0
        %1463 = vmatpush1.bf16.msra.mxu0 0
        %1464 = vmatprep.subr.bf16.mxu0 0
        %1465 = vmatpush1.bf16.msra.mxu0 0
        %1466 = vmatprep.subr.bf16.mxu0 0
        %1467 = vmatpush1.bf16.msra.mxu0 0
        %1468 = vmatprep.subr.bf16.mxu0 0
        %1469 = vmatpush1.bf16.msra.mxu0 0
        %1470 = vmatprep.subr.bf16.mxu0 0
        %1471 = vmatpush1.bf16.msra.mxu0 0
        %1472 = vmatprep.subr.bf16.mxu0 0
        %1473 = vmatpush1.bf16.msra.mxu0 0
        %1474 = vmatprep.subr.bf16.mxu0 0
        %1475 = vmatpush1.bf16.msra.mxu0 0
        %1476 = vmatprep.subr.bf16.mxu0 0
        %1477 = vmatpush1.bf16.msra.mxu0 0
        %1478 = vmatprep.subr.bf16.mxu0 0
        %1479 = vmatpush1.bf16.msra.mxu0 0
        %1480 = vmatprep.subr.bf16.mxu0 0
        %1481 = vmatpush1.bf16.msra.mxu0 0
        %1482 = vmatprep.subr.bf16.mxu0 0
        %1483 = vmatpush1.bf16.msra.mxu0 0
        %1484 = vmatprep.subr.bf16.mxu0 0
        %1485 = vmatpush1.bf16.msra.mxu0 0
        %1486 = vmatprep.mubr.bf16.mxu0 0
        %1487 = vmatmul.mubr.bf16.gmra.mrb[0].mxu0 %v1440
        %v1488 = vpop.f32.mrb[0].mxu0
        %v1489 = vadd.f32 0.0, %v1488
        %v1490 = vpop.f32.mrb[0].mxu0
        %v1491 = vadd.f32 0.0, %v1490
        %v1492 = vpop.f32.mrb[0].mxu0
        %v1493 = vpop.f32.mrb[0].mxu0
        %1494 = vdwg.mxu0
        %1495 = vmatprep.subr.bf16.mxu0 %v1452
        %1496 = vmatpush1.bf16.msra.mxu0 %v1449
        %1497 = vmatprep.subr.bf16.mxu0 0
        %1498 = vmatpush1.bf16.msra.mxu0 0
        %1499 = vmatprep.subr.bf16.mxu0 0
        %1500 = vmatpush1.bf16.msra.mxu0 0
        %1501 = vmatprep.subr.bf16.mxu0 0
        %1502 = vmatpush1.bf16.msra.mxu0 0
        %1503 = vmatprep.subr.bf16.mxu0 0
        %1504 = vmatpush1.bf16.msra.mxu0 0
        %1505 = vmatprep.subr.bf16.mxu0 0
        %1506 = vmatpush1.bf16.msra.mxu0 0
        %1507 = vmatprep.subr.bf16.mxu0 0
        %1508 = vmatpush1.bf16.msra.mxu0 0
        %1509 = vmatprep.subr.bf16.mxu0 0
        %1510 = vmatpush1.bf16.msra.mxu0 0
        %1511 = vmatprep.subr.bf16.mxu0 0
        %1512 = vmatpush1.bf16.msra.mxu0 0
        %1513 = vmatprep.subr.bf16.mxu0 0
        %1514 = vmatpush1.bf16.msra.mxu0 0
        %1515 = vmatprep.subr.bf16.mxu0 0
        %1516 = vmatpush1.bf16.msra.mxu0 0
        %1517 = vmatprep.subr.bf16.mxu0 0
        %1518 = vmatpush1.bf16.msra.mxu0 0
        %1519 = vmatprep.subr.bf16.mxu0 0
        %1520 = vmatpush1.bf16.msra.mxu0 0
        %1521 = vmatprep.subr.bf16.mxu0 0
        %1522 = vmatpush1.bf16.msra.mxu0 0
        %1523 = vmatprep.subr.bf16.mxu0 0
        %1524 = vmatpush1.bf16.msra.mxu0 0
        %1525 = vmatprep.subr.bf16.mxu0 0
        %1526 = vmatpush1.bf16.msra.mxu0 0
        %1527 = vmatprep.mubr.bf16.mxu0 0
        %1528 = vmatmul.mubr.bf16.gmra.mrb[0].mxu0 %v1440
        %v1529 = vpop.f32.mrb[0].mxu0
        %v1530 = vadd.f32 0.0, %v1529
        %v1531 = vpop.f32.mrb[0].mxu0
        %v1532 = vadd.f32 0.0, %v1531
        %v1533 = vpop.f32.mrb[0].mxu0
        %v1534 = vpop.f32.mrb[0].mxu0
        %1535 = vdwg.mxu0
        %v1536 = vadd.f32 %v1390, %v1489
        %v1537 = vadd.f32 %v1391, %v1491
        %v1538 = vadd.f32 %v1392, %v1530
        %v1539 = vadd.f32 %v1393, %v1532
        %v1540 = vld [vmem:[%s464] sm:$0xff]
        %v1541 = vld [vmem:[%s464 + $0x8] sm:$0x3]
        %s1542 = scalar_lea.vmem %s2, 32
        %v1543 = vld [vmem:[%s1542] sm:$0xf]
        %v1546 = vcombine.high %v1540, %v1540
        %v1548 = vunpack.c.l.s4 1983009808
        %v1549 = vunpack.c.0.s8 %v1548
        %v1550 = vlaneseq
        %v1551 = vshrl.u32 %v1550, 7
        %v1552 = vsub.s32 %v1549, %v1551
        %v1553 = vrot.slane %v1540, %v1552
        %v1555 = vunpack.c.l.s4 1983009808
        %v1556 = vunpack.c.0.s8 %v1555
        %v1557 = vlaneseq
        %v1558 = vshrl.u32 %v1557, 7
        %v1559 = vsub.s32 %v1556, %v1558
        %v1560 = vrot.slane %v1546, %v1559
        %v1561 = vcombine.high %v1553, %v1553
        %v1562 = vcombine.high %v1560, %v1560
        %v1564 = vunpack.c.l.s4 1983009808
        %v1565 = vunpack.c.0.s8 %v1564
        %v1566 = vlaneseq
        %v1567 = vshrl.u32 %v1566, 7
        %v1568 = vsub.s32 %v1565, %v1567
        %v1569 = vrot.slane %v1541, %v1568
        %1570 = vrot.lane.b32.xlu0 %v1553, 81
        %v1571 = vpop.permute.xlu0 %1570
        %1572 = vrot.lane.b32.xlu0 %v1561, 81
        %v1573 = vpop.permute.xlu0 %1572
        %1574 = vrot.lane.b32.xlu0 %v1560, 81
        %v1575 = vpop.permute.xlu0 %1574
        %1576 = vrot.lane.b32.xlu0 %v1562, 81
        %v1577 = vpop.permute.xlu0 %1576
        %1578 = vrot.lane.b32.xlu0 %v1569, 81
        %v1579 = vpop.permute.xlu0 %1578
        %vm1580 = vcmask 662528
        %v1581 = vsel %vm1580, %v1571, %v1573
        %v1582 = vsel %vm1580, %v1573, %v1575
        %v1583 = vsel %vm1580, %v1575, %v1577
        %v1584 = vsel %vm1580, %v1577, %v1579
        %v1586 = vsel %vm501, %v1543, 0
        %v1589 = vand.u32 %v1581, %v508
        %v1592 = vand.u32 %v1582, %v508
        %v1595 = vand.u32 %v1583, %v508
        %v1598 = vand.u32 %v1584, %v508
        %1600 = vmatprep.subr.bf16.mxu0 %v1592
        %1601 = vmatpush1.bf16.msra.mxu0 %v1589
        %1602 = vmatprep.subr.bf16.mxu0 0
        %1603 = vmatpush1.bf16.msra.mxu0 0
        %1604 = vmatprep.subr.bf16.mxu0 0
        %1605 = vmatpush1.bf16.msra.mxu0 0
        %1606 = vmatprep.subr.bf16.mxu0 0
        %1607 = vmatpush1.bf16.msra.mxu0 0
        %1608 = vmatprep.subr.bf16.mxu0 0
        %1609 = vmatpush1.bf16.msra.mxu0 0
        %1610 = vmatprep.subr.bf16.mxu0 0
        %1611 = vmatpush1.bf16.msra.mxu0 0
        %1612 = vmatprep.subr.bf16.mxu0 0
        %1613 = vmatpush1.bf16.msra.mxu0 0
        %1614 = vmatprep.subr.bf16.mxu0 0
        %1615 = vmatpush1.bf16.msra.mxu0 0
        %1616 = vmatprep.subr.bf16.mxu0 0
        %1617 = vmatpush1.bf16.msra.mxu0 0
        %1618 = vmatprep.subr.bf16.mxu0 0
        %1619 = vmatpush1.bf16.msra.mxu0 0
        %1620 = vmatprep.subr.bf16.mxu0 0
        %1621 = vmatpush1.bf16.msra.mxu0 0
        %1622 = vmatprep.subr.bf16.mxu0 0
        %1623 = vmatpush1.bf16.msra.mxu0 0
        %1624 = vmatprep.subr.bf16.mxu0 0
        %1625 = vmatpush1.bf16.msra.mxu0 0
        %1626 = vmatprep.subr.bf16.mxu0 0
        %1627 = vmatpush1.bf16.msra.mxu0 0
        %1628 = vmatprep.subr.bf16.mxu0 0
        %1629 = vmatpush1.bf16.msra.mxu0 0
        %1630 = vmatprep.subr.bf16.mxu0 0
        %1631 = vmatpush1.bf16.msra.mxu0 0
        %1632 = vmatprep.mubr.bf16.mxu0 0
        %1633 = vmatmul.mubr.bf16.gmra.mrb[0].mxu0 %v1586
        %v1634 = vpop.f32.mrb[0].mxu0
        %v1635 = vadd.f32 0.0, %v1634
        %v1636 = vpop.f32.mrb[0].mxu0
        %v1637 = vadd.f32 0.0, %v1636
        %v1638 = vpop.f32.mrb[0].mxu0
        %v1639 = vpop.f32.mrb[0].mxu0
        %1640 = vdwg.mxu0
        %1641 = vmatprep.subr.bf16.mxu0 %v1598
        %1642 = vmatpush1.bf16.msra.mxu0 %v1595
        %1643 = vmatprep.subr.bf16.mxu0 0
        %1644 = vmatpush1.bf16.msra.mxu0 0
        %1645 = vmatprep.subr.bf16.mxu0 0
        %1646 = vmatpush1.bf16.msra.mxu0 0
        %1647 = vmatprep.subr.bf16.mxu0 0
        %1648 = vmatpush1.bf16.msra.mxu0 0
        %1649 = vmatprep.subr.bf16.mxu0 0
        %1650 = vmatpush1.bf16.msra.mxu0 0
        %1651 = vmatprep.subr.bf16.mxu0 0
        %1652 = vmatpush1.bf16.msra.mxu0 0
        %1653 = vmatprep.subr.bf16.mxu0 0
        %1654 = vmatpush1.bf16.msra.mxu0 0
        %1655 = vmatprep.subr.bf16.mxu0 0
        %1656 = vmatpush1.bf16.msra.mxu0 0
        %1657 = vmatprep.subr.bf16.mxu0 0
        %1658 = vmatpush1.bf16.msra.mxu0 0
        %1659 = vmatprep.subr.bf16.mxu0 0
        %1660 = vmatpush1.bf16.msra.mxu0 0
        %1661 = vmatprep.subr.bf16.mxu0 0
        %1662 = vmatpush1.bf16.msra.mxu0 0
        %1663 = vmatprep.subr.bf16.mxu0 0
        %1664 = vmatpush1.bf16.msra.mxu0 0
        %1665 = vmatprep.subr.bf16.mxu0 0
        %1666 = vmatpush1.bf16.msra.mxu0 0
        %1667 = vmatprep.subr.bf16.mxu0 0
        %1668 = vmatpush1.bf16.msra.mxu0 0
        %1669 = vmatprep.subr.bf16.mxu0 0
        %1670 = vmatpush1.bf16.msra.mxu0 0
        %1671 = vmatprep.subr.bf16.mxu0 0
        %1672 = vmatpush1.bf16.msra.mxu0 0
        %1673 = vmatprep.mubr.bf16.mxu0 0
        %1674 = vmatmul.mubr.bf16.gmra.mrb[0].mxu0 %v1586
        %v1675 = vpop.f32.mrb[0].mxu0
        %v1676 = vadd.f32 0.0, %v1675
        %v1677 = vpop.f32.mrb[0].mxu0
        %v1678 = vadd.f32 0.0, %v1677
        %v1679 = vpop.f32.mrb[0].mxu0
        %v1680 = vpop.f32.mrb[0].mxu0
        %1681 = vdwg.mxu0
        %v1682 = vadd.f32 %v1536, %v1635
        %v1683 = vadd.f32 %v1537, %v1637
        %v1684 = vadd.f32 %v1538, %v1676
        %v1685 = vadd.f32 %v1539, %v1678
        %v1686 = vld [vmem:[%s3] sm:$0xff]
        %1688 = vset.pattern.permute.xlu0 0
        %1689 = vperm.xlu0 %1688, %v1686
        %v1690 = vpop.permute.xlu0 %1689
        %v1692 = vadd.f32 %v1682, %v1690
        %v1693 = vadd.f32 %v1683, %v1690
        %v1694 = vadd.f32 %v1684, %v1690
        %v1695 = vadd.f32 %v1685, %v1690
        %v1696 = vmax.f32 %v1692, 0.0
        %v1697 = vmax.f32 %v1693, 0.0
        %v1698 = vmax.f32 %v1694, 0.0
        %v1699 = vmax.f32 %v1695, 0.0
        %v1700 = vld [vmem:[%s4] sm:$0xff]
        %1702 = vset.pattern.permute.xlu0 0
        %1703 = vperm.xlu0 %1702, %v1700
        %v1704 = vpop.permute.xlu0 %1703
        %v1706 = vmul.f32 %v1696, %v1704
        %v1707 = vmul.f32 %v1697, %v1704
        %v1708 = vmul.f32 %v1698, %v1704
        %v1709 = vmul.f32 %v1699, %v1704
        %v1710 = vld [vmem:[%s5] sm:$0xff]
        %1712 = vset.pattern.permute.xlu0 0
        %1713 = vperm.xlu0 %1712, %v1710
        %v1714 = vpop.permute.xlu0 %1713
        %v1716 = vadd.f32 %v1706, %v1714
        %v1717 = vadd.f32 %v1707, %v1714
        %v1718 = vadd.f32 %v1708, %v1714
        %v1719 = vadd.f32 %v1709, %v1714
        %v1721 = vlaneseq
        %v1722 = vshrl.u32 %v1721, 7
        %v1723 = vsub.s32 0, %v1722
        %v1724 = vrot.slane %v466, %v1723
        %v1725 = vlaneseq
        %v1726 = vshrl.u32 %v1725, 7
        %v1727 = vsub.s32 1, %v1726
        %v1728 = vrot.slane %v466, %v1727
        %v1729 = vlaneseq
        %v1730 = vshrl.u32 %v1729, 7
        %v1731 = vsub.s32 2, %v1730
        %v1732 = vrot.slane %v466, %v1731
        %v1733 = vlaneseq
        %v1734 = vshrl.u32 %v1733, 7
        %v1735 = vsub.s32 3, %v1734
        %v1736 = vrot.slane %v466, %v1735
        %v1741 = vmul.f32 %v1716, %v1724
        %v1742 = vmul.f32 %v1717, %v1728
        %v1743 = vmul.f32 %v1718, %v1732
        %v1744 = vmul.f32 %v1719, %v1736
        %1745 = vst [vmem:[#allocation2] sm:$0xff] 0
        %1746 = vst [vmem:[#allocation2 + $0x8] sm:$0xff] 0
        %vm1747 = vcmask 158720
        %1748 = vst.msk [vmem:[#allocation2 + $0x10] sm:$0xf] %vm1747, 0
        %v1749 = vpack.c.bf16 %v1741, %v1741
        %v1750 = vpack.c.bf16 %v1742, %v1742
        %v1751 = vpack.c.bf16 %v1743, %v1743
        %v1752 = vpack.c.bf16 %v1744, %v1744
        %v1757 = vunpack.c.l.b16 %v1749
        %v1758 = vunpack.c.l.b16 %v1750
        %v1759 = vunpack.c.l.b16 %v1751
        %v1760 = vunpack.c.l.b16 %v1752
        %v1761 = vpack.c.b16 %v1758, %v1757
        %v1762 = vpack.c.b16 %v1760, %v1759
        %1763 = vrot.lane.b32.xlu0 %v1761, 24
        %v1764 = vpop.permute.xlu0 %1763
        %1765 = vrot.lane.b32.xlu0 %v1762, 24
        %v1766 = vpop.permute.xlu0 %1765
        %v1767 = vrot.slane %v1764, 4
        %v1768 = vrot.slane %v1766, 4
        %vm1769 = vcmask 195584
        %v1770 = vsel %vm1769, %v1767, %v1764
        %vm1771 = vcmask 1043456
        %v1772 = vsel %vm1771, %v1767, %v1768
        %v1773 = vsel %vm1769, %v1772, %v1766
        %vm1776 = vcmask 1043648
        %vm1777 = vcmask 1047556
        %vm1778 = vmor %vm1777, %vm1776
        %1779 = vst.msk [vmem:[#allocation2] sm:$0xff] %vm1778, %v1770
        %vm1780 = vcmask 1043456
        %vm1781 = vcmask 1014788
        %vm1782 = vmor %vm1781, %vm1780
        %1783 = vst.msk [vmem:[#allocation2 + $0x8] sm:$0xff] %vm1782, %v1773
        %v1784 = vld [vmem:[#allocation2] sm:$0xff]
        %v1785 = vld [vmem:[#allocation2 + $0x8] sm:$0xff]
        %v1786 = vld [vmem:[%s6] sm:$0xf]
        %v1787 = vld [vmem:[%s6 + $0x4] sm:$0xf]
        %s1788 = scalar_lea.vmem %s6, 8
        %v1789 = vld [vmem:[%s1788] sm:$0xf]
        %v1790 = vld [vmem:[%s1788 + $0x4] sm:$0xf]
        %v1793 = vunpack.c.l.b16 %v1789
        %v1794 = vunpack.c.l.b16 %v1790
        %v1795 = vpack.c.b16 %v1794, %v1793
        %v1798 = vunpack.c.l.b16 %v1784
        %v1799 = vunpack.c.h.b16 %v1784
        %v1800 = vunpack.c.l.b16 %v1785
        %v1801 = vunpack.c.h.b16 %v1785
        %v1802 = vpack.c.b16 %v1798, %v1798
        %v1803 = vpack.c.b16 %v1799, %v1799
        %v1804 = vpack.c.b16 %v1800, %v1800
        %v1805 = vpack.c.b16 %v1801, %v1801
        %1806 = vrot.lane.b32.xlu0 %v1802, 126
        %v1807 = vpop.permute.xlu0 %1806
        %1808 = vrot.lane.b32.xlu0 %v1803, 126
        %v1809 = vpop.permute.xlu0 %1808
        %1810 = vrot.lane.b32.xlu0 %v1804, 126
        %v1811 = vpop.permute.xlu0 %1810
        %1812 = vrot.lane.b32.xlu0 %v1805, 126
        %v1813 = vpop.permute.xlu0 %1812
        %v1814 = vsel %vm497, %v1807, %v1809
        %v1815 = vsel %vm497, %v1809, %v1811
        %v1816 = vsel %vm497, %v1811, %v1813
        %vm1817 = vcmask 64512
        %v1819 = vsel %vm1817, %v1795, 0
        %v1822 = vsel %vm1780, %v1814, 0
        %v1825 = vsel %vm1780, %v1815, 0
        %v1828 = vsel %vm1780, %v1816, 0
        %v1831 = vsel %vm1780, %v1813, 0
        %1833 = vmatprep.subr.bf16.mxu0 %v1825
        %1834 = vmatpush1.bf16.msra.mxu0 %v1822
        %1835 = vmatprep.subr.bf16.mxu0 0
        %1836 = vmatpush1.bf16.msra.mxu0 0
        %1837 = vmatprep.subr.bf16.mxu0 0
        %1838 = vmatpush1.bf16.msra.mxu0 0
        %1839 = vmatprep.subr.bf16.mxu0 0
        %1840 = vmatpush1.bf16.msra.mxu0 0
        %1841 = vmatprep.subr.bf16.mxu0 0
        %1842 = vmatpush1.bf16.msra.mxu0 0
        %1843 = vmatprep.subr.bf16.mxu0 0
        %1844 = vmatpush1.bf16.msra.mxu0 0
        %1845 = vmatprep.subr.bf16.mxu0 0
        %1846 = vmatpush1.bf16.msra.mxu0 0
        %1847 = vmatprep.subr.bf16.mxu0 0
        %1848 = vmatpush1.bf16.msra.mxu0 0
        %1849 = vmatprep.subr.bf16.mxu0 0
        %1850 = vmatpush1.bf16.msra.mxu0 0
        %1851 = vmatprep.subr.bf16.mxu0 0
        %1852 = vmatpush1.bf16.msra.mxu0 0
        %1853 = vmatprep.subr.bf16.mxu0 0
        %1854 = vmatpush1.bf16.msra.mxu0 0
        %1855 = vmatprep.subr.bf16.mxu0 0
        %1856 = vmatpush1.bf16.msra.mxu0 0
        %1857 = vmatprep.subr.bf16.mxu0 0
        %1858 = vmatpush1.bf16.msra.mxu0 0
        %1859 = vmatprep.subr.bf16.mxu0 0
        %1860 = vmatpush1.bf16.msra.mxu0 0
        %1861 = vmatprep.subr.bf16.mxu0 0
        %1862 = vmatpush1.bf16.msra.mxu0 0
        %1863 = vmatprep.subr.bf16.mxu0 0
        %1864 = vmatpush1.bf16.msra.mxu0 0
        %1865 = vmatprep.mubr.bf16.mxu0 0
        %1866 = vmatmul.mubr.bf16.gmra.mrb[0].mxu0 %v1819
        %v1867 = vpop.f32.mrb[0].mxu0
        %v1868 = vadd.f32 0.0, %v1867
        %v1869 = vpop.f32.mrb[0].mxu0
        %v1870 = vadd.f32 0.0, %v1869
        %v1871 = vpop.f32.mrb[0].mxu0
        %v1872 = vadd.f32 0.0, %v1871
        %v1873 = vpop.f32.mrb[0].mxu0
        %v1874 = vadd.f32 0.0, %v1873
        %1875 = vdwg.mxu0
        %1876 = vmatprep.subr.bf16.mxu0 %v1831
        %1877 = vmatpush1.bf16.msra.mxu0 %v1828
        %1878 = vmatprep.subr.bf16.mxu0 0
        %1879 = vmatpush1.bf16.msra.mxu0 0
        %1880 = vmatprep.subr.bf16.mxu0 0
        %1881 = vmatpush1.bf16.msra.mxu0 0
        %1882 = vmatprep.subr.bf16.mxu0 0
        %1883 = vmatpush1.bf16.msra.mxu0 0
        %1884 = vmatprep.subr.bf16.mxu0 0
        %1885 = vmatpush1.bf16.msra.mxu0 0
        %1886 = vmatprep.subr.bf16.mxu0 0
        %1887 = vmatpush1.bf16.msra.mxu0 0
        %1888 = vmatprep.subr.bf16.mxu0 0
        %1889 = vmatpush1.bf16.msra.mxu0 0
        %1890 = vmatprep.subr.bf16.mxu0 0
        %1891 = vmatpush1.bf16.msra.mxu0 0
        %1892 = vmatprep.subr.bf16.mxu0 0
        %1893 = vmatpush1.bf16.msra.mxu0 0
        %1894 = vmatprep.subr.bf16.mxu0 0
        %1895 = vmatpush1.bf16.msra.mxu0 0
        %1896 = vmatprep.subr.bf16.mxu0 0
        %1897 = vmatpush1.bf16.msra.mxu0 0
        %1898 = vmatprep.subr.bf16.mxu0 0
        %1899 = vmatpush1.bf16.msra.mxu0 0
        %1900 = vmatprep.subr.bf16.mxu0 0
        %1901 = vmatpush1.bf16.msra.mxu0 0
        %1902 = vmatprep.subr.bf16.mxu0 0
        %1903 = vmatpush1.bf16.msra.mxu0 0
        %1904 = vmatprep.subr.bf16.mxu0 0
        %1905 = vmatpush1.bf16.msra.mxu0 0
        %1906 = vmatprep.subr.bf16.mxu0 0
        %1907 = vmatpush1.bf16.msra.mxu0 0
        %1908 = vmatprep.mubr.bf16.mxu0 0
        %1909 = vmatmul.mubr.bf16.gmra.mrb[0].mxu0 %v1819
        %v1910 = vpop.f32.mrb[0].mxu0
        %v1911 = vadd.f32 0.0, %v1910
        %v1912 = vpop.f32.mrb[0].mxu0
        %v1913 = vadd.f32 0.0, %v1912
        %v1914 = vpop.f32.mrb[0].mxu0
        %v1915 = vadd.f32 0.0, %v1914
        %v1916 = vpop.f32.mrb[0].mxu0
        %v1917 = vadd.f32 0.0, %v1916
        %1918 = vdwg.mxu0
        %v1921 = vunpack.c.l.b16 %v1786
        %v1922 = vunpack.c.l.b16 %v1787
        %v1923 = vpack.c.b16 %v1922, %v1921
        %1924 = vrot.lane.b32.xlu0 %v1802, 127
        %v1925 = vpop.permute.xlu0 %1924
        %1926 = vrot.lane.b32.xlu0 %v1803, 127
        %v1927 = vpop.permute.xlu0 %1926
        %1928 = vrot.lane.b32.xlu0 %v1804, 127
        %v1929 = vpop.permute.xlu0 %1928
        %1930 = vrot.lane.b32.xlu0 %v1805, 127
        %v1931 = vpop.permute.xlu0 %1930
        %v1932 = vsel %vm611, %v1925, %v1927
        %v1933 = vsel %vm611, %v1927, %v1929
        %v1934 = vsel %vm611, %v1929, %v1931
        %v1936 = vsel %vm1817, %v1923, 0
        %v1939 = vsel %vm1780, %v1932, 0
        %v1942 = vsel %vm1780, %v1933, 0
        %v1945 = vsel %vm1780, %v1934, 0
        %v1948 = vsel %vm1780, %v1931, 0
        %1950 = vmatprep.subr.bf16.mxu0 %v1942
        %1951 = vmatpush1.bf16.msra.mxu0 %v1939
        %1952 = vmatprep.subr.bf16.mxu0 0
        %1953 = vmatpush1.bf16.msra.mxu0 0
        %1954 = vmatprep.subr.bf16.mxu0 0
        %1955 = vmatpush1.bf16.msra.mxu0 0
        %1956 = vmatprep.subr.bf16.mxu0 0
        %1957 = vmatpush1.bf16.msra.mxu0 0
        %1958 = vmatprep.subr.bf16.mxu0 0
        %1959 = vmatpush1.bf16.msra.mxu0 0
        %1960 = vmatprep.subr.bf16.mxu0 0
        %1961 = vmatpush1.bf16.msra.mxu0 0
        %1962 = vmatprep.subr.bf16.mxu0 0
        %1963 = vmatpush1.bf16.msra.mxu0 0
        %1964 = vmatprep.subr.bf16.mxu0 0
        %1965 = vmatpush1.bf16.msra.mxu0 0
        %1966 = vmatprep.subr.bf16.mxu0 0
        %1967 = vmatpush1.bf16.msra.mxu0 0
        %1968 = vmatprep.subr.bf16.mxu0 0
        %1969 = vmatpush1.bf16.msra.mxu0 0
        %1970 = vmatprep.subr.bf16.mxu0 0
        %1971 = vmatpush1.bf16.msra.mxu0 0
        %1972 = vmatprep.subr.bf16.mxu0 0
        %1973 = vmatpush1.bf16.msra.mxu0 0
        %1974 = vmatprep.subr.bf16.mxu0 0
        %1975 = vmatpush1.bf16.msra.mxu0 0
        %1976 = vmatprep.subr.bf16.mxu0 0
        %1977 = vmatpush1.bf16.msra.mxu0 0
        %1978 = vmatprep.subr.bf16.mxu0 0
        %1979 = vmatpush1.bf16.msra.mxu0 0
        %1980 = vmatprep.subr.bf16.mxu0 0
        %1981 = vmatpush1.bf16.msra.mxu0 0
        %1982 = vmatprep.mubr.bf16.mxu0 0
        %1983 = vmatmul.mubr.bf16.gmra.mrb[0].mxu0 %v1936
        %v1984 = vpop.f32.mrb[0].mxu0
        %v1985 = vadd.f32 %v1868, %v1984
        %v1986 = vpop.f32.mrb[0].mxu0
        %v1987 = vadd.f32 %v1870, %v1986
        %v1988 = vpop.f32.mrb[0].mxu0
        %v1989 = vadd.f32 %v1872, %v1988
        %v1990 = vpop.f32.mrb[0].mxu0
        %v1991 = vadd.f32 %v1874, %v1990
        %1992 = vdwg.mxu0
        %1993 = vmatprep.subr.bf16.mxu0 %v1948
        %1994 = vmatpush1.bf16.msra.mxu0 %v1945
        %1995 = vmatprep.subr.bf16.mxu0 0
        %1996 = vmatpush1.bf16.msra.mxu0 0
        %1997 = vmatprep.subr.bf16.mxu0 0
        %1998 = vmatpush1.bf16.msra.mxu0 0
        %1999 = vmatprep.subr.bf16.mxu0 0
        %2000 = vmatpush1.bf16.msra.mxu0 0
        %2001 = vmatprep.subr.bf16.mxu0 0
        %2002 = vmatpush1.bf16.msra.mxu0 0
        %2003 = vmatprep.subr.bf16.mxu0 0
        %2004 = vmatpush1.bf16.msra.mxu0 0
        %2005 = vmatprep.subr.bf16.mxu0 0
        %2006 = vmatpush1.bf16.msra.mxu0 0
        %2007 = vmatprep.subr.bf16.mxu0 0
        %2008 = vmatpush1.bf16.msra.mxu0 0
        %2009 = vmatprep.subr.bf16.mxu0 0
        %2010 = vmatpush1.bf16.msra.mxu0 0
        %2011 = vmatprep.subr.bf16.mxu0 0
        %2012 = vmatpush1.bf16.msra.mxu0 0
        %2013 = vmatprep.subr.bf16.mxu0 0
        %2014 = vmatpush1.bf16.msra.mxu0 0
        %2015 = vmatprep.subr.bf16.mxu0 0
        %2016 = vmatpush1.bf16.msra.mxu0 0
        %2017 = vmatprep.subr.bf16.mxu0 0
        %2018 = vmatpush1.bf16.msra.mxu0 0
        %2019 = vmatprep.subr.bf16.mxu0 0
        %2020 = vmatpush1.bf16.msra.mxu0 0
        %2021 = vmatprep.subr.bf16.mxu0 0
        %2022 = vmatpush1.bf16.msra.mxu0 0
        %2023 = vmatprep.subr.bf16.mxu0 0
        %2024 = vmatpush1.bf16.msra.mxu0 0
        %2025 = vmatprep.mubr.bf16.mxu0 0
        %2026 = vmatmul.mubr.bf16.gmra.mrb[0].mxu0 %v1936
        %v2027 = vpop.f32.mrb[0].mxu0
        %v2028 = vadd.f32 %v1911, %v2027
        %v2029 = vpop.f32.mrb[0].mxu0
        %v2030 = vadd.f32 %v1913, %v2029
        %v2031 = vpop.f32.mrb[0].mxu0
        %v2032 = vadd.f32 %v1915, %v2031
        %v2033 = vpop.f32.mrb[0].mxu0
        %v2034 = vadd.f32 %v1917, %v2033
        %2035 = vdwg.mxu0
        %s2036 = scalar_lea.vmem %s6, 16
        %v2037 = vld [vmem:[%s2036] sm:$0xf]
        %v2038 = vld [vmem:[%s2036 + $0x4] sm:$0xf]
        %v2041 = vunpack.c.l.b16 %v2037
        %v2042 = vunpack.c.l.b16 %v2038
        %v2043 = vpack.c.b16 %v2042, %v2041
        %2044 = vrot.lane.b32.xlu0 %v1802, 125
        %v2045 = vpop.permute.xlu0 %2044
        %2046 = vrot.lane.b32.xlu0 %v1803, 125
        %v2047 = vpop.permute.xlu0 %2046
        %2048 = vrot.lane.b32.xlu0 %v1804, 125
        %v2049 = vpop.permute.xlu0 %2048
        %2050 = vrot.lane.b32.xlu0 %v1805, 125
        %v2051 = vpop.permute.xlu0 %2050
        %v2052 = vsel %vm741, %v2045, %v2047
        %v2053 = vsel %vm741, %v2047, %v2049
        %v2054 = vsel %vm741, %v2049, %v2051
        %v2056 = vsel %vm1817, %v2043, 0
        %v2059 = vsel %vm1780, %v2052, 0
        %v2062 = vsel %vm1780, %v2053, 0
        %v2065 = vsel %vm1780, %v2054, 0
        %v2068 = vsel %vm1780, %v2051, 0
        %2070 = vmatprep.subr.bf16.mxu0 %v2062
        %2071 = vmatpush1.bf16.msra.mxu0 %v2059
        %2072 = vmatprep.subr.bf16.mxu0 0
        %2073 = vmatpush1.bf16.msra.mxu0 0
        %2074 = vmatprep.subr.bf16.mxu0 0
        %2075 = vmatpush1.bf16.msra.mxu0 0
        %2076 = vmatprep.subr.bf16.mxu0 0
        %2077 = vmatpush1.bf16.msra.mxu0 0
        %2078 = vmatprep.subr.bf16.mxu0 0
        %2079 = vmatpush1.bf16.msra.mxu0 0
        %2080 = vmatprep.subr.bf16.mxu0 0
        %2081 = vmatpush1.bf16.msra.mxu0 0
        %2082 = vmatprep.subr.bf16.mxu0 0
        %2083 = vmatpush1.bf16.msra.mxu0 0
        %2084 = vmatprep.subr.bf16.mxu0 0
        %2085 = vmatpush1.bf16.msra.mxu0 0
        %2086 = vmatprep.subr.bf16.mxu0 0
        %2087 = vmatpush1.bf16.msra.mxu0 0
        %2088 = vmatprep.subr.bf16.mxu0 0
        %2089 = vmatpush1.bf16.msra.mxu0 0
        %2090 = vmatprep.subr.bf16.mxu0 0
        %2091 = vmatpush1.bf16.msra.mxu0 0
        %2092 = vmatprep.subr.bf16.mxu0 0
        %2093 = vmatpush1.bf16.msra.mxu0 0
        %2094 = vmatprep.subr.bf16.mxu0 0
        %2095 = vmatpush1.bf16.msra.mxu0 0
        %2096 = vmatprep.subr.bf16.mxu0 0
        %2097 = vmatpush1.bf16.msra.mxu0 0
        %2098 = vmatprep.subr.bf16.mxu0 0
        %2099 = vmatpush1.bf16.msra.mxu0 0
        %2100 = vmatprep.subr.bf16.mxu0 0
        %2101 = vmatpush1.bf16.msra.mxu0 0
        %2102 = vmatprep.mubr.bf16.mxu0 0
        %2103 = vmatmul.mubr.bf16.gmra.mrb[0].mxu0 %v2056
        %v2104 = vpop.f32.mrb[0].mxu0
        %v2105 = vadd.f32 0.0, %v2104
        %v2106 = vpop.f32.mrb[0].mxu0
        %v2107 = vadd.f32 0.0, %v2106
        %v2108 = vpop.f32.mrb[0].mxu0
        %v2109 = vadd.f32 0.0, %v2108
        %v2110 = vpop.f32.mrb[0].mxu0
        %v2111 = vadd.f32 0.0, %v2110
        %2112 = vdwg.mxu0
        %2113 = vmatprep.subr.bf16.mxu0 %v2068
        %2114 = vmatpush1.bf16.msra.mxu0 %v2065
        %2115 = vmatprep.subr.bf16.mxu0 0
        %2116 = vmatpush1.bf16.msra.mxu0 0
        %2117 = vmatprep.subr.bf16.mxu0 0
        %2118 = vmatpush1.bf16.msra.mxu0 0
        %2119 = vmatprep.subr.bf16.mxu0 0
        %2120 = vmatpush1.bf16.msra.mxu0 0
        %2121 = vmatprep.subr.bf16.mxu0 0
        %2122 = vmatpush1.bf16.msra.mxu0 0
        %2123 = vmatprep.subr.bf16.mxu0 0
        %2124 = vmatpush1.bf16.msra.mxu0 0
        %2125 = vmatprep.subr.bf16.mxu0 0
        %2126 = vmatpush1.bf16.msra.mxu0 0
        %2127 = vmatprep.subr.bf16.mxu0 0
        %2128 = vmatpush1.bf16.msra.mxu0 0
        %2129 = vmatprep.subr.bf16.mxu0 0
        %2130 = vmatpush1.bf16.msra.mxu0 0
        %2131 = vmatprep.subr.bf16.mxu0 0
        %2132 = vmatpush1.bf16.msra.mxu0 0
        %2133 = vmatprep.subr.bf16.mxu0 0
        %2134 = vmatpush1.bf16.msra.mxu0 0
        %2135 = vmatprep.subr.bf16.mxu0 0
        %2136 = vmatpush1.bf16.msra.mxu0 0
        %2137 = vmatprep.subr.bf16.mxu0 0
        %2138 = vmatpush1.bf16.msra.mxu0 0
        %2139 = vmatprep.subr.bf16.mxu0 0
        %2140 = vmatpush1.bf16.msra.mxu0 0
        %2141 = vmatprep.subr.bf16.mxu0 0
        %2142 = vmatpush1.bf16.msra.mxu0 0
        %2143 = vmatprep.subr.bf16.mxu0 0
        %2144 = vmatpush1.bf16.msra.mxu0 0
        %2145 = vmatprep.mubr.bf16.mxu0 0
        %2146 = vmatmul.mubr.bf16.gmra.mrb[0].mxu0 %v2056
        %v2147 = vpop.f32.mrb[0].mxu0
        %v2148 = vadd.f32 0.0, %v2147
        %v2149 = vpop.f32.mrb[0].mxu0
        %v2150 = vadd.f32 0.0, %v2149
        %v2151 = vpop.f32.mrb[0].mxu0
        %v2152 = vadd.f32 0.0, %v2151
        %v2153 = vpop.f32.mrb[0].mxu0
        %v2154 = vadd.f32 0.0, %v2153
        %2155 = vdwg.mxu0
        %v2156 = vadd.f32 %v1985, %v2105
        %v2157 = vadd.f32 %v1987, %v2107
        %v2158 = vadd.f32 %v2028, %v2148
        %v2159 = vadd.f32 %v2030, %v2150
        %v2160 = vadd.f32 %v1989, %v2109
        %v2161 = vadd.f32 %v1991, %v2111
        %v2162 = vadd.f32 %v2032, %v2152
        %v2163 = vadd.f32 %v2034, %v2154
        %s2164 = scalar_lea.vmem %s6, 24
        %v2165 = vld [vmem:[%s2164] sm:$0xf]
        %v2166 = vld [vmem:[%s2164 + $0x4] sm:$0xf]
        %v2169 = vunpack.c.l.b16 %v2165
        %v2170 = vunpack.c.l.b16 %v2166
        %v2171 = vpack.c.b16 %v2170, %v2169
        %2172 = vrot.lane.b32.xlu0 %v1802, 105
        %v2173 = vpop.permute.xlu0 %2172
        %2174 = vrot.lane.b32.xlu0 %v1803, 105
        %v2175 = vpop.permute.xlu0 %2174
        %2176 = vrot.lane.b32.xlu0 %v1804, 105
        %v2177 = vpop.permute.xlu0 %2176
        %2178 = vrot.lane.b32.xlu0 %v1805, 105
        %v2179 = vpop.permute.xlu0 %2178
        %v2180 = vsel %vm875, %v2173, %v2175
        %v2181 = vsel %vm875, %v2175, %v2177
        %v2182 = vsel %vm875, %v2177, %v2179
        %v2184 = vsel %vm1817, %v2171, 0
        %v2187 = vsel %vm1780, %v2180, 0
        %v2190 = vsel %vm1780, %v2181, 0
        %v2193 = vsel %vm1780, %v2182, 0
        %v2196 = vsel %vm1780, %v2179, 0
        %2198 = vmatprep.subr.bf16.mxu0 %v2190
        %2199 = vmatpush1.bf16.msra.mxu0 %v2187
        %2200 = vmatprep.subr.bf16.mxu0 0
        %2201 = vmatpush1.bf16.msra.mxu0 0
        %2202 = vmatprep.subr.bf16.mxu0 0
        %2203 = vmatpush1.bf16.msra.mxu0 0
        %2204 = vmatprep.subr.bf16.mxu0 0
        %2205 = vmatpush1.bf16.msra.mxu0 0
        %2206 = vmatprep.subr.bf16.mxu0 0
        %2207 = vmatpush1.bf16.msra.mxu0 0
        %2208 = vmatprep.subr.bf16.mxu0 0
        %2209 = vmatpush1.bf16.msra.mxu0 0
        %2210 = vmatprep.subr.bf16.mxu0 0
        %2211 = vmatpush1.bf16.msra.mxu0 0
        %2212 = vmatprep.subr.bf16.mxu0 0
        %2213 = vmatpush1.bf16.msra.mxu0 0
        %2214 = vmatprep.subr.bf16.mxu0 0
        %2215 = vmatpush1.bf16.msra.mxu0 0
        %2216 = vmatprep.subr.bf16.mxu0 0
        %2217 = vmatpush1.bf16.msra.mxu0 0
        %2218 = vmatprep.subr.bf16.mxu0 0
        %2219 = vmatpush1.bf16.msra.mxu0 0
        %2220 = vmatprep.subr.bf16.mxu0 0
        %2221 = vmatpush1.bf16.msra.mxu0 0
        %2222 = vmatprep.subr.bf16.mxu0 0
        %2223 = vmatpush1.bf16.msra.mxu0 0
        %2224 = vmatprep.subr.bf16.mxu0 0
        %2225 = vmatpush1.bf16.msra.mxu0 0
        %2226 = vmatprep.subr.bf16.mxu0 0
        %2227 = vmatpush1.bf16.msra.mxu0 0
        %2228 = vmatprep.subr.bf16.mxu0 0
        %2229 = vmatpush1.bf16.msra.mxu0 0
        %2230 = vmatprep.mubr.bf16.mxu0 0
        %2231 = vmatmul.mubr.bf16.gmra.mrb[0].mxu0 %v2184
        %v2232 = vpop.f32.mrb[0].mxu0
        %v2233 = vadd.f32 0.0, %v2232
        %v2234 = vpop.f32.mrb[0].mxu0
        %v2235 = vadd.f32 0.0, %v2234
        %v2236 = vpop.f32.mrb[0].mxu0
        %v2237 = vadd.f32 0.0, %v2236
        %v2238 = vpop.f32.mrb[0].mxu0
        %v2239 = vadd.f32 0.0, %v2238
        %2240 = vdwg.mxu0
        %2241 = vmatprep.subr.bf16.mxu0 %v2196
        %2242 = vmatpush1.bf16.msra.mxu0 %v2193
        %2243 = vmatprep.subr.bf16.mxu0 0
        %2244 = vmatpush1.bf16.msra.mxu0 0
        %2245 = vmatprep.subr.bf16.mxu0 0
        %2246 = vmatpush1.bf16.msra.mxu0 0
        %2247 = vmatprep.subr.bf16.mxu0 0
        %2248 = vmatpush1.bf16.msra.mxu0 0
        %2249 = vmatprep.subr.bf16.mxu0 0
        %2250 = vmatpush1.bf16.msra.mxu0 0
        %2251 = vmatprep.subr.bf16.mxu0 0
        %2252 = vmatpush1.bf16.msra.mxu0 0
        %2253 = vmatprep.subr.bf16.mxu0 0
        %2254 = vmatpush1.bf16.msra.mxu0 0
        %2255 = vmatprep.subr.bf16.mxu0 0
        %2256 = vmatpush1.bf16.msra.mxu0 0
        %2257 = vmatprep.subr.bf16.mxu0 0
        %2258 = vmatpush1.bf16.msra.mxu0 0
        %2259 = vmatprep.subr.bf16.mxu0 0
        %2260 = vmatpush1.bf16.msra.mxu0 0
        %2261 = vmatprep.subr.bf16.mxu0 0
        %2262 = vmatpush1.bf16.msra.mxu0 0
        %2263 = vmatprep.subr.bf16.mxu0 0
        %2264 = vmatpush1.bf16.msra.mxu0 0
        %2265 = vmatprep.subr.bf16.mxu0 0
        %2266 = vmatpush1.bf16.msra.mxu0 0
        %2267 = vmatprep.subr.bf16.mxu0 0
        %2268 = vmatpush1.bf16.msra.mxu0 0
        %2269 = vmatprep.subr.bf16.mxu0 0
        %2270 = vmatpush1.bf16.msra.mxu0 0
        %2271 = vmatprep.subr.bf16.mxu0 0
        %2272 = vmatpush1.bf16.msra.mxu0 0
        %2273 = vmatprep.mubr.bf16.mxu0 0
        %2274 = vmatmul.mubr.bf16.gmra.mrb[0].mxu0 %v2184
        %v2275 = vpop.f32.mrb[0].mxu0
        %v2276 = vadd.f32 0.0, %v2275
        %v2277 = vpop.f32.mrb[0].mxu0
        %v2278 = vadd.f32 0.0, %v2277
        %v2279 = vpop.f32.mrb[0].mxu0
        %v2280 = vadd.f32 0.0, %v2279
        %v2281 = vpop.f32.mrb[0].mxu0
        %v2282 = vadd.f32 0.0, %v2281
        %2283 = vdwg.mxu0
        %v2284 = vadd.f32 %v2156, %v2233
        %v2285 = vadd.f32 %v2157, %v2235
        %v2286 = vadd.f32 %v2158, %v2276
        %v2287 = vadd.f32 %v2159, %v2278
        %v2288 = vadd.f32 %v2160, %v2237
        %v2289 = vadd.f32 %v2161, %v2239
        %v2290 = vadd.f32 %v2162, %v2280
        %v2291 = vadd.f32 %v2163, %v2282
        %s2292 = scalar_lea.vmem %s6, 32
        %v2293 = vld [vmem:[%s2292] sm:$0xf]
        %v2294 = vld [vmem:[%s2292 + $0x4] sm:$0xf]
        %v2297 = vunpack.c.l.b16 %v2293
        %v2298 = vunpack.c.l.b16 %v2294
        %v2299 = vpack.c.b16 %v2298, %v2297
        %2300 = vrot.lane.b32.xlu0 %v1802, 104
        %v2301 = vpop.permute.xlu0 %2300
        %2302 = vrot.lane.b32.xlu0 %v1803, 104
        %v2303 = vpop.permute.xlu0 %2302
        %2304 = vrot.lane.b32.xlu0 %v1804, 104
        %v2305 = vpop.permute.xlu0 %2304
        %2306 = vrot.lane.b32.xlu0 %v1805, 104
        %v2307 = vpop.permute.xlu0 %2306
        %v2308 = vsel %vm1009, %v2301, %v2303
        %v2309 = vsel %vm1009, %v2303, %v2305
        %v2310 = vsel %vm1009, %v2305, %v2307
        %v2312 = vsel %vm1817, %v2299, 0
        %v2315 = vsel %vm1780, %v2308, 0
        %v2318 = vsel %vm1780, %v2309, 0
        %v2321 = vsel %vm1780, %v2310, 0
        %v2324 = vsel %vm1780, %v2307, 0
        %2326 = vmatprep.subr.bf16.mxu0 %v2318
        %2327 = vmatpush1.bf16.msra.mxu0 %v2315
        %2328 = vmatprep.subr.bf16.mxu0 0
        %2329 = vmatpush1.bf16.msra.mxu0 0
        %2330 = vmatprep.subr.bf16.mxu0 0
        %2331 = vmatpush1.bf16.msra.mxu0 0
        %2332 = vmatprep.subr.bf16.mxu0 0
        %2333 = vmatpush1.bf16.msra.mxu0 0
        %2334 = vmatprep.subr.bf16.mxu0 0
        %2335 = vmatpush1.bf16.msra.mxu0 0
        %2336 = vmatprep.subr.bf16.mxu0 0
        %2337 = vmatpush1.bf16.msra.mxu0 0
        %2338 = vmatprep.subr.bf16.mxu0 0
        %2339 = vmatpush1.bf16.msra.mxu0 0
        %2340 = vmatprep.subr.bf16.mxu0 0
        %2341 = vmatpush1.bf16.msra.mxu0 0
        %2342 = vmatprep.subr.bf16.mxu0 0
        %2343 = vmatpush1.bf16.msra.mxu0 0
        %2344 = vmatprep.subr.bf16.mxu0 0
        %2345 = vmatpush1.bf16.msra.mxu0 0
        %2346 = vmatprep.subr.bf16.mxu0 0
        %2347 = vmatpush1.bf16.msra.mxu0 0
        %2348 = vmatprep.subr.bf16.mxu0 0
        %2349 = vmatpush1.bf16.msra.mxu0 0
        %2350 = vmatprep.subr.bf16.mxu0 0
        %2351 = vmatpush1.bf16.msra.mxu0 0
        %2352 = vmatprep.subr.bf16.mxu0 0
        %2353 = vmatpush1.bf16.msra.mxu0 0
        %2354 = vmatprep.subr.bf16.mxu0 0
        %2355 = vmatpush1.bf16.msra.mxu0 0
        %2356 = vmatprep.subr.bf16.mxu0 0
        %2357 = vmatpush1.bf16.msra.mxu0 0
        %2358 = vmatprep.mubr.bf16.mxu0 0
        %2359 = vmatmul.mubr.bf16.gmra.mrb[0].mxu0 %v2312
        %v2360 = vpop.f32.mrb[0].mxu0
        %v2361 = vadd.f32 0.0, %v2360
        %v2362 = vpop.f32.mrb[0].mxu0
        %v2363 = vadd.f32 0.0, %v2362
        %v2364 = vpop.f32.mrb[0].mxu0
        %v2365 = vadd.f32 0.0, %v2364
        %v2366 = vpop.f32.mrb[0].mxu0
        %v2367 = vadd.f32 0.0, %v2366
        %2368 = vdwg.mxu0
        %2369 = vmatprep.subr.bf16.mxu0 %v2324
        %2370 = vmatpush1.bf16.msra.mxu0 %v2321
        %2371 = vmatprep.subr.bf16.mxu0 0
        %2372 = vmatpush1.bf16.msra.mxu0 0
        %2373 = vmatprep.subr.bf16.mxu0 0
        %2374 = vmatpush1.bf16.msra.mxu0 0
        %2375 = vmatprep.subr.bf16.mxu0 0
        %2376 = vmatpush1.bf16.msra.mxu0 0
        %2377 = vmatprep.subr.bf16.mxu0 0
        %2378 = vmatpush1.bf16.msra.mxu0 0
        %2379 = vmatprep.subr.bf16.mxu0 0
        %2380 = vmatpush1.bf16.msra.mxu0 0
        %2381 = vmatprep.subr.bf16.mxu0 0
        %2382 = vmatpush1.bf16.msra.mxu0 0
        %2383 = vmatprep.subr.bf16.mxu0 0
        %2384 = vmatpush1.bf16.msra.mxu0 0
        %2385 = vmatprep.subr.bf16.mxu0 0
        %2386 = vmatpush1.bf16.msra.mxu0 0
        %2387 = vmatprep.subr.bf16.mxu0 0
        %2388 = vmatpush1.bf16.msra.mxu0 0
        %2389 = vmatprep.subr.bf16.mxu0 0
        %2390 = vmatpush1.bf16.msra.mxu0 0
        %2391 = vmatprep.subr.bf16.mxu0 0
        %2392 = vmatpush1.bf16.msra.mxu0 0
        %2393 = vmatprep.subr.bf16.mxu0 0
        %2394 = vmatpush1.bf16.msra.mxu0 0
        %2395 = vmatprep.subr.bf16.mxu0 0
        %2396 = vmatpush1.bf16.msra.mxu0 0
        %2397 = vmatprep.subr.bf16.mxu0 0
        %2398 = vmatpush1.bf16.msra.mxu0 0
        %2399 = vmatprep.subr.bf16.mxu0 0
        %2400 = vmatpush1.bf16.msra.mxu0 0
        %2401 = vmatprep.mubr.bf16.mxu0 0
        %2402 = vmatmul.mubr.bf16.gmra.mrb[0].mxu0 %v2312
        %v2403 = vpop.f32.mrb[0].mxu0
        %v2404 = vadd.f32 0.0, %v2403
        %v2405 = vpop.f32.mrb[0].mxu0
        %v2406 = vadd.f32 0.0, %v2405
        %v2407 = vpop.f32.mrb[0].mxu0
        %v2408 = vadd.f32 0.0, %v2407
        %v2409 = vpop.f32.mrb[0].mxu0
        %v2410 = vadd.f32 0.0, %v2409
        %2411 = vdwg.mxu0
        %v2412 = vadd.f32 %v2284, %v2361
        %v2413 = vadd.f32 %v2285, %v2363
        %v2414 = vadd.f32 %v2286, %v2404
        %v2415 = vadd.f32 %v2287, %v2406
        %v2416 = vadd.f32 %v2288, %v2365
        %v2417 = vadd.f32 %v2289, %v2367
        %v2418 = vadd.f32 %v2290, %v2408
        %v2419 = vadd.f32 %v2291, %v2410
        %s2420 = scalar_lea.vmem %s6, 40
        %v2421 = vld [vmem:[%s2420] sm:$0xf]
        %v2422 = vld [vmem:[%s2420 + $0x4] sm:$0xf]
        %v2425 = vunpack.c.l.b16 %v2421
        %v2426 = vunpack.c.l.b16 %v2422
        %v2427 = vpack.c.b16 %v2426, %v2425
        %2428 = vrot.lane.b32.xlu0 %v1802, 103
        %v2429 = vpop.permute.xlu0 %2428
        %2430 = vrot.lane.b32.xlu0 %v1803, 103
        %v2431 = vpop.permute.xlu0 %2430
        %2432 = vrot.lane.b32.xlu0 %v1804, 103
        %v2433 = vpop.permute.xlu0 %2432
        %2434 = vrot.lane.b32.xlu0 %v1805, 103
        %v2435 = vpop.permute.xlu0 %2434
        %v2436 = vsel %vm1143, %v2429, %v2431
        %v2437 = vsel %vm1143, %v2431, %v2433
        %v2438 = vsel %vm1143, %v2433, %v2435
        %v2440 = vsel %vm1817, %v2427, 0
        %v2443 = vsel %vm1780, %v2436, 0
        %v2446 = vsel %vm1780, %v2437, 0
        %v2449 = vsel %vm1780, %v2438, 0
        %v2452 = vsel %vm1780, %v2435, 0
        %2454 = vmatprep.subr.bf16.mxu0 %v2446
        %2455 = vmatpush1.bf16.msra.mxu0 %v2443
        %2456 = vmatprep.subr.bf16.mxu0 0
        %2457 = vmatpush1.bf16.msra.mxu0 0
        %2458 = vmatprep.subr.bf16.mxu0 0
        %2459 = vmatpush1.bf16.msra.mxu0 0
        %2460 = vmatprep.subr.bf16.mxu0 0
        %2461 = vmatpush1.bf16.msra.mxu0 0
        %2462 = vmatprep.subr.bf16.mxu0 0
        %2463 = vmatpush1.bf16.msra.mxu0 0
        %2464 = vmatprep.subr.bf16.mxu0 0
        %2465 = vmatpush1.bf16.msra.mxu0 0
        %2466 = vmatprep.subr.bf16.mxu0 0
        %2467 = vmatpush1.bf16.msra.mxu0 0
        %2468 = vmatprep.subr.bf16.mxu0 0
        %2469 = vmatpush1.bf16.msra.mxu0 0
        %2470 = vmatprep.subr.bf16.mxu0 0
        %2471 = vmatpush1.bf16.msra.mxu0 0
        %2472 = vmatprep.subr.bf16.mxu0 0
        %2473 = vmatpush1.bf16.msra.mxu0 0
        %2474 = vmatprep.subr.bf16.mxu0 0
        %2475 = vmatpush1.bf16.msra.mxu0 0
        %2476 = vmatprep.subr.bf16.mxu0 0
        %2477 = vmatpush1.bf16.msra.mxu0 0
        %2478 = vmatprep.subr.bf16.mxu0 0
        %2479 = vmatpush1.bf16.msra.mxu0 0
        %2480 = vmatprep.subr.bf16.mxu0 0
        %2481 = vmatpush1.bf16.msra.mxu0 0
        %2482 = vmatprep.subr.bf16.mxu0 0
        %2483 = vmatpush1.bf16.msra.mxu0 0
        %2484 = vmatprep.subr.bf16.mxu0 0
        %2485 = vmatpush1.bf16.msra.mxu0 0
        %2486 = vmatprep.mubr.bf16.mxu0 0
        %2487 = vmatmul.mubr.bf16.gmra.mrb[0].mxu0 %v2440
        %v2488 = vpop.f32.mrb[0].mxu0
        %v2489 = vadd.f32 0.0, %v2488
        %v2490 = vpop.f32.mrb[0].mxu0
        %v2491 = vadd.f32 0.0, %v2490
        %v2492 = vpop.f32.mrb[0].mxu0
        %v2493 = vadd.f32 0.0, %v2492
        %v2494 = vpop.f32.mrb[0].mxu0
        %v2495 = vadd.f32 0.0, %v2494
        %2496 = vdwg.mxu0
        %2497 = vmatprep.subr.bf16.mxu0 %v2452
        %2498 = vmatpush1.bf16.msra.mxu0 %v2449
        %2499 = vmatprep.subr.bf16.mxu0 0
        %2500 = vmatpush1.bf16.msra.mxu0 0
        %2501 = vmatprep.subr.bf16.mxu0 0
        %2502 = vmatpush1.bf16.msra.mxu0 0
        %2503 = vmatprep.subr.bf16.mxu0 0
        %2504 = vmatpush1.bf16.msra.mxu0 0
        %2505 = vmatprep.subr.bf16.mxu0 0
        %2506 = vmatpush1.bf16.msra.mxu0 0
        %2507 = vmatprep.subr.bf16.mxu0 0
        %2508 = vmatpush1.bf16.msra.mxu0 0
        %2509 = vmatprep.subr.bf16.mxu0 0
        %2510 = vmatpush1.bf16.msra.mxu0 0
        %2511 = vmatprep.subr.bf16.mxu0 0
        %2512 = vmatpush1.bf16.msra.mxu0 0
        %2513 = vmatprep.subr.bf16.mxu0 0
        %2514 = vmatpush1.bf16.msra.mxu0 0
        %2515 = vmatprep.subr.bf16.mxu0 0
        %2516 = vmatpush1.bf16.msra.mxu0 0
        %2517 = vmatprep.subr.bf16.mxu0 0
        %2518 = vmatpush1.bf16.msra.mxu0 0
        %2519 = vmatprep.subr.bf16.mxu0 0
        %2520 = vmatpush1.bf16.msra.mxu0 0
        %2521 = vmatprep.subr.bf16.mxu0 0
        %2522 = vmatpush1.bf16.msra.mxu0 0
        %2523 = vmatprep.subr.bf16.mxu0 0
        %2524 = vmatpush1.bf16.msra.mxu0 0
        %2525 = vmatprep.subr.bf16.mxu0 0
        %2526 = vmatpush1.bf16.msra.mxu0 0
        %2527 = vmatprep.subr.bf16.mxu0 0
        %2528 = vmatpush1.bf16.msra.mxu0 0
        %2529 = vmatprep.mubr.bf16.mxu0 0
        %2530 = vmatmul.mubr.bf16.gmra.mrb[0].mxu0 %v2440
        %v2531 = vpop.f32.mrb[0].mxu0
        %v2532 = vadd.f32 0.0, %v2531
        %v2533 = vpop.f32.mrb[0].mxu0
        %v2534 = vadd.f32 0.0, %v2533
        %v2535 = vpop.f32.mrb[0].mxu0
        %v2536 = vadd.f32 0.0, %v2535
        %v2537 = vpop.f32.mrb[0].mxu0
        %v2538 = vadd.f32 0.0, %v2537
        %2539 = vdwg.mxu0
        %v2540 = vadd.f32 %v2412, %v2489
        %v2541 = vadd.f32 %v2413, %v2491
        %v2542 = vadd.f32 %v2414, %v2532
        %v2543 = vadd.f32 %v2415, %v2534
        %v2544 = vadd.f32 %v2416, %v2493
        %v2545 = vadd.f32 %v2417, %v2495
        %v2546 = vadd.f32 %v2418, %v2536
        %v2547 = vadd.f32 %v2419, %v2538
        %v2548 = vld [vmem:[#allocation2] sm:$0xff]
        %v2549 = vld [vmem:[#allocation2 + $0x8] sm:$0xff]
        %v2550 = vld [vmem:[#allocation2 + $0x10] sm:$0xf]
        %s2551 = scalar_lea.vmem %s6, 48
        %v2552 = vld [vmem:[%s2551] sm:$0xf]
        %v2553 = vld [vmem:[%s2551 + $0x4] sm:$0xf]
        %v2556 = vunpack.c.l.b16 %v2552
        %v2557 = vunpack.c.l.b16 %v2553
        %v2558 = vpack.c.b16 %v2557, %v2556
        %v2562 = vunpack.c.l.b16 %v2548
        %v2563 = vunpack.c.h.b16 %v2548
        %v2564 = vunpack.c.l.b16 %v2549
        %v2565 = vunpack.c.h.b16 %v2549
        %v2566 = vunpack.c.l.b16 %v2550
        %v2567 = vpack.c.b16 %v2562, %v2562
        %v2568 = vpack.c.b16 %v2563, %v2563
        %v2569 = vpack.c.b16 %v2564, %v2564
        %v2570 = vpack.c.b16 %v2565, %v2565
        %v2571 = vpack.c.b16 %v2566, %v2566
        %2572 = vrot.lane.b32.xlu0 %v2567, 83
        %v2573 = vpop.permute.xlu0 %2572
        %2574 = vrot.lane.b32.xlu0 %v2568, 83
        %v2575 = vpop.permute.xlu0 %2574
        %2576 = vrot.lane.b32.xlu0 %v2569, 83
        %v2577 = vpop.permute.xlu0 %2576
        %2578 = vrot.lane.b32.xlu0 %v2570, 83
        %v2579 = vpop.permute.xlu0 %2578
        %2580 = vrot.lane.b32.xlu0 %v2571, 83
        %v2581 = vpop.permute.xlu0 %2580
        %v2582 = vsel %vm1288, %v2573, %v2575
        %v2583 = vsel %vm1288, %v2575, %v2577
        %v2584 = vsel %vm1288, %v2577, %v2579
        %v2585 = vsel %vm1288, %v2579, %v2581
        %v2587 = vsel %vm1817, %v2558, 0
        %v2590 = vsel %vm1780, %v2582, 0
        %v2593 = vsel %vm1780, %v2583, 0
        %v2596 = vsel %vm1780, %v2584, 0
        %v2599 = vsel %vm1780, %v2585, 0
        %2601 = vmatprep.subr.bf16.mxu0 %v2593
        %2602 = vmatpush1.bf16.msra.mxu0 %v2590
        %2603 = vmatprep.subr.bf16.mxu0 0
        %2604 = vmatpush1.bf16.msra.mxu0 0
        %2605 = vmatprep.subr.bf16.mxu0 0
        %2606 = vmatpush1.bf16.msra.mxu0 0
        %2607 = vmatprep.subr.bf16.mxu0 0
        %2608 = vmatpush1.bf16.msra.mxu0 0
        %2609 = vmatprep.subr.bf16.mxu0 0
        %2610 = vmatpush1.bf16.msra.mxu0 0
        %2611 = vmatprep.subr.bf16.mxu0 0
        %2612 = vmatpush1.bf16.msra.mxu0 0
        %2613 = vmatprep.subr.bf16.mxu0 0
        %2614 = vmatpush1.bf16.msra.mxu0 0
        %2615 = vmatprep.subr.bf16.mxu0 0
        %2616 = vmatpush1.bf16.msra.mxu0 0
        %2617 = vmatprep.subr.bf16.mxu0 0
        %2618 = vmatpush1.bf16.msra.mxu0 0
        %2619 = vmatprep.subr.bf16.mxu0 0
        %2620 = vmatpush1.bf16.msra.mxu0 0
        %2621 = vmatprep.subr.bf16.mxu0 0
        %2622 = vmatpush1.bf16.msra.mxu0 0
        %2623 = vmatprep.subr.bf16.mxu0 0
        %2624 = vmatpush1.bf16.msra.mxu0 0
        %2625 = vmatprep.subr.bf16.mxu0 0
        %2626 = vmatpush1.bf16.msra.mxu0 0
        %2627 = vmatprep.subr.bf16.mxu0 0
        %2628 = vmatpush1.bf16.msra.mxu0 0
        %2629 = vmatprep.subr.bf16.mxu0 0
        %2630 = vmatpush1.bf16.msra.mxu0 0
        %2631 = vmatprep.subr.bf16.mxu0 0
        %2632 = vmatpush1.bf16.msra.mxu0 0
        %2633 = vmatprep.mubr.bf16.mxu0 0
        %2634 = vmatmul.mubr.bf16.gmra.mrb[0].mxu0 %v2587
        %v2635 = vpop.f32.mrb[0].mxu0
        %v2636 = vadd.f32 0.0, %v2635
        %v2637 = vpop.f32.mrb[0].mxu0
        %v2638 = vadd.f32 0.0, %v2637
        %v2639 = vpop.f32.mrb[0].mxu0
        %v2640 = vadd.f32 0.0, %v2639
        %v2641 = vpop.f32.mrb[0].mxu0
        %v2642 = vadd.f32 0.0, %v2641
        %2643 = vdwg.mxu0
        %2644 = vmatprep.subr.bf16.mxu0 %v2599
        %2645 = vmatpush1.bf16.msra.mxu0 %v2596
        %2646 = vmatprep.subr.bf16.mxu0 0
        %2647 = vmatpush1.bf16.msra.mxu0 0
        %2648 = vmatprep.subr.bf16.mxu0 0
        %2649 = vmatpush1.bf16.msra.mxu0 0
        %2650 = vmatprep.subr.bf16.mxu0 0
        %2651 = vmatpush1.bf16.msra.mxu0 0
        %2652 = vmatprep.subr.bf16.mxu0 0
        %2653 = vmatpush1.bf16.msra.mxu0 0
        %2654 = vmatprep.subr.bf16.mxu0 0
        %2655 = vmatpush1.bf16.msra.mxu0 0
        %2656 = vmatprep.subr.bf16.mxu0 0
        %2657 = vmatpush1.bf16.msra.mxu0 0
        %2658 = vmatprep.subr.bf16.mxu0 0
        %2659 = vmatpush1.bf16.msra.mxu0 0
        %2660 = vmatprep.subr.bf16.mxu0 0
        %2661 = vmatpush1.bf16.msra.mxu0 0
        %2662 = vmatprep.subr.bf16.mxu0 0
        %2663 = vmatpush1.bf16.msra.mxu0 0
        %2664 = vmatprep.subr.bf16.mxu0 0
        %2665 = vmatpush1.bf16.msra.mxu0 0
        %2666 = vmatprep.subr.bf16.mxu0 0
        %2667 = vmatpush1.bf16.msra.mxu0 0
        %2668 = vmatprep.subr.bf16.mxu0 0
        %2669 = vmatpush1.bf16.msra.mxu0 0
        %2670 = vmatprep.subr.bf16.mxu0 0
        %2671 = vmatpush1.bf16.msra.mxu0 0
        %2672 = vmatprep.subr.bf16.mxu0 0
        %2673 = vmatpush1.bf16.msra.mxu0 0
        %2674 = vmatprep.subr.bf16.mxu0 0
        %2675 = vmatpush1.bf16.msra.mxu0 0
        %2676 = vmatprep.mubr.bf16.mxu0 0
        %2677 = vmatmul.mubr.bf16.gmra.mrb[0].mxu0 %v2587
        %v2678 = vpop.f32.mrb[0].mxu0
        %v2679 = vadd.f32 0.0, %v2678
        %v2680 = vpop.f32.mrb[0].mxu0
        %v2681 = vadd.f32 0.0, %v2680
        %v2682 = vpop.f32.mrb[0].mxu0
        %v2683 = vadd.f32 0.0, %v2682
        %v2684 = vpop.f32.mrb[0].mxu0
        %v2685 = vadd.f32 0.0, %v2684
        %2686 = vdwg.mxu0
        %v2687 = vadd.f32 %v2540, %v2636
        %v2688 = vadd.f32 %v2541, %v2638
        %v2689 = vadd.f32 %v2542, %v2679
        %v2690 = vadd.f32 %v2543, %v2681
        %v2691 = vadd.f32 %v2544, %v2640
        %v2692 = vadd.f32 %v2545, %v2642
        %v2693 = vadd.f32 %v2546, %v2683
        %v2694 = vadd.f32 %v2547, %v2685
        %s2695 = scalar_lea.vmem %s6, 56
        %v2696 = vld [vmem:[%s2695] sm:$0xf]
        %v2697 = vld [vmem:[%s2695 + $0x4] sm:$0xf]
        %v2700 = vunpack.c.l.b16 %v2696
        %v2701 = vunpack.c.l.b16 %v2697
        %v2702 = vpack.c.b16 %v2701, %v2700
        %2703 = vrot.lane.b32.xlu0 %v2567, 82
        %v2704 = vpop.permute.xlu0 %2703
        %2705 = vrot.lane.b32.xlu0 %v2568, 82
        %v2706 = vpop.permute.xlu0 %2705
        %2707 = vrot.lane.b32.xlu0 %v2569, 82
        %v2708 = vpop.permute.xlu0 %2707
        %2709 = vrot.lane.b32.xlu0 %v2570, 82
        %v2710 = vpop.permute.xlu0 %2709
        %2711 = vrot.lane.b32.xlu0 %v2571, 82
        %v2712 = vpop.permute.xlu0 %2711
        %v2713 = vsel %vm1434, %v2704, %v2706
        %v2714 = vsel %vm1434, %v2706, %v2708
        %v2715 = vsel %vm1434, %v2708, %v2710
        %v2716 = vsel %vm1434, %v2710, %v2712
        %v2718 = vsel %vm1817, %v2702, 0
        %v2721 = vsel %vm1780, %v2713, 0
        %v2724 = vsel %vm1780, %v2714, 0
        %v2727 = vsel %vm1780, %v2715, 0
        %v2730 = vsel %vm1780, %v2716, 0
        %2732 = vmatprep.subr.bf16.mxu0 %v2724
        %2733 = vmatpush1.bf16.msra.mxu0 %v2721
        %2734 = vmatprep.subr.bf16.mxu0 0
        %2735 = vmatpush1.bf16.msra.mxu0 0
        %2736 = vmatprep.subr.bf16.mxu0 0
        %2737 = vmatpush1.bf16.msra.mxu0 0
        %2738 = vmatprep.subr.bf16.mxu0 0
        %2739 = vmatpush1.bf16.msra.mxu0 0
        %2740 = vmatprep.subr.bf16.mxu0 0
        %2741 = vmatpush1.bf16.msra.mxu0 0
        %2742 = vmatprep.subr.bf16.mxu0 0
        %2743 = vmatpush1.bf16.msra.mxu0 0
        %2744 = vmatprep.subr.bf16.mxu0 0
        %2745 = vmatpush1.bf16.msra.mxu0 0
        %2746 = vmatprep.subr.bf16.mxu0 0
        %2747 = vmatpush1.bf16.msra.mxu0 0
        %2748 = vmatprep.subr.bf16.mxu0 0
        %2749 = vmatpush1.bf16.msra.mxu0 0
        %2750 = vmatprep.subr.bf16.mxu0 0
        %2751 = vmatpush1.bf16.msra.mxu0 0
        %2752 = vmatprep.subr.bf16.mxu0 0
        %2753 = vmatpush1.bf16.msra.mxu0 0
        %2754 = vmatprep.subr.bf16.mxu0 0
        %2755 = vmatpush1.bf16.msra.mxu0 0
        %2756 = vmatprep.subr.bf16.mxu0 0
        %2757 = vmatpush1.bf16.msra.mxu0 0
        %2758 = vmatprep.subr.bf16.mxu0 0
        %2759 = vmatpush1.bf16.msra.mxu0 0
        %2760 = vmatprep.subr.bf16.mxu0 0
        %2761 = vmatpush1.bf16.msra.mxu0 0
        %2762 = vmatprep.subr.bf16.mxu0 0
        %2763 = vmatpush1.bf16.msra.mxu0 0
        %2764 = vmatprep.mubr.bf16.mxu0 0
        %2765 = vmatmul.mubr.bf16.gmra.mrb[0].mxu0 %v2718
        %v2766 = vpop.f32.mrb[0].mxu0
        %v2767 = vadd.f32 0.0, %v2766
        %v2768 = vpop.f32.mrb[0].mxu0
        %v2769 = vadd.f32 0.0, %v2768
        %v2770 = vpop.f32.mrb[0].mxu0
        %v2771 = vadd.f32 0.0, %v2770
        %v2772 = vpop.f32.mrb[0].mxu0
        %v2773 = vadd.f32 0.0, %v2772
        %2774 = vdwg.mxu0
        %2775 = vmatprep.subr.bf16.mxu0 %v2730
        %2776 = vmatpush1.bf16.msra.mxu0 %v2727
        %2777 = vmatprep.subr.bf16.mxu0 0
        %2778 = vmatpush1.bf16.msra.mxu0 0
        %2779 = vmatprep.subr.bf16.mxu0 0
        %2780 = vmatpush1.bf16.msra.mxu0 0
        %2781 = vmatprep.subr.bf16.mxu0 0
        %2782 = vmatpush1.bf16.msra.mxu0 0
        %2783 = vmatprep.subr.bf16.mxu0 0
        %2784 = vmatpush1.bf16.msra.mxu0 0
        %2785 = vmatprep.subr.bf16.mxu0 0
        %2786 = vmatpush1.bf16.msra.mxu0 0
        %2787 = vmatprep.subr.bf16.mxu0 0
        %2788 = vmatpush1.bf16.msra.mxu0 0
        %2789 = vmatprep.subr.bf16.mxu0 0
        %2790 = vmatpush1.bf16.msra.mxu0 0
        %2791 = vmatprep.subr.bf16.mxu0 0
        %2792 = vmatpush1.bf16.msra.mxu0 0
        %2793 = vmatprep.subr.bf16.mxu0 0
        %2794 = vmatpush1.bf16.msra.mxu0 0
        %2795 = vmatprep.subr.bf16.mxu0 0
        %2796 = vmatpush1.bf16.msra.mxu0 0
        %2797 = vmatprep.subr.bf16.mxu0 0
        %2798 = vmatpush1.bf16.msra.mxu0 0
        %2799 = vmatprep.subr.bf16.mxu0 0
        %2800 = vmatpush1.bf16.msra.mxu0 0
        %2801 = vmatprep.subr.bf16.mxu0 0
        %2802 = vmatpush1.bf16.msra.mxu0 0
        %2803 = vmatprep.subr.bf16.mxu0 0
        %2804 = vmatpush1.bf16.msra.mxu0 0
        %2805 = vmatprep.subr.bf16.mxu0 0
        %2806 = vmatpush1.bf16.msra.mxu0 0
        %2807 = vmatprep.mubr.bf16.mxu0 0
        %2808 = vmatmul.mubr.bf16.gmra.mrb[0].mxu0 %v2718
        %v2809 = vpop.f32.mrb[0].mxu0
        %v2810 = vadd.f32 0.0, %v2809
        %v2811 = vpop.f32.mrb[0].mxu0
        %v2812 = vadd.f32 0.0, %v2811
        %v2813 = vpop.f32.mrb[0].mxu0
        %v2814 = vadd.f32 0.0, %v2813
        %v2815 = vpop.f32.mrb[0].mxu0
        %v2816 = vadd.f32 0.0, %v2815
        %2817 = vdwg.mxu0
        %v2818 = vadd.f32 %v2687, %v2767
        %v2819 = vadd.f32 %v2688, %v2769
        %v2820 = vadd.f32 %v2689, %v2810
        %v2821 = vadd.f32 %v2690, %v2812
        %v2822 = vadd.f32 %v2691, %v2771
        %v2823 = vadd.f32 %v2692, %v2773
        %v2824 = vadd.f32 %v2693, %v2814
        %v2825 = vadd.f32 %v2694, %v2816
        %s2826 = scalar_lea.vmem %s6, 64
        %v2827 = vld [vmem:[%s2826] sm:$0xf]
        %v2828 = vld [vmem:[%s2826 + $0x4] sm:$0xf]
        %v2831 = vunpack.c.l.b16 %v2827
        %v2832 = vunpack.c.l.b16 %v2828
        %v2833 = vpack.c.b16 %v2832, %v2831
        %2834 = vrot.lane.b32.xlu0 %v2567, 81
        %v2835 = vpop.permute.xlu0 %2834
        %2836 = vrot.lane.b32.xlu0 %v2568, 81
        %v2837 = vpop.permute.xlu0 %2836
        %2838 = vrot.lane.b32.xlu0 %v2569, 81
        %v2839 = vpop.permute.xlu0 %2838
        %2840 = vrot.lane.b32.xlu0 %v2570, 81
        %v2841 = vpop.permute.xlu0 %2840
        %2842 = vrot.lane.b32.xlu0 %v2571, 81
        %v2843 = vpop.permute.xlu0 %2842
        %v2844 = vsel %vm1580, %v2835, %v2837
        %v2845 = vsel %vm1580, %v2837, %v2839
        %v2846 = vsel %vm1580, %v2839, %v2841
        %v2847 = vsel %vm1580, %v2841, %v2843
        %v2849 = vsel %vm1817, %v2833, 0
        %v2852 = vsel %vm1780, %v2844, 0
        %v2855 = vsel %vm1780, %v2845, 0
        %v2858 = vsel %vm1780, %v2846, 0
        %v2861 = vsel %vm1780, %v2847, 0
        %2863 = vmatprep.subr.bf16.mxu0 %v2855
        %2864 = vmatpush1.bf16.msra.mxu0 %v2852
        %2865 = vmatprep.subr.bf16.mxu0 0
        %2866 = vmatpush1.bf16.msra.mxu0 0
        %2867 = vmatprep.subr.bf16.mxu0 0
        %2868 = vmatpush1.bf16.msra.mxu0 0
        %2869 = vmatprep.subr.bf16.mxu0 0
        %2870 = vmatpush1.bf16.msra.mxu0 0
        %2871 = vmatprep.subr.bf16.mxu0 0
        %2872 = vmatpush1.bf16.msra.mxu0 0
        %2873 = vmatprep.subr.bf16.mxu0 0
        %2874 = vmatpush1.bf16.msra.mxu0 0
        %2875 = vmatprep.subr.bf16.mxu0 0
        %2876 = vmatpush1.bf16.msra.mxu0 0
        %2877 = vmatprep.subr.bf16.mxu0 0
        %2878 = vmatpush1.bf16.msra.mxu0 0
        %2879 = vmatprep.subr.bf16.mxu0 0
        %2880 = vmatpush1.bf16.msra.mxu0 0
        %2881 = vmatprep.subr.bf16.mxu0 0
        %2882 = vmatpush1.bf16.msra.mxu0 0
        %2883 = vmatprep.subr.bf16.mxu0 0
        %2884 = vmatpush1.bf16.msra.mxu0 0
        %2885 = vmatprep.subr.bf16.mxu0 0
        %2886 = vmatpush1.bf16.msra.mxu0 0
        %2887 = vmatprep.subr.bf16.mxu0 0
        %2888 = vmatpush1.bf16.msra.mxu0 0
        %2889 = vmatprep.subr.bf16.mxu0 0
        %2890 = vmatpush1.bf16.msra.mxu0 0
        %2891 = vmatprep.subr.bf16.mxu0 0
        %2892 = vmatpush1.bf16.msra.mxu0 0
        %2893 = vmatprep.subr.bf16.mxu0 0
        %2894 = vmatpush1.bf16.msra.mxu0 0
        %2895 = vmatprep.mubr.bf16.mxu0 0
        %2896 = vmatmul.mubr.bf16.gmra.mrb[0].mxu0 %v2849
        %v2897 = vpop.f32.mrb[0].mxu0
        %v2898 = vadd.f32 0.0, %v2897
        %v2899 = vpop.f32.mrb[0].mxu0
        %v2900 = vadd.f32 0.0, %v2899
        %v2901 = vpop.f32.mrb[0].mxu0
        %v2902 = vadd.f32 0.0, %v2901
        %v2903 = vpop.f32.mrb[0].mxu0
        %v2904 = vadd.f32 0.0, %v2903
        %2905 = vdwg.mxu0
        %2906 = vmatprep.subr.bf16.mxu0 %v2861
        %2907 = vmatpush1.bf16.msra.mxu0 %v2858
        %2908 = vmatprep.subr.bf16.mxu0 0
        %2909 = vmatpush1.bf16.msra.mxu0 0
        %2910 = vmatprep.subr.bf16.mxu0 0
        %2911 = vmatpush1.bf16.msra.mxu0 0
        %2912 = vmatprep.subr.bf16.mxu0 0
        %2913 = vmatpush1.bf16.msra.mxu0 0
        %2914 = vmatprep.subr.bf16.mxu0 0
        %2915 = vmatpush1.bf16.msra.mxu0 0
        %2916 = vmatprep.subr.bf16.mxu0 0
        %2917 = vmatpush1.bf16.msra.mxu0 0
        %2918 = vmatprep.subr.bf16.mxu0 0
        %2919 = vmatpush1.bf16.msra.mxu0 0
        %2920 = vmatprep.subr.bf16.mxu0 0
        %2921 = vmatpush1.bf16.msra.mxu0 0
        %2922 = vmatprep.subr.bf16.mxu0 0
        %2923 = vmatpush1.bf16.msra.mxu0 0
        %2924 = vmatprep.subr.bf16.mxu0 0
        %2925 = vmatpush1.bf16.msra.mxu0 0
        %2926 = vmatprep.subr.bf16.mxu0 0
        %2927 = vmatpush1.bf16.msra.mxu0 0
        %2928 = vmatprep.subr.bf16.mxu0 0
        %2929 = vmatpush1.bf16.msra.mxu0 0
        %2930 = vmatprep.subr.bf16.mxu0 0
        %2931 = vmatpush1.bf16.msra.mxu0 0
        %2932 = vmatprep.subr.bf16.mxu0 0
        %2933 = vmatpush1.bf16.msra.mxu0 0
        %2934 = vmatprep.subr.bf16.mxu0 0
        %2935 = vmatpush1.bf16.msra.mxu0 0
        %2936 = vmatprep.subr.bf16.mxu0 0
        %2937 = vmatpush1.bf16.msra.mxu0 0
        %2938 = vmatprep.mubr.bf16.mxu0 0
        %2939 = vmatmul.mubr.bf16.gmra.mrb[0].mxu0 %v2849
        %v2940 = vpop.f32.mrb[0].mxu0
        %v2941 = vadd.f32 0.0, %v2940
        %v2942 = vpop.f32.mrb[0].mxu0
        %v2943 = vadd.f32 0.0, %v2942
        %v2944 = vpop.f32.mrb[0].mxu0
        %v2945 = vadd.f32 0.0, %v2944
        %v2946 = vpop.f32.mrb[0].mxu0
        %v2947 = vadd.f32 0.0, %v2946
        %2948 = vdwg.mxu0
        %v2949 = vadd.f32 %v2818, %v2898
        %v2950 = vadd.f32 %v2819, %v2900
        %v2951 = vadd.f32 %v2820, %v2941
        %v2952 = vadd.f32 %v2821, %v2943
        %v2953 = vadd.f32 %v2822, %v2902
        %v2954 = vadd.f32 %v2823, %v2904
        %v2955 = vadd.f32 %v2824, %v2945
        %v2956 = vadd.f32 %v2825, %v2947
        %v2957 = vld [vmem:[%s7] sm:$0xff]
        %v2958 = vld [vmem:[%s7 + $0x8] sm:$0xff]
        %2960 = vset.pattern.permute.xlu0 0
        %2961 = vperm.xlu0 %2960, %v2957
        %v2962 = vpop.permute.xlu0 %2961
        %2965 = vset.pattern.permute.xlu0 0
        %2966 = vperm.xlu0 %2965, %v2958
        %v2967 = vpop.permute.xlu0 %2966
        %v2969 = vadd.f32 %v2949, %v2962
        %v2970 = vadd.f32 %v2950, %v2962
        %v2971 = vadd.f32 %v2951, %v2962
        %v2972 = vadd.f32 %v2952, %v2962
        %v2973 = vadd.f32 %v2953, %v2967
        %v2974 = vadd.f32 %v2954, %v2967
        %v2975 = vadd.f32 %v2955, %v2967
        %v2976 = vadd.f32 %v2956, %v2967
        %v2977 = vmax.f32 %v2969, 0.0
        %v2978 = vmax.f32 %v2970, 0.0
        %v2979 = vmax.f32 %v2971, 0.0
        %v2980 = vmax.f32 %v2972, 0.0
        %v2981 = vmax.f32 %v2973, 0.0
        %v2982 = vmax.f32 %v2974, 0.0
        %v2983 = vmax.f32 %v2975, 0.0
        %v2984 = vmax.f32 %v2976, 0.0
        %v2985 = vld [vmem:[%s8] sm:$0xff]
        %v2986 = vld [vmem:[%s8 + $0x8] sm:$0xff]
        %2988 = vset.pattern.permute.xlu0 0
        %2989 = vperm.xlu0 %2988, %v2985
        %v2990 = vpop.permute.xlu0 %2989
        %2993 = vset.pattern.permute.xlu0 0
        %2994 = vperm.xlu0 %2993, %v2986
        %v2995 = vpop.permute.xlu0 %2994
        %v2997 = vmul.f32 %v2977, %v2990
        %v2998 = vmul.f32 %v2978, %v2990
        %v2999 = vmul.f32 %v2979, %v2990
        %v3000 = vmul.f32 %v2980, %v2990
        %v3001 = vmul.f32 %v2981, %v2995
        %v3002 = vmul.f32 %v2982, %v2995
        %v3003 = vmul.f32 %v2983, %v2995
        %v3004 = vmul.f32 %v2984, %v2995
        %v3005 = vld [vmem:[%s9] sm:$0xff]
        %v3006 = vld [vmem:[%s9 + $0x8] sm:$0xff]
        %3008 = vset.pattern.permute.xlu0 0
        %3009 = vperm.xlu0 %3008, %v3005
        %v3010 = vpop.permute.xlu0 %3009
        %3013 = vset.pattern.permute.xlu0 0
        %3014 = vperm.xlu0 %3013, %v3006
        %v3015 = vpop.permute.xlu0 %3014
        %v3017 = vadd.f32 %v2997, %v3010
        %v3018 = vadd.f32 %v2998, %v3010
        %v3019 = vadd.f32 %v2999, %v3010
        %v3020 = vadd.f32 %v3000, %v3010
        %v3021 = vadd.f32 %v3001, %v3015
        %v3022 = vadd.f32 %v3002, %v3015
        %v3023 = vadd.f32 %v3003, %v3015
        %v3024 = vadd.f32 %v3004, %v3015
        %v3025 = vmul.f32 %v3017, %v1724
        %v3026 = vmul.f32 %v3018, %v1728
        %v3027 = vmul.f32 %v3019, %v1732
        %v3028 = vmul.f32 %v3020, %v1736
        %v3029 = vmul.f32 %v3021, %v1724
        %v3030 = vmul.f32 %v3022, %v1728
        %v3031 = vmul.f32 %v3023, %v1732
        %v3032 = vmul.f32 %v3024, %v1736
        %v3033 = vpack.c.bf16 %v3029, %v3025
        %v3034 = vpack.c.bf16 %v3030, %v3026
        %v3035 = vpack.c.bf16 %v3031, %v3027
        %v3036 = vpack.c.bf16 %v3032, %v3028
        %v3037 = vld [vmem:[%s10] sm:$0xf]
        %v3038 = vld [vmem:[%s10 + $0x4] sm:$0xf]
        %v3039 = vld [vmem:[%s10 + $0x8] sm:$0xf]
        %v3040 = vld [vmem:[%s10 + $0xc] sm:$0xf]
        %v3041 = vld [vmem:[%s10 + $0x10] sm:$0xf]
        %v3042 = vld [vmem:[%s10 + $0x14] sm:$0xf]
        %v3043 = vld [vmem:[%s10 + $0x18] sm:$0xf]
        %v3044 = vld [vmem:[%s10 + $0x1c] sm:$0xf]
        %v3045 = vld [vmem:[%s10 + $0x20] sm:$0xf]
        %v3046 = vld [vmem:[%s10 + $0x24] sm:$0xf]
        %v3047 = vld [vmem:[%s10 + $0x28] sm:$0xf]
        %v3048 = vld [vmem:[%s10 + $0x2c] sm:$0xf]
        %v3049 = vld [vmem:[%s10 + $0x30] sm:$0xf]
        %v3050 = vld [vmem:[%s10 + $0x34] sm:$0xf]
        %v3051 = vld [vmem:[%s10 + $0x38] sm:$0xf]
        %v3052 = vld [vmem:[%s10 + $0x3c] sm:$0xf]
        %v3053 = vld [vmem:[%s10 + $0x40] sm:$0xf]
        %v3054 = vld [vmem:[%s10 + $0x44] sm:$0xf]
        %v3055 = vld [vmem:[%s10 + $0x48] sm:$0xf]
        %v3056 = vld [vmem:[%s10 + $0x4c] sm:$0xf]
        %v3057 = vld [vmem:[%s10 + $0x50] sm:$0xf]
        %v3058 = vld [vmem:[%s10 + $0x54] sm:$0xf]
        %v3059 = vld [vmem:[%s10 + $0x58] sm:$0xf]
        %v3060 = vld [vmem:[%s10 + $0x5c] sm:$0xf]
        %v3061 = vld [vmem:[%s10 + $0x60] sm:$0xf]
        %v3062 = vld [vmem:[%s10 + $0x64] sm:$0xf]
        %v3063 = vld [vmem:[%s10 + $0x68] sm:$0xf]
        %v3064 = vld [vmem:[%s10 + $0x6c] sm:$0xf]
        %v3065 = vld [vmem:[%s10 + $0x70] sm:$0xf]
        %v3066 = vld [vmem:[%s10 + $0x74] sm:$0xf]
        %v3067 = vld [vmem:[%s10 + $0x78] sm:$0xf]
        %v3068 = vld [vmem:[%s10 + $0x7c] sm:$0xf]
        %v3069 = vld [vmem:[%s10 + $0x80] sm:$0xf]
        %v3070 = vld [vmem:[%s10 + $0x84] sm:$0xf]
        %v3071 = vld [vmem:[%s10 + $0x88] sm:$0xf]
        %v3072 = vld [vmem:[%s10 + $0x8c] sm:$0xf]
        %v3073 = vld [vmem:[%s10 + $0x90] sm:$0xf]
        %v3074 = vld [vmem:[%s10 + $0x94] sm:$0xf]
        %v3075 = vld [vmem:[%s10 + $0x98] sm:$0xf]
        %v3076 = vld [vmem:[%s10 + $0x9c] sm:$0xf]
        %v3077 = vld [vmem:[%s10 + $0xa0] sm:$0xf]
        %v3078 = vld [vmem:[%s10 + $0xa4] sm:$0xf]
        %v3079 = vld [vmem:[%s10 + $0xa8] sm:$0xf]
        %v3080 = vld [vmem:[%s10 + $0xac] sm:$0xf]
        %v3081 = vld [vmem:[%s10 + $0xb0] sm:$0xf]
        %v3082 = vld [vmem:[%s10 + $0xb4] sm:$0xf]
        %v3083 = vld [vmem:[%s10 + $0xb8] sm:$0xf]
        %v3084 = vld [vmem:[%s10 + $0xbc] sm:$0xf]
        %v3085 = vld [vmem:[%s10 + $0xc0] sm:$0xf]
        %v3086 = vld [vmem:[%s10 + $0xc4] sm:$0xf]
        %v3087 = vld [vmem:[%s10 + $0xc8] sm:$0xf]
        %v3088 = vld [vmem:[%s10 + $0xcc] sm:$0xf]
        %v3089 = vld [vmem:[%s10 + $0xd0] sm:$0xf]
        %v3090 = vld [vmem:[%s10 + $0xd4] sm:$0xf]
        %v3091 = vld [vmem:[%s10 + $0xd8] sm:$0xf]
        %v3092 = vld [vmem:[%s10 + $0xdc] sm:$0xf]
        %v3093 = vld [vmem:[%s10 + $0xe0] sm:$0xf]
        %v3094 = vld [vmem:[%s10 + $0xe4] sm:$0xf]
        %v3095 = vld [vmem:[%s10 + $0xe8] sm:$0xf]
        %v3096 = vld [vmem:[%s10 + $0xec] sm:$0xf]
        %v3097 = vld [vmem:[%s10 + $0xf0] sm:$0x3]
        %s3098 = scalar_lea.vmem %s10, 244
        %v3099 = vld [vmem:[%s3098] sm:$0xf]
        %v3100 = vld [vmem:[%s3098 + $0x4] sm:$0xf]
        %v3101 = vld [vmem:[%s3098 + $0x8] sm:$0xf]
        %v3102 = vld [vmem:[%s3098 + $0xc] sm:$0xf]
        %v3103 = vld [vmem:[%s3098 + $0x10] sm:$0xf]
        %v3104 = vld [vmem:[%s3098 + $0x14] sm:$0xf]
        %v3105 = vld [vmem:[%s3098 + $0x18] sm:$0xf]
        %v3106 = vld [vmem:[%s3098 + $0x1c] sm:$0xf]
        %v3107 = vld [vmem:[%s3098 + $0x20] sm:$0xf]
        %v3108 = vld [vmem:[%s3098 + $0x24] sm:$0xf]
        %v3109 = vld [vmem:[%s3098 + $0x28] sm:$0xf]
        %v3110 = vld [vmem:[%s3098 + $0x2c] sm:$0xf]
        %v3111 = vld [vmem:[%s3098 + $0x30] sm:$0xf]
        %v3112 = vld [vmem:[%s3098 + $0x34] sm:$0xf]
        %v3113 = vld [vmem:[%s3098 + $0x38] sm:$0xf]
        %v3114 = vld [vmem:[%s3098 + $0x3c] sm:$0xf]
        %v3115 = vld [vmem:[%s3098 + $0x40] sm:$0xf]
        %v3116 = vld [vmem:[%s3098 + $0x44] sm:$0xf]
        %v3117 = vld [vmem:[%s3098 + $0x48] sm:$0xf]
        %v3118 = vld [vmem:[%s3098 + $0x4c] sm:$0xf]
        %v3119 = vld [vmem:[%s3098 + $0x50] sm:$0xf]
        %v3120 = vld [vmem:[%s3098 + $0x54] sm:$0xf]
        %v3121 = vld [vmem:[%s3098 + $0x58] sm:$0xf]
        %v3122 = vld [vmem:[%s3098 + $0x5c] sm:$0xf]
        %v3123 = vld [vmem:[%s3098 + $0x60] sm:$0xf]
        %v3124 = vld [vmem:[%s3098 + $0x64] sm:$0xf]
        %v3125 = vld [vmem:[%s3098 + $0x68] sm:$0xf]
        %v3126 = vld [vmem:[%s3098 + $0x6c] sm:$0xf]
        %v3127 = vld [vmem:[%s3098 + $0x70] sm:$0xf]
        %v3128 = vld [vmem:[%s3098 + $0x74] sm:$0xf]
        %v3129 = vld [vmem:[%s3098 + $0x78] sm:$0xf]
        %v3130 = vld [vmem:[%s3098 + $0x7c] sm:$0xf]
        %v3131 = vld [vmem:[%s3098 + $0x80] sm:$0xf]
        %v3132 = vld [vmem:[%s3098 + $0x84] sm:$0xf]
        %v3133 = vld [vmem:[%s3098 + $0x88] sm:$0xf]
        %v3134 = vld [vmem:[%s3098 + $0x8c] sm:$0xf]
        %v3135 = vld [vmem:[%s3098 + $0x90] sm:$0xf]
        %v3136 = vld [vmem:[%s3098 + $0x94] sm:$0xf]
        %v3137 = vld [vmem:[%s3098 + $0x98] sm:$0xf]
        %v3138 = vld [vmem:[%s3098 + $0x9c] sm:$0xf]
        %v3139 = vld [vmem:[%s3098 + $0xa0] sm:$0xf]
        %v3140 = vld [vmem:[%s3098 + $0xa4] sm:$0xf]
        %v3141 = vld [vmem:[%s3098 + $0xa8] sm:$0xf]
        %v3142 = vld [vmem:[%s3098 + $0xac] sm:$0xf]
        %v3143 = vld [vmem:[%s3098 + $0xb0] sm:$0xf]
        %v3144 = vld [vmem:[%s3098 + $0xb4] sm:$0xf]
        %v3145 = vld [vmem:[%s3098 + $0xb8] sm:$0xf]
        %v3146 = vld [vmem:[%s3098 + $0xbc] sm:$0xf]
        %v3147 = vld [vmem:[%s3098 + $0xc0] sm:$0xf]
        %v3148 = vld [vmem:[%s3098 + $0xc4] sm:$0xf]
        %v3149 = vld [vmem:[%s3098 + $0xc8] sm:$0xf]
        %v3150 = vld [vmem:[%s3098 + $0xcc] sm:$0xf]
        %v3151 = vld [vmem:[%s3098 + $0xd0] sm:$0xf]
        %v3152 = vld [vmem:[%s3098 + $0xd4] sm:$0xf]
        %v3153 = vld [vmem:[%s3098 + $0xd8] sm:$0xf]
        %v3154 = vld [vmem:[%s3098 + $0xdc] sm:$0xf]
        %v3155 = vld [vmem:[%s3098 + $0xe0] sm:$0xf]
        %v3156 = vld [vmem:[%s3098 + $0xe4] sm:$0xf]
        %v3157 = vld [vmem:[%s3098 + $0xe8] sm:$0xf]
        %v3158 = vld [vmem:[%s3098 + $0xec] sm:$0xf]
        %v3159 = vld [vmem:[%s3098 + $0xf0] sm:$0x3]
        %v3161 = vshrl.u32 %v3033, 16
        %v3164 = vshrl.u32 %v3034, 16
        %v3167 = vshrl.u32 %v3035, 16
        %v3170 = vshrl.u32 %v3036, 16
        %v3236 = vunpack.c.l.b16 %v3099
        %v3237 = vunpack.c.l.b16 %v3100
        %v3238 = vunpack.c.l.b16 %v3101
        %v3239 = vunpack.c.l.b16 %v3102
        %v3240 = vunpack.c.l.b16 %v3103
        %v3241 = vunpack.c.l.b16 %v3104
        %v3242 = vunpack.c.l.b16 %v3105
        %v3243 = vunpack.c.l.b16 %v3106
        %v3244 = vunpack.c.l.b16 %v3107
        %v3245 = vunpack.c.l.b16 %v3108
        %v3246 = vunpack.c.l.b16 %v3109
        %v3247 = vunpack.c.l.b16 %v3110
        %v3248 = vunpack.c.l.b16 %v3111
        %v3249 = vunpack.c.l.b16 %v3112
        %v3250 = vunpack.c.l.b16 %v3113
        %v3251 = vunpack.c.l.b16 %v3114
        %v3252 = vunpack.c.l.b16 %v3115
        %v3253 = vunpack.c.l.b16 %v3116
        %v3254 = vunpack.c.l.b16 %v3117
        %v3255 = vunpack.c.l.b16 %v3118
        %v3256 = vunpack.c.l.b16 %v3119
        %v3257 = vunpack.c.l.b16 %v3120
        %v3258 = vunpack.c.l.b16 %v3121
        %v3259 = vunpack.c.l.b16 %v3122
        %v3260 = vunpack.c.l.b16 %v3123
        %v3261 = vunpack.c.l.b16 %v3124
        %v3262 = vunpack.c.l.b16 %v3125
        %v3263 = vunpack.c.l.b16 %v3126
        %v3264 = vunpack.c.l.b16 %v3127
        %v3265 = vunpack.c.l.b16 %v3128
        %v3266 = vunpack.c.l.b16 %v3129
        %v3267 = vunpack.c.l.b16 %v3130
        %v3268 = vunpack.c.l.b16 %v3131
        %v3269 = vunpack.c.l.b16 %v3132
        %v3270 = vunpack.c.l.b16 %v3133
        %v3271 = vunpack.c.l.b16 %v3134
        %v3272 = vunpack.c.l.b16 %v3135
        %v3273 = vunpack.c.l.b16 %v3136
        %v3274 = vunpack.c.l.b16 %v3137
        %v3275 = vunpack.c.l.b16 %v3138
        %v3276 = vunpack.c.l.b16 %v3139
        %v3277 = vunpack.c.l.b16 %v3140
        %v3278 = vunpack.c.l.b16 %v3141
        %v3279 = vunpack.c.l.b16 %v3142
        %v3280 = vunpack.c.l.b16 %v3143
        %v3281 = vunpack.c.l.b16 %v3144
        %v3282 = vunpack.c.l.b16 %v3145
        %v3283 = vunpack.c.l.b16 %v3146
        %v3284 = vunpack.c.l.b16 %v3147
        %v3285 = vunpack.c.l.b16 %v3148
        %v3286 = vunpack.c.l.b16 %v3149
        %v3287 = vunpack.c.l.b16 %v3150
        %v3288 = vunpack.c.l.b16 %v3151
        %v3289 = vunpack.c.l.b16 %v3152
        %v3290 = vunpack.c.l.b16 %v3153
        %v3291 = vunpack.c.l.b16 %v3154
        %v3292 = vunpack.c.l.b16 %v3155
        %v3293 = vunpack.c.l.b16 %v3156
        %v3294 = vunpack.c.l.b16 %v3157
        %v3295 = vunpack.c.l.b16 %v3158
        %v3296 = vunpack.c.l.b16 %v3159
        %v3297 = vpack.c.b16 %v3237, %v3236
        %v3298 = vpack.c.b16 %v3239, %v3238
        %v3299 = vpack.c.b16 %v3241, %v3240
        %v3300 = vpack.c.b16 %v3243, %v3242
        %v3301 = vpack.c.b16 %v3245, %v3244
        %v3302 = vpack.c.b16 %v3247, %v3246
        %v3303 = vpack.c.b16 %v3249, %v3248
        %v3304 = vpack.c.b16 %v3251, %v3250
        %v3305 = vpack.c.b16 %v3253, %v3252
        %v3306 = vpack.c.b16 %v3255, %v3254
        %v3307 = vpack.c.b16 %v3257, %v3256
        %v3308 = vpack.c.b16 %v3259, %v3258
        %v3309 = vpack.c.b16 %v3261, %v3260
        %v3310 = vpack.c.b16 %v3263, %v3262
        %v3311 = vpack.c.b16 %v3265, %v3264
        %v3312 = vpack.c.b16 %v3267, %v3266
        %v3313 = vpack.c.b16 %v3269, %v3268
        %v3314 = vpack.c.b16 %v3271, %v3270
        %v3315 = vpack.c.b16 %v3273, %v3272
        %v3316 = vpack.c.b16 %v3275, %v3274
        %v3317 = vpack.c.b16 %v3277, %v3276
        %v3318 = vpack.c.b16 %v3279, %v3278
        %v3319 = vpack.c.b16 %v3281, %v3280
        %v3320 = vpack.c.b16 %v3283, %v3282
        %v3321 = vpack.c.b16 %v3285, %v3284
        %v3322 = vpack.c.b16 %v3287, %v3286
        %v3323 = vpack.c.b16 %v3289, %v3288
        %v3324 = vpack.c.b16 %v3291, %v3290
        %v3325 = vpack.c.b16 %v3293, %v3292
        %v3326 = vpack.c.b16 %v3295, %v3294
        %v3327 = vpack.c.b16 %v3296, %v3296
        %vm3358 = vcmask 818176
        %v3360 = vsel %vm3358, %v3170, 0
        %v3363 = vsel %vm506, %v3327, 0
        %3365 = vmatprep.subr.bf16.mxu0 0
        %3366 = vmatpush1.bf16.msra.mxu0 %v3297
        %3367 = vmatprep.subr.bf16.mxu0 0
        %3368 = vmatpush1.bf16.msra.mxu0 %v3298
        %3369 = vmatprep.subr.bf16.mxu0 0
        %3370 = vmatpush1.bf16.msra.mxu0 %v3299
        %3371 = vmatprep.subr.bf16.mxu0 0
        %3372 = vmatpush1.bf16.msra.mxu0 %v3300
        %3373 = vmatprep.subr.bf16.mxu0 0
        %3374 = vmatpush1.bf16.msra.mxu0 %v3301
        %3375 = vmatprep.subr.bf16.mxu0 0
        %3376 = vmatpush1.bf16.msra.mxu0 %v3302
        %3377 = vmatprep.subr.bf16.mxu0 0
        %3378 = vmatpush1.bf16.msra.mxu0 %v3303
        %3379 = vmatprep.subr.bf16.mxu0 0
        %3380 = vmatpush1.bf16.msra.mxu0 %v3304
        %3381 = vmatprep.subr.bf16.mxu0 0
        %3382 = vmatpush1.bf16.msra.mxu0 %v3305
        %3383 = vmatprep.subr.bf16.mxu0 0
        %3384 = vmatpush1.bf16.msra.mxu0 %v3306
        %3385 = vmatprep.subr.bf16.mxu0 0
        %3386 = vmatpush1.bf16.msra.mxu0 %v3307
        %3387 = vmatprep.subr.bf16.mxu0 0
        %3388 = vmatpush1.bf16.msra.mxu0 %v3308
        %3389 = vmatprep.subr.bf16.mxu0 0
        %3390 = vmatpush1.bf16.msra.mxu0 %v3309
        %3391 = vmatprep.subr.bf16.mxu0 0
        %3392 = vmatpush1.bf16.msra.mxu0 %v3310
        %3393 = vmatprep.subr.bf16.mxu0 0
        %3394 = vmatpush1.bf16.msra.mxu0 %v3311
        %3395 = vmatprep.subr.bf16.mxu0 0
        %3396 = vmatpush1.bf16.msra.mxu0 %v3312
        %3397 = vmatprep.mubr.bf16.mxu0 %v3164
        %3398 = vmatmul.mubr.bf16.gmra.mrb[0].mxu0 %v3161
        %v3399 = vpop.f32.mrb[0].mxu0
        %v3400 = vadd.f32 0.0, %v3399
        %v3401 = vpop.f32.mrb[0].mxu0
        %v3402 = vpop.f32.mrb[0].mxu0
        %v3403 = vpop.f32.mrb[0].mxu0
        %3404 = vdwg.mxu0
        %3405 = vmatprep.subr.bf16.mxu0 0
        %3406 = vmatpush1.bf16.msra.mxu0 %v3313
        %3407 = vmatprep.subr.bf16.mxu0 0
        %3408 = vmatpush1.bf16.msra.mxu0 %v3314
        %3409 = vmatprep.subr.bf16.mxu0 0
        %3410 = vmatpush1.bf16.msra.mxu0 %v3315
        %3411 = vmatprep.subr.bf16.mxu0 0
        %3412 = vmatpush1.bf16.msra.mxu0 %v3316
        %3413 = vmatprep.subr.bf16.mxu0 0
        %3414 = vmatpush1.bf16.msra.mxu0 %v3317
        %3415 = vmatprep.subr.bf16.mxu0 0
        %3416 = vmatpush1.bf16.msra.mxu0 %v3318
        %3417 = vmatprep.subr.bf16.mxu0 0
        %3418 = vmatpush1.bf16.msra.mxu0 %v3319
        %3419 = vmatprep.subr.bf16.mxu0 0
        %3420 = vmatpush1.bf16.msra.mxu0 %v3320
        %3421 = vmatprep.subr.bf16.mxu0 0
        %3422 = vmatpush1.bf16.msra.mxu0 %v3321
        %3423 = vmatprep.subr.bf16.mxu0 0
        %3424 = vmatpush1.bf16.msra.mxu0 %v3322
        %3425 = vmatprep.subr.bf16.mxu0 0
        %3426 = vmatpush1.bf16.msra.mxu0 %v3323
        %3427 = vmatprep.subr.bf16.mxu0 0
        %3428 = vmatpush1.bf16.msra.mxu0 %v3324
        %3429 = vmatprep.subr.bf16.mxu0 0
        %3430 = vmatpush1.bf16.msra.mxu0 %v3325
        %3431 = vmatprep.subr.bf16.mxu0 0
        %3432 = vmatpush1.bf16.msra.mxu0 %v3326
        %3433 = vmatprep.subr.bf16.mxu0 0
        %3434 = vmatpush1.bf16.msra.mxu0 %v3363
        %3435 = vmatprep.subr.bf16.mxu0 0
        %3436 = vmatpush1.bf16.msra.mxu0 0
        %3437 = vmatprep.mubr.bf16.mxu0 %v3360
        %3438 = vmatmul.mubr.bf16.gmra.mrb[0].mxu0 %v3167
        %v3439 = vpop.f32.mrb[0].mxu0
        %v3440 = vadd.f32 %v3400, %v3439
        %v3441 = vpop.f32.mrb[0].mxu0
        %v3442 = vpop.f32.mrb[0].mxu0
        %v3443 = vpop.f32.mrb[0].mxu0
        %3444 = vdwg.mxu0
        %v3506 = vunpack.c.l.b16 %v3037
        %v3507 = vunpack.c.l.b16 %v3038
        %v3508 = vunpack.c.l.b16 %v3039
        %v3509 = vunpack.c.l.b16 %v3040
        %v3510 = vunpack.c.l.b16 %v3041
        %v3511 = vunpack.c.l.b16 %v3042
        %v3512 = vunpack.c.l.b16 %v3043
        %v3513 = vunpack.c.l.b16 %v3044
        %v3514 = vunpack.c.l.b16 %v3045
        %v3515 = vunpack.c.l.b16 %v3046
        %v3516 = vunpack.c.l.b16 %v3047
        %v3517 = vunpack.c.l.b16 %v3048
        %v3518 = vunpack.c.l.b16 %v3049
        %v3519 = vunpack.c.l.b16 %v3050
        %v3520 = vunpack.c.l.b16 %v3051
        %v3521 = vunpack.c.l.b16 %v3052
        %v3522 = vunpack.c.l.b16 %v3053
        %v3523 = vunpack.c.l.b16 %v3054
        %v3524 = vunpack.c.l.b16 %v3055
        %v3525 = vunpack.c.l.b16 %v3056
        %v3526 = vunpack.c.l.b16 %v3057
        %v3527 = vunpack.c.l.b16 %v3058
        %v3528 = vunpack.c.l.b16 %v3059
        %v3529 = vunpack.c.l.b16 %v3060
        %v3530 = vunpack.c.l.b16 %v3061
        %v3531 = vunpack.c.l.b16 %v3062
        %v3532 = vunpack.c.l.b16 %v3063
        %v3533 = vunpack.c.l.b16 %v3064
        %v3534 = vunpack.c.l.b16 %v3065
        %v3535 = vunpack.c.l.b16 %v3066
        %v3536 = vunpack.c.l.b16 %v3067
        %v3537 = vunpack.c.l.b16 %v3068
        %v3538 = vunpack.c.l.b16 %v3069
        %v3539 = vunpack.c.l.b16 %v3070
        %v3540 = vunpack.c.l.b16 %v3071
        %v3541 = vunpack.c.l.b16 %v3072
        %v3542 = vunpack.c.l.b16 %v3073
        %v3543 = vunpack.c.l.b16 %v3074
        %v3544 = vunpack.c.l.b16 %v3075
        %v3545 = vunpack.c.l.b16 %v3076
        %v3546 = vunpack.c.l.b16 %v3077
        %v3547 = vunpack.c.l.b16 %v3078
        %v3548 = vunpack.c.l.b16 %v3079
        %v3549 = vunpack.c.l.b16 %v3080
        %v3550 = vunpack.c.l.b16 %v3081
        %v3551 = vunpack.c.l.b16 %v3082
        %v3552 = vunpack.c.l.b16 %v3083
        %v3553 = vunpack.c.l.b16 %v3084
        %v3554 = vunpack.c.l.b16 %v3085
        %v3555 = vunpack.c.l.b16 %v3086
        %v3556 = vunpack.c.l.b16 %v3087
        %v3557 = vunpack.c.l.b16 %v3088
        %v3558 = vunpack.c.l.b16 %v3089
        %v3559 = vunpack.c.l.b16 %v3090
        %v3560 = vunpack.c.l.b16 %v3091
        %v3561 = vunpack.c.l.b16 %v3092
        %v3562 = vunpack.c.l.b16 %v3093
        %v3563 = vunpack.c.l.b16 %v3094
        %v3564 = vunpack.c.l.b16 %v3095
        %v3565 = vunpack.c.l.b16 %v3096
        %v3566 = vunpack.c.l.b16 %v3097
        %v3567 = vpack.c.b16 %v3507, %v3506
        %v3568 = vpack.c.b16 %v3509, %v3508
        %v3569 = vpack.c.b16 %v3511, %v3510
        %v3570 = vpack.c.b16 %v3513, %v3512
        %v3571 = vpack.c.b16 %v3515, %v3514
        %v3572 = vpack.c.b16 %v3517, %v3516
        %v3573 = vpack.c.b16 %v3519, %v3518
        %v3574 = vpack.c.b16 %v3521, %v3520
        %v3575 = vpack.c.b16 %v3523, %v3522
        %v3576 = vpack.c.b16 %v3525, %v3524
        %v3577 = vpack.c.b16 %v3527, %v3526
        %v3578 = vpack.c.b16 %v3529, %v3528
        %v3579 = vpack.c.b16 %v3531, %v3530
        %v3580 = vpack.c.b16 %v3533, %v3532
        %v3581 = vpack.c.b16 %v3535, %v3534
        %v3582 = vpack.c.b16 %v3537, %v3536
        %v3583 = vpack.c.b16 %v3539, %v3538
        %v3584 = vpack.c.b16 %v3541, %v3540
        %v3585 = vpack.c.b16 %v3543, %v3542
        %v3586 = vpack.c.b16 %v3545, %v3544
        %v3587 = vpack.c.b16 %v3547, %v3546
        %v3588 = vpack.c.b16 %v3549, %v3548
        %v3589 = vpack.c.b16 %v3551, %v3550
        %v3590 = vpack.c.b16 %v3553, %v3552
        %v3591 = vpack.c.b16 %v3555, %v3554
        %v3592 = vpack.c.b16 %v3557, %v3556
        %v3593 = vpack.c.b16 %v3559, %v3558
        %v3594 = vpack.c.b16 %v3561, %v3560
        %v3595 = vpack.c.b16 %v3563, %v3562
        %v3596 = vpack.c.b16 %v3565, %v3564
        %v3597 = vpack.c.b16 %v3566, %v3566
        %v3628 = vsel %vm3358, %v3036, 0
        %v3631 = vsel %vm506, %v3597, 0
        %3633 = vmatprep.subr.bf16.mxu0 0
        %3634 = vmatpush1.bf16.msra.mxu0 %v3567
        %3635 = vmatprep.subr.bf16.mxu0 0
        %3636 = vmatpush1.bf16.msra.mxu0 %v3568
        %3637 = vmatprep.subr.bf16.mxu0 0
        %3638 = vmatpush1.bf16.msra.mxu0 %v3569
        %3639 = vmatprep.subr.bf16.mxu0 0
        %3640 = vmatpush1.bf16.msra.mxu0 %v3570
        %3641 = vmatprep.subr.bf16.mxu0 0
        %3642 = vmatpush1.bf16.msra.mxu0 %v3571
        %3643 = vmatprep.subr.bf16.mxu0 0
        %3644 = vmatpush1.bf16.msra.mxu0 %v3572
        %3645 = vmatprep.subr.bf16.mxu0 0
        %3646 = vmatpush1.bf16.msra.mxu0 %v3573
        %3647 = vmatprep.subr.bf16.mxu0 0
        %3648 = vmatpush1.bf16.msra.mxu0 %v3574
        %3649 = vmatprep.subr.bf16.mxu0 0
        %3650 = vmatpush1.bf16.msra.mxu0 %v3575
        %3651 = vmatprep.subr.bf16.mxu0 0
        %3652 = vmatpush1.bf16.msra.mxu0 %v3576
        %3653 = vmatprep.subr.bf16.mxu0 0
        %3654 = vmatpush1.bf16.msra.mxu0 %v3577
        %3655 = vmatprep.subr.bf16.mxu0 0
        %3656 = vmatpush1.bf16.msra.mxu0 %v3578
        %3657 = vmatprep.subr.bf16.mxu0 0
        %3658 = vmatpush1.bf16.msra.mxu0 %v3579
        %3659 = vmatprep.subr.bf16.mxu0 0
        %3660 = vmatpush1.bf16.msra.mxu0 %v3580
        %3661 = vmatprep.subr.bf16.mxu0 0
        %3662 = vmatpush1.bf16.msra.mxu0 %v3581
        %3663 = vmatprep.subr.bf16.mxu0 0
        %3664 = vmatpush1.bf16.msra.mxu0 %v3582
        %3665 = vmatprep.mubr.bf16.mxu0 %v3034
        %3666 = vmatmul.mubr.bf16.gmra.mrb[0].mxu0 %v3033
        %v3667 = vpop.f32.mrb[0].mxu0
        %v3668 = vadd.f32 %v3440, %v3667
        %v3669 = vpop.f32.mrb[0].mxu0
        %v3670 = vpop.f32.mrb[0].mxu0
        %v3671 = vpop.f32.mrb[0].mxu0
        %3672 = vdwg.mxu0
        %3673 = vmatprep.subr.bf16.mxu0 0
        %3674 = vmatpush1.bf16.msra.mxu0 %v3583
        %3675 = vmatprep.subr.bf16.mxu0 0
        %3676 = vmatpush1.bf16.msra.mxu0 %v3584
        %3677 = vmatprep.subr.bf16.mxu0 0
        %3678 = vmatpush1.bf16.msra.mxu0 %v3585
        %3679 = vmatprep.subr.bf16.mxu0 0
        %3680 = vmatpush1.bf16.msra.mxu0 %v3586
        %3681 = vmatprep.subr.bf16.mxu0 0
        %3682 = vmatpush1.bf16.msra.mxu0 %v3587
        %3683 = vmatprep.subr.bf16.mxu0 0
        %3684 = vmatpush1.bf16.msra.mxu0 %v3588
        %3685 = vmatprep.subr.bf16.mxu0 0
        %3686 = vmatpush1.bf16.msra.mxu0 %v3589
        %3687 = vmatprep.subr.bf16.mxu0 0
        %3688 = vmatpush1.bf16.msra.mxu0 %v3590
        %3689 = vmatprep.subr.bf16.mxu0 0
        %3690 = vmatpush1.bf16.msra.mxu0 %v3591
        %3691 = vmatprep.subr.bf16.mxu0 0
        %3692 = vmatpush1.bf16.msra.mxu0 %v3592
        %3693 = vmatprep.subr.bf16.mxu0 0
        %3694 = vmatpush1.bf16.msra.mxu0 %v3593
        %3695 = vmatprep.subr.bf16.mxu0 0
        %3696 = vmatpush1.bf16.msra.mxu0 %v3594
        %3697 = vmatprep.subr.bf16.mxu0 0
        %3698 = vmatpush1.bf16.msra.mxu0 %v3595
        %3699 = vmatprep.subr.bf16.mxu0 0
        %3700 = vmatpush1.bf16.msra.mxu0 %v3596
        %3701 = vmatprep.subr.bf16.mxu0 0
        %3702 = vmatpush1.bf16.msra.mxu0 %v3631
        %3703 = vmatprep.subr.bf16.mxu0 0
        %3704 = vmatpush1.bf16.msra.mxu0 0
        %3705 = vmatprep.mubr.bf16.mxu0 %v3628
        %3706 = vmatmul.mubr.bf16.gmra.mrb[0].mxu0 %v3035
        %v3707 = vpop.f32.mrb[0].mxu0
        %v3708 = vadd.f32 %v3668, %v3707
        %v3709 = vpop.f32.mrb[0].mxu0
        %v3710 = vpop.f32.mrb[0].mxu0
        %v3711 = vpop.f32.mrb[0].mxu0
        %3712 = vdwg.mxu0
        %s3713 = scalar_lea.vmem %s10, 488
        %v3714 = vld [vmem:[%s3713] sm:$0xf]
        %v3715 = vld [vmem:[%s3713 + $0x4] sm:$0xf]
        %v3716 = vld [vmem:[%s3713 + $0x8] sm:$0xf]
        %v3717 = vld [vmem:[%s3713 + $0xc] sm:$0xf]
        %v3718 = vld [vmem:[%s3713 + $0x10] sm:$0xf]
        %v3719 = vld [vmem:[%s3713 + $0x14] sm:$0xf]
        %v3720 = vld [vmem:[%s3713 + $0x18] sm:$0xf]
        %v3721 = vld [vmem:[%s3713 + $0x1c] sm:$0xf]
        %v3722 = vld [vmem:[%s3713 + $0x20] sm:$0xf]
        %v3723 = vld [vmem:[%s3713 + $0x24] sm:$0xf]
        %v3724 = vld [vmem:[%s3713 + $0x28] sm:$0xf]
        %v3725 = vld [vmem:[%s3713 + $0x2c] sm:$0xf]
        %v3726 = vld [vmem:[%s3713 + $0x30] sm:$0xf]
        %v3727 = vld [vmem:[%s3713 + $0x34] sm:$0xf]
        %v3728 = vld [vmem:[%s3713 + $0x38] sm:$0xf]
        %v3729 = vld [vmem:[%s3713 + $0x3c] sm:$0xf]
        %v3730 = vld [vmem:[%s3713 + $0x40] sm:$0xf]
        %v3731 = vld [vmem:[%s3713 + $0x44] sm:$0xf]
        %v3732 = vld [vmem:[%s3713 + $0x48] sm:$0xf]
        %v3733 = vld [vmem:[%s3713 + $0x4c] sm:$0xf]
        %v3734 = vld [vmem:[%s3713 + $0x50] sm:$0xf]
        %v3735 = vld [vmem:[%s3713 + $0x54] sm:$0xf]
        %v3736 = vld [vmem:[%s3713 + $0x58] sm:$0xf]
        %v3737 = vld [vmem:[%s3713 + $0x5c] sm:$0xf]
        %v3738 = vld [vmem:[%s3713 + $0x60] sm:$0xf]
        %v3739 = vld [vmem:[%s3713 + $0x64] sm:$0xf]
        %v3740 = vld [vmem:[%s3713 + $0x68] sm:$0xf]
        %v3741 = vld [vmem:[%s3713 + $0x6c] sm:$0xf]
        %v3742 = vld [vmem:[%s3713 + $0x70] sm:$0xf]
        %v3743 = vld [vmem:[%s3713 + $0x74] sm:$0xf]
        %v3744 = vld [vmem:[%s3713 + $0x78] sm:$0xf]
        %v3745 = vld [vmem:[%s3713 + $0x7c] sm:$0xf]
        %v3746 = vld [vmem:[%s3713 + $0x80] sm:$0xf]
        %v3747 = vld [vmem:[%s3713 + $0x84] sm:$0xf]
        %v3748 = vld [vmem:[%s3713 + $0x88] sm:$0xf]
        %v3749 = vld [vmem:[%s3713 + $0x8c] sm:$0xf]
        %v3750 = vld [vmem:[%s3713 + $0x90] sm:$0xf]
        %v3751 = vld [vmem:[%s3713 + $0x94] sm:$0xf]
        %v3752 = vld [vmem:[%s3713 + $0x98] sm:$0xf]
        %v3753 = vld [vmem:[%s3713 + $0x9c] sm:$0xf]
        %v3754 = vld [vmem:[%s3713 + $0xa0] sm:$0xf]
        %v3755 = vld [vmem:[%s3713 + $0xa4] sm:$0xf]
        %v3756 = vld [vmem:[%s3713 + $0xa8] sm:$0xf]
        %v3757 = vld [vmem:[%s3713 + $0xac] sm:$0xf]
        %v3758 = vld [vmem:[%s3713 + $0xb0] sm:$0xf]
        %v3759 = vld [vmem:[%s3713 + $0xb4] sm:$0xf]
        %v3760 = vld [vmem:[%s3713 + $0xb8] sm:$0xf]
        %v3761 = vld [vmem:[%s3713 + $0xbc] sm:$0xf]
        %v3762 = vld [vmem:[%s3713 + $0xc0] sm:$0xf]
        %v3763 = vld [vmem:[%s3713 + $0xc4] sm:$0xf]
        %v3764 = vld [vmem:[%s3713 + $0xc8] sm:$0xf]
        %v3765 = vld [vmem:[%s3713 + $0xcc] sm:$0xf]
        %v3766 = vld [vmem:[%s3713 + $0xd0] sm:$0xf]
        %v3767 = vld [vmem:[%s3713 + $0xd4] sm:$0xf]
        %v3768 = vld [vmem:[%s3713 + $0xd8] sm:$0xf]
        %v3769 = vld [vmem:[%s3713 + $0xdc] sm:$0xf]
        %v3770 = vld [vmem:[%s3713 + $0xe0] sm:$0xf]
        %v3771 = vld [vmem:[%s3713 + $0xe4] sm:$0xf]
        %v3772 = vld [vmem:[%s3713 + $0xe8] sm:$0xf]
        %v3773 = vld [vmem:[%s3713 + $0xec] sm:$0xf]
        %v3774 = vld [vmem:[%s3713 + $0xf0] sm:$0x3]
        %v3779 = vrot.slane %v3033, 1
        %v3780 = vrot.slane %v3034, 1
        %v3781 = vrot.slane %v3035, 1
        %v3782 = vrot.slane %v3036, 1
        %v3847 = vunpack.c.l.b16 %v3714
        %v3848 = vunpack.c.l.b16 %v3715
        %v3849 = vunpack.c.l.b16 %v3716
        %v3850 = vunpack.c.l.b16 %v3717
        %v3851 = vunpack.c.l.b16 %v3718
        %v3852 = vunpack.c.l.b16 %v3719
        %v3853 = vunpack.c.l.b16 %v3720
        %v3854 = vunpack.c.l.b16 %v3721
        %v3855 = vunpack.c.l.b16 %v3722
        %v3856 = vunpack.c.l.b16 %v3723
        %v3857 = vunpack.c.l.b16 %v3724
        %v3858 = vunpack.c.l.b16 %v3725
        %v3859 = vunpack.c.l.b16 %v3726
        %v3860 = vunpack.c.l.b16 %v3727
        %v3861 = vunpack.c.l.b16 %v3728
        %v3862 = vunpack.c.l.b16 %v3729
        %v3863 = vunpack.c.l.b16 %v3730
        %v3864 = vunpack.c.l.b16 %v3731
        %v3865 = vunpack.c.l.b16 %v3732
        %v3866 = vunpack.c.l.b16 %v3733
        %v3867 = vunpack.c.l.b16 %v3734
        %v3868 = vunpack.c.l.b16 %v3735
        %v3869 = vunpack.c.l.b16 %v3736
        %v3870 = vunpack.c.l.b16 %v3737
        %v3871 = vunpack.c.l.b16 %v3738
        %v3872 = vunpack.c.l.b16 %v3739
        %v3873 = vunpack.c.l.b16 %v3740
        %v3874 = vunpack.c.l.b16 %v3741
        %v3875 = vunpack.c.l.b16 %v3742
        %v3876 = vunpack.c.l.b16 %v3743
        %v3877 = vunpack.c.l.b16 %v3744
        %v3878 = vunpack.c.l.b16 %v3745
        %v3879 = vunpack.c.l.b16 %v3746
        %v3880 = vunpack.c.l.b16 %v3747
        %v3881 = vunpack.c.l.b16 %v3748
        %v3882 = vunpack.c.l.b16 %v3749
        %v3883 = vunpack.c.l.b16 %v3750
        %v3884 = vunpack.c.l.b16 %v3751
        %v3885 = vunpack.c.l.b16 %v3752
        %v3886 = vunpack.c.l.b16 %v3753
        %v3887 = vunpack.c.l.b16 %v3754
        %v3888 = vunpack.c.l.b16 %v3755
        %v3889 = vunpack.c.l.b16 %v3756
        %v3890 = vunpack.c.l.b16 %v3757
        %v3891 = vunpack.c.l.b16 %v3758
        %v3892 = vunpack.c.l.b16 %v3759
        %v3893 = vunpack.c.l.b16 %v3760
        %v3894 = vunpack.c.l.b16 %v3761
        %v3895 = vunpack.c.l.b16 %v3762
        %v3896 = vunpack.c.l.b16 %v3763
        %v3897 = vunpack.c.l.b16 %v3764
        %v3898 = vunpack.c.l.b16 %v3765
        %v3899 = vunpack.c.l.b16 %v3766
        %v3900 = vunpack.c.l.b16 %v3767
        %v3901 = vunpack.c.l.b16 %v3768
        %v3902 = vunpack.c.l.b16 %v3769
        %v3903 = vunpack.c.l.b16 %v3770
        %v3904 = vunpack.c.l.b16 %v3771
        %v3905 = vunpack.c.l.b16 %v3772
        %v3906 = vunpack.c.l.b16 %v3773
        %v3907 = vunpack.c.l.b16 %v3774
        %v3908 = vpack.c.b16 %v3848, %v3847
        %v3909 = vpack.c.b16 %v3850, %v3849
        %v3910 = vpack.c.b16 %v3852, %v3851
        %v3911 = vpack.c.b16 %v3854, %v3853
        %v3912 = vpack.c.b16 %v3856, %v3855
        %v3913 = vpack.c.b16 %v3858, %v3857
        %v3914 = vpack.c.b16 %v3860, %v3859
        %v3915 = vpack.c.b16 %v3862, %v3861
        %v3916 = vpack.c.b16 %v3864, %v3863
        %v3917 = vpack.c.b16 %v3866, %v3865
        %v3918 = vpack.c.b16 %v3868, %v3867
        %v3919 = vpack.c.b16 %v3870, %v3869
        %v3920 = vpack.c.b16 %v3872, %v3871
        %v3921 = vpack.c.b16 %v3874, %v3873
        %v3922 = vpack.c.b16 %v3876, %v3875
        %v3923 = vpack.c.b16 %v3878, %v3877
        %v3924 = vpack.c.b16 %v3880, %v3879
        %v3925 = vpack.c.b16 %v3882, %v3881
        %v3926 = vpack.c.b16 %v3884, %v3883
        %v3927 = vpack.c.b16 %v3886, %v3885
        %v3928 = vpack.c.b16 %v3888, %v3887
        %v3929 = vpack.c.b16 %v3890, %v3889
        %v3930 = vpack.c.b16 %v3892, %v3891
        %v3931 = vpack.c.b16 %v3894, %v3893
        %v3932 = vpack.c.b16 %v3896, %v3895
        %v3933 = vpack.c.b16 %v3898, %v3897
        %v3934 = vpack.c.b16 %v3900, %v3899
        %v3935 = vpack.c.b16 %v3902, %v3901
        %v3936 = vpack.c.b16 %v3904, %v3903
        %v3937 = vpack.c.b16 %v3906, %v3905
        %v3938 = vpack.c.b16 %v3907, %v3907
        %v3970 = vsel %vm3358, %v3782, 0
        %v3973 = vsel %vm506, %v3938, 0
        %3975 = vmatprep.subr.bf16.mxu0 0
        %3976 = vmatpush1.bf16.msra.mxu0 %v3908
        %3977 = vmatprep.subr.bf16.mxu0 0
        %3978 = vmatpush1.bf16.msra.mxu0 %v3909
        %3979 = vmatprep.subr.bf16.mxu0 0
        %3980 = vmatpush1.bf16.msra.mxu0 %v3910
        %3981 = vmatprep.subr.bf16.mxu0 0
        %3982 = vmatpush1.bf16.msra.mxu0 %v3911
        %3983 = vmatprep.subr.bf16.mxu0 0
        %3984 = vmatpush1.bf16.msra.mxu0 %v3912
        %3985 = vmatprep.subr.bf16.mxu0 0
        %3986 = vmatpush1.bf16.msra.mxu0 %v3913
        %3987 = vmatprep.subr.bf16.mxu0 0
        %3988 = vmatpush1.bf16.msra.mxu0 %v3914
        %3989 = vmatprep.subr.bf16.mxu0 0
        %3990 = vmatpush1.bf16.msra.mxu0 %v3915
        %3991 = vmatprep.subr.bf16.mxu0 0
        %3992 = vmatpush1.bf16.msra.mxu0 %v3916
        %3993 = vmatprep.subr.bf16.mxu0 0
        %3994 = vmatpush1.bf16.msra.mxu0 %v3917
        %3995 = vmatprep.subr.bf16.mxu0 0
        %3996 = vmatpush1.bf16.msra.mxu0 %v3918
        %3997 = vmatprep.subr.bf16.mxu0 0
        %3998 = vmatpush1.bf16.msra.mxu0 %v3919
        %3999 = vmatprep.subr.bf16.mxu0 0
        %4000 = vmatpush1.bf16.msra.mxu0 %v3920
        %4001 = vmatprep.subr.bf16.mxu0 0
        %4002 = vmatpush1.bf16.msra.mxu0 %v3921
        %4003 = vmatprep.subr.bf16.mxu0 0
        %4004 = vmatpush1.bf16.msra.mxu0 %v3922
        %4005 = vmatprep.subr.bf16.mxu0 0
        %4006 = vmatpush1.bf16.msra.mxu0 %v3923
        %4007 = vmatprep.mubr.bf16.mxu0 %v3780
        %4008 = vmatmul.mubr.bf16.gmra.mrb[0].mxu0 %v3779
        %v4009 = vpop.f32.mrb[0].mxu0
        %v4010 = vadd.f32 0.0, %v4009
        %v4011 = vpop.f32.mrb[0].mxu0
        %v4012 = vpop.f32.mrb[0].mxu0
        %v4013 = vpop.f32.mrb[0].mxu0
        %4014 = vdwg.mxu0
        %4015 = vmatprep.subr.bf16.mxu0 0
        %4016 = vmatpush1.bf16.msra.mxu0 %v3924
        %4017 = vmatprep.subr.bf16.mxu0 0
        %4018 = vmatpush1.bf16.msra.mxu0 %v3925
        %4019 = vmatprep.subr.bf16.mxu0 0
        %4020 = vmatpush1.bf16.msra.mxu0 %v3926
        %4021 = vmatprep.subr.bf16.mxu0 0
        %4022 = vmatpush1.bf16.msra.mxu0 %v3927
        %4023 = vmatprep.subr.bf16.mxu0 0
        %4024 = vmatpush1.bf16.msra.mxu0 %v3928
        %4025 = vmatprep.subr.bf16.mxu0 0
        %4026 = vmatpush1.bf16.msra.mxu0 %v3929
        %4027 = vmatprep.subr.bf16.mxu0 0
        %4028 = vmatpush1.bf16.msra.mxu0 %v3930
        %4029 = vmatprep.subr.bf16.mxu0 0
        %4030 = vmatpush1.bf16.msra.mxu0 %v3931
        %4031 = vmatprep.subr.bf16.mxu0 0
        %4032 = vmatpush1.bf16.msra.mxu0 %v3932
        %4033 = vmatprep.subr.bf16.mxu0 0
        %4034 = vmatpush1.bf16.msra.mxu0 %v3933
        %4035 = vmatprep.subr.bf16.mxu0 0
        %4036 = vmatpush1.bf16.msra.mxu0 %v3934
        %4037 = vmatprep.subr.bf16.mxu0 0
        %4038 = vmatpush1.bf16.msra.mxu0 %v3935
        %4039 = vmatprep.subr.bf16.mxu0 0
        %4040 = vmatpush1.bf16.msra.mxu0 %v3936
        %4041 = vmatprep.subr.bf16.mxu0 0
        %4042 = vmatpush1.bf16.msra.mxu0 %v3937
        %4043 = vmatprep.subr.bf16.mxu0 0
        %4044 = vmatpush1.bf16.msra.mxu0 %v3973
        %4045 = vmatprep.subr.bf16.mxu0 0
        %4046 = vmatpush1.bf16.msra.mxu0 0
        %4047 = vmatprep.mubr.bf16.mxu0 %v3970
        %4048 = vmatmul.mubr.bf16.gmra.mrb[0].mxu0 %v3781
        %v4049 = vpop.f32.mrb[0].mxu0
        %v4050 = vadd.f32 %v4010, %v4049
        %v4051 = vpop.f32.mrb[0].mxu0
        %v4052 = vpop.f32.mrb[0].mxu0
        %v4053 = vpop.f32.mrb[0].mxu0
        %4054 = vdwg.mxu0
        %v4055 = vadd.f32 %v3708, %v4050
        %s4056 = scalar_lea.vmem %s10, 732
        %v4057 = vld [vmem:[%s4056] sm:$0xf]
        %v4058 = vld [vmem:[%s4056 + $0x4] sm:$0xf]
        %v4059 = vld [vmem:[%s4056 + $0x8] sm:$0xf]
        %v4060 = vld [vmem:[%s4056 + $0xc] sm:$0xf]
        %v4061 = vld [vmem:[%s4056 + $0x10] sm:$0xf]
        %v4062 = vld [vmem:[%s4056 + $0x14] sm:$0xf]
        %v4063 = vld [vmem:[%s4056 + $0x18] sm:$0xf]
        %v4064 = vld [vmem:[%s4056 + $0x1c] sm:$0xf]
        %v4065 = vld [vmem:[%s4056 + $0x20] sm:$0xf]
        %v4066 = vld [vmem:[%s4056 + $0x24] sm:$0xf]
        %v4067 = vld [vmem:[%s4056 + $0x28] sm:$0xf]
        %v4068 = vld [vmem:[%s4056 + $0x2c] sm:$0xf]
        %v4069 = vld [vmem:[%s4056 + $0x30] sm:$0xf]
        %v4070 = vld [vmem:[%s4056 + $0x34] sm:$0xf]
        %v4071 = vld [vmem:[%s4056 + $0x38] sm:$0xf]
        %v4072 = vld [vmem:[%s4056 + $0x3c] sm:$0xf]
        %v4073 = vld [vmem:[%s4056 + $0x40] sm:$0xf]
        %v4074 = vld [vmem:[%s4056 + $0x44] sm:$0xf]
        %v4075 = vld [vmem:[%s4056 + $0x48] sm:$0xf]
        %v4076 = vld [vmem:[%s4056 + $0x4c] sm:$0xf]
        %v4077 = vld [vmem:[%s4056 + $0x50] sm:$0xf]
        %v4078 = vld [vmem:[%s4056 + $0x54] sm:$0xf]
        %v4079 = vld [vmem:[%s4056 + $0x58] sm:$0xf]
        %v4080 = vld [vmem:[%s4056 + $0x5c] sm:$0xf]
        %v4081 = vld [vmem:[%s4056 + $0x60] sm:$0xf]
        %v4082 = vld [vmem:[%s4056 + $0x64] sm:$0xf]
        %v4083 = vld [vmem:[%s4056 + $0x68] sm:$0xf]
        %v4084 = vld [vmem:[%s4056 + $0x6c] sm:$0xf]
        %v4085 = vld [vmem:[%s4056 + $0x70] sm:$0xf]
        %v4086 = vld [vmem:[%s4056 + $0x74] sm:$0xf]
        %v4087 = vld [vmem:[%s4056 + $0x78] sm:$0xf]
        %v4088 = vld [vmem:[%s4056 + $0x7c] sm:$0xf]
        %v4089 = vld [vmem:[%s4056 + $0x80] sm:$0xf]
        %v4090 = vld [vmem:[%s4056 + $0x84] sm:$0xf]
        %v4091 = vld [vmem:[%s4056 + $0x88] sm:$0xf]
        %v4092 = vld [vmem:[%s4056 + $0x8c] sm:$0xf]
        %v4093 = vld [vmem:[%s4056 + $0x90] sm:$0xf]
        %v4094 = vld [vmem:[%s4056 + $0x94] sm:$0xf]
        %v4095 = vld [vmem:[%s4056 + $0x98] sm:$0xf]
        %v4096 = vld [vmem:[%s4056 + $0x9c] sm:$0xf]
        %v4097 = vld [vmem:[%s4056 + $0xa0] sm:$0xf]
        %v4098 = vld [vmem:[%s4056 + $0xa4] sm:$0xf]
        %v4099 = vld [vmem:[%s4056 + $0xa8] sm:$0xf]
        %v4100 = vld [vmem:[%s4056 + $0xac] sm:$0xf]
        %v4101 = vld [vmem:[%s4056 + $0xb0] sm:$0xf]
        %v4102 = vld [vmem:[%s4056 + $0xb4] sm:$0xf]
        %v4103 = vld [vmem:[%s4056 + $0xb8] sm:$0xf]
        %v4104 = vld [vmem:[%s4056 + $0xbc] sm:$0xf]
        %v4105 = vld [vmem:[%s4056 + $0xc0] sm:$0xf]
        %v4106 = vld [vmem:[%s4056 + $0xc4] sm:$0xf]
        %v4107 = vld [vmem:[%s4056 + $0xc8] sm:$0xf]
        %v4108 = vld [vmem:[%s4056 + $0xcc] sm:$0xf]
        %v4109 = vld [vmem:[%s4056 + $0xd0] sm:$0xf]
        %v4110 = vld [vmem:[%s4056 + $0xd4] sm:$0xf]
        %v4111 = vld [vmem:[%s4056 + $0xd8] sm:$0xf]
        %v4112 = vld [vmem:[%s4056 + $0xdc] sm:$0xf]
        %v4113 = vld [vmem:[%s4056 + $0xe0] sm:$0xf]
        %v4114 = vld [vmem:[%s4056 + $0xe4] sm:$0xf]
        %v4115 = vld [vmem:[%s4056 + $0xe8] sm:$0xf]
        %v4116 = vld [vmem:[%s4056 + $0xec] sm:$0xf]
        %v4117 = vld [vmem:[%s4056 + $0xf0] sm:$0x3]
        %v4118 = vrot.slane %v3161, 1
        %v4119 = vrot.slane %v3164, 1
        %v4120 = vrot.slane %v3167, 1
        %v4121 = vrot.slane %v3170, 1
        %v4186 = vunpack.c.l.b16 %v4057
        %v4187 = vunpack.c.l.b16 %v4058
        %v4188 = vunpack.c.l.b16 %v4059
        %v4189 = vunpack.c.l.b16 %v4060
        %v4190 = vunpack.c.l.b16 %v4061
        %v4191 = vunpack.c.l.b16 %v4062
        %v4192 = vunpack.c.l.b16 %v4063
        %v4193 = vunpack.c.l.b16 %v4064
        %v4194 = vunpack.c.l.b16 %v4065
        %v4195 = vunpack.c.l.b16 %v4066
        %v4196 = vunpack.c.l.b16 %v4067
        %v4197 = vunpack.c.l.b16 %v4068
        %v4198 = vunpack.c.l.b16 %v4069
        %v4199 = vunpack.c.l.b16 %v4070
        %v4200 = vunpack.c.l.b16 %v4071
        %v4201 = vunpack.c.l.b16 %v4072
        %v4202 = vunpack.c.l.b16 %v4073
        %v4203 = vunpack.c.l.b16 %v4074
        %v4204 = vunpack.c.l.b16 %v4075
        %v4205 = vunpack.c.l.b16 %v4076
        %v4206 = vunpack.c.l.b16 %v4077
        %v4207 = vunpack.c.l.b16 %v4078
        %v4208 = vunpack.c.l.b16 %v4079
        %v4209 = vunpack.c.l.b16 %v4080
        %v4210 = vunpack.c.l.b16 %v4081
        %v4211 = vunpack.c.l.b16 %v4082
        %v4212 = vunpack.c.l.b16 %v4083
        %v4213 = vunpack.c.l.b16 %v4084
        %v4214 = vunpack.c.l.b16 %v4085
        %v4215 = vunpack.c.l.b16 %v4086
        %v4216 = vunpack.c.l.b16 %v4087
        %v4217 = vunpack.c.l.b16 %v4088
        %v4218 = vunpack.c.l.b16 %v4089
        %v4219 = vunpack.c.l.b16 %v4090
        %v4220 = vunpack.c.l.b16 %v4091
        %v4221 = vunpack.c.l.b16 %v4092
        %v4222 = vunpack.c.l.b16 %v4093
        %v4223 = vunpack.c.l.b16 %v4094
        %v4224 = vunpack.c.l.b16 %v4095
        %v4225 = vunpack.c.l.b16 %v4096
        %v4226 = vunpack.c.l.b16 %v4097
        %v4227 = vunpack.c.l.b16 %v4098
        %v4228 = vunpack.c.l.b16 %v4099
        %v4229 = vunpack.c.l.b16 %v4100
        %v4230 = vunpack.c.l.b16 %v4101
        %v4231 = vunpack.c.l.b16 %v4102
        %v4232 = vunpack.c.l.b16 %v4103
        %v4233 = vunpack.c.l.b16 %v4104
        %v4234 = vunpack.c.l.b16 %v4105
        %v4235 = vunpack.c.l.b16 %v4106
        %v4236 = vunpack.c.l.b16 %v4107
        %v4237 = vunpack.c.l.b16 %v4108
        %v4238 = vunpack.c.l.b16 %v4109
        %v4239 = vunpack.c.l.b16 %v4110
        %v4240 = vunpack.c.l.b16 %v4111
        %v4241 = vunpack.c.l.b16 %v4112
        %v4242 = vunpack.c.l.b16 %v4113
        %v4243 = vunpack.c.l.b16 %v4114
        %v4244 = vunpack.c.l.b16 %v4115
        %v4245 = vunpack.c.l.b16 %v4116
        %v4246 = vunpack.c.l.b16 %v4117
        %v4247 = vpack.c.b16 %v4187, %v4186
        %v4248 = vpack.c.b16 %v4189, %v4188
        %v4249 = vpack.c.b16 %v4191, %v4190
        %v4250 = vpack.c.b16 %v4193, %v4192
        %v4251 = vpack.c.b16 %v4195, %v4194
        %v4252 = vpack.c.b16 %v4197, %v4196
        %v4253 = vpack.c.b16 %v4199, %v4198
        %v4254 = vpack.c.b16 %v4201, %v4200
        %v4255 = vpack.c.b16 %v4203, %v4202
        %v4256 = vpack.c.b16 %v4205, %v4204
        %v4257 = vpack.c.b16 %v4207, %v4206
        %v4258 = vpack.c.b16 %v4209, %v4208
        %v4259 = vpack.c.b16 %v4211, %v4210
        %v4260 = vpack.c.b16 %v4213, %v4212
        %v4261 = vpack.c.b16 %v4215, %v4214
        %v4262 = vpack.c.b16 %v4217, %v4216
        %v4263 = vpack.c.b16 %v4219, %v4218
        %v4264 = vpack.c.b16 %v4221, %v4220
        %v4265 = vpack.c.b16 %v4223, %v4222
        %v4266 = vpack.c.b16 %v4225, %v4224
        %v4267 = vpack.c.b16 %v4227, %v4226
        %v4268 = vpack.c.b16 %v4229, %v4228
        %v4269 = vpack.c.b16 %v4231, %v4230
        %v4270 = vpack.c.b16 %v4233, %v4232
        %v4271 = vpack.c.b16 %v4235, %v4234
        %v4272 = vpack.c.b16 %v4237, %v4236
        %v4273 = vpack.c.b16 %v4239, %v4238
        %v4274 = vpack.c.b16 %v4241, %v4240
        %v4275 = vpack.c.b16 %v4243, %v4242
        %v4276 = vpack.c.b16 %v4245, %v4244
        %v4277 = vpack.c.b16 %v4246, %v4246
        %v4309 = vsel %vm3358, %v4121, 0
        %v4312 = vsel %vm506, %v4277, 0
        %4314 = vmatprep.subr.bf16.mxu0 0
        %4315 = vmatpush1.bf16.msra.mxu0 %v4247
        %4316 = vmatprep.subr.bf16.mxu0 0
        %4317 = vmatpush1.bf16.msra.mxu0 %v4248
        %4318 = vmatprep.subr.bf16.mxu0 0
        %4319 = vmatpush1.bf16.msra.mxu0 %v4249
        %4320 = vmatprep.subr.bf16.mxu0 0
        %4321 = vmatpush1.bf16.msra.mxu0 %v4250
        %4322 = vmatprep.subr.bf16.mxu0 0
        %4323 = vmatpush1.bf16.msra.mxu0 %v4251
        %4324 = vmatprep.subr.bf16.mxu0 0
        %4325 = vmatpush1.bf16.msra.mxu0 %v4252
        %4326 = vmatprep.subr.bf16.mxu0 0
        %4327 = vmatpush1.bf16.msra.mxu0 %v4253
        %4328 = vmatprep.subr.bf16.mxu0 0
        %4329 = vmatpush1.bf16.msra.mxu0 %v4254
        %4330 = vmatprep.subr.bf16.mxu0 0
        %4331 = vmatpush1.bf16.msra.mxu0 %v4255
        %4332 = vmatprep.subr.bf16.mxu0 0
        %4333 = vmatpush1.bf16.msra.mxu0 %v4256
        %4334 = vmatprep.subr.bf16.mxu0 0
        %4335 = vmatpush1.bf16.msra.mxu0 %v4257
        %4336 = vmatprep.subr.bf16.mxu0 0
        %4337 = vmatpush1.bf16.msra.mxu0 %v4258
        %4338 = vmatprep.subr.bf16.mxu0 0
        %4339 = vmatpush1.bf16.msra.mxu0 %v4259
        %4340 = vmatprep.subr.bf16.mxu0 0
        %4341 = vmatpush1.bf16.msra.mxu0 %v4260
        %4342 = vmatprep.subr.bf16.mxu0 0
        %4343 = vmatpush1.bf16.msra.mxu0 %v4261
        %4344 = vmatprep.subr.bf16.mxu0 0
        %4345 = vmatpush1.bf16.msra.mxu0 %v4262
        %4346 = vmatprep.mubr.bf16.mxu0 %v4119
        %4347 = vmatmul.mubr.bf16.gmra.mrb[0].mxu0 %v4118
        %v4348 = vpop.f32.mrb[0].mxu0
        %v4349 = vadd.f32 0.0, %v4348
        %v4350 = vpop.f32.mrb[0].mxu0
        %v4351 = vpop.f32.mrb[0].mxu0
        %v4352 = vpop.f32.mrb[0].mxu0
        %4353 = vdwg.mxu0
        %4354 = vmatprep.subr.bf16.mxu0 0
        %4355 = vmatpush1.bf16.msra.mxu0 %v4263
        %4356 = vmatprep.subr.bf16.mxu0 0
        %4357 = vmatpush1.bf16.msra.mxu0 %v4264
        %4358 = vmatprep.subr.bf16.mxu0 0
        %4359 = vmatpush1.bf16.msra.mxu0 %v4265
        %4360 = vmatprep.subr.bf16.mxu0 0
        %4361 = vmatpush1.bf16.msra.mxu0 %v4266
        %4362 = vmatprep.subr.bf16.mxu0 0
        %4363 = vmatpush1.bf16.msra.mxu0 %v4267
        %4364 = vmatprep.subr.bf16.mxu0 0
        %4365 = vmatpush1.bf16.msra.mxu0 %v4268
        %4366 = vmatprep.subr.bf16.mxu0 0
        %4367 = vmatpush1.bf16.msra.mxu0 %v4269
        %4368 = vmatprep.subr.bf16.mxu0 0
        %4369 = vmatpush1.bf16.msra.mxu0 %v4270
        %4370 = vmatprep.subr.bf16.mxu0 0
        %4371 = vmatpush1.bf16.msra.mxu0 %v4271
        %4372 = vmatprep.subr.bf16.mxu0 0
        %4373 = vmatpush1.bf16.msra.mxu0 %v4272
        %4374 = vmatprep.subr.bf16.mxu0 0
        %4375 = vmatpush1.bf16.msra.mxu0 %v4273
        %4376 = vmatprep.subr.bf16.mxu0 0
        %4377 = vmatpush1.bf16.msra.mxu0 %v4274
        %4378 = vmatprep.subr.bf16.mxu0 0
        %4379 = vmatpush1.bf16.msra.mxu0 %v4275
        %4380 = vmatprep.subr.bf16.mxu0 0
        %4381 = vmatpush1.bf16.msra.mxu0 %v4276
        %4382 = vmatprep.subr.bf16.mxu0 0
        %4383 = vmatpush1.bf16.msra.mxu0 %v4312
        %4384 = vmatprep.subr.bf16.mxu0 0
        %4385 = vmatpush1.bf16.msra.mxu0 0
        %4386 = vmatprep.mubr.bf16.mxu0 %v4309
        %4387 = vmatmul.mubr.bf16.gmra.mrb[0].mxu0 %v4120
        %v4388 = vpop.f32.mrb[0].mxu0
        %v4389 = vadd.f32 %v4349, %v4388
        %v4390 = vpop.f32.mrb[0].mxu0
        %v4391 = vpop.f32.mrb[0].mxu0
        %v4392 = vpop.f32.mrb[0].mxu0
        %4393 = vdwg.mxu0
        %v4394 = vadd.f32 %v4055, %v4389
        %s4395 = scalar_lea.vmem %s10, 976
        %v4396 = vld [vmem:[%s4395] sm:$0xf]
        %v4397 = vld [vmem:[%s4395 + $0x4] sm:$0xf]
        %v4398 = vld [vmem:[%s4395 + $0x8] sm:$0xf]
        %v4399 = vld [vmem:[%s4395 + $0xc] sm:$0xf]
        %v4400 = vld [vmem:[%s4395 + $0x10] sm:$0xf]
        %v4401 = vld [vmem:[%s4395 + $0x14] sm:$0xf]
        %v4402 = vld [vmem:[%s4395 + $0x18] sm:$0xf]
        %v4403 = vld [vmem:[%s4395 + $0x1c] sm:$0xf]
        %v4404 = vld [vmem:[%s4395 + $0x20] sm:$0xf]
        %v4405 = vld [vmem:[%s4395 + $0x24] sm:$0xf]
        %v4406 = vld [vmem:[%s4395 + $0x28] sm:$0xf]
        %v4407 = vld [vmem:[%s4395 + $0x2c] sm:$0xf]
        %v4408 = vld [vmem:[%s4395 + $0x30] sm:$0xf]
        %v4409 = vld [vmem:[%s4395 + $0x34] sm:$0xf]
        %v4410 = vld [vmem:[%s4395 + $0x38] sm:$0xf]
        %v4411 = vld [vmem:[%s4395 + $0x3c] sm:$0xf]
        %v4412 = vld [vmem:[%s4395 + $0x40] sm:$0xf]
        %v4413 = vld [vmem:[%s4395 + $0x44] sm:$0xf]
        %v4414 = vld [vmem:[%s4395 + $0x48] sm:$0xf]
        %v4415 = vld [vmem:[%s4395 + $0x4c] sm:$0xf]
        %v4416 = vld [vmem:[%s4395 + $0x50] sm:$0xf]
        %v4417 = vld [vmem:[%s4395 + $0x54] sm:$0xf]
        %v4418 = vld [vmem:[%s4395 + $0x58] sm:$0xf]
        %v4419 = vld [vmem:[%s4395 + $0x5c] sm:$0xf]
        %v4420 = vld [vmem:[%s4395 + $0x60] sm:$0xf]
        %v4421 = vld [vmem:[%s4395 + $0x64] sm:$0xf]
        %v4422 = vld [vmem:[%s4395 + $0x68] sm:$0xf]
        %v4423 = vld [vmem:[%s4395 + $0x6c] sm:$0xf]
        %v4424 = vld [vmem:[%s4395 + $0x70] sm:$0xf]
        %v4425 = vld [vmem:[%s4395 + $0x74] sm:$0xf]
        %v4426 = vld [vmem:[%s4395 + $0x78] sm:$0xf]
        %v4427 = vld [vmem:[%s4395 + $0x7c] sm:$0xf]
        %v4428 = vld [vmem:[%s4395 + $0x80] sm:$0xf]
        %v4429 = vld [vmem:[%s4395 + $0x84] sm:$0xf]
        %v4430 = vld [vmem:[%s4395 + $0x88] sm:$0xf]
        %v4431 = vld [vmem:[%s4395 + $0x8c] sm:$0xf]
        %v4432 = vld [vmem:[%s4395 + $0x90] sm:$0xf]
        %v4433 = vld [vmem:[%s4395 + $0x94] sm:$0xf]
        %v4434 = vld [vmem:[%s4395 + $0x98] sm:$0xf]
        %v4435 = vld [vmem:[%s4395 + $0x9c] sm:$0xf]
        %v4436 = vld [vmem:[%s4395 + $0xa0] sm:$0xf]
        %v4437 = vld [vmem:[%s4395 + $0xa4] sm:$0xf]
        %v4438 = vld [vmem:[%s4395 + $0xa8] sm:$0xf]
        %v4439 = vld [vmem:[%s4395 + $0xac] sm:$0xf]
        %v4440 = vld [vmem:[%s4395 + $0xb0] sm:$0xf]
        %v4441 = vld [vmem:[%s4395 + $0xb4] sm:$0xf]
        %v4442 = vld [vmem:[%s4395 + $0xb8] sm:$0xf]
        %v4443 = vld [vmem:[%s4395 + $0xbc] sm:$0xf]
        %v4444 = vld [vmem:[%s4395 + $0xc0] sm:$0xf]
        %v4445 = vld [vmem:[%s4395 + $0xc4] sm:$0xf]
        %v4446 = vld [vmem:[%s4395 + $0xc8] sm:$0xf]
        %v4447 = vld [vmem:[%s4395 + $0xcc] sm:$0xf]
        %v4448 = vld [vmem:[%s4395 + $0xd0] sm:$0xf]
        %v4449 = vld [vmem:[%s4395 + $0xd4] sm:$0xf]
        %v4450 = vld [vmem:[%s4395 + $0xd8] sm:$0xf]
        %v4451 = vld [vmem:[%s4395 + $0xdc] sm:$0xf]
        %v4452 = vld [vmem:[%s4395 + $0xe0] sm:$0xf]
        %v4453 = vld [vmem:[%s4395 + $0xe4] sm:$0xf]
        %v4454 = vld [vmem:[%s4395 + $0xe8] sm:$0xf]
        %v4455 = vld [vmem:[%s4395 + $0xec] sm:$0xf]
        %v4456 = vld [vmem:[%s4395 + $0xf0] sm:$0x3]
        %v4457 = vrot.slane %v3033, 2
        %v4458 = vrot.slane %v3034, 2
        %v4459 = vrot.slane %v3035, 2
        %v4460 = vrot.slane %v3036, 2
        %v4525 = vunpack.c.l.b16 %v4396
        %v4526 = vunpack.c.l.b16 %v4397
        %v4527 = vunpack.c.l.b16 %v4398
        %v4528 = vunpack.c.l.b16 %v4399
        %v4529 = vunpack.c.l.b16 %v4400
        %v4530 = vunpack.c.l.b16 %v4401
        %v4531 = vunpack.c.l.b16 %v4402
        %v4532 = vunpack.c.l.b16 %v4403
        %v4533 = vunpack.c.l.b16 %v4404
        %v4534 = vunpack.c.l.b16 %v4405
        %v4535 = vunpack.c.l.b16 %v4406
        %v4536 = vunpack.c.l.b16 %v4407
        %v4537 = vunpack.c.l.b16 %v4408
        %v4538 = vunpack.c.l.b16 %v4409
        %v4539 = vunpack.c.l.b16 %v4410
        %v4540 = vunpack.c.l.b16 %v4411
        %v4541 = vunpack.c.l.b16 %v4412
        %v4542 = vunpack.c.l.b16 %v4413
        %v4543 = vunpack.c.l.b16 %v4414
        %v4544 = vunpack.c.l.b16 %v4415
        %v4545 = vunpack.c.l.b16 %v4416
        %v4546 = vunpack.c.l.b16 %v4417
        %v4547 = vunpack.c.l.b16 %v4418
        %v4548 = vunpack.c.l.b16 %v4419
        %v4549 = vunpack.c.l.b16 %v4420
        %v4550 = vunpack.c.l.b16 %v4421
        %v4551 = vunpack.c.l.b16 %v4422
        %v4552 = vunpack.c.l.b16 %v4423
        %v4553 = vunpack.c.l.b16 %v4424
        %v4554 = vunpack.c.l.b16 %v4425
        %v4555 = vunpack.c.l.b16 %v4426
        %v4556 = vunpack.c.l.b16 %v4427
        %v4557 = vunpack.c.l.b16 %v4428
        %v4558 = vunpack.c.l.b16 %v4429
        %v4559 = vunpack.c.l.b16 %v4430
        %v4560 = vunpack.c.l.b16 %v4431
        %v4561 = vunpack.c.l.b16 %v4432
        %v4562 = vunpack.c.l.b16 %v4433
        %v4563 = vunpack.c.l.b16 %v4434
        %v4564 = vunpack.c.l.b16 %v4435
        %v4565 = vunpack.c.l.b16 %v4436
        %v4566 = vunpack.c.l.b16 %v4437
        %v4567 = vunpack.c.l.b16 %v4438
        %v4568 = vunpack.c.l.b16 %v4439
        %v4569 = vunpack.c.l.b16 %v4440
        %v4570 = vunpack.c.l.b16 %v4441
        %v4571 = vunpack.c.l.b16 %v4442
        %v4572 = vunpack.c.l.b16 %v4443
        %v4573 = vunpack.c.l.b16 %v4444
        %v4574 = vunpack.c.l.b16 %v4445
        %v4575 = vunpack.c.l.b16 %v4446
        %v4576 = vunpack.c.l.b16 %v4447
        %v4577 = vunpack.c.l.b16 %v4448
        %v4578 = vunpack.c.l.b16 %v4449
        %v4579 = vunpack.c.l.b16 %v4450
        %v4580 = vunpack.c.l.b16 %v4451
        %v4581 = vunpack.c.l.b16 %v4452
        %v4582 = vunpack.c.l.b16 %v4453
        %v4583 = vunpack.c.l.b16 %v4454
        %v4584 = vunpack.c.l.b16 %v4455
        %v4585 = vunpack.c.l.b16 %v4456
        %v4586 = vpack.c.b16 %v4526, %v4525
        %v4587 = vpack.c.b16 %v4528, %v4527
        %v4588 = vpack.c.b16 %v4530, %v4529
        %v4589 = vpack.c.b16 %v4532, %v4531
        %v4590 = vpack.c.b16 %v4534, %v4533
        %v4591 = vpack.c.b16 %v4536, %v4535
        %v4592 = vpack.c.b16 %v4538, %v4537
        %v4593 = vpack.c.b16 %v4540, %v4539
        %v4594 = vpack.c.b16 %v4542, %v4541
        %v4595 = vpack.c.b16 %v4544, %v4543
        %v4596 = vpack.c.b16 %v4546, %v4545
        %v4597 = vpack.c.b16 %v4548, %v4547
        %v4598 = vpack.c.b16 %v4550, %v4549
        %v4599 = vpack.c.b16 %v4552, %v4551
        %v4600 = vpack.c.b16 %v4554, %v4553
        %v4601 = vpack.c.b16 %v4556, %v4555
        %v4602 = vpack.c.b16 %v4558, %v4557
        %v4603 = vpack.c.b16 %v4560, %v4559
        %v4604 = vpack.c.b16 %v4562, %v4561
        %v4605 = vpack.c.b16 %v4564, %v4563
        %v4606 = vpack.c.b16 %v4566, %v4565
        %v4607 = vpack.c.b16 %v4568, %v4567
        %v4608 = vpack.c.b16 %v4570, %v4569
        %v4609 = vpack.c.b16 %v4572, %v4571
        %v4610 = vpack.c.b16 %v4574, %v4573
        %v4611 = vpack.c.b16 %v4576, %v4575
        %v4612 = vpack.c.b16 %v4578, %v4577
        %v4613 = vpack.c.b16 %v4580, %v4579
        %v4614 = vpack.c.b16 %v4582, %v4581
        %v4615 = vpack.c.b16 %v4584, %v4583
        %v4616 = vpack.c.b16 %v4585, %v4585
        %v4648 = vsel %vm3358, %v4460, 0
        %v4651 = vsel %vm506, %v4616, 0
        %4653 = vmatprep.subr.bf16.mxu0 0
        %4654 = vmatpush1.bf16.msra.mxu0 %v4586
        %4655 = vmatprep.subr.bf16.mxu0 0
        %4656 = vmatpush1.bf16.msra.mxu0 %v4587
        %4657 = vmatprep.subr.bf16.mxu0 0
        %4658 = vmatpush1.bf16.msra.mxu0 %v4588
        %4659 = vmatprep.subr.bf16.mxu0 0
        %4660 = vmatpush1.bf16.msra.mxu0 %v4589
        %4661 = vmatprep.subr.bf16.mxu0 0
        %4662 = vmatpush1.bf16.msra.mxu0 %v4590
        %4663 = vmatprep.subr.bf16.mxu0 0
        %4664 = vmatpush1.bf16.msra.mxu0 %v4591
        %4665 = vmatprep.subr.bf16.mxu0 0
        %4666 = vmatpush1.bf16.msra.mxu0 %v4592
        %4667 = vmatprep.subr.bf16.mxu0 0
        %4668 = vmatpush1.bf16.msra.mxu0 %v4593
        %4669 = vmatprep.subr.bf16.mxu0 0
        %4670 = vmatpush1.bf16.msra.mxu0 %v4594
        %4671 = vmatprep.subr.bf16.mxu0 0
        %4672 = vmatpush1.bf16.msra.mxu0 %v4595
        %4673 = vmatprep.subr.bf16.mxu0 0
        %4674 = vmatpush1.bf16.msra.mxu0 %v4596
        %4675 = vmatprep.subr.bf16.mxu0 0
        %4676 = vmatpush1.bf16.msra.mxu0 %v4597
        %4677 = vmatprep.subr.bf16.mxu0 0
        %4678 = vmatpush1.bf16.msra.mxu0 %v4598
        %4679 = vmatprep.subr.bf16.mxu0 0
        %4680 = vmatpush1.bf16.msra.mxu0 %v4599
        %4681 = vmatprep.subr.bf16.mxu0 0
        %4682 = vmatpush1.bf16.msra.mxu0 %v4600
        %4683 = vmatprep.subr.bf16.mxu0 0
        %4684 = vmatpush1.bf16.msra.mxu0 %v4601
        %4685 = vmatprep.mubr.bf16.mxu0 %v4458
        %4686 = vmatmul.mubr.bf16.gmra.mrb[0].mxu0 %v4457
        %v4687 = vpop.f32.mrb[0].mxu0
        %v4688 = vadd.f32 0.0, %v4687
        %v4689 = vpop.f32.mrb[0].mxu0
        %v4690 = vpop.f32.mrb[0].mxu0
        %v4691 = vpop.f32.mrb[0].mxu0
        %4692 = vdwg.mxu0
        %4693 = vmatprep.subr.bf16.mxu0 0
        %4694 = vmatpush1.bf16.msra.mxu0 %v4602
        %4695 = vmatprep.subr.bf16.mxu0 0
        %4696 = vmatpush1.bf16.msra.mxu0 %v4603
        %4697 = vmatprep.subr.bf16.mxu0 0
        %4698 = vmatpush1.bf16.msra.mxu0 %v4604
        %4699 = vmatprep.subr.bf16.mxu0 0
        %4700 = vmatpush1.bf16.msra.mxu0 %v4605
        %4701 = vmatprep.subr.bf16.mxu0 0
        %4702 = vmatpush1.bf16.msra.mxu0 %v4606
        %4703 = vmatprep.subr.bf16.mxu0 0
        %4704 = vmatpush1.bf16.msra.mxu0 %v4607
        %4705 = vmatprep.subr.bf16.mxu0 0
        %4706 = vmatpush1.bf16.msra.mxu0 %v4608
        %4707 = vmatprep.subr.bf16.mxu0 0
        %4708 = vmatpush1.bf16.msra.mxu0 %v4609
        %4709 = vmatprep.subr.bf16.mxu0 0
        %4710 = vmatpush1.bf16.msra.mxu0 %v4610
        %4711 = vmatprep.subr.bf16.mxu0 0
        %4712 = vmatpush1.bf16.msra.mxu0 %v4611
        %4713 = vmatprep.subr.bf16.mxu0 0
        %4714 = vmatpush1.bf16.msra.mxu0 %v4612
        %4715 = vmatprep.subr.bf16.mxu0 0
        %4716 = vmatpush1.bf16.msra.mxu0 %v4613
        %4717 = vmatprep.subr.bf16.mxu0 0
        %4718 = vmatpush1.bf16.msra.mxu0 %v4614
        %4719 = vmatprep.subr.bf16.mxu0 0
        %4720 = vmatpush1.bf16.msra.mxu0 %v4615
        %4721 = vmatprep.subr.bf16.mxu0 0
        %4722 = vmatpush1.bf16.msra.mxu0 %v4651
        %4723 = vmatprep.subr.bf16.mxu0 0
        %4724 = vmatpush1.bf16.msra.mxu0 0
        %4725 = vmatprep.mubr.bf16.mxu0 %v4648
        %4726 = vmatmul.mubr.bf16.gmra.mrb[0].mxu0 %v4459
        %v4727 = vpop.f32.mrb[0].mxu0
        %v4728 = vadd.f32 %v4688, %v4727
        %v4729 = vpop.f32.mrb[0].mxu0
        %v4730 = vpop.f32.mrb[0].mxu0
        %v4731 = vpop.f32.mrb[0].mxu0
        %4732 = vdwg.mxu0
        %v4733 = vadd.f32 %v4394, %v4728
        %s4734 = scalar_lea.vmem %s10, 1220
        %v4735 = vld [vmem:[%s4734] sm:$0xf]
        %v4736 = vld [vmem:[%s4734 + $0x4] sm:$0xf]
        %v4737 = vld [vmem:[%s4734 + $0x8] sm:$0xf]
        %v4738 = vld [vmem:[%s4734 + $0xc] sm:$0xf]
        %v4739 = vld [vmem:[%s4734 + $0x10] sm:$0xf]
        %v4740 = vld [vmem:[%s4734 + $0x14] sm:$0xf]
        %v4741 = vld [vmem:[%s4734 + $0x18] sm:$0xf]
        %v4742 = vld [vmem:[%s4734 + $0x1c] sm:$0xf]
        %v4743 = vld [vmem:[%s4734 + $0x20] sm:$0xf]
        %v4744 = vld [vmem:[%s4734 + $0x24] sm:$0xf]
        %v4745 = vld [vmem:[%s4734 + $0x28] sm:$0xf]
        %v4746 = vld [vmem:[%s4734 + $0x2c] sm:$0xf]
        %v4747 = vld [vmem:[%s4734 + $0x30] sm:$0xf]
        %v4748 = vld [vmem:[%s4734 + $0x34] sm:$0xf]
        %v4749 = vld [vmem:[%s4734 + $0x38] sm:$0xf]
        %v4750 = vld [vmem:[%s4734 + $0x3c] sm:$0xf]
        %v4751 = vld [vmem:[%s4734 + $0x40] sm:$0xf]
        %v4752 = vld [vmem:[%s4734 + $0x44] sm:$0xf]
        %v4753 = vld [vmem:[%s4734 + $0x48] sm:$0xf]
        %v4754 = vld [vmem:[%s4734 + $0x4c] sm:$0xf]
        %v4755 = vld [vmem:[%s4734 + $0x50] sm:$0xf]
        %v4756 = vld [vmem:[%s4734 + $0x54] sm:$0xf]
        %v4757 = vld [vmem:[%s4734 + $0x58] sm:$0xf]
        %v4758 = vld [vmem:[%s4734 + $0x5c] sm:$0xf]
        %v4759 = vld [vmem:[%s4734 + $0x60] sm:$0xf]
        %v4760 = vld [vmem:[%s4734 + $0x64] sm:$0xf]
        %v4761 = vld [vmem:[%s4734 + $0x68] sm:$0xf]
        %v4762 = vld [vmem:[%s4734 + $0x6c] sm:$0xf]
        %v4763 = vld [vmem:[%s4734 + $0x70] sm:$0xf]
        %v4764 = vld [vmem:[%s4734 + $0x74] sm:$0xf]
        %v4765 = vld [vmem:[%s4734 + $0x78] sm:$0xf]
        %v4766 = vld [vmem:[%s4734 + $0x7c] sm:$0xf]
        %v4767 = vld [vmem:[%s4734 + $0x80] sm:$0xf]
        %v4768 = vld [vmem:[%s4734 + $0x84] sm:$0xf]
        %v4769 = vld [vmem:[%s4734 + $0x88] sm:$0xf]
        %v4770 = vld [vmem:[%s4734 + $0x8c] sm:$0xf]
        %v4771 = vld [vmem:[%s4734 + $0x90] sm:$0xf]
        %v4772 = vld [vmem:[%s4734 + $0x94] sm:$0xf]
        %v4773 = vld [vmem:[%s4734 + $0x98] sm:$0xf]
        %v4774 = vld [vmem:[%s4734 + $0x9c] sm:$0xf]
        %v4775 = vld [vmem:[%s4734 + $0xa0] sm:$0xf]
        %v4776 = vld [vmem:[%s4734 + $0xa4] sm:$0xf]
        %v4777 = vld [vmem:[%s4734 + $0xa8] sm:$0xf]
        %v4778 = vld [vmem:[%s4734 + $0xac] sm:$0xf]
        %v4779 = vld [vmem:[%s4734 + $0xb0] sm:$0xf]
        %v4780 = vld [vmem:[%s4734 + $0xb4] sm:$0xf]
        %v4781 = vld [vmem:[%s4734 + $0xb8] sm:$0xf]
        %v4782 = vld [vmem:[%s4734 + $0xbc] sm:$0xf]
        %v4783 = vld [vmem:[%s4734 + $0xc0] sm:$0xf]
        %v4784 = vld [vmem:[%s4734 + $0xc4] sm:$0xf]
        %v4785 = vld [vmem:[%s4734 + $0xc8] sm:$0xf]
        %v4786 = vld [vmem:[%s4734 + $0xcc] sm:$0xf]
        %v4787 = vld [vmem:[%s4734 + $0xd0] sm:$0xf]
        %v4788 = vld [vmem:[%s4734 + $0xd4] sm:$0xf]
        %v4789 = vld [vmem:[%s4734 + $0xd8] sm:$0xf]
        %v4790 = vld [vmem:[%s4734 + $0xdc] sm:$0xf]
        %v4791 = vld [vmem:[%s4734 + $0xe0] sm:$0xf]
        %v4792 = vld [vmem:[%s4734 + $0xe4] sm:$0xf]
        %v4793 = vld [vmem:[%s4734 + $0xe8] sm:$0xf]
        %v4794 = vld [vmem:[%s4734 + $0xec] sm:$0xf]
        %v4795 = vld [vmem:[%s4734 + $0xf0] sm:$0x3]
        %v4796 = vrot.slane %v3161, 2
        %v4797 = vrot.slane %v3164, 2
        %v4798 = vrot.slane %v3167, 2
        %v4799 = vrot.slane %v3170, 2
        %v4864 = vunpack.c.l.b16 %v4735
        %v4865 = vunpack.c.l.b16 %v4736
        %v4866 = vunpack.c.l.b16 %v4737
        %v4867 = vunpack.c.l.b16 %v4738
        %v4868 = vunpack.c.l.b16 %v4739
        %v4869 = vunpack.c.l.b16 %v4740
        %v4870 = vunpack.c.l.b16 %v4741
        %v4871 = vunpack.c.l.b16 %v4742
        %v4872 = vunpack.c.l.b16 %v4743
        %v4873 = vunpack.c.l.b16 %v4744
        %v4874 = vunpack.c.l.b16 %v4745
        %v4875 = vunpack.c.l.b16 %v4746
        %v4876 = vunpack.c.l.b16 %v4747
        %v4877 = vunpack.c.l.b16 %v4748
        %v4878 = vunpack.c.l.b16 %v4749
        %v4879 = vunpack.c.l.b16 %v4750
        %v4880 = vunpack.c.l.b16 %v4751
        %v4881 = vunpack.c.l.b16 %v4752
        %v4882 = vunpack.c.l.b16 %v4753
        %v4883 = vunpack.c.l.b16 %v4754
        %v4884 = vunpack.c.l.b16 %v4755
        %v4885 = vunpack.c.l.b16 %v4756
        %v4886 = vunpack.c.l.b16 %v4757
        %v4887 = vunpack.c.l.b16 %v4758
        %v4888 = vunpack.c.l.b16 %v4759
        %v4889 = vunpack.c.l.b16 %v4760
        %v4890 = vunpack.c.l.b16 %v4761
        %v4891 = vunpack.c.l.b16 %v4762
        %v4892 = vunpack.c.l.b16 %v4763
        %v4893 = vunpack.c.l.b16 %v4764
        %v4894 = vunpack.c.l.b16 %v4765
        %v4895 = vunpack.c.l.b16 %v4766
        %v4896 = vunpack.c.l.b16 %v4767
        %v4897 = vunpack.c.l.b16 %v4768
        %v4898 = vunpack.c.l.b16 %v4769
        %v4899 = vunpack.c.l.b16 %v4770
        %v4900 = vunpack.c.l.b16 %v4771
        %v4901 = vunpack.c.l.b16 %v4772
        %v4902 = vunpack.c.l.b16 %v4773
        %v4903 = vunpack.c.l.b16 %v4774
        %v4904 = vunpack.c.l.b16 %v4775
        %v4905 = vunpack.c.l.b16 %v4776
        %v4906 = vunpack.c.l.b16 %v4777
        %v4907 = vunpack.c.l.b16 %v4778
        %v4908 = vunpack.c.l.b16 %v4779
        %v4909 = vunpack.c.l.b16 %v4780
        %v4910 = vunpack.c.l.b16 %v4781
        %v4911 = vunpack.c.l.b16 %v4782
        %v4912 = vunpack.c.l.b16 %v4783
        %v4913 = vunpack.c.l.b16 %v4784
        %v4914 = vunpack.c.l.b16 %v4785
        %v4915 = vunpack.c.l.b16 %v4786
        %v4916 = vunpack.c.l.b16 %v4787
        %v4917 = vunpack.c.l.b16 %v4788
        %v4918 = vunpack.c.l.b16 %v4789
        %v4919 = vunpack.c.l.b16 %v4790
        %v4920 = vunpack.c.l.b16 %v4791
        %v4921 = vunpack.c.l.b16 %v4792
        %v4922 = vunpack.c.l.b16 %v4793
        %v4923 = vunpack.c.l.b16 %v4794
        %v4924 = vunpack.c.l.b16 %v4795
        %v4925 = vpack.c.b16 %v4865, %v4864
        %v4926 = vpack.c.b16 %v4867, %v4866
        %v4927 = vpack.c.b16 %v4869, %v4868
        %v4928 = vpack.c.b16 %v4871, %v4870
        %v4929 = vpack.c.b16 %v4873, %v4872
        %v4930 = vpack.c.b16 %v4875, %v4874
        %v4931 = vpack.c.b16 %v4877, %v4876
        %v4932 = vpack.c.b16 %v4879, %v4878
        %v4933 = vpack.c.b16 %v4881, %v4880
        %v4934 = vpack.c.b16 %v4883, %v4882
        %v4935 = vpack.c.b16 %v4885, %v4884
        %v4936 = vpack.c.b16 %v4887, %v4886
        %v4937 = vpack.c.b16 %v4889, %v4888
        %v4938 = vpack.c.b16 %v4891, %v4890
        %v4939 = vpack.c.b16 %v4893, %v4892
        %v4940 = vpack.c.b16 %v4895, %v4894
        %v4941 = vpack.c.b16 %v4897, %v4896
        %v4942 = vpack.c.b16 %v4899, %v4898
        %v4943 = vpack.c.b16 %v4901, %v4900
        %v4944 = vpack.c.b16 %v4903, %v4902
        %v4945 = vpack.c.b16 %v4905, %v4904
        %v4946 = vpack.c.b16 %v4907, %v4906
        %v4947 = vpack.c.b16 %v4909, %v4908
        %v4948 = vpack.c.b16 %v4911, %v4910
        %v4949 = vpack.c.b16 %v4913, %v4912
        %v4950 = vpack.c.b16 %v4915, %v4914
        %v4951 = vpack.c.b16 %v4917, %v4916
        %v4952 = vpack.c.b16 %v4919, %v4918
        %v4953 = vpack.c.b16 %v4921, %v4920
        %v4954 = vpack.c.b16 %v4923, %v4922
        %v4955 = vpack.c.b16 %v4924, %v4924
        %v4987 = vsel %vm3358, %v4799, 0
        %v4990 = vsel %vm506, %v4955, 0
        %4992 = vmatprep.subr.bf16.mxu0 0
        %4993 = vmatpush1.bf16.msra.mxu0 %v4925
        %4994 = vmatprep.subr.bf16.mxu0 0
        %4995 = vmatpush1.bf16.msra.mxu0 %v4926
        %4996 = vmatprep.subr.bf16.mxu0 0
        %4997 = vmatpush1.bf16.msra.mxu0 %v4927
        %4998 = vmatprep.subr.bf16.mxu0 0
        %4999 = vmatpush1.bf16.msra.mxu0 %v4928
        %5000 = vmatprep.subr.bf16.mxu0 0
        %5001 = vmatpush1.bf16.msra.mxu0 %v4929
        %5002 = vmatprep.subr.bf16.mxu0 0
        %5003 = vmatpush1.bf16.msra.mxu0 %v4930
        %5004 = vmatprep.subr.bf16.mxu0 0
        %5005 = vmatpush1.bf16.msra.mxu0 %v4931
        %5006 = vmatprep.subr.bf16.mxu0 0
        %5007 = vmatpush1.bf16.msra.mxu0 %v4932
        %5008 = vmatprep.subr.bf16.mxu0 0
        %5009 = vmatpush1.bf16.msra.mxu0 %v4933
        %5010 = vmatprep.subr.bf16.mxu0 0
        %5011 = vmatpush1.bf16.msra.mxu0 %v4934
        %5012 = vmatprep.subr.bf16.mxu0 0
        %5013 = vmatpush1.bf16.msra.mxu0 %v4935
        %5014 = vmatprep.subr.bf16.mxu0 0
        %5015 = vmatpush1.bf16.msra.mxu0 %v4936
        %5016 = vmatprep.subr.bf16.mxu0 0
        %5017 = vmatpush1.bf16.msra.mxu0 %v4937
        %5018 = vmatprep.subr.bf16.mxu0 0
        %5019 = vmatpush1.bf16.msra.mxu0 %v4938
        %5020 = vmatprep.subr.bf16.mxu0 0
        %5021 = vmatpush1.bf16.msra.mxu0 %v4939
        %5022 = vmatprep.subr.bf16.mxu0 0
        %5023 = vmatpush1.bf16.msra.mxu0 %v4940
        %5024 = vmatprep.mubr.bf16.mxu0 %v4797
        %5025 = vmatmul.mubr.bf16.gmra.mrb[0].mxu0 %v4796
        %v5026 = vpop.f32.mrb[0].mxu0
        %v5027 = vadd.f32 0.0, %v5026
        %v5028 = vpop.f32.mrb[0].mxu0
        %v5029 = vpop.f32.mrb[0].mxu0
        %v5030 = vpop.f32.mrb[0].mxu0
        %5031 = vdwg.mxu0
        %5032 = vmatprep.subr.bf16.mxu0 0
        %5033 = vmatpush1.bf16.msra.mxu0 %v4941
        %5034 = vmatprep.subr.bf16.mxu0 0
        %5035 = vmatpush1.bf16.msra.mxu0 %v4942
        %5036 = vmatprep.subr.bf16.mxu0 0
        %5037 = vmatpush1.bf16.msra.mxu0 %v4943
        %5038 = vmatprep.subr.bf16.mxu0 0
        %5039 = vmatpush1.bf16.msra.mxu0 %v4944
        %5040 = vmatprep.subr.bf16.mxu0 0
        %5041 = vmatpush1.bf16.msra.mxu0 %v4945
        %5042 = vmatprep.subr.bf16.mxu0 0
        %5043 = vmatpush1.bf16.msra.mxu0 %v4946
        %5044 = vmatprep.subr.bf16.mxu0 0
        %5045 = vmatpush1.bf16.msra.mxu0 %v4947
        %5046 = vmatprep.subr.bf16.mxu0 0
        %5047 = vmatpush1.bf16.msra.mxu0 %v4948
        %5048 = vmatprep.subr.bf16.mxu0 0
        %5049 = vmatpush1.bf16.msra.mxu0 %v4949
        %5050 = vmatprep.subr.bf16.mxu0 0
        %5051 = vmatpush1.bf16.msra.mxu0 %v4950
        %5052 = vmatprep.subr.bf16.mxu0 0
        %5053 = vmatpush1.bf16.msra.mxu0 %v4951
        %5054 = vmatprep.subr.bf16.mxu0 0
        %5055 = vmatpush1.bf16.msra.mxu0 %v4952
        %5056 = vmatprep.subr.bf16.mxu0 0
        %5057 = vmatpush1.bf16.msra.mxu0 %v4953
        %5058 = vmatprep.subr.bf16.mxu0 0
        %5059 = vmatpush1.bf16.msra.mxu0 %v4954
        %5060 = vmatprep.subr.bf16.mxu0 0
        %5061 = vmatpush1.bf16.msra.mxu0 %v4990
        %5062 = vmatprep.subr.bf16.mxu0 0
        %5063 = vmatpush1.bf16.msra.mxu0 0
        %5064 = vmatprep.mubr.bf16.mxu0 %v4987
        %5065 = vmatmul.mubr.bf16.gmra.mrb[0].mxu0 %v4798
        %v5066 = vpop.f32.mrb[0].mxu0
        %v5067 = vadd.f32 %v5027, %v5066
        %v5068 = vpop.f32.mrb[0].mxu0
        %v5069 = vpop.f32.mrb[0].mxu0
        %v5070 = vpop.f32.mrb[0].mxu0
        %5071 = vdwg.mxu0
        %v5072 = vadd.f32 %v4733, %v5067
        %s5073 = scalar_lea.vmem %s10, 1464
        %v5074 = vld [vmem:[%s5073] sm:$0xf]
        %v5075 = vld [vmem:[%s5073 + $0x4] sm:$0xf]
        %v5076 = vld [vmem:[%s5073 + $0x8] sm:$0xf]
        %v5077 = vld [vmem:[%s5073 + $0xc] sm:$0xf]
        %v5078 = vld [vmem:[%s5073 + $0x10] sm:$0xf]
        %v5079 = vld [vmem:[%s5073 + $0x14] sm:$0xf]
        %v5080 = vld [vmem:[%s5073 + $0x18] sm:$0xf]
        %v5081 = vld [vmem:[%s5073 + $0x1c] sm:$0xf]
        %v5082 = vld [vmem:[%s5073 + $0x20] sm:$0xf]
        %v5083 = vld [vmem:[%s5073 + $0x24] sm:$0xf]
        %v5084 = vld [vmem:[%s5073 + $0x28] sm:$0xf]
        %v5085 = vld [vmem:[%s5073 + $0x2c] sm:$0xf]
        %v5086 = vld [vmem:[%s5073 + $0x30] sm:$0xf]
        %v5087 = vld [vmem:[%s5073 + $0x34] sm:$0xf]
        %v5088 = vld [vmem:[%s5073 + $0x38] sm:$0xf]
        %v5089 = vld [vmem:[%s5073 + $0x3c] sm:$0xf]
        %v5090 = vld [vmem:[%s5073 + $0x40] sm:$0xf]
        %v5091 = vld [vmem:[%s5073 + $0x44] sm:$0xf]
        %v5092 = vld [vmem:[%s5073 + $0x48] sm:$0xf]
        %v5093 = vld [vmem:[%s5073 + $0x4c] sm:$0xf]
        %v5094 = vld [vmem:[%s5073 + $0x50] sm:$0xf]
        %v5095 = vld [vmem:[%s5073 + $0x54] sm:$0xf]
        %v5096 = vld [vmem:[%s5073 + $0x58] sm:$0xf]
        %v5097 = vld [vmem:[%s5073 + $0x5c] sm:$0xf]
        %v5098 = vld [vmem:[%s5073 + $0x60] sm:$0xf]
        %v5099 = vld [vmem:[%s5073 + $0x64] sm:$0xf]
        %v5100 = vld [vmem:[%s5073 + $0x68] sm:$0xf]
        %v5101 = vld [vmem:[%s5073 + $0x6c] sm:$0xf]
        %v5102 = vld [vmem:[%s5073 + $0x70] sm:$0xf]
        %v5103 = vld [vmem:[%s5073 + $0x74] sm:$0xf]
        %v5104 = vld [vmem:[%s5073 + $0x78] sm:$0xf]
        %v5105 = vld [vmem:[%s5073 + $0x7c] sm:$0xf]
        %v5106 = vld [vmem:[%s5073 + $0x80] sm:$0xf]
        %v5107 = vld [vmem:[%s5073 + $0x84] sm:$0xf]
        %v5108 = vld [vmem:[%s5073 + $0x88] sm:$0xf]
        %v5109 = vld [vmem:[%s5073 + $0x8c] sm:$0xf]
        %v5110 = vld [vmem:[%s5073 + $0x90] sm:$0xf]
        %v5111 = vld [vmem:[%s5073 + $0x94] sm:$0xf]
        %v5112 = vld [vmem:[%s5073 + $0x98] sm:$0xf]
        %v5113 = vld [vmem:[%s5073 + $0x9c] sm:$0xf]
        %v5114 = vld [vmem:[%s5073 + $0xa0] sm:$0xf]
        %v5115 = vld [vmem:[%s5073 + $0xa4] sm:$0xf]
        %v5116 = vld [vmem:[%s5073 + $0xa8] sm:$0xf]
        %v5117 = vld [vmem:[%s5073 + $0xac] sm:$0xf]
        %v5118 = vld [vmem:[%s5073 + $0xb0] sm:$0xf]
        %v5119 = vld [vmem:[%s5073 + $0xb4] sm:$0xf]
        %v5120 = vld [vmem:[%s5073 + $0xb8] sm:$0xf]
        %v5121 = vld [vmem:[%s5073 + $0xbc] sm:$0xf]
        %v5122 = vld [vmem:[%s5073 + $0xc0] sm:$0xf]
        %v5123 = vld [vmem:[%s5073 + $0xc4] sm:$0xf]
        %v5124 = vld [vmem:[%s5073 + $0xc8] sm:$0xf]
        %v5125 = vld [vmem:[%s5073 + $0xcc] sm:$0xf]
        %v5126 = vld [vmem:[%s5073 + $0xd0] sm:$0xf]
        %v5127 = vld [vmem:[%s5073 + $0xd4] sm:$0xf]
        %v5128 = vld [vmem:[%s5073 + $0xd8] sm:$0xf]
        %v5129 = vld [vmem:[%s5073 + $0xdc] sm:$0xf]
        %v5130 = vld [vmem:[%s5073 + $0xe0] sm:$0xf]
        %v5131 = vld [vmem:[%s5073 + $0xe4] sm:$0xf]
        %v5132 = vld [vmem:[%s5073 + $0xe8] sm:$0xf]
        %v5133 = vld [vmem:[%s5073 + $0xec] sm:$0xf]
        %v5134 = vld [vmem:[%s5073 + $0xf0] sm:$0x3]
        %v5135 = vrot.slane %v3033, 3
        %v5136 = vrot.slane %v3034, 3
        %v5137 = vrot.slane %v3035, 3
        %v5138 = vrot.slane %v3036, 3
        %v5203 = vunpack.c.l.b16 %v5074
        %v5204 = vunpack.c.l.b16 %v5075
        %v5205 = vunpack.c.l.b16 %v5076
        %v5206 = vunpack.c.l.b16 %v5077
        %v5207 = vunpack.c.l.b16 %v5078
        %v5208 = vunpack.c.l.b16 %v5079
        %v5209 = vunpack.c.l.b16 %v5080
        %v5210 = vunpack.c.l.b16 %v5081
        %v5211 = vunpack.c.l.b16 %v5082
        %v5212 = vunpack.c.l.b16 %v5083
        %v5213 = vunpack.c.l.b16 %v5084
        %v5214 = vunpack.c.l.b16 %v5085
        %v5215 = vunpack.c.l.b16 %v5086
        %v5216 = vunpack.c.l.b16 %v5087
        %v5217 = vunpack.c.l.b16 %v5088
        %v5218 = vunpack.c.l.b16 %v5089
        %v5219 = vunpack.c.l.b16 %v5090
        %v5220 = vunpack.c.l.b16 %v5091
        %v5221 = vunpack.c.l.b16 %v5092
        %v5222 = vunpack.c.l.b16 %v5093
        %v5223 = vunpack.c.l.b16 %v5094
        %v5224 = vunpack.c.l.b16 %v5095
        %v5225 = vunpack.c.l.b16 %v5096
        %v5226 = vunpack.c.l.b16 %v5097
        %v5227 = vunpack.c.l.b16 %v5098
        %v5228 = vunpack.c.l.b16 %v5099
        %v5229 = vunpack.c.l.b16 %v5100
        %v5230 = vunpack.c.l.b16 %v5101
        %v5231 = vunpack.c.l.b16 %v5102
        %v5232 = vunpack.c.l.b16 %v5103
        %v5233 = vunpack.c.l.b16 %v5104
        %v5234 = vunpack.c.l.b16 %v5105
        %v5235 = vunpack.c.l.b16 %v5106
        %v5236 = vunpack.c.l.b16 %v5107
        %v5237 = vunpack.c.l.b16 %v5108
        %v5238 = vunpack.c.l.b16 %v5109
        %v5239 = vunpack.c.l.b16 %v5110
        %v5240 = vunpack.c.l.b16 %v5111
        %v5241 = vunpack.c.l.b16 %v5112
        %v5242 = vunpack.c.l.b16 %v5113
        %v5243 = vunpack.c.l.b16 %v5114
        %v5244 = vunpack.c.l.b16 %v5115
        %v5245 = vunpack.c.l.b16 %v5116
        %v5246 = vunpack.c.l.b16 %v5117
        %v5247 = vunpack.c.l.b16 %v5118
        %v5248 = vunpack.c.l.b16 %v5119
        %v5249 = vunpack.c.l.b16 %v5120
        %v5250 = vunpack.c.l.b16 %v5121
        %v5251 = vunpack.c.l.b16 %v5122
        %v5252 = vunpack.c.l.b16 %v5123
        %v5253 = vunpack.c.l.b16 %v5124
        %v5254 = vunpack.c.l.b16 %v5125
        %v5255 = vunpack.c.l.b16 %v5126
        %v5256 = vunpack.c.l.b16 %v5127
        %v5257 = vunpack.c.l.b16 %v5128
        %v5258 = vunpack.c.l.b16 %v5129
        %v5259 = vunpack.c.l.b16 %v5130
        %v5260 = vunpack.c.l.b16 %v5131
        %v5261 = vunpack.c.l.b16 %v5132
        %v5262 = vunpack.c.l.b16 %v5133
        %v5263 = vunpack.c.l.b16 %v5134
        %v5264 = vpack.c.b16 %v5204, %v5203
        %v5265 = vpack.c.b16 %v5206, %v5205
        %v5266 = vpack.c.b16 %v5208, %v5207
        %v5267 = vpack.c.b16 %v5210, %v5209
        %v5268 = vpack.c.b16 %v5212, %v5211
        %v5269 = vpack.c.b16 %v5214, %v5213
        %v5270 = vpack.c.b16 %v5216, %v5215
        %v5271 = vpack.c.b16 %v5218, %v5217
        %v5272 = vpack.c.b16 %v5220, %v5219
        %v5273 = vpack.c.b16 %v5222, %v5221
        %v5274 = vpack.c.b16 %v5224, %v5223
        %v5275 = vpack.c.b16 %v5226, %v5225
        %v5276 = vpack.c.b16 %v5228, %v5227
        %v5277 = vpack.c.b16 %v5230, %v5229
        %v5278 = vpack.c.b16 %v5232, %v5231
        %v5279 = vpack.c.b16 %v5234, %v5233
        %v5280 = vpack.c.b16 %v5236, %v5235
        %v5281 = vpack.c.b16 %v5238, %v5237
        %v5282 = vpack.c.b16 %v5240, %v5239
        %v5283 = vpack.c.b16 %v5242, %v5241
        %v5284 = vpack.c.b16 %v5244, %v5243
        %v5285 = vpack.c.b16 %v5246, %v5245
        %v5286 = vpack.c.b16 %v5248, %v5247
        %v5287 = vpack.c.b16 %v5250, %v5249
        %v5288 = vpack.c.b16 %v5252, %v5251
        %v5289 = vpack.c.b16 %v5254, %v5253
        %v5290 = vpack.c.b16 %v5256, %v5255
        %v5291 = vpack.c.b16 %v5258, %v5257
        %v5292 = vpack.c.b16 %v5260, %v5259
        %v5293 = vpack.c.b16 %v5262, %v5261
        %v5294 = vpack.c.b16 %v5263, %v5263
        %v5326 = vsel %vm3358, %v5138, 0
        %v5329 = vsel %vm506, %v5294, 0
        %5331 = vmatprep.subr.bf16.mxu0 0
        %5332 = vmatpush1.bf16.msra.mxu0 %v5264
        %5333 = vmatprep.subr.bf16.mxu0 0
        %5334 = vmatpush1.bf16.msra.mxu0 %v5265
        %5335 = vmatprep.subr.bf16.mxu0 0
        %5336 = vmatpush1.bf16.msra.mxu0 %v5266
        %5337 = vmatprep.subr.bf16.mxu0 0
        %5338 = vmatpush1.bf16.msra.mxu0 %v5267
        %5339 = vmatprep.subr.bf16.mxu0 0
        %5340 = vmatpush1.bf16.msra.mxu0 %v5268
        %5341 = vmatprep.subr.bf16.mxu0 0
        %5342 = vmatpush1.bf16.msra.mxu0 %v5269
        %5343 = vmatprep.subr.bf16.mxu0 0
        %5344 = vmatpush1.bf16.msra.mxu0 %v5270
        %5345 = vmatprep.subr.bf16.mxu0 0
        %5346 = vmatpush1.bf16.msra.mxu0 %v5271
        %5347 = vmatprep.subr.bf16.mxu0 0
        %5348 = vmatpush1.bf16.msra.mxu0 %v5272
        %5349 = vmatprep.subr.bf16.mxu0 0
        %5350 = vmatpush1.bf16.msra.mxu0 %v5273
        %5351 = vmatprep.subr.bf16.mxu0 0
        %5352 = vmatpush1.bf16.msra.mxu0 %v5274
        %5353 = vmatprep.subr.bf16.mxu0 0
        %5354 = vmatpush1.bf16.msra.mxu0 %v5275
        %5355 = vmatprep.subr.bf16.mxu0 0
        %5356 = vmatpush1.bf16.msra.mxu0 %v5276
        %5357 = vmatprep.subr.bf16.mxu0 0
        %5358 = vmatpush1.bf16.msra.mxu0 %v5277
        %5359 = vmatprep.subr.bf16.mxu0 0
        %5360 = vmatpush1.bf16.msra.mxu0 %v5278
        %5361 = vmatprep.subr.bf16.mxu0 0
        %5362 = vmatpush1.bf16.msra.mxu0 %v5279
        %5363 = vmatprep.mubr.bf16.mxu0 %v5136
        %5364 = vmatmul.mubr.bf16.gmra.mrb[0].mxu0 %v5135
        %v5365 = vpop.f32.mrb[0].mxu0
        %v5366 = vadd.f32 0.0, %v5365
        %v5367 = vpop.f32.mrb[0].mxu0
        %v5368 = vpop.f32.mrb[0].mxu0
        %v5369 = vpop.f32.mrb[0].mxu0
        %5370 = vdwg.mxu0
        %5371 = vmatprep.subr.bf16.mxu0 0
        %5372 = vmatpush1.bf16.msra.mxu0 %v5280
        %5373 = vmatprep.subr.bf16.mxu0 0
        %5374 = vmatpush1.bf16.msra.mxu0 %v5281
        %5375 = vmatprep.subr.bf16.mxu0 0
        %5376 = vmatpush1.bf16.msra.mxu0 %v5282
        %5377 = vmatprep.subr.bf16.mxu0 0
        %5378 = vmatpush1.bf16.msra.mxu0 %v5283
        %5379 = vmatprep.subr.bf16.mxu0 0
        %5380 = vmatpush1.bf16.msra.mxu0 %v5284
        %5381 = vmatprep.subr.bf16.mxu0 0
        %5382 = vmatpush1.bf16.msra.mxu0 %v5285
        %5383 = vmatprep.subr.bf16.mxu0 0
        %5384 = vmatpush1.bf16.msra.mxu0 %v5286
        %5385 = vmatprep.subr.bf16.mxu0 0
        %5386 = vmatpush1.bf16.msra.mxu0 %v5287
        %5387 = vmatprep.subr.bf16.mxu0 0
        %5388 = vmatpush1.bf16.msra.mxu0 %v5288
        %5389 = vmatprep.subr.bf16.mxu0 0
        %5390 = vmatpush1.bf16.msra.mxu0 %v5289
        %5391 = vmatprep.subr.bf16.mxu0 0
        %5392 = vmatpush1.bf16.msra.mxu0 %v5290
        %5393 = vmatprep.subr.bf16.mxu0 0
        %5394 = vmatpush1.bf16.msra.mxu0 %v5291
        %5395 = vmatprep.subr.bf16.mxu0 0
        %5396 = vmatpush1.bf16.msra.mxu0 %v5292
        %5397 = vmatprep.subr.bf16.mxu0 0
        %5398 = vmatpush1.bf16.msra.mxu0 %v5293
        %5399 = vmatprep.subr.bf16.mxu0 0
        %5400 = vmatpush1.bf16.msra.mxu0 %v5329
        %5401 = vmatprep.subr.bf16.mxu0 0
        %5402 = vmatpush1.bf16.msra.mxu0 0
        %5403 = vmatprep.mubr.bf16.mxu0 %v5326
        %5404 = vmatmul.mubr.bf16.gmra.mrb[0].mxu0 %v5137
        %v5405 = vpop.f32.mrb[0].mxu0
        %v5406 = vadd.f32 %v5366, %v5405
        %v5407 = vpop.f32.mrb[0].mxu0
        %v5408 = vpop.f32.mrb[0].mxu0
        %v5409 = vpop.f32.mrb[0].mxu0
        %5410 = vdwg.mxu0
        %v5411 = vadd.f32 %v5072, %v5406
        %s5412 = scalar_lea.vmem %s10, 1708
        %v5413 = vld [vmem:[%s5412] sm:$0xf]
        %v5414 = vld [vmem:[%s5412 + $0x4] sm:$0xf]
        %v5415 = vld [vmem:[%s5412 + $0x8] sm:$0xf]
        %v5416 = vld [vmem:[%s5412 + $0xc] sm:$0xf]
        %v5417 = vld [vmem:[%s5412 + $0x10] sm:$0xf]
        %v5418 = vld [vmem:[%s5412 + $0x14] sm:$0xf]
        %v5419 = vld [vmem:[%s5412 + $0x18] sm:$0xf]
        %v5420 = vld [vmem:[%s5412 + $0x1c] sm:$0xf]
        %v5421 = vld [vmem:[%s5412 + $0x20] sm:$0xf]
        %v5422 = vld [vmem:[%s5412 + $0x24] sm:$0xf]
        %v5423 = vld [vmem:[%s5412 + $0x28] sm:$0xf]
        %v5424 = vld [vmem:[%s5412 + $0x2c] sm:$0xf]
        %v5425 = vld [vmem:[%s5412 + $0x30] sm:$0xf]
        %v5426 = vld [vmem:[%s5412 + $0x34] sm:$0xf]
        %v5427 = vld [vmem:[%s5412 + $0x38] sm:$0xf]
        %v5428 = vld [vmem:[%s5412 + $0x3c] sm:$0xf]
        %v5429 = vld [vmem:[%s5412 + $0x40] sm:$0xf]
        %v5430 = vld [vmem:[%s5412 + $0x44] sm:$0xf]
        %v5431 = vld [vmem:[%s5412 + $0x48] sm:$0xf]
        %v5432 = vld [vmem:[%s5412 + $0x4c] sm:$0xf]
        %v5433 = vld [vmem:[%s5412 + $0x50] sm:$0xf]
        %v5434 = vld [vmem:[%s5412 + $0x54] sm:$0xf]
        %v5435 = vld [vmem:[%s5412 + $0x58] sm:$0xf]
        %v5436 = vld [vmem:[%s5412 + $0x5c] sm:$0xf]
        %v5437 = vld [vmem:[%s5412 + $0x60] sm:$0xf]
        %v5438 = vld [vmem:[%s5412 + $0x64] sm:$0xf]
        %v5439 = vld [vmem:[%s5412 + $0x68] sm:$0xf]
        %v5440 = vld [vmem:[%s5412 + $0x6c] sm:$0xf]
        %v5441 = vld [vmem:[%s5412 + $0x70] sm:$0xf]
        %v5442 = vld [vmem:[%s5412 + $0x74] sm:$0xf]
        %v5443 = vld [vmem:[%s5412 + $0x78] sm:$0xf]
        %v5444 = vld [vmem:[%s5412 + $0x7c] sm:$0xf]
        %v5445 = vld [vmem:[%s5412 + $0x80] sm:$0xf]
        %v5446 = vld [vmem:[%s5412 + $0x84] sm:$0xf]
        %v5447 = vld [vmem:[%s5412 + $0x88] sm:$0xf]
        %v5448 = vld [vmem:[%s5412 + $0x8c] sm:$0xf]
        %v5449 = vld [vmem:[%s5412 + $0x90] sm:$0xf]
        %v5450 = vld [vmem:[%s5412 + $0x94] sm:$0xf]
        %v5451 = vld [vmem:[%s5412 + $0x98] sm:$0xf]
        %v5452 = vld [vmem:[%s5412 + $0x9c] sm:$0xf]
        %v5453 = vld [vmem:[%s5412 + $0xa0] sm:$0xf]
        %v5454 = vld [vmem:[%s5412 + $0xa4] sm:$0xf]
        %v5455 = vld [vmem:[%s5412 + $0xa8] sm:$0xf]
        %v5456 = vld [vmem:[%s5412 + $0xac] sm:$0xf]
        %v5457 = vld [vmem:[%s5412 + $0xb0] sm:$0xf]
        %v5458 = vld [vmem:[%s5412 + $0xb4] sm:$0xf]
        %v5459 = vld [vmem:[%s5412 + $0xb8] sm:$0xf]
        %v5460 = vld [vmem:[%s5412 + $0xbc] sm:$0xf]
        %v5461 = vld [vmem:[%s5412 + $0xc0] sm:$0xf]
        %v5462 = vld [vmem:[%s5412 + $0xc4] sm:$0xf]
        %v5463 = vld [vmem:[%s5412 + $0xc8] sm:$0xf]
        %v5464 = vld [vmem:[%s5412 + $0xcc] sm:$0xf]
        %v5465 = vld [vmem:[%s5412 + $0xd0] sm:$0xf]
        %v5466 = vld [vmem:[%s5412 + $0xd4] sm:$0xf]
        %v5467 = vld [vmem:[%s5412 + $0xd8] sm:$0xf]
        %v5468 = vld [vmem:[%s5412 + $0xdc] sm:$0xf]
        %v5469 = vld [vmem:[%s5412 + $0xe0] sm:$0xf]
        %v5470 = vld [vmem:[%s5412 + $0xe4] sm:$0xf]
        %v5471 = vld [vmem:[%s5412 + $0xe8] sm:$0xf]
        %v5472 = vld [vmem:[%s5412 + $0xec] sm:$0xf]
        %v5473 = vld [vmem:[%s5412 + $0xf0] sm:$0x3]
        %v5474 = vrot.slane %v3161, 3
        %v5475 = vrot.slane %v3164, 3
        %v5476 = vrot.slane %v3167, 3
        %v5477 = vrot.slane %v3170, 3
        %v5542 = vunpack.c.l.b16 %v5413
        %v5543 = vunpack.c.l.b16 %v5414
        %v5544 = vunpack.c.l.b16 %v5415
        %v5545 = vunpack.c.l.b16 %v5416
        %v5546 = vunpack.c.l.b16 %v5417
        %v5547 = vunpack.c.l.b16 %v5418
        %v5548 = vunpack.c.l.b16 %v5419
        %v5549 = vunpack.c.l.b16 %v5420
        %v5550 = vunpack.c.l.b16 %v5421
        %v5551 = vunpack.c.l.b16 %v5422
        %v5552 = vunpack.c.l.b16 %v5423
        %v5553 = vunpack.c.l.b16 %v5424
        %v5554 = vunpack.c.l.b16 %v5425
        %v5555 = vunpack.c.l.b16 %v5426
        %v5556 = vunpack.c.l.b16 %v5427
        %v5557 = vunpack.c.l.b16 %v5428
        %v5558 = vunpack.c.l.b16 %v5429
        %v5559 = vunpack.c.l.b16 %v5430
        %v5560 = vunpack.c.l.b16 %v5431
        %v5561 = vunpack.c.l.b16 %v5432
        %v5562 = vunpack.c.l.b16 %v5433
        %v5563 = vunpack.c.l.b16 %v5434
        %v5564 = vunpack.c.l.b16 %v5435
        %v5565 = vunpack.c.l.b16 %v5436
        %v5566 = vunpack.c.l.b16 %v5437
        %v5567 = vunpack.c.l.b16 %v5438
        %v5568 = vunpack.c.l.b16 %v5439
        %v5569 = vunpack.c.l.b16 %v5440
        %v5570 = vunpack.c.l.b16 %v5441
        %v5571 = vunpack.c.l.b16 %v5442
        %v5572 = vunpack.c.l.b16 %v5443
        %v5573 = vunpack.c.l.b16 %v5444
        %v5574 = vunpack.c.l.b16 %v5445
        %v5575 = vunpack.c.l.b16 %v5446
        %v5576 = vunpack.c.l.b16 %v5447
        %v5577 = vunpack.c.l.b16 %v5448
        %v5578 = vunpack.c.l.b16 %v5449
        %v5579 = vunpack.c.l.b16 %v5450
        %v5580 = vunpack.c.l.b16 %v5451
        %v5581 = vunpack.c.l.b16 %v5452
        %v5582 = vunpack.c.l.b16 %v5453
        %v5583 = vunpack.c.l.b16 %v5454
        %v5584 = vunpack.c.l.b16 %v5455
        %v5585 = vunpack.c.l.b16 %v5456
        %v5586 = vunpack.c.l.b16 %v5457
        %v5587 = vunpack.c.l.b16 %v5458
        %v5588 = vunpack.c.l.b16 %v5459
        %v5589 = vunpack.c.l.b16 %v5460
        %v5590 = vunpack.c.l.b16 %v5461
        %v5591 = vunpack.c.l.b16 %v5462
        %v5592 = vunpack.c.l.b16 %v5463
        %v5593 = vunpack.c.l.b16 %v5464
        %v5594 = vunpack.c.l.b16 %v5465
        %v5595 = vunpack.c.l.b16 %v5466
        %v5596 = vunpack.c.l.b16 %v5467
        %v5597 = vunpack.c.l.b16 %v5468
        %v5598 = vunpack.c.l.b16 %v5469
        %v5599 = vunpack.c.l.b16 %v5470
        %v5600 = vunpack.c.l.b16 %v5471
        %v5601 = vunpack.c.l.b16 %v5472
        %v5602 = vunpack.c.l.b16 %v5473
        %v5603 = vpack.c.b16 %v5543, %v5542
        %v5604 = vpack.c.b16 %v5545, %v5544
        %v5605 = vpack.c.b16 %v5547, %v5546
        %v5606 = vpack.c.b16 %v5549, %v5548
        %v5607 = vpack.c.b16 %v5551, %v5550
        %v5608 = vpack.c.b16 %v5553, %v5552
        %v5609 = vpack.c.b16 %v5555, %v5554
        %v5610 = vpack.c.b16 %v5557, %v5556
        %v5611 = vpack.c.b16 %v5559, %v5558
        %v5612 = vpack.c.b16 %v5561, %v5560
        %v5613 = vpack.c.b16 %v5563, %v5562
        %v5614 = vpack.c.b16 %v5565, %v5564
        %v5615 = vpack.c.b16 %v5567, %v5566
        %v5616 = vpack.c.b16 %v5569, %v5568
        %v5617 = vpack.c.b16 %v5571, %v5570
        %v5618 = vpack.c.b16 %v5573, %v5572
        %v5619 = vpack.c.b16 %v5575, %v5574
        %v5620 = vpack.c.b16 %v5577, %v5576
        %v5621 = vpack.c.b16 %v5579, %v5578
        %v5622 = vpack.c.b16 %v5581, %v5580
        %v5623 = vpack.c.b16 %v5583, %v5582
        %v5624 = vpack.c.b16 %v5585, %v5584
        %v5625 = vpack.c.b16 %v5587, %v5586
        %v5626 = vpack.c.b16 %v5589, %v5588
        %v5627 = vpack.c.b16 %v5591, %v5590
        %v5628 = vpack.c.b16 %v5593, %v5592
        %v5629 = vpack.c.b16 %v5595, %v5594
        %v5630 = vpack.c.b16 %v5597, %v5596
        %v5631 = vpack.c.b16 %v5599, %v5598
        %v5632 = vpack.c.b16 %v5601, %v5600
        %v5633 = vpack.c.b16 %v5602, %v5602
        %v5665 = vsel %vm3358, %v5477, 0
        %v5668 = vsel %vm506, %v5633, 0
        %5670 = vmatprep.subr.bf16.mxu0 0
        %5671 = vmatpush1.bf16.msra.mxu0 %v5603
        %5672 = vmatprep.subr.bf16.mxu0 0
        %5673 = vmatpush1.bf16.msra.mxu0 %v5604
        %5674 = vmatprep.subr.bf16.mxu0 0
        %5675 = vmatpush1.bf16.msra.mxu0 %v5605
        %5676 = vmatprep.subr.bf16.mxu0 0
        %5677 = vmatpush1.bf16.msra.mxu0 %v5606
        %5678 = vmatprep.subr.bf16.mxu0 0
        %5679 = vmatpush1.bf16.msra.mxu0 %v5607
        %5680 = vmatprep.subr.bf16.mxu0 0
        %5681 = vmatpush1.bf16.msra.mxu0 %v5608
        %5682 = vmatprep.subr.bf16.mxu0 0
        %5683 = vmatpush1.bf16.msra.mxu0 %v5609
        %5684 = vmatprep.subr.bf16.mxu0 0
        %5685 = vmatpush1.bf16.msra.mxu0 %v5610
        %5686 = vmatprep.subr.bf16.mxu0 0
        %5687 = vmatpush1.bf16.msra.mxu0 %v5611
        %5688 = vmatprep.subr.bf16.mxu0 0
        %5689 = vmatpush1.bf16.msra.mxu0 %v5612
        %5690 = vmatprep.subr.bf16.mxu0 0
        %5691 = vmatpush1.bf16.msra.mxu0 %v5613
        %5692 = vmatprep.subr.bf16.mxu0 0
        %5693 = vmatpush1.bf16.msra.mxu0 %v5614
        %5694 = vmatprep.subr.bf16.mxu0 0
        %5695 = vmatpush1.bf16.msra.mxu0 %v5615
        %5696 = vmatprep.subr.bf16.mxu0 0
        %5697 = vmatpush1.bf16.msra.mxu0 %v5616
        %5698 = vmatprep.subr.bf16.mxu0 0
        %5699 = vmatpush1.bf16.msra.mxu0 %v5617
        %5700 = vmatprep.subr.bf16.mxu0 0
        %5701 = vmatpush1.bf16.msra.mxu0 %v5618
        %5702 = vmatprep.mubr.bf16.mxu0 %v5475
        %5703 = vmatmul.mubr.bf16.gmra.mrb[0].mxu0 %v5474
        %v5704 = vpop.f32.mrb[0].mxu0
        %v5705 = vadd.f32 0.0, %v5704
        %v5706 = vpop.f32.mrb[0].mxu0
        %v5707 = vpop.f32.mrb[0].mxu0
        %v5708 = vpop.f32.mrb[0].mxu0
        %5709 = vdwg.mxu0
        %5710 = vmatprep.subr.bf16.mxu0 0
        %5711 = vmatpush1.bf16.msra.mxu0 %v5619
        %5712 = vmatprep.subr.bf16.mxu0 0
        %5713 = vmatpush1.bf16.msra.mxu0 %v5620
        %5714 = vmatprep.subr.bf16.mxu0 0
        %5715 = vmatpush1.bf16.msra.mxu0 %v5621
        %5716 = vmatprep.subr.bf16.mxu0 0
        %5717 = vmatpush1.bf16.msra.mxu0 %v5622
        %5718 = vmatprep.subr.bf16.mxu0 0
        %5719 = vmatpush1.bf16.msra.mxu0 %v5623
        %5720 = vmatprep.subr.bf16.mxu0 0
        %5721 = vmatpush1.bf16.msra.mxu0 %v5624
        %5722 = vmatprep.subr.bf16.mxu0 0
        %5723 = vmatpush1.bf16.msra.mxu0 %v5625
        %5724 = vmatprep.subr.bf16.mxu0 0
        %5725 = vmatpush1.bf16.msra.mxu0 %v5626
        %5726 = vmatprep.subr.bf16.mxu0 0
        %5727 = vmatpush1.bf16.msra.mxu0 %v5627
        %5728 = vmatprep.subr.bf16.mxu0 0
        %5729 = vmatpush1.bf16.msra.mxu0 %v5628
        %5730 = vmatprep.subr.bf16.mxu0 0
        %5731 = vmatpush1.bf16.msra.mxu0 %v5629
        %5732 = vmatprep.subr.bf16.mxu0 0
        %5733 = vmatpush1.bf16.msra.mxu0 %v5630
        %5734 = vmatprep.subr.bf16.mxu0 0
        %5735 = vmatpush1.bf16.msra.mxu0 %v5631
        %5736 = vmatprep.subr.bf16.mxu0 0
        %5737 = vmatpush1.bf16.msra.mxu0 %v5632
        %5738 = vmatprep.subr.bf16.mxu0 0
        %5739 = vmatpush1.bf16.msra.mxu0 %v5668
        %5740 = vmatprep.subr.bf16.mxu0 0
        %5741 = vmatpush1.bf16.msra.mxu0 0
        %5742 = vmatprep.mubr.bf16.mxu0 %v5665
        %5743 = vmatmul.mubr.bf16.gmra.mrb[0].mxu0 %v5476
        %v5744 = vpop.f32.mrb[0].mxu0
        %v5745 = vadd.f32 %v5705, %v5744
        %v5746 = vpop.f32.mrb[0].mxu0
        %v5747 = vpop.f32.mrb[0].mxu0
        %v5748 = vpop.f32.mrb[0].mxu0
        %5749 = vdwg.mxu0
        %v5750 = vadd.f32 %v5411, %v5745
        %s5751 = scalar_lea.vmem %s10, 1952
        %v5752 = vld [vmem:[%s5751] sm:$0xf]
        %v5753 = vld [vmem:[%s5751 + $0x4] sm:$0xf]
        %v5754 = vld [vmem:[%s5751 + $0x8] sm:$0xf]
        %v5755 = vld [vmem:[%s5751 + $0xc] sm:$0xf]
        %v5756 = vld [vmem:[%s5751 + $0x10] sm:$0xf]
        %v5757 = vld [vmem:[%s5751 + $0x14] sm:$0xf]
        %v5758 = vld [vmem:[%s5751 + $0x18] sm:$0xf]
        %v5759 = vld [vmem:[%s5751 + $0x1c] sm:$0xf]
        %v5760 = vld [vmem:[%s5751 + $0x20] sm:$0xf]
        %v5761 = vld [vmem:[%s5751 + $0x24] sm:$0xf]
        %v5762 = vld [vmem:[%s5751 + $0x28] sm:$0xf]
        %v5763 = vld [vmem:[%s5751 + $0x2c] sm:$0xf]
        %v5764 = vld [vmem:[%s5751 + $0x30] sm:$0xf]
        %v5765 = vld [vmem:[%s5751 + $0x34] sm:$0xf]
        %v5766 = vld [vmem:[%s5751 + $0x38] sm:$0xf]
        %v5767 = vld [vmem:[%s5751 + $0x3c] sm:$0xf]
        %v5768 = vld [vmem:[%s5751 + $0x40] sm:$0xf]
        %v5769 = vld [vmem:[%s5751 + $0x44] sm:$0xf]
        %v5770 = vld [vmem:[%s5751 + $0x48] sm:$0xf]
        %v5771 = vld [vmem:[%s5751 + $0x4c] sm:$0xf]
        %v5772 = vld [vmem:[%s5751 + $0x50] sm:$0xf]
        %v5773 = vld [vmem:[%s5751 + $0x54] sm:$0xf]
        %v5774 = vld [vmem:[%s5751 + $0x58] sm:$0xf]
        %v5775 = vld [vmem:[%s5751 + $0x5c] sm:$0xf]
        %v5776 = vld [vmem:[%s5751 + $0x60] sm:$0xf]
        %v5777 = vld [vmem:[%s5751 + $0x64] sm:$0xf]
        %v5778 = vld [vmem:[%s5751 + $0x68] sm:$0xf]
        %v5779 = vld [vmem:[%s5751 + $0x6c] sm:$0xf]
        %v5780 = vld [vmem:[%s5751 + $0x70] sm:$0xf]
        %v5781 = vld [vmem:[%s5751 + $0x74] sm:$0xf]
        %v5782 = vld [vmem:[%s5751 + $0x78] sm:$0xf]
        %v5783 = vld [vmem:[%s5751 + $0x7c] sm:$0xf]
        %v5784 = vld [vmem:[%s5751 + $0x80] sm:$0xf]
        %v5785 = vld [vmem:[%s5751 + $0x84] sm:$0xf]
        %v5786 = vld [vmem:[%s5751 + $0x88] sm:$0xf]
        %v5787 = vld [vmem:[%s5751 + $0x8c] sm:$0xf]
        %v5788 = vld [vmem:[%s5751 + $0x90] sm:$0xf]
        %v5789 = vld [vmem:[%s5751 + $0x94] sm:$0xf]
        %v5790 = vld [vmem:[%s5751 + $0x98] sm:$0xf]
        %v5791 = vld [vmem:[%s5751 + $0x9c] sm:$0xf]
        %v5792 = vld [vmem:[%s5751 + $0xa0] sm:$0xf]
        %v5793 = vld [vmem:[%s5751 + $0xa4] sm:$0xf]
        %v5794 = vld [vmem:[%s5751 + $0xa8] sm:$0xf]
        %v5795 = vld [vmem:[%s5751 + $0xac] sm:$0xf]
        %v5796 = vld [vmem:[%s5751 + $0xb0] sm:$0xf]
        %v5797 = vld [vmem:[%s5751 + $0xb4] sm:$0xf]
        %v5798 = vld [vmem:[%s5751 + $0xb8] sm:$0xf]
        %v5799 = vld [vmem:[%s5751 + $0xbc] sm:$0xf]
        %v5800 = vld [vmem:[%s5751 + $0xc0] sm:$0xf]
        %v5801 = vld [vmem:[%s5751 + $0xc4] sm:$0xf]
        %v5802 = vld [vmem:[%s5751 + $0xc8] sm:$0xf]
        %v5803 = vld [vmem:[%s5751 + $0xcc] sm:$0xf]
        %v5804 = vld [vmem:[%s5751 + $0xd0] sm:$0xf]
        %v5805 = vld [vmem:[%s5751 + $0xd4] sm:$0xf]
        %v5806 = vld [vmem:[%s5751 + $0xd8] sm:$0xf]
        %v5807 = vld [vmem:[%s5751 + $0xdc] sm:$0xf]
        %v5808 = vld [vmem:[%s5751 + $0xe0] sm:$0xf]
        %v5809 = vld [vmem:[%s5751 + $0xe4] sm:$0xf]
        %v5810 = vld [vmem:[%s5751 + $0xe8] sm:$0xf]
        %v5811 = vld [vmem:[%s5751 + $0xec] sm:$0xf]
        %v5812 = vld [vmem:[%s5751 + $0xf0] sm:$0x3]
        %v5813 = vrot.slane %v3033, 4
        %v5814 = vrot.slane %v3034, 4
        %v5815 = vrot.slane %v3035, 4
        %v5816 = vrot.slane %v3036, 4
        %v5881 = vunpack.c.l.b16 %v5752
        %v5882 = vunpack.c.l.b16 %v5753
        %v5883 = vunpack.c.l.b16 %v5754
        %v5884 = vunpack.c.l.b16 %v5755
        %v5885 = vunpack.c.l.b16 %v5756
        %v5886 = vunpack.c.l.b16 %v5757
        %v5887 = vunpack.c.l.b16 %v5758
        %v5888 = vunpack.c.l.b16 %v5759
        %v5889 = vunpack.c.l.b16 %v5760
        %v5890 = vunpack.c.l.b16 %v5761
        %v5891 = vunpack.c.l.b16 %v5762
        %v5892 = vunpack.c.l.b16 %v5763
        %v5893 = vunpack.c.l.b16 %v5764
        %v5894 = vunpack.c.l.b16 %v5765
        %v5895 = vunpack.c.l.b16 %v5766
        %v5896 = vunpack.c.l.b16 %v5767
        %v5897 = vunpack.c.l.b16 %v5768
        %v5898 = vunpack.c.l.b16 %v5769
        %v5899 = vunpack.c.l.b16 %v5770
        %v5900 = vunpack.c.l.b16 %v5771
        %v5901 = vunpack.c.l.b16 %v5772
        %v5902 = vunpack.c.l.b16 %v5773
        %v5903 = vunpack.c.l.b16 %v5774
        %v5904 = vunpack.c.l.b16 %v5775
        %v5905 = vunpack.c.l.b16 %v5776
        %v5906 = vunpack.c.l.b16 %v5777
        %v5907 = vunpack.c.l.b16 %v5778
        %v5908 = vunpack.c.l.b16 %v5779
        %v5909 = vunpack.c.l.b16 %v5780
        %v5910 = vunpack.c.l.b16 %v5781
        %v5911 = vunpack.c.l.b16 %v5782
        %v5912 = vunpack.c.l.b16 %v5783
        %v5913 = vunpack.c.l.b16 %v5784
        %v5914 = vunpack.c.l.b16 %v5785
        %v5915 = vunpack.c.l.b16 %v5786
        %v5916 = vunpack.c.l.b16 %v5787
        %v5917 = vunpack.c.l.b16 %v5788
        %v5918 = vunpack.c.l.b16 %v5789
        %v5919 = vunpack.c.l.b16 %v5790
        %v5920 = vunpack.c.l.b16 %v5791
        %v5921 = vunpack.c.l.b16 %v5792
        %v5922 = vunpack.c.l.b16 %v5793
        %v5923 = vunpack.c.l.b16 %v5794
        %v5924 = vunpack.c.l.b16 %v5795
        %v5925 = vunpack.c.l.b16 %v5796
        %v5926 = vunpack.c.l.b16 %v5797
        %v5927 = vunpack.c.l.b16 %v5798
        %v5928 = vunpack.c.l.b16 %v5799
        %v5929 = vunpack.c.l.b16 %v5800
        %v5930 = vunpack.c.l.b16 %v5801
        %v5931 = vunpack.c.l.b16 %v5802
        %v5932 = vunpack.c.l.b16 %v5803
        %v5933 = vunpack.c.l.b16 %v5804
        %v5934 = vunpack.c.l.b16 %v5805
        %v5935 = vunpack.c.l.b16 %v5806
        %v5936 = vunpack.c.l.b16 %v5807
        %v5937 = vunpack.c.l.b16 %v5808
        %v5938 = vunpack.c.l.b16 %v5809
        %v5939 = vunpack.c.l.b16 %v5810
        %v5940 = vunpack.c.l.b16 %v5811
        %v5941 = vunpack.c.l.b16 %v5812
        %v5942 = vpack.c.b16 %v5882, %v5881
        %v5943 = vpack.c.b16 %v5884, %v5883
        %v5944 = vpack.c.b16 %v5886, %v5885
        %v5945 = vpack.c.b16 %v5888, %v5887
        %v5946 = vpack.c.b16 %v5890, %v5889
        %v5947 = vpack.c.b16 %v5892, %v5891
        %v5948 = vpack.c.b16 %v5894, %v5893
        %v5949 = vpack.c.b16 %v5896, %v5895
        %v5950 = vpack.c.b16 %v5898, %v5897
        %v5951 = vpack.c.b16 %v5900, %v5899
        %v5952 = vpack.c.b16 %v5902, %v5901
        %v5953 = vpack.c.b16 %v5904, %v5903
        %v5954 = vpack.c.b16 %v5906, %v5905
        %v5955 = vpack.c.b16 %v5908, %v5907
        %v5956 = vpack.c.b16 %v5910, %v5909
        %v5957 = vpack.c.b16 %v5912, %v5911
        %v5958 = vpack.c.b16 %v5914, %v5913
        %v5959 = vpack.c.b16 %v5916, %v5915
        %v5960 = vpack.c.b16 %v5918, %v5917
        %v5961 = vpack.c.b16 %v5920, %v5919
        %v5962 = vpack.c.b16 %v5922, %v5921
        %v5963 = vpack.c.b16 %v5924, %v5923
        %v5964 = vpack.c.b16 %v5926, %v5925
        %v5965 = vpack.c.b16 %v5928, %v5927
        %v5966 = vpack.c.b16 %v5930, %v5929
        %v5967 = vpack.c.b16 %v5932, %v5931
        %v5968 = vpack.c.b16 %v5934, %v5933
        %v5969 = vpack.c.b16 %v5936, %v5935
        %v5970 = vpack.c.b16 %v5938, %v5937
        %v5971 = vpack.c.b16 %v5940, %v5939
        %v5972 = vpack.c.b16 %v5941, %v5941
        %v6004 = vsel %vm3358, %v5816, 0
        %v6007 = vsel %vm506, %v5972, 0
        %6009 = vmatprep.subr.bf16.mxu0 0
        %6010 = vmatpush1.bf16.msra.mxu0 %v5942
        %6011 = vmatprep.subr.bf16.mxu0 0
        %6012 = vmatpush1.bf16.msra.mxu0 %v5943
        %6013 = vmatprep.subr.bf16.mxu0 0
        %6014 = vmatpush1.bf16.msra.mxu0 %v5944
        %6015 = vmatprep.subr.bf16.mxu0 0
        %6016 = vmatpush1.bf16.msra.mxu0 %v5945
        %6017 = vmatprep.subr.bf16.mxu0 0
        %6018 = vmatpush1.bf16.msra.mxu0 %v5946
        %6019 = vmatprep.subr.bf16.mxu0 0
        %6020 = vmatpush1.bf16.msra.mxu0 %v5947
        %6021 = vmatprep.subr.bf16.mxu0 0
        %6022 = vmatpush1.bf16.msra.mxu0 %v5948
        %6023 = vmatprep.subr.bf16.mxu0 0
        %6024 = vmatpush1.bf16.msra.mxu0 %v5949
        %6025 = vmatprep.subr.bf16.mxu0 0
        %6026 = vmatpush1.bf16.msra.mxu0 %v5950
        %6027 = vmatprep.subr.bf16.mxu0 0
        %6028 = vmatpush1.bf16.msra.mxu0 %v5951
        %6029 = vmatprep.subr.bf16.mxu0 0
        %6030 = vmatpush1.bf16.msra.mxu0 %v5952
        %6031 = vmatprep.subr.bf16.mxu0 0
        %6032 = vmatpush1.bf16.msra.mxu0 %v5953
        %6033 = vmatprep.subr.bf16.mxu0 0
        %6034 = vmatpush1.bf16.msra.mxu0 %v5954
        %6035 = vmatprep.subr.bf16.mxu0 0
        %6036 = vmatpush1.bf16.msra.mxu0 %v5955
        %6037 = vmatprep.subr.bf16.mxu0 0
        %6038 = vmatpush1.bf16.msra.mxu0 %v5956
        %6039 = vmatprep.subr.bf16.mxu0 0
        %6040 = vmatpush1.bf16.msra.mxu0 %v5957
        %6041 = vmatprep.mubr.bf16.mxu0 %v5814
        %6042 = vmatmul.mubr.bf16.gmra.mrb[0].mxu0 %v5813
        %v6043 = vpop.f32.mrb[0].mxu0
        %v6044 = vadd.f32 0.0, %v6043
        %v6045 = vpop.f32.mrb[0].mxu0
        %v6046 = vpop.f32.mrb[0].mxu0
        %v6047 = vpop.f32.mrb[0].mxu0
        %6048 = vdwg.mxu0
        %6049 = vmatprep.subr.bf16.mxu0 0
        %6050 = vmatpush1.bf16.msra.mxu0 %v5958
        %6051 = vmatprep.subr.bf16.mxu0 0
        %6052 = vmatpush1.bf16.msra.mxu0 %v5959
        %6053 = vmatprep.subr.bf16.mxu0 0
        %6054 = vmatpush1.bf16.msra.mxu0 %v5960
        %6055 = vmatprep.subr.bf16.mxu0 0
        %6056 = vmatpush1.bf16.msra.mxu0 %v5961
        %6057 = vmatprep.subr.bf16.mxu0 0
        %6058 = vmatpush1.bf16.msra.mxu0 %v5962
        %6059 = vmatprep.subr.bf16.mxu0 0
        %6060 = vmatpush1.bf16.msra.mxu0 %v5963
        %6061 = vmatprep.subr.bf16.mxu0 0
        %6062 = vmatpush1.bf16.msra.mxu0 %v5964
        %6063 = vmatprep.subr.bf16.mxu0 0
        %6064 = vmatpush1.bf16.msra.mxu0 %v5965
        %6065 = vmatprep.subr.bf16.mxu0 0
        %6066 = vmatpush1.bf16.msra.mxu0 %v5966
        %6067 = vmatprep.subr.bf16.mxu0 0
        %6068 = vmatpush1.bf16.msra.mxu0 %v5967
        %6069 = vmatprep.subr.bf16.mxu0 0
        %6070 = vmatpush1.bf16.msra.mxu0 %v5968
        %6071 = vmatprep.subr.bf16.mxu0 0
        %6072 = vmatpush1.bf16.msra.mxu0 %v5969
        %6073 = vmatprep.subr.bf16.mxu0 0
        %6074 = vmatpush1.bf16.msra.mxu0 %v5970
        %6075 = vmatprep.subr.bf16.mxu0 0
        %6076 = vmatpush1.bf16.msra.mxu0 %v5971
        %6077 = vmatprep.subr.bf16.mxu0 0
        %6078 = vmatpush1.bf16.msra.mxu0 %v6007
        %6079 = vmatprep.subr.bf16.mxu0 0
        %6080 = vmatpush1.bf16.msra.mxu0 0
        %6081 = vmatprep.mubr.bf16.mxu0 %v6004
        %6082 = vmatmul.mubr.bf16.gmra.mrb[0].mxu0 %v5815
        %v6083 = vpop.f32.mrb[0].mxu0
        %v6084 = vadd.f32 %v6044, %v6083
        %v6085 = vpop.f32.mrb[0].mxu0
        %v6086 = vpop.f32.mrb[0].mxu0
        %v6087 = vpop.f32.mrb[0].mxu0
        %6088 = vdwg.mxu0
        %v6089 = vadd.f32 %v5750, %v6084
        %s6090 = scalar_lea.vmem %s10, 2196
        %v6091 = vld [vmem:[%s6090] sm:$0xf]
        %v6092 = vld [vmem:[%s6090 + $0x4] sm:$0xf]
        %v6093 = vld [vmem:[%s6090 + $0x8] sm:$0xf]
        %v6094 = vld [vmem:[%s6090 + $0xc] sm:$0xf]
        %v6095 = vld [vmem:[%s6090 + $0x10] sm:$0xf]
        %v6096 = vld [vmem:[%s6090 + $0x14] sm:$0xf]
        %v6097 = vld [vmem:[%s6090 + $0x18] sm:$0xf]
        %v6098 = vld [vmem:[%s6090 + $0x1c] sm:$0xf]
        %v6099 = vld [vmem:[%s6090 + $0x20] sm:$0xf]
        %v6100 = vld [vmem:[%s6090 + $0x24] sm:$0xf]
        %v6101 = vld [vmem:[%s6090 + $0x28] sm:$0xf]
        %v6102 = vld [vmem:[%s6090 + $0x2c] sm:$0xf]
        %v6103 = vld [vmem:[%s6090 + $0x30] sm:$0xf]
        %v6104 = vld [vmem:[%s6090 + $0x34] sm:$0xf]
        %v6105 = vld [vmem:[%s6090 + $0x38] sm:$0xf]
        %v6106 = vld [vmem:[%s6090 + $0x3c] sm:$0xf]
        %v6107 = vld [vmem:[%s6090 + $0x40] sm:$0xf]
        %v6108 = vld [vmem:[%s6090 + $0x44] sm:$0xf]
        %v6109 = vld [vmem:[%s6090 + $0x48] sm:$0xf]
        %v6110 = vld [vmem:[%s6090 + $0x4c] sm:$0xf]
        %v6111 = vld [vmem:[%s6090 + $0x50] sm:$0xf]
        %v6112 = vld [vmem:[%s6090 + $0x54] sm:$0xf]
        %v6113 = vld [vmem:[%s6090 + $0x58] sm:$0xf]
        %v6114 = vld [vmem:[%s6090 + $0x5c] sm:$0xf]
        %v6115 = vld [vmem:[%s6090 + $0x60] sm:$0xf]
        %v6116 = vld [vmem:[%s6090 + $0x64] sm:$0xf]
        %v6117 = vld [vmem:[%s6090 + $0x68] sm:$0xf]
        %v6118 = vld [vmem:[%s6090 + $0x6c] sm:$0xf]
        %v6119 = vld [vmem:[%s6090 + $0x70] sm:$0xf]
        %v6120 = vld [vmem:[%s6090 + $0x74] sm:$0xf]
        %v6121 = vld [vmem:[%s6090 + $0x78] sm:$0xf]
        %v6122 = vld [vmem:[%s6090 + $0x7c] sm:$0xf]
        %v6123 = vld [vmem:[%s6090 + $0x80] sm:$0xf]
        %v6124 = vld [vmem:[%s6090 + $0x84] sm:$0xf]
        %v6125 = vld [vmem:[%s6090 + $0x88] sm:$0xf]
        %v6126 = vld [vmem:[%s6090 + $0x8c] sm:$0xf]
        %v6127 = vld [vmem:[%s6090 + $0x90] sm:$0xf]
        %v6128 = vld [vmem:[%s6090 + $0x94] sm:$0xf]
        %v6129 = vld [vmem:[%s6090 + $0x98] sm:$0xf]
        %v6130 = vld [vmem:[%s6090 + $0x9c] sm:$0xf]
        %v6131 = vld [vmem:[%s6090 + $0xa0] sm:$0xf]
        %v6132 = vld [vmem:[%s6090 + $0xa4] sm:$0xf]
        %v6133 = vld [vmem:[%s6090 + $0xa8] sm:$0xf]
        %v6134 = vld [vmem:[%s6090 + $0xac] sm:$0xf]
        %v6135 = vld [vmem:[%s6090 + $0xb0] sm:$0xf]
        %v6136 = vld [vmem:[%s6090 + $0xb4] sm:$0xf]
        %v6137 = vld [vmem:[%s6090 + $0xb8] sm:$0xf]
        %v6138 = vld [vmem:[%s6090 + $0xbc] sm:$0xf]
        %v6139 = vld [vmem:[%s6090 + $0xc0] sm:$0xf]
        %v6140 = vld [vmem:[%s6090 + $0xc4] sm:$0xf]
        %v6141 = vld [vmem:[%s6090 + $0xc8] sm:$0xf]
        %v6142 = vld [vmem:[%s6090 + $0xcc] sm:$0xf]
        %v6143 = vld [vmem:[%s6090 + $0xd0] sm:$0xf]
        %v6144 = vld [vmem:[%s6090 + $0xd4] sm:$0xf]
        %v6145 = vld [vmem:[%s6090 + $0xd8] sm:$0xf]
        %v6146 = vld [vmem:[%s6090 + $0xdc] sm:$0xf]
        %v6147 = vld [vmem:[%s6090 + $0xe0] sm:$0xf]
        %v6148 = vld [vmem:[%s6090 + $0xe4] sm:$0xf]
        %v6149 = vld [vmem:[%s6090 + $0xe8] sm:$0xf]
        %v6150 = vld [vmem:[%s6090 + $0xec] sm:$0xf]
        %v6151 = vld [vmem:[%s6090 + $0xf0] sm:$0x3]
        %v6152 = vrot.slane %v3161, 4
        %v6153 = vrot.slane %v3164, 4
        %v6154 = vrot.slane %v3167, 4
        %v6155 = vrot.slane %v3170, 4
        %v6220 = vunpack.c.l.b16 %v6091
        %v6221 = vunpack.c.l.b16 %v6092
        %v6222 = vunpack.c.l.b16 %v6093
        %v6223 = vunpack.c.l.b16 %v6094
        %v6224 = vunpack.c.l.b16 %v6095
        %v6225 = vunpack.c.l.b16 %v6096
        %v6226 = vunpack.c.l.b16 %v6097
        %v6227 = vunpack.c.l.b16 %v6098
        %v6228 = vunpack.c.l.b16 %v6099
        %v6229 = vunpack.c.l.b16 %v6100
        %v6230 = vunpack.c.l.b16 %v6101
        %v6231 = vunpack.c.l.b16 %v6102
        %v6232 = vunpack.c.l.b16 %v6103
        %v6233 = vunpack.c.l.b16 %v6104
        %v6234 = vunpack.c.l.b16 %v6105
        %v6235 = vunpack.c.l.b16 %v6106
        %v6236 = vunpack.c.l.b16 %v6107
        %v6237 = vunpack.c.l.b16 %v6108
        %v6238 = vunpack.c.l.b16 %v6109
        %v6239 = vunpack.c.l.b16 %v6110
        %v6240 = vunpack.c.l.b16 %v6111
        %v6241 = vunpack.c.l.b16 %v6112
        %v6242 = vunpack.c.l.b16 %v6113
        %v6243 = vunpack.c.l.b16 %v6114
        %v6244 = vunpack.c.l.b16 %v6115
        %v6245 = vunpack.c.l.b16 %v6116
        %v6246 = vunpack.c.l.b16 %v6117
        %v6247 = vunpack.c.l.b16 %v6118
        %v6248 = vunpack.c.l.b16 %v6119
        %v6249 = vunpack.c.l.b16 %v6120
        %v6250 = vunpack.c.l.b16 %v6121
        %v6251 = vunpack.c.l.b16 %v6122
        %v6252 = vunpack.c.l.b16 %v6123
        %v6253 = vunpack.c.l.b16 %v6124
        %v6254 = vunpack.c.l.b16 %v6125
        %v6255 = vunpack.c.l.b16 %v6126
        %v6256 = vunpack.c.l.b16 %v6127
        %v6257 = vunpack.c.l.b16 %v6128
        %v6258 = vunpack.c.l.b16 %v6129
        %v6259 = vunpack.c.l.b16 %v6130
        %v6260 = vunpack.c.l.b16 %v6131
        %v6261 = vunpack.c.l.b16 %v6132
        %v6262 = vunpack.c.l.b16 %v6133
        %v6263 = vunpack.c.l.b16 %v6134
        %v6264 = vunpack.c.l.b16 %v6135
        %v6265 = vunpack.c.l.b16 %v6136
        %v6266 = vunpack.c.l.b16 %v6137
        %v6267 = vunpack.c.l.b16 %v6138
        %v6268 = vunpack.c.l.b16 %v6139
        %v6269 = vunpack.c.l.b16 %v6140
        %v6270 = vunpack.c.l.b16 %v6141
        %v6271 = vunpack.c.l.b16 %v6142
        %v6272 = vunpack.c.l.b16 %v6143
        %v6273 = vunpack.c.l.b16 %v6144
        %v6274 = vunpack.c.l.b16 %v6145
        %v6275 = vunpack.c.l.b16 %v6146
        %v6276 = vunpack.c.l.b16 %v6147
        %v6277 = vunpack.c.l.b16 %v6148
        %v6278 = vunpack.c.l.b16 %v6149
        %v6279 = vunpack.c.l.b16 %v6150
        %v6280 = vunpack.c.l.b16 %v6151
        %v6281 = vpack.c.b16 %v6221, %v6220
        %v6282 = vpack.c.b16 %v6223, %v6222
        %v6283 = vpack.c.b16 %v6225, %v6224
        %v6284 = vpack.c.b16 %v6227, %v6226
        %v6285 = vpack.c.b16 %v6229, %v6228
        %v6286 = vpack.c.b16 %v6231, %v6230
        %v6287 = vpack.c.b16 %v6233, %v6232
        %v6288 = vpack.c.b16 %v6235, %v6234
        %v6289 = vpack.c.b16 %v6237, %v6236
        %v6290 = vpack.c.b16 %v6239, %v6238
        %v6291 = vpack.c.b16 %v6241, %v6240
        %v6292 = vpack.c.b16 %v6243, %v6242
        %v6293 = vpack.c.b16 %v6245, %v6244
        %v6294 = vpack.c.b16 %v6247, %v6246
        %v6295 = vpack.c.b16 %v6249, %v6248
        %v6296 = vpack.c.b16 %v6251, %v6250
        %v6297 = vpack.c.b16 %v6253, %v6252
        %v6298 = vpack.c.b16 %v6255, %v6254
        %v6299 = vpack.c.b16 %v6257, %v6256
        %v6300 = vpack.c.b16 %v6259, %v6258
        %v6301 = vpack.c.b16 %v6261, %v6260
        %v6302 = vpack.c.b16 %v6263, %v6262
        %v6303 = vpack.c.b16 %v6265, %v6264
        %v6304 = vpack.c.b16 %v6267, %v6266
        %v6305 = vpack.c.b16 %v6269, %v6268
        %v6306 = vpack.c.b16 %v6271, %v6270
        %v6307 = vpack.c.b16 %v6273, %v6272
        %v6308 = vpack.c.b16 %v6275, %v6274
        %v6309 = vpack.c.b16 %v6277, %v6276
        %v6310 = vpack.c.b16 %v6279, %v6278
        %v6311 = vpack.c.b16 %v6280, %v6280
        %v6343 = vsel %vm3358, %v6155, 0
        %v6346 = vsel %vm506, %v6311, 0
        %6348 = vmatprep.subr.bf16.mxu0 0
        %6349 = vmatpush1.bf16.msra.mxu0 %v6281
        %6350 = vmatprep.subr.bf16.mxu0 0
        %6351 = vmatpush1.bf16.msra.mxu0 %v6282
        %6352 = vmatprep.subr.bf16.mxu0 0
        %6353 = vmatpush1.bf16.msra.mxu0 %v6283
        %6354 = vmatprep.subr.bf16.mxu0 0
        %6355 = vmatpush1.bf16.msra.mxu0 %v6284
        %6356 = vmatprep.subr.bf16.mxu0 0
        %6357 = vmatpush1.bf16.msra.mxu0 %v6285
        %6358 = vmatprep.subr.bf16.mxu0 0
        %6359 = vmatpush1.bf16.msra.mxu0 %v6286
        %6360 = vmatprep.subr.bf16.mxu0 0
        %6361 = vmatpush1.bf16.msra.mxu0 %v6287
        %6362 = vmatprep.subr.bf16.mxu0 0
        %6363 = vmatpush1.bf16.msra.mxu0 %v6288
        %6364 = vmatprep.subr.bf16.mxu0 0
        %6365 = vmatpush1.bf16.msra.mxu0 %v6289
        %6366 = vmatprep.subr.bf16.mxu0 0
        %6367 = vmatpush1.bf16.msra.mxu0 %v6290
        %6368 = vmatprep.subr.bf16.mxu0 0
        %6369 = vmatpush1.bf16.msra.mxu0 %v6291
        %6370 = vmatprep.subr.bf16.mxu0 0
        %6371 = vmatpush1.bf16.msra.mxu0 %v6292
        %6372 = vmatprep.subr.bf16.mxu0 0
        %6373 = vmatpush1.bf16.msra.mxu0 %v6293
        %6374 = vmatprep.subr.bf16.mxu0 0
        %6375 = vmatpush1.bf16.msra.mxu0 %v6294
        %6376 = vmatprep.subr.bf16.mxu0 0
        %6377 = vmatpush1.bf16.msra.mxu0 %v6295
        %6378 = vmatprep.subr.bf16.mxu0 0
        %6379 = vmatpush1.bf16.msra.mxu0 %v6296
        %6380 = vmatprep.mubr.bf16.mxu0 %v6153
        %6381 = vmatmul.mubr.bf16.gmra.mrb[0].mxu0 %v6152
        %v6382 = vpop.f32.mrb[0].mxu0
        %v6383 = vadd.f32 0.0, %v6382
        %v6384 = vpop.f32.mrb[0].mxu0
        %v6385 = vpop.f32.mrb[0].mxu0
        %v6386 = vpop.f32.mrb[0].mxu0
        %6387 = vdwg.mxu0
        %6388 = vmatprep.subr.bf16.mxu0 0
        %6389 = vmatpush1.bf16.msra.mxu0 %v6297
        %6390 = vmatprep.subr.bf16.mxu0 0
        %6391 = vmatpush1.bf16.msra.mxu0 %v6298
        %6392 = vmatprep.subr.bf16.mxu0 0
        %6393 = vmatpush1.bf16.msra.mxu0 %v6299
        %6394 = vmatprep.subr.bf16.mxu0 0
        %6395 = vmatpush1.bf16.msra.mxu0 %v6300
        %6396 = vmatprep.subr.bf16.mxu0 0
        %6397 = vmatpush1.bf16.msra.mxu0 %v6301
        %6398 = vmatprep.subr.bf16.mxu0 0
        %6399 = vmatpush1.bf16.msra.mxu0 %v6302
        %6400 = vmatprep.subr.bf16.mxu0 0
        %6401 = vmatpush1.bf16.msra.mxu0 %v6303
        %6402 = vmatprep.subr.bf16.mxu0 0
        %6403 = vmatpush1.bf16.msra.mxu0 %v6304
        %6404 = vmatprep.subr.bf16.mxu0 0
        %6405 = vmatpush1.bf16.msra.mxu0 %v6305
        %6406 = vmatprep.subr.bf16.mxu0 0
        %6407 = vmatpush1.bf16.msra.mxu0 %v6306
        %6408 = vmatprep.subr.bf16.mxu0 0
        %6409 = vmatpush1.bf16.msra.mxu0 %v6307
        %6410 = vmatprep.subr.bf16.mxu0 0
        %6411 = vmatpush1.bf16.msra.mxu0 %v6308
        %6412 = vmatprep.subr.bf16.mxu0 0
        %6413 = vmatpush1.bf16.msra.mxu0 %v6309
        %6414 = vmatprep.subr.bf16.mxu0 0
        %6415 = vmatpush1.bf16.msra.mxu0 %v6310
        %6416 = vmatprep.subr.bf16.mxu0 0
        %6417 = vmatpush1.bf16.msra.mxu0 %v6346
        %6418 = vmatprep.subr.bf16.mxu0 0
        %6419 = vmatpush1.bf16.msra.mxu0 0
        %6420 = vmatprep.mubr.bf16.mxu0 %v6343
        %6421 = vmatmul.mubr.bf16.gmra.mrb[0].mxu0 %v6154
        %v6422 = vpop.f32.mrb[0].mxu0
        %v6423 = vadd.f32 %v6383, %v6422
        %v6424 = vpop.f32.mrb[0].mxu0
        %v6425 = vpop.f32.mrb[0].mxu0
        %v6426 = vpop.f32.mrb[0].mxu0
        %6427 = vdwg.mxu0
        %v6428 = vadd.f32 %v6089, %v6423
        %s6429 = scalar_lea.vmem %s10, 2440
        %v6430 = vld [vmem:[%s6429] sm:$0xf]
        %v6431 = vld [vmem:[%s6429 + $0x4] sm:$0xf]
        %v6432 = vld [vmem:[%s6429 + $0x8] sm:$0xf]
        %v6433 = vld [vmem:[%s6429 + $0xc] sm:$0xf]
        %v6434 = vld [vmem:[%s6429 + $0x10] sm:$0xf]
        %v6435 = vld [vmem:[%s6429 + $0x14] sm:$0xf]
        %v6436 = vld [vmem:[%s6429 + $0x18] sm:$0xf]
        %v6437 = vld [vmem:[%s6429 + $0x1c] sm:$0xf]
        %v6438 = vld [vmem:[%s6429 + $0x20] sm:$0xf]
        %v6439 = vld [vmem:[%s6429 + $0x24] sm:$0xf]
        %v6440 = vld [vmem:[%s6429 + $0x28] sm:$0xf]
        %v6441 = vld [vmem:[%s6429 + $0x2c] sm:$0xf]
        %v6442 = vld [vmem:[%s6429 + $0x30] sm:$0xf]
        %v6443 = vld [vmem:[%s6429 + $0x34] sm:$0xf]
        %v6444 = vld [vmem:[%s6429 + $0x38] sm:$0xf]
        %v6445 = vld [vmem:[%s6429 + $0x3c] sm:$0xf]
        %v6446 = vld [vmem:[%s6429 + $0x40] sm:$0xf]
        %v6447 = vld [vmem:[%s6429 + $0x44] sm:$0xf]
        %v6448 = vld [vmem:[%s6429 + $0x48] sm:$0xf]
        %v6449 = vld [vmem:[%s6429 + $0x4c] sm:$0xf]
        %v6450 = vld [vmem:[%s6429 + $0x50] sm:$0xf]
        %v6451 = vld [vmem:[%s6429 + $0x54] sm:$0xf]
        %v6452 = vld [vmem:[%s6429 + $0x58] sm:$0xf]
        %v6453 = vld [vmem:[%s6429 + $0x5c] sm:$0xf]
        %v6454 = vld [vmem:[%s6429 + $0x60] sm:$0xf]
        %v6455 = vld [vmem:[%s6429 + $0x64] sm:$0xf]
        %v6456 = vld [vmem:[%s6429 + $0x68] sm:$0xf]
        %v6457 = vld [vmem:[%s6429 + $0x6c] sm:$0xf]
        %v6458 = vld [vmem:[%s6429 + $0x70] sm:$0xf]
        %v6459 = vld [vmem:[%s6429 + $0x74] sm:$0xf]
        %v6460 = vld [vmem:[%s6429 + $0x78] sm:$0xf]
        %v6461 = vld [vmem:[%s6429 + $0x7c] sm:$0xf]
        %v6462 = vld [vmem:[%s6429 + $0x80] sm:$0xf]
        %v6463 = vld [vmem:[%s6429 + $0x84] sm:$0xf]
        %v6464 = vld [vmem:[%s6429 + $0x88] sm:$0xf]
        %v6465 = vld [vmem:[%s6429 + $0x8c] sm:$0xf]
        %v6466 = vld [vmem:[%s6429 + $0x90] sm:$0xf]
        %v6467 = vld [vmem:[%s6429 + $0x94] sm:$0xf]
        %v6468 = vld [vmem:[%s6429 + $0x98] sm:$0xf]
        %v6469 = vld [vmem:[%s6429 + $0x9c] sm:$0xf]
        %v6470 = vld [vmem:[%s6429 + $0xa0] sm:$0xf]
        %v6471 = vld [vmem:[%s6429 + $0xa4] sm:$0xf]
        %v6472 = vld [vmem:[%s6429 + $0xa8] sm:$0xf]
        %v6473 = vld [vmem:[%s6429 + $0xac] sm:$0xf]
        %v6474 = vld [vmem:[%s6429 + $0xb0] sm:$0xf]
        %v6475 = vld [vmem:[%s6429 + $0xb4] sm:$0xf]
        %v6476 = vld [vmem:[%s6429 + $0xb8] sm:$0xf]
        %v6477 = vld [vmem:[%s6429 + $0xbc] sm:$0xf]
        %v6478 = vld [vmem:[%s6429 + $0xc0] sm:$0xf]
        %v6479 = vld [vmem:[%s6429 + $0xc4] sm:$0xf]
        %v6480 = vld [vmem:[%s6429 + $0xc8] sm:$0xf]
        %v6481 = vld [vmem:[%s6429 + $0xcc] sm:$0xf]
        %v6482 = vld [vmem:[%s6429 + $0xd0] sm:$0xf]
        %v6483 = vld [vmem:[%s6429 + $0xd4] sm:$0xf]
        %v6484 = vld [vmem:[%s6429 + $0xd8] sm:$0xf]
        %v6485 = vld [vmem:[%s6429 + $0xdc] sm:$0xf]
        %v6486 = vld [vmem:[%s6429 + $0xe0] sm:$0xf]
        %v6487 = vld [vmem:[%s6429 + $0xe4] sm:$0xf]
        %v6488 = vld [vmem:[%s6429 + $0xe8] sm:$0xf]
        %v6489 = vld [vmem:[%s6429 + $0xec] sm:$0xf]
        %v6490 = vld [vmem:[%s6429 + $0xf0] sm:$0x3]
        %v6491 = vrot.slane %v3033, 5
        %v6492 = vrot.slane %v3034, 5
        %v6493 = vrot.slane %v3035, 5
        %v6494 = vrot.slane %v3036, 5
        %v6559 = vunpack.c.l.b16 %v6430
        %v6560 = vunpack.c.l.b16 %v6431
        %v6561 = vunpack.c.l.b16 %v6432
        %v6562 = vunpack.c.l.b16 %v6433
        %v6563 = vunpack.c.l.b16 %v6434
        %v6564 = vunpack.c.l.b16 %v6435
        %v6565 = vunpack.c.l.b16 %v6436
        %v6566 = vunpack.c.l.b16 %v6437
        %v6567 = vunpack.c.l.b16 %v6438
        %v6568 = vunpack.c.l.b16 %v6439
        %v6569 = vunpack.c.l.b16 %v6440
        %v6570 = vunpack.c.l.b16 %v6441
        %v6571 = vunpack.c.l.b16 %v6442
        %v6572 = vunpack.c.l.b16 %v6443
        %v6573 = vunpack.c.l.b16 %v6444
        %v6574 = vunpack.c.l.b16 %v6445
        %v6575 = vunpack.c.l.b16 %v6446
        %v6576 = vunpack.c.l.b16 %v6447
        %v6577 = vunpack.c.l.b16 %v6448
        %v6578 = vunpack.c.l.b16 %v6449
        %v6579 = vunpack.c.l.b16 %v6450
        %v6580 = vunpack.c.l.b16 %v6451
        %v6581 = vunpack.c.l.b16 %v6452
        %v6582 = vunpack.c.l.b16 %v6453
        %v6583 = vunpack.c.l.b16 %v6454
        %v6584 = vunpack.c.l.b16 %v6455
        %v6585 = vunpack.c.l.b16 %v6456
        %v6586 = vunpack.c.l.b16 %v6457
        %v6587 = vunpack.c.l.b16 %v6458
        %v6588 = vunpack.c.l.b16 %v6459
        %v6589 = vunpack.c.l.b16 %v6460
        %v6590 = vunpack.c.l.b16 %v6461
        %v6591 = vunpack.c.l.b16 %v6462
        %v6592 = vunpack.c.l.b16 %v6463
        %v6593 = vunpack.c.l.b16 %v6464
        %v6594 = vunpack.c.l.b16 %v6465
        %v6595 = vunpack.c.l.b16 %v6466
        %v6596 = vunpack.c.l.b16 %v6467
        %v6597 = vunpack.c.l.b16 %v6468
        %v6598 = vunpack.c.l.b16 %v6469
        %v6599 = vunpack.c.l.b16 %v6470
        %v6600 = vunpack.c.l.b16 %v6471
        %v6601 = vunpack.c.l.b16 %v6472
        %v6602 = vunpack.c.l.b16 %v6473
        %v6603 = vunpack.c.l.b16 %v6474
        %v6604 = vunpack.c.l.b16 %v6475
        %v6605 = vunpack.c.l.b16 %v6476
        %v6606 = vunpack.c.l.b16 %v6477
        %v6607 = vunpack.c.l.b16 %v6478
        %v6608 = vunpack.c.l.b16 %v6479
        %v6609 = vunpack.c.l.b16 %v6480
        %v6610 = vunpack.c.l.b16 %v6481
        %v6611 = vunpack.c.l.b16 %v6482
        %v6612 = vunpack.c.l.b16 %v6483
        %v6613 = vunpack.c.l.b16 %v6484
        %v6614 = vunpack.c.l.b16 %v6485
        %v6615 = vunpack.c.l.b16 %v6486
        %v6616 = vunpack.c.l.b16 %v6487
        %v6617 = vunpack.c.l.b16 %v6488
        %v6618 = vunpack.c.l.b16 %v6489
        %v6619 = vunpack.c.l.b16 %v6490
        %v6620 = vpack.c.b16 %v6560, %v6559
        %v6621 = vpack.c.b16 %v6562, %v6561
        %v6622 = vpack.c.b16 %v6564, %v6563
        %v6623 = vpack.c.b16 %v6566, %v6565
        %v6624 = vpack.c.b16 %v6568, %v6567
        %v6625 = vpack.c.b16 %v6570, %v6569
        %v6626 = vpack.c.b16 %v6572, %v6571
        %v6627 = vpack.c.b16 %v6574, %v6573
        %v6628 = vpack.c.b16 %v6576, %v6575
        %v6629 = vpack.c.b16 %v6578, %v6577
        %v6630 = vpack.c.b16 %v6580, %v6579
        %v6631 = vpack.c.b16 %v6582, %v6581
        %v6632 = vpack.c.b16 %v6584, %v6583
        %v6633 = vpack.c.b16 %v6586, %v6585
        %v6634 = vpack.c.b16 %v6588, %v6587
        %v6635 = vpack.c.b16 %v6590, %v6589
        %v6636 = vpack.c.b16 %v6592, %v6591
        %v6637 = vpack.c.b16 %v6594, %v6593
        %v6638 = vpack.c.b16 %v6596, %v6595
        %v6639 = vpack.c.b16 %v6598, %v6597
        %v6640 = vpack.c.b16 %v6600, %v6599
        %v6641 = vpack.c.b16 %v6602, %v6601
        %v6642 = vpack.c.b16 %v6604, %v6603
        %v6643 = vpack.c.b16 %v6606, %v6605
        %v6644 = vpack.c.b16 %v6608, %v6607
        %v6645 = vpack.c.b16 %v6610, %v6609
        %v6646 = vpack.c.b16 %v6612, %v6611
        %v6647 = vpack.c.b16 %v6614, %v6613
        %v6648 = vpack.c.b16 %v6616, %v6615
        %v6649 = vpack.c.b16 %v6618, %v6617
        %v6650 = vpack.c.b16 %v6619, %v6619
        %v6682 = vsel %vm3358, %v6494, 0
        %v6685 = vsel %vm506, %v6650, 0
        %6687 = vmatprep.subr.bf16.mxu0 0
        %6688 = vmatpush1.bf16.msra.mxu0 %v6620
        %6689 = vmatprep.subr.bf16.mxu0 0
        %6690 = vmatpush1.bf16.msra.mxu0 %v6621
        %6691 = vmatprep.subr.bf16.mxu0 0
        %6692 = vmatpush1.bf16.msra.mxu0 %v6622
        %6693 = vmatprep.subr.bf16.mxu0 0
        %6694 = vmatpush1.bf16.msra.mxu0 %v6623
        %6695 = vmatprep.subr.bf16.mxu0 0
        %6696 = vmatpush1.bf16.msra.mxu0 %v6624
        %6697 = vmatprep.subr.bf16.mxu0 0
        %6698 = vmatpush1.bf16.msra.mxu0 %v6625
        %6699 = vmatprep.subr.bf16.mxu0 0
        %6700 = vmatpush1.bf16.msra.mxu0 %v6626
        %6701 = vmatprep.subr.bf16.mxu0 0
        %6702 = vmatpush1.bf16.msra.mxu0 %v6627
        %6703 = vmatprep.subr.bf16.mxu0 0
        %6704 = vmatpush1.bf16.msra.mxu0 %v6628
        %6705 = vmatprep.subr.bf16.mxu0 0
        %6706 = vmatpush1.bf16.msra.mxu0 %v6629
        %6707 = vmatprep.subr.bf16.mxu0 0
        %6708 = vmatpush1.bf16.msra.mxu0 %v6630
        %6709 = vmatprep.subr.bf16.mxu0 0
        %6710 = vmatpush1.bf16.msra.mxu0 %v6631
        %6711 = vmatprep.subr.bf16.mxu0 0
        %6712 = vmatpush1.bf16.msra.mxu0 %v6632
        %6713 = vmatprep.subr.bf16.mxu0 0
        %6714 = vmatpush1.bf16.msra.mxu0 %v6633
        %6715 = vmatprep.subr.bf16.mxu0 0
        %6716 = vmatpush1.bf16.msra.mxu0 %v6634
        %6717 = vmatprep.subr.bf16.mxu0 0
        %6718 = vmatpush1.bf16.msra.mxu0 %v6635
        %6719 = vmatprep.mubr.bf16.mxu0 %v6492
        %6720 = vmatmul.mubr.bf16.gmra.mrb[0].mxu0 %v6491
        %v6721 = vpop.f32.mrb[0].mxu0
        %v6722 = vadd.f32 0.0, %v6721
        %v6723 = vpop.f32.mrb[0].mxu0
        %v6724 = vpop.f32.mrb[0].mxu0
        %v6725 = vpop.f32.mrb[0].mxu0
        %6726 = vdwg.mxu0
        %6727 = vmatprep.subr.bf16.mxu0 0
        %6728 = vmatpush1.bf16.msra.mxu0 %v6636
        %6729 = vmatprep.subr.bf16.mxu0 0
        %6730 = vmatpush1.bf16.msra.mxu0 %v6637
        %6731 = vmatprep.subr.bf16.mxu0 0
        %6732 = vmatpush1.bf16.msra.mxu0 %v6638
        %6733 = vmatprep.subr.bf16.mxu0 0
        %6734 = vmatpush1.bf16.msra.mxu0 %v6639
        %6735 = vmatprep.subr.bf16.mxu0 0
        %6736 = vmatpush1.bf16.msra.mxu0 %v6640
        %6737 = vmatprep.subr.bf16.mxu0 0
        %6738 = vmatpush1.bf16.msra.mxu0 %v6641
        %6739 = vmatprep.subr.bf16.mxu0 0
        %6740 = vmatpush1.bf16.msra.mxu0 %v6642
        %6741 = vmatprep.subr.bf16.mxu0 0
        %6742 = vmatpush1.bf16.msra.mxu0 %v6643
        %6743 = vmatprep.subr.bf16.mxu0 0
        %6744 = vmatpush1.bf16.msra.mxu0 %v6644
        %6745 = vmatprep.subr.bf16.mxu0 0
        %6746 = vmatpush1.bf16.msra.mxu0 %v6645
        %6747 = vmatprep.subr.bf16.mxu0 0
        %6748 = vmatpush1.bf16.msra.mxu0 %v6646
        %6749 = vmatprep.subr.bf16.mxu0 0
        %6750 = vmatpush1.bf16.msra.mxu0 %v6647
        %6751 = vmatprep.subr.bf16.mxu0 0
        %6752 = vmatpush1.bf16.msra.mxu0 %v6648
        %6753 = vmatprep.subr.bf16.mxu0 0
        %6754 = vmatpush1.bf16.msra.mxu0 %v6649
        %6755 = vmatprep.subr.bf16.mxu0 0
        %6756 = vmatpush1.bf16.msra.mxu0 %v6685
        %6757 = vmatprep.subr.bf16.mxu0 0
        %6758 = vmatpush1.bf16.msra.mxu0 0
        %6759 = vmatprep.mubr.bf16.mxu0 %v6682
        %6760 = vmatmul.mubr.bf16.gmra.mrb[0].mxu0 %v6493
        %v6761 = vpop.f32.mrb[0].mxu0
        %v6762 = vadd.f32 %v6722, %v6761
        %v6763 = vpop.f32.mrb[0].mxu0
        %v6764 = vpop.f32.mrb[0].mxu0
        %v6765 = vpop.f32.mrb[0].mxu0
        %6766 = vdwg.mxu0
        %v6767 = vadd.f32 %v6428, %v6762
        %s6768 = scalar_lea.vmem %s10, 2684
        %v6769 = vld [vmem:[%s6768] sm:$0xf]
        %v6770 = vld [vmem:[%s6768 + $0x4] sm:$0xf]
        %v6771 = vld [vmem:[%s6768 + $0x8] sm:$0xf]
        %v6772 = vld [vmem:[%s6768 + $0xc] sm:$0xf]
        %v6773 = vld [vmem:[%s6768 + $0x10] sm:$0xf]
        %v6774 = vld [vmem:[%s6768 + $0x14] sm:$0xf]
        %v6775 = vld [vmem:[%s6768 + $0x18] sm:$0xf]
        %v6776 = vld [vmem:[%s6768 + $0x1c] sm:$0xf]
        %v6777 = vld [vmem:[%s6768 + $0x20] sm:$0xf]
        %v6778 = vld [vmem:[%s6768 + $0x24] sm:$0xf]
        %v6779 = vld [vmem:[%s6768 + $0x28] sm:$0xf]
        %v6780 = vld [vmem:[%s6768 + $0x2c] sm:$0xf]
        %v6781 = vld [vmem:[%s6768 + $0x30] sm:$0xf]
        %v6782 = vld [vmem:[%s6768 + $0x34] sm:$0xf]
        %v6783 = vld [vmem:[%s6768 + $0x38] sm:$0xf]
        %v6784 = vld [vmem:[%s6768 + $0x3c] sm:$0xf]
        %v6785 = vld [vmem:[%s6768 + $0x40] sm:$0xf]
        %v6786 = vld [vmem:[%s6768 + $0x44] sm:$0xf]
        %v6787 = vld [vmem:[%s6768 + $0x48] sm:$0xf]
        %v6788 = vld [vmem:[%s6768 + $0x4c] sm:$0xf]
        %v6789 = vld [vmem:[%s6768 + $0x50] sm:$0xf]
        %v6790 = vld [vmem:[%s6768 + $0x54] sm:$0xf]
        %v6791 = vld [vmem:[%s6768 + $0x58] sm:$0xf]
        %v6792 = vld [vmem:[%s6768 + $0x5c] sm:$0xf]
        %v6793 = vld [vmem:[%s6768 + $0x60] sm:$0xf]
        %v6794 = vld [vmem:[%s6768 + $0x64] sm:$0xf]
        %v6795 = vld [vmem:[%s6768 + $0x68] sm:$0xf]
        %v6796 = vld [vmem:[%s6768 + $0x6c] sm:$0xf]
        %v6797 = vld [vmem:[%s6768 + $0x70] sm:$0xf]
        %v6798 = vld [vmem:[%s6768 + $0x74] sm:$0xf]
        %v6799 = vld [vmem:[%s6768 + $0x78] sm:$0xf]
        %v6800 = vld [vmem:[%s6768 + $0x7c] sm:$0xf]
        %v6801 = vld [vmem:[%s6768 + $0x80] sm:$0xf]
        %v6802 = vld [vmem:[%s6768 + $0x84] sm:$0xf]
        %v6803 = vld [vmem:[%s6768 + $0x88] sm:$0xf]
        %v6804 = vld [vmem:[%s6768 + $0x8c] sm:$0xf]
        %v6805 = vld [vmem:[%s6768 + $0x90] sm:$0xf]
        %v6806 = vld [vmem:[%s6768 + $0x94] sm:$0xf]
        %v6807 = vld [vmem:[%s6768 + $0x98] sm:$0xf]
        %v6808 = vld [vmem:[%s6768 + $0x9c] sm:$0xf]
        %v6809 = vld [vmem:[%s6768 + $0xa0] sm:$0xf]
        %v6810 = vld [vmem:[%s6768 + $0xa4] sm:$0xf]
        %v6811 = vld [vmem:[%s6768 + $0xa8] sm:$0xf]
        %v6812 = vld [vmem:[%s6768 + $0xac] sm:$0xf]
        %v6813 = vld [vmem:[%s6768 + $0xb0] sm:$0xf]
        %v6814 = vld [vmem:[%s6768 + $0xb4] sm:$0xf]
        %v6815 = vld [vmem:[%s6768 + $0xb8] sm:$0xf]
        %v6816 = vld [vmem:[%s6768 + $0xbc] sm:$0xf]
        %v6817 = vld [vmem:[%s6768 + $0xc0] sm:$0xf]
        %v6818 = vld [vmem:[%s6768 + $0xc4] sm:$0xf]
        %v6819 = vld [vmem:[%s6768 + $0xc8] sm:$0xf]
        %v6820 = vld [vmem:[%s6768 + $0xcc] sm:$0xf]
        %v6821 = vld [vmem:[%s6768 + $0xd0] sm:$0xf]
        %v6822 = vld [vmem:[%s6768 + $0xd4] sm:$0xf]
        %v6823 = vld [vmem:[%s6768 + $0xd8] sm:$0xf]
        %v6824 = vld [vmem:[%s6768 + $0xdc] sm:$0xf]
        %v6825 = vld [vmem:[%s6768 + $0xe0] sm:$0xf]
        %v6826 = vld [vmem:[%s6768 + $0xe4] sm:$0xf]
        %v6827 = vld [vmem:[%s6768 + $0xe8] sm:$0xf]
        %v6828 = vld [vmem:[%s6768 + $0xec] sm:$0xf]
        %v6829 = vld [vmem:[%s6768 + $0xf0] sm:$0x3]
        %v6830 = vrot.slane %v3161, 5
        %v6831 = vrot.slane %v3164, 5
        %v6832 = vrot.slane %v3167, 5
        %v6833 = vrot.slane %v3170, 5
        %v6898 = vunpack.c.l.b16 %v6769
        %v6899 = vunpack.c.l.b16 %v6770
        %v6900 = vunpack.c.l.b16 %v6771
        %v6901 = vunpack.c.l.b16 %v6772
        %v6902 = vunpack.c.l.b16 %v6773
        %v6903 = vunpack.c.l.b16 %v6774
        %v6904 = vunpack.c.l.b16 %v6775
        %v6905 = vunpack.c.l.b16 %v6776
        %v6906 = vunpack.c.l.b16 %v6777
        %v6907 = vunpack.c.l.b16 %v6778
        %v6908 = vunpack.c.l.b16 %v6779
        %v6909 = vunpack.c.l.b16 %v6780
        %v6910 = vunpack.c.l.b16 %v6781
        %v6911 = vunpack.c.l.b16 %v6782
        %v6912 = vunpack.c.l.b16 %v6783
        %v6913 = vunpack.c.l.b16 %v6784
        %v6914 = vunpack.c.l.b16 %v6785
        %v6915 = vunpack.c.l.b16 %v6786
        %v6916 = vunpack.c.l.b16 %v6787
        %v6917 = vunpack.c.l.b16 %v6788
        %v6918 = vunpack.c.l.b16 %v6789
        %v6919 = vunpack.c.l.b16 %v6790
        %v6920 = vunpack.c.l.b16 %v6791
        %v6921 = vunpack.c.l.b16 %v6792
        %v6922 = vunpack.c.l.b16 %v6793
        %v6923 = vunpack.c.l.b16 %v6794
        %v6924 = vunpack.c.l.b16 %v6795
        %v6925 = vunpack.c.l.b16 %v6796
        %v6926 = vunpack.c.l.b16 %v6797
        %v6927 = vunpack.c.l.b16 %v6798
        %v6928 = vunpack.c.l.b16 %v6799
        %v6929 = vunpack.c.l.b16 %v6800
        %v6930 = vunpack.c.l.b16 %v6801
        %v6931 = vunpack.c.l.b16 %v6802
        %v6932 = vunpack.c.l.b16 %v6803
        %v6933 = vunpack.c.l.b16 %v6804
        %v6934 = vunpack.c.l.b16 %v6805
        %v6935 = vunpack.c.l.b16 %v6806
        %v6936 = vunpack.c.l.b16 %v6807
        %v6937 = vunpack.c.l.b16 %v6808
        %v6938 = vunpack.c.l.b16 %v6809
        %v6939 = vunpack.c.l.b16 %v6810
        %v6940 = vunpack.c.l.b16 %v6811
        %v6941 = vunpack.c.l.b16 %v6812
        %v6942 = vunpack.c.l.b16 %v6813
        %v6943 = vunpack.c.l.b16 %v6814
        %v6944 = vunpack.c.l.b16 %v6815
        %v6945 = vunpack.c.l.b16 %v6816
        %v6946 = vunpack.c.l.b16 %v6817
        %v6947 = vunpack.c.l.b16 %v6818
        %v6948 = vunpack.c.l.b16 %v6819
        %v6949 = vunpack.c.l.b16 %v6820
        %v6950 = vunpack.c.l.b16 %v6821
        %v6951 = vunpack.c.l.b16 %v6822
        %v6952 = vunpack.c.l.b16 %v6823
        %v6953 = vunpack.c.l.b16 %v6824
        %v6954 = vunpack.c.l.b16 %v6825
        %v6955 = vunpack.c.l.b16 %v6826
        %v6956 = vunpack.c.l.b16 %v6827
        %v6957 = vunpack.c.l.b16 %v6828
        %v6958 = vunpack.c.l.b16 %v6829
        %v6959 = vpack.c.b16 %v6899, %v6898
        %v6960 = vpack.c.b16 %v6901, %v6900
        %v6961 = vpack.c.b16 %v6903, %v6902
        %v6962 = vpack.c.b16 %v6905, %v6904
        %v6963 = vpack.c.b16 %v6907, %v6906
        %v6964 = vpack.c.b16 %v6909, %v6908
        %v6965 = vpack.c.b16 %v6911, %v6910
        %v6966 = vpack.c.b16 %v6913, %v6912
        %v6967 = vpack.c.b16 %v6915, %v6914
        %v6968 = vpack.c.b16 %v6917, %v6916
        %v6969 = vpack.c.b16 %v6919, %v6918
        %v6970 = vpack.c.b16 %v6921, %v6920
        %v6971 = vpack.c.b16 %v6923, %v6922
        %v6972 = vpack.c.b16 %v6925, %v6924
        %v6973 = vpack.c.b16 %v6927, %v6926
        %v6974 = vpack.c.b16 %v6929, %v6928
        %v6975 = vpack.c.b16 %v6931, %v6930
        %v6976 = vpack.c.b16 %v6933, %v6932
        %v6977 = vpack.c.b16 %v6935, %v6934
        %v6978 = vpack.c.b16 %v6937, %v6936
        %v6979 = vpack.c.b16 %v6939, %v6938
        %v6980 = vpack.c.b16 %v6941, %v6940
        %v6981 = vpack.c.b16 %v6943, %v6942
        %v6982 = vpack.c.b16 %v6945, %v6944
        %v6983 = vpack.c.b16 %v6947, %v6946
        %v6984 = vpack.c.b16 %v6949, %v6948
        %v6985 = vpack.c.b16 %v6951, %v6950
        %v6986 = vpack.c.b16 %v6953, %v6952
        %v6987 = vpack.c.b16 %v6955, %v6954
        %v6988 = vpack.c.b16 %v6957, %v6956
        %v6989 = vpack.c.b16 %v6958, %v6958
        %v7021 = vsel %vm3358, %v6833, 0
        %v7024 = vsel %vm506, %v6989, 0
        %7026 = vmatprep.subr.bf16.mxu0 0
        %7027 = vmatpush1.bf16.msra.mxu0 %v6959
        %7028 = vmatprep.subr.bf16.mxu0 0
        %7029 = vmatpush1.bf16.msra.mxu0 %v6960
        %7030 = vmatprep.subr.bf16.mxu0 0
        %7031 = vmatpush1.bf16.msra.mxu0 %v6961
        %7032 = vmatprep.subr.bf16.mxu0 0
        %7033 = vmatpush1.bf16.msra.mxu0 %v6962
        %7034 = vmatprep.subr.bf16.mxu0 0
        %7035 = vmatpush1.bf16.msra.mxu0 %v6963
        %7036 = vmatprep.subr.bf16.mxu0 0
        %7037 = vmatpush1.bf16.msra.mxu0 %v6964
        %7038 = vmatprep.subr.bf16.mxu0 0
        %7039 = vmatpush1.bf16.msra.mxu0 %v6965
        %7040 = vmatprep.subr.bf16.mxu0 0
        %7041 = vmatpush1.bf16.msra.mxu0 %v6966
        %7042 = vmatprep.subr.bf16.mxu0 0
        %7043 = vmatpush1.bf16.msra.mxu0 %v6967
        %7044 = vmatprep.subr.bf16.mxu0 0
        %7045 = vmatpush1.bf16.msra.mxu0 %v6968
        %7046 = vmatprep.subr.bf16.mxu0 0
        %7047 = vmatpush1.bf16.msra.mxu0 %v6969
        %7048 = vmatprep.subr.bf16.mxu0 0
        %7049 = vmatpush1.bf16.msra.mxu0 %v6970
        %7050 = vmatprep.subr.bf16.mxu0 0
        %7051 = vmatpush1.bf16.msra.mxu0 %v6971
        %7052 = vmatprep.subr.bf16.mxu0 0
        %7053 = vmatpush1.bf16.msra.mxu0 %v6972
        %7054 = vmatprep.subr.bf16.mxu0 0
        %7055 = vmatpush1.bf16.msra.mxu0 %v6973
        %7056 = vmatprep.subr.bf16.mxu0 0
        %7057 = vmatpush1.bf16.msra.mxu0 %v6974
        %7058 = vmatprep.mubr.bf16.mxu0 %v6831
        %7059 = vmatmul.mubr.bf16.gmra.mrb[0].mxu0 %v6830
        %v7060 = vpop.f32.mrb[0].mxu0
        %v7061 = vadd.f32 0.0, %v7060
        %v7062 = vpop.f32.mrb[0].mxu0
        %v7063 = vpop.f32.mrb[0].mxu0
        %v7064 = vpop.f32.mrb[0].mxu0
        %7065 = vdwg.mxu0
        %7066 = vmatprep.subr.bf16.mxu0 0
        %7067 = vmatpush1.bf16.msra.mxu0 %v6975
        %7068 = vmatprep.subr.bf16.mxu0 0
        %7069 = vmatpush1.bf16.msra.mxu0 %v6976
        %7070 = vmatprep.subr.bf16.mxu0 0
        %7071 = vmatpush1.bf16.msra.mxu0 %v6977
        %7072 = vmatprep.subr.bf16.mxu0 0
        %7073 = vmatpush1.bf16.msra.mxu0 %v6978
        %7074 = vmatprep.subr.bf16.mxu0 0
        %7075 = vmatpush1.bf16.msra.mxu0 %v6979
        %7076 = vmatprep.subr.bf16.mxu0 0
        %7077 = vmatpush1.bf16.msra.mxu0 %v6980
        %7078 = vmatprep.subr.bf16.mxu0 0
        %7079 = vmatpush1.bf16.msra.mxu0 %v6981
        %7080 = vmatprep.subr.bf16.mxu0 0
        %7081 = vmatpush1.bf16.msra.mxu0 %v6982
        %7082 = vmatprep.subr.bf16.mxu0 0
        %7083 = vmatpush1.bf16.msra.mxu0 %v6983
        %7084 = vmatprep.subr.bf16.mxu0 0
        %7085 = vmatpush1.bf16.msra.mxu0 %v6984
        %7086 = vmatprep.subr.bf16.mxu0 0
        %7087 = vmatpush1.bf16.msra.mxu0 %v6985
        %7088 = vmatprep.subr.bf16.mxu0 0
        %7089 = vmatpush1.bf16.msra.mxu0 %v6986
        %7090 = vmatprep.subr.bf16.mxu0 0
        %7091 = vmatpush1.bf16.msra.mxu0 %v6987
        %7092 = vmatprep.subr.bf16.mxu0 0
        %7093 = vmatpush1.bf16.msra.mxu0 %v6988
        %7094 = vmatprep.subr.bf16.mxu0 0
        %7095 = vmatpush1.bf16.msra.mxu0 %v7024
        %7096 = vmatprep.subr.bf16.mxu0 0
        %7097 = vmatpush1.bf16.msra.mxu0 0
        %7098 = vmatprep.mubr.bf16.mxu0 %v7021
        %7099 = vmatmul.mubr.bf16.gmra.mrb[0].mxu0 %v6832
        %v7100 = vpop.f32.mrb[0].mxu0
        %v7101 = vadd.f32 %v7061, %v7100
        %v7102 = vpop.f32.mrb[0].mxu0
        %v7103 = vpop.f32.mrb[0].mxu0
        %v7104 = vpop.f32.mrb[0].mxu0
        %7105 = vdwg.mxu0
        %v7106 = vadd.f32 %v6767, %v7101
        %s7107 = scalar_lea.vmem %s10, 2928
        %v7108 = vld [vmem:[%s7107] sm:$0xf]
        %v7109 = vld [vmem:[%s7107 + $0x4] sm:$0xf]
        %v7110 = vld [vmem:[%s7107 + $0x8] sm:$0xf]
        %v7111 = vld [vmem:[%s7107 + $0xc] sm:$0xf]
        %v7112 = vld [vmem:[%s7107 + $0x10] sm:$0xf]
        %v7113 = vld [vmem:[%s7107 + $0x14] sm:$0xf]
        %v7114 = vld [vmem:[%s7107 + $0x18] sm:$0xf]
        %v7115 = vld [vmem:[%s7107 + $0x1c] sm:$0xf]
        %v7116 = vld [vmem:[%s7107 + $0x20] sm:$0xf]
        %v7117 = vld [vmem:[%s7107 + $0x24] sm:$0xf]
        %v7118 = vld [vmem:[%s7107 + $0x28] sm:$0xf]
        %v7119 = vld [vmem:[%s7107 + $0x2c] sm:$0xf]
        %v7120 = vld [vmem:[%s7107 + $0x30] sm:$0xf]
        %v7121 = vld [vmem:[%s7107 + $0x34] sm:$0xf]
        %v7122 = vld [vmem:[%s7107 + $0x38] sm:$0xf]
        %v7123 = vld [vmem:[%s7107 + $0x3c] sm:$0xf]
        %v7124 = vld [vmem:[%s7107 + $0x40] sm:$0xf]
        %v7125 = vld [vmem:[%s7107 + $0x44] sm:$0xf]
        %v7126 = vld [vmem:[%s7107 + $0x48] sm:$0xf]
        %v7127 = vld [vmem:[%s7107 + $0x4c] sm:$0xf]
        %v7128 = vld [vmem:[%s7107 + $0x50] sm:$0xf]
        %v7129 = vld [vmem:[%s7107 + $0x54] sm:$0xf]
        %v7130 = vld [vmem:[%s7107 + $0x58] sm:$0xf]
        %v7131 = vld [vmem:[%s7107 + $0x5c] sm:$0xf]
        %v7132 = vld [vmem:[%s7107 + $0x60] sm:$0xf]
        %v7133 = vld [vmem:[%s7107 + $0x64] sm:$0xf]
        %v7134 = vld [vmem:[%s7107 + $0x68] sm:$0xf]
        %v7135 = vld [vmem:[%s7107 + $0x6c] sm:$0xf]
        %v7136 = vld [vmem:[%s7107 + $0x70] sm:$0xf]
        %v7137 = vld [vmem:[%s7107 + $0x74] sm:$0xf]
        %v7138 = vld [vmem:[%s7107 + $0x78] sm:$0xf]
        %v7139 = vld [vmem:[%s7107 + $0x7c] sm:$0xf]
        %v7140 = vld [vmem:[%s7107 + $0x80] sm:$0xf]
        %v7141 = vld [vmem:[%s7107 + $0x84] sm:$0xf]
        %v7142 = vld [vmem:[%s7107 + $0x88] sm:$0xf]
        %v7143 = vld [vmem:[%s7107 + $0x8c] sm:$0xf]
        %v7144 = vld [vmem:[%s7107 + $0x90] sm:$0xf]
        %v7145 = vld [vmem:[%s7107 + $0x94] sm:$0xf]
        %v7146 = vld [vmem:[%s7107 + $0x98] sm:$0xf]
        %v7147 = vld [vmem:[%s7107 + $0x9c] sm:$0xf]
        %v7148 = vld [vmem:[%s7107 + $0xa0] sm:$0xf]
        %v7149 = vld [vmem:[%s7107 + $0xa4] sm:$0xf]
        %v7150 = vld [vmem:[%s7107 + $0xa8] sm:$0xf]
        %v7151 = vld [vmem:[%s7107 + $0xac] sm:$0xf]
        %v7152 = vld [vmem:[%s7107 + $0xb0] sm:$0xf]
        %v7153 = vld [vmem:[%s7107 + $0xb4] sm:$0xf]
        %v7154 = vld [vmem:[%s7107 + $0xb8] sm:$0xf]
        %v7155 = vld [vmem:[%s7107 + $0xbc] sm:$0xf]
        %v7156 = vld [vmem:[%s7107 + $0xc0] sm:$0xf]
        %v7157 = vld [vmem:[%s7107 + $0xc4] sm:$0xf]
        %v7158 = vld [vmem:[%s7107 + $0xc8] sm:$0xf]
        %v7159 = vld [vmem:[%s7107 + $0xcc] sm:$0xf]
        %v7160 = vld [vmem:[%s7107 + $0xd0] sm:$0xf]
        %v7161 = vld [vmem:[%s7107 + $0xd4] sm:$0xf]
        %v7162 = vld [vmem:[%s7107 + $0xd8] sm:$0xf]
        %v7163 = vld [vmem:[%s7107 + $0xdc] sm:$0xf]
        %v7164 = vld [vmem:[%s7107 + $0xe0] sm:$0xf]
        %v7165 = vld [vmem:[%s7107 + $0xe4] sm:$0xf]
        %v7166 = vld [vmem:[%s7107 + $0xe8] sm:$0xf]
        %v7167 = vld [vmem:[%s7107 + $0xec] sm:$0xf]
        %v7168 = vld [vmem:[%s7107 + $0xf0] sm:$0x3]
        %v7169 = vrot.slane %v3033, 6
        %v7170 = vrot.slane %v3034, 6
        %v7171 = vrot.slane %v3035, 6
        %v7172 = vrot.slane %v3036, 6
        %v7237 = vunpack.c.l.b16 %v7108
        %v7238 = vunpack.c.l.b16 %v7109
        %v7239 = vunpack.c.l.b16 %v7110
        %v7240 = vunpack.c.l.b16 %v7111
        %v7241 = vunpack.c.l.b16 %v7112
        %v7242 = vunpack.c.l.b16 %v7113
        %v7243 = vunpack.c.l.b16 %v7114
        %v7244 = vunpack.c.l.b16 %v7115
        %v7245 = vunpack.c.l.b16 %v7116
        %v7246 = vunpack.c.l.b16 %v7117
        %v7247 = vunpack.c.l.b16 %v7118
        %v7248 = vunpack.c.l.b16 %v7119
        %v7249 = vunpack.c.l.b16 %v7120
        %v7250 = vunpack.c.l.b16 %v7121
        %v7251 = vunpack.c.l.b16 %v7122
        %v7252 = vunpack.c.l.b16 %v7123
        %v7253 = vunpack.c.l.b16 %v7124
        %v7254 = vunpack.c.l.b16 %v7125
        %v7255 = vunpack.c.l.b16 %v7126
        %v7256 = vunpack.c.l.b16 %v7127
        %v7257 = vunpack.c.l.b16 %v7128
        %v7258 = vunpack.c.l.b16 %v7129
        %v7259 = vunpack.c.l.b16 %v7130
        %v7260 = vunpack.c.l.b16 %v7131
        %v7261 = vunpack.c.l.b16 %v7132
        %v7262 = vunpack.c.l.b16 %v7133
        %v7263 = vunpack.c.l.b16 %v7134
        %v7264 = vunpack.c.l.b16 %v7135
        %v7265 = vunpack.c.l.b16 %v7136
        %v7266 = vunpack.c.l.b16 %v7137
        %v7267 = vunpack.c.l.b16 %v7138
        %v7268 = vunpack.c.l.b16 %v7139
        %v7269 = vunpack.c.l.b16 %v7140
        %v7270 = vunpack.c.l.b16 %v7141
        %v7271 = vunpack.c.l.b16 %v7142
        %v7272 = vunpack.c.l.b16 %v7143
        %v7273 = vunpack.c.l.b16 %v7144
        %v7274 = vunpack.c.l.b16 %v7145
        %v7275 = vunpack.c.l.b16 %v7146
        %v7276 = vunpack.c.l.b16 %v7147
        %v7277 = vunpack.c.l.b16 %v7148
        %v7278 = vunpack.c.l.b16 %v7149
        %v7279 = vunpack.c.l.b16 %v7150
        %v7280 = vunpack.c.l.b16 %v7151
        %v7281 = vunpack.c.l.b16 %v7152
        %v7282 = vunpack.c.l.b16 %v7153
        %v7283 = vunpack.c.l.b16 %v7154
        %v7284 = vunpack.c.l.b16 %v7155
        %v7285 = vunpack.c.l.b16 %v7156
        %v7286 = vunpack.c.l.b16 %v7157
        %v7287 = vunpack.c.l.b16 %v7158
        %v7288 = vunpack.c.l.b16 %v7159
        %v7289 = vunpack.c.l.b16 %v7160
        %v7290 = vunpack.c.l.b16 %v7161
        %v7291 = vunpack.c.l.b16 %v7162
        %v7292 = vunpack.c.l.b16 %v7163
        %v7293 = vunpack.c.l.b16 %v7164
        %v7294 = vunpack.c.l.b16 %v7165
        %v7295 = vunpack.c.l.b16 %v7166
        %v7296 = vunpack.c.l.b16 %v7167
        %v7297 = vunpack.c.l.b16 %v7168
        %v7298 = vpack.c.b16 %v7238, %v7237
        %v7299 = vpack.c.b16 %v7240, %v7239
        %v7300 = vpack.c.b16 %v7242, %v7241
        %v7301 = vpack.c.b16 %v7244, %v7243
        %v7302 = vpack.c.b16 %v7246, %v7245
        %v7303 = vpack.c.b16 %v7248, %v7247
        %v7304 = vpack.c.b16 %v7250, %v7249
        %v7305 = vpack.c.b16 %v7252, %v7251
        %v7306 = vpack.c.b16 %v7254, %v7253
        %v7307 = vpack.c.b16 %v7256, %v7255
        %v7308 = vpack.c.b16 %v7258, %v7257
        %v7309 = vpack.c.b16 %v7260, %v7259
        %v7310 = vpack.c.b16 %v7262, %v7261
        %v7311 = vpack.c.b16 %v7264, %v7263
        %v7312 = vpack.c.b16 %v7266, %v7265
        %v7313 = vpack.c.b16 %v7268, %v7267
        %v7314 = vpack.c.b16 %v7270, %v7269
        %v7315 = vpack.c.b16 %v7272, %v7271
        %v7316 = vpack.c.b16 %v7274, %v7273
        %v7317 = vpack.c.b16 %v7276, %v7275
        %v7318 = vpack.c.b16 %v7278, %v7277
        %v7319 = vpack.c.b16 %v7280, %v7279
        %v7320 = vpack.c.b16 %v7282, %v7281
        %v7321 = vpack.c.b16 %v7284, %v7283
        %v7322 = vpack.c.b16 %v7286, %v7285
        %v7323 = vpack.c.b16 %v7288, %v7287
        %v7324 = vpack.c.b16 %v7290, %v7289
        %v7325 = vpack.c.b16 %v7292, %v7291
        %v7326 = vpack.c.b16 %v7294, %v7293
        %v7327 = vpack.c.b16 %v7296, %v7295
        %v7328 = vpack.c.b16 %v7297, %v7297
        %v7360 = vsel %vm3358, %v7172, 0
        %v7363 = vsel %vm506, %v7328, 0
        %7365 = vmatprep.subr.bf16.mxu0 0
        %7366 = vmatpush1.bf16.msra.mxu0 %v7298
        %7367 = vmatprep.subr.bf16.mxu0 0
        %7368 = vmatpush1.bf16.msra.mxu0 %v7299
        %7369 = vmatprep.subr.bf16.mxu0 0
        %7370 = vmatpush1.bf16.msra.mxu0 %v7300
        %7371 = vmatprep.subr.bf16.mxu0 0
        %7372 = vmatpush1.bf16.msra.mxu0 %v7301
        %7373 = vmatprep.subr.bf16.mxu0 0
        %7374 = vmatpush1.bf16.msra.mxu0 %v7302
        %7375 = vmatprep.subr.bf16.mxu0 0
        %7376 = vmatpush1.bf16.msra.mxu0 %v7303
        %7377 = vmatprep.subr.bf16.mxu0 0
        %7378 = vmatpush1.bf16.msra.mxu0 %v7304
        %7379 = vmatprep.subr.bf16.mxu0 0
        %7380 = vmatpush1.bf16.msra.mxu0 %v7305
        %7381 = vmatprep.subr.bf16.mxu0 0
        %7382 = vmatpush1.bf16.msra.mxu0 %v7306
        %7383 = vmatprep.subr.bf16.mxu0 0
        %7384 = vmatpush1.bf16.msra.mxu0 %v7307
        %7385 = vmatprep.subr.bf16.mxu0 0
        %7386 = vmatpush1.bf16.msra.mxu0 %v7308
        %7387 = vmatprep.subr.bf16.mxu0 0
        %7388 = vmatpush1.bf16.msra.mxu0 %v7309
        %7389 = vmatprep.subr.bf16.mxu0 0
        %7390 = vmatpush1.bf16.msra.mxu0 %v7310
        %7391 = vmatprep.subr.bf16.mxu0 0
        %7392 = vmatpush1.bf16.msra.mxu0 %v7311
        %7393 = vmatprep.subr.bf16.mxu0 0
        %7394 = vmatpush1.bf16.msra.mxu0 %v7312
        %7395 = vmatprep.subr.bf16.mxu0 0
        %7396 = vmatpush1.bf16.msra.mxu0 %v7313
        %7397 = vmatprep.mubr.bf16.mxu0 %v7170
        %7398 = vmatmul.mubr.bf16.gmra.mrb[0].mxu0 %v7169
        %v7399 = vpop.f32.mrb[0].mxu0
        %v7400 = vadd.f32 0.0, %v7399
        %v7401 = vpop.f32.mrb[0].mxu0
        %v7402 = vpop.f32.mrb[0].mxu0
        %v7403 = vpop.f32.mrb[0].mxu0
        %7404 = vdwg.mxu0
        %7405 = vmatprep.subr.bf16.mxu0 0
        %7406 = vmatpush1.bf16.msra.mxu0 %v7314
        %7407 = vmatprep.subr.bf16.mxu0 0
        %7408 = vmatpush1.bf16.msra.mxu0 %v7315
        %7409 = vmatprep.subr.bf16.mxu0 0
        %7410 = vmatpush1.bf16.msra.mxu0 %v7316
        %7411 = vmatprep.subr.bf16.mxu0 0
        %7412 = vmatpush1.bf16.msra.mxu0 %v7317
        %7413 = vmatprep.subr.bf16.mxu0 0
        %7414 = vmatpush1.bf16.msra.mxu0 %v7318
        %7415 = vmatprep.subr.bf16.mxu0 0
        %7416 = vmatpush1.bf16.msra.mxu0 %v7319
        %7417 = vmatprep.subr.bf16.mxu0 0
        %7418 = vmatpush1.bf16.msra.mxu0 %v7320
        %7419 = vmatprep.subr.bf16.mxu0 0
        %7420 = vmatpush1.bf16.msra.mxu0 %v7321
        %7421 = vmatprep.subr.bf16.mxu0 0
        %7422 = vmatpush1.bf16.msra.mxu0 %v7322
        %7423 = vmatprep.subr.bf16.mxu0 0
        %7424 = vmatpush1.bf16.msra.mxu0 %v7323
        %7425 = vmatprep.subr.bf16.mxu0 0
        %7426 = vmatpush1.bf16.msra.mxu0 %v7324
        %7427 = vmatprep.subr.bf16.mxu0 0
        %7428 = vmatpush1.bf16.msra.mxu0 %v7325
        %7429 = vmatprep.subr.bf16.mxu0 0
        %7430 = vmatpush1.bf16.msra.mxu0 %v7326
        %7431 = vmatprep.subr.bf16.mxu0 0
        %7432 = vmatpush1.bf16.msra.mxu0 %v7327
        %7433 = vmatprep.subr.bf16.mxu0 0
        %7434 = vmatpush1.bf16.msra.mxu0 %v7363
        %7435 = vmatprep.subr.bf16.mxu0 0
        %7436 = vmatpush1.bf16.msra.mxu0 0
        %7437 = vmatprep.mubr.bf16.mxu0 %v7360
        %7438 = vmatmul.mubr.bf16.gmra.mrb[0].mxu0 %v7171
        %v7439 = vpop.f32.mrb[0].mxu0
        %v7440 = vadd.f32 %v7400, %v7439
        %v7441 = vpop.f32.mrb[0].mxu0
        %v7442 = vpop.f32.mrb[0].mxu0
        %v7443 = vpop.f32.mrb[0].mxu0
        %7444 = vdwg.mxu0
        %v7445 = vadd.f32 %v7106, %v7440
        %s7446 = scalar_lea.vmem %s10, 3172
        %v7447 = vld [vmem:[%s7446] sm:$0xf]
        %v7448 = vld [vmem:[%s7446 + $0x4] sm:$0xf]
        %v7449 = vld [vmem:[%s7446 + $0x8] sm:$0xf]
        %v7450 = vld [vmem:[%s7446 + $0xc] sm:$0xf]
        %v7451 = vld [vmem:[%s7446 + $0x10] sm:$0xf]
        %v7452 = vld [vmem:[%s7446 + $0x14] sm:$0xf]
        %v7453 = vld [vmem:[%s7446 + $0x18] sm:$0xf]
        %v7454 = vld [vmem:[%s7446 + $0x1c] sm:$0xf]
        %v7455 = vld [vmem:[%s7446 + $0x20] sm:$0xf]
        %v7456 = vld [vmem:[%s7446 + $0x24] sm:$0xf]
        %v7457 = vld [vmem:[%s7446 + $0x28] sm:$0xf]
        %v7458 = vld [vmem:[%s7446 + $0x2c] sm:$0xf]
        %v7459 = vld [vmem:[%s7446 + $0x30] sm:$0xf]
        %v7460 = vld [vmem:[%s7446 + $0x34] sm:$0xf]
        %v7461 = vld [vmem:[%s7446 + $0x38] sm:$0xf]
        %v7462 = vld [vmem:[%s7446 + $0x3c] sm:$0xf]
        %v7463 = vld [vmem:[%s7446 + $0x40] sm:$0xf]
        %v7464 = vld [vmem:[%s7446 + $0x44] sm:$0xf]
        %v7465 = vld [vmem:[%s7446 + $0x48] sm:$0xf]
        %v7466 = vld [vmem:[%s7446 + $0x4c] sm:$0xf]
        %v7467 = vld [vmem:[%s7446 + $0x50] sm:$0xf]
        %v7468 = vld [vmem:[%s7446 + $0x54] sm:$0xf]
        %v7469 = vld [vmem:[%s7446 + $0x58] sm:$0xf]
        %v7470 = vld [vmem:[%s7446 + $0x5c] sm:$0xf]
        %v7471 = vld [vmem:[%s7446 + $0x60] sm:$0xf]
        %v7472 = vld [vmem:[%s7446 + $0x64] sm:$0xf]
        %v7473 = vld [vmem:[%s7446 + $0x68] sm:$0xf]
        %v7474 = vld [vmem:[%s7446 + $0x6c] sm:$0xf]
        %v7475 = vld [vmem:[%s7446 + $0x70] sm:$0xf]
        %v7476 = vld [vmem:[%s7446 + $0x74] sm:$0xf]
        %v7477 = vld [vmem:[%s7446 + $0x78] sm:$0xf]
        %v7478 = vld [vmem:[%s7446 + $0x7c] sm:$0xf]
        %v7479 = vld [vmem:[%s7446 + $0x80] sm:$0xf]
        %v7480 = vld [vmem:[%s7446 + $0x84] sm:$0xf]
        %v7481 = vld [vmem:[%s7446 + $0x88] sm:$0xf]
        %v7482 = vld [vmem:[%s7446 + $0x8c] sm:$0xf]
        %v7483 = vld [vmem:[%s7446 + $0x90] sm:$0xf]
        %v7484 = vld [vmem:[%s7446 + $0x94] sm:$0xf]
        %v7485 = vld [vmem:[%s7446 + $0x98] sm:$0xf]
        %v7486 = vld [vmem:[%s7446 + $0x9c] sm:$0xf]
        %v7487 = vld [vmem:[%s7446 + $0xa0] sm:$0xf]
        %v7488 = vld [vmem:[%s7446 + $0xa4] sm:$0xf]
        %v7489 = vld [vmem:[%s7446 + $0xa8] sm:$0xf]
        %v7490 = vld [vmem:[%s7446 + $0xac] sm:$0xf]
        %v7491 = vld [vmem:[%s7446 + $0xb0] sm:$0xf]
        %v7492 = vld [vmem:[%s7446 + $0xb4] sm:$0xf]
        %v7493 = vld [vmem:[%s7446 + $0xb8] sm:$0xf]
        %v7494 = vld [vmem:[%s7446 + $0xbc] sm:$0xf]
        %v7495 = vld [vmem:[%s7446 + $0xc0] sm:$0xf]
        %v7496 = vld [vmem:[%s7446 + $0xc4] sm:$0xf]
        %v7497 = vld [vmem:[%s7446 + $0xc8] sm:$0xf]
        %v7498 = vld [vmem:[%s7446 + $0xcc] sm:$0xf]
        %v7499 = vld [vmem:[%s7446 + $0xd0] sm:$0xf]
        %v7500 = vld [vmem:[%s7446 + $0xd4] sm:$0xf]
        %v7501 = vld [vmem:[%s7446 + $0xd8] sm:$0xf]
        %v7502 = vld [vmem:[%s7446 + $0xdc] sm:$0xf]
        %v7503 = vld [vmem:[%s7446 + $0xe0] sm:$0xf]
        %v7504 = vld [vmem:[%s7446 + $0xe4] sm:$0xf]
        %v7505 = vld [vmem:[%s7446 + $0xe8] sm:$0xf]
        %v7506 = vld [vmem:[%s7446 + $0xec] sm:$0xf]
        %v7507 = vld [vmem:[%s7446 + $0xf0] sm:$0x3]
        %v7508 = vrot.slane %v3161, 6
        %v7509 = vrot.slane %v3164, 6
        %v7510 = vrot.slane %v3167, 6
        %v7511 = vrot.slane %v3170, 6
        %v7576 = vunpack.c.l.b16 %v7447
        %v7577 = vunpack.c.l.b16 %v7448
        %v7578 = vunpack.c.l.b16 %v7449
        %v7579 = vunpack.c.l.b16 %v7450
        %v7580 = vunpack.c.l.b16 %v7451
        %v7581 = vunpack.c.l.b16 %v7452
        %v7582 = vunpack.c.l.b16 %v7453
        %v7583 = vunpack.c.l.b16 %v7454
        %v7584 = vunpack.c.l.b16 %v7455
        %v7585 = vunpack.c.l.b16 %v7456
        %v7586 = vunpack.c.l.b16 %v7457
        %v7587 = vunpack.c.l.b16 %v7458
        %v7588 = vunpack.c.l.b16 %v7459
        %v7589 = vunpack.c.l.b16 %v7460
        %v7590 = vunpack.c.l.b16 %v7461
        %v7591 = vunpack.c.l.b16 %v7462
        %v7592 = vunpack.c.l.b16 %v7463
        %v7593 = vunpack.c.l.b16 %v7464
        %v7594 = vunpack.c.l.b16 %v7465
        %v7595 = vunpack.c.l.b16 %v7466
        %v7596 = vunpack.c.l.b16 %v7467
        %v7597 = vunpack.c.l.b16 %v7468
        %v7598 = vunpack.c.l.b16 %v7469
        %v7599 = vunpack.c.l.b16 %v7470
        %v7600 = vunpack.c.l.b16 %v7471
        %v7601 = vunpack.c.l.b16 %v7472
        %v7602 = vunpack.c.l.b16 %v7473
        %v7603 = vunpack.c.l.b16 %v7474
        %v7604 = vunpack.c.l.b16 %v7475
        %v7605 = vunpack.c.l.b16 %v7476
        %v7606 = vunpack.c.l.b16 %v7477
        %v7607 = vunpack.c.l.b16 %v7478
        %v7608 = vunpack.c.l.b16 %v7479
        %v7609 = vunpack.c.l.b16 %v7480
        %v7610 = vunpack.c.l.b16 %v7481
        %v7611 = vunpack.c.l.b16 %v7482
        %v7612 = vunpack.c.l.b16 %v7483
        %v7613 = vunpack.c.l.b16 %v7484
        %v7614 = vunpack.c.l.b16 %v7485
        %v7615 = vunpack.c.l.b16 %v7486
        %v7616 = vunpack.c.l.b16 %v7487
        %v7617 = vunpack.c.l.b16 %v7488
        %v7618 = vunpack.c.l.b16 %v7489
        %v7619 = vunpack.c.l.b16 %v7490
        %v7620 = vunpack.c.l.b16 %v7491
        %v7621 = vunpack.c.l.b16 %v7492
        %v7622 = vunpack.c.l.b16 %v7493
        %v7623 = vunpack.c.l.b16 %v7494
        %v7624 = vunpack.c.l.b16 %v7495
        %v7625 = vunpack.c.l.b16 %v7496
        %v7626 = vunpack.c.l.b16 %v7497
        %v7627 = vunpack.c.l.b16 %v7498
        %v7628 = vunpack.c.l.b16 %v7499
        %v7629 = vunpack.c.l.b16 %v7500
        %v7630 = vunpack.c.l.b16 %v7501
        %v7631 = vunpack.c.l.b16 %v7502
        %v7632 = vunpack.c.l.b16 %v7503
        %v7633 = vunpack.c.l.b16 %v7504
        %v7634 = vunpack.c.l.b16 %v7505
        %v7635 = vunpack.c.l.b16 %v7506
        %v7636 = vunpack.c.l.b16 %v7507
        %v7637 = vpack.c.b16 %v7577, %v7576
        %v7638 = vpack.c.b16 %v7579, %v7578
        %v7639 = vpack.c.b16 %v7581, %v7580
        %v7640 = vpack.c.b16 %v7583, %v7582
        %v7641 = vpack.c.b16 %v7585, %v7584
        %v7642 = vpack.c.b16 %v7587, %v7586
        %v7643 = vpack.c.b16 %v7589, %v7588
        %v7644 = vpack.c.b16 %v7591, %v7590
        %v7645 = vpack.c.b16 %v7593, %v7592
        %v7646 = vpack.c.b16 %v7595, %v7594
        %v7647 = vpack.c.b16 %v7597, %v7596
        %v7648 = vpack.c.b16 %v7599, %v7598
        %v7649 = vpack.c.b16 %v7601, %v7600
        %v7650 = vpack.c.b16 %v7603, %v7602
        %v7651 = vpack.c.b16 %v7605, %v7604
        %v7652 = vpack.c.b16 %v7607, %v7606
        %v7653 = vpack.c.b16 %v7609, %v7608
        %v7654 = vpack.c.b16 %v7611, %v7610
        %v7655 = vpack.c.b16 %v7613, %v7612
        %v7656 = vpack.c.b16 %v7615, %v7614
        %v7657 = vpack.c.b16 %v7617, %v7616
        %v7658 = vpack.c.b16 %v7619, %v7618
        %v7659 = vpack.c.b16 %v7621, %v7620
        %v7660 = vpack.c.b16 %v7623, %v7622
        %v7661 = vpack.c.b16 %v7625, %v7624
        %v7662 = vpack.c.b16 %v7627, %v7626
        %v7663 = vpack.c.b16 %v7629, %v7628
        %v7664 = vpack.c.b16 %v7631, %v7630
        %v7665 = vpack.c.b16 %v7633, %v7632
        %v7666 = vpack.c.b16 %v7635, %v7634
        %v7667 = vpack.c.b16 %v7636, %v7636
        %v7699 = vsel %vm3358, %v7511, 0
        %v7702 = vsel %vm506, %v7667, 0
        %7704 = vmatprep.subr.bf16.mxu0 0
        %7705 = vmatpush1.bf16.msra.mxu0 %v7637
        %7706 = vmatprep.subr.bf16.mxu0 0
        %7707 = vmatpush1.bf16.msra.mxu0 %v7638
        %7708 = vmatprep.subr.bf16.mxu0 0
        %7709 = vmatpush1.bf16.msra.mxu0 %v7639
        %7710 = vmatprep.subr.bf16.mxu0 0
        %7711 = vmatpush1.bf16.msra.mxu0 %v7640
        %7712 = vmatprep.subr.bf16.mxu0 0
        %7713 = vmatpush1.bf16.msra.mxu0 %v7641
        %7714 = vmatprep.subr.bf16.mxu0 0
        %7715 = vmatpush1.bf16.msra.mxu0 %v7642
        %7716 = vmatprep.subr.bf16.mxu0 0
        %7717 = vmatpush1.bf16.msra.mxu0 %v7643
        %7718 = vmatprep.subr.bf16.mxu0 0
        %7719 = vmatpush1.bf16.msra.mxu0 %v7644
        %7720 = vmatprep.subr.bf16.mxu0 0
        %7721 = vmatpush1.bf16.msra.mxu0 %v7645
        %7722 = vmatprep.subr.bf16.mxu0 0
        %7723 = vmatpush1.bf16.msra.mxu0 %v7646
        %7724 = vmatprep.subr.bf16.mxu0 0
        %7725 = vmatpush1.bf16.msra.mxu0 %v7647
        %7726 = vmatprep.subr.bf16.mxu0 0
        %7727 = vmatpush1.bf16.msra.mxu0 %v7648
        %7728 = vmatprep.subr.bf16.mxu0 0
        %7729 = vmatpush1.bf16.msra.mxu0 %v7649
        %7730 = vmatprep.subr.bf16.mxu0 0
        %7731 = vmatpush1.bf16.msra.mxu0 %v7650
        %7732 = vmatprep.subr.bf16.mxu0 0
        %7733 = vmatpush1.bf16.msra.mxu0 %v7651
        %7734 = vmatprep.subr.bf16.mxu0 0
        %7735 = vmatpush1.bf16.msra.mxu0 %v7652
        %7736 = vmatprep.mubr.bf16.mxu0 %v7509
        %7737 = vmatmul.mubr.bf16.gmra.mrb[0].mxu0 %v7508
        %v7738 = vpop.f32.mrb[0].mxu0
        %v7739 = vadd.f32 0.0, %v7738
        %v7740 = vpop.f32.mrb[0].mxu0
        %v7741 = vpop.f32.mrb[0].mxu0
        %v7742 = vpop.f32.mrb[0].mxu0
        %7743 = vdwg.mxu0
        %7744 = vmatprep.subr.bf16.mxu0 0
        %7745 = vmatpush1.bf16.msra.mxu0 %v7653
        %7746 = vmatprep.subr.bf16.mxu0 0
        %7747 = vmatpush1.bf16.msra.mxu0 %v7654
        %7748 = vmatprep.subr.bf16.mxu0 0
        %7749 = vmatpush1.bf16.msra.mxu0 %v7655
        %7750 = vmatprep.subr.bf16.mxu0 0
        %7751 = vmatpush1.bf16.msra.mxu0 %v7656
        %7752 = vmatprep.subr.bf16.mxu0 0
        %7753 = vmatpush1.bf16.msra.mxu0 %v7657
        %7754 = vmatprep.subr.bf16.mxu0 0
        %7755 = vmatpush1.bf16.msra.mxu0 %v7658
        %7756 = vmatprep.subr.bf16.mxu0 0
        %7757 = vmatpush1.bf16.msra.mxu0 %v7659
        %7758 = vmatprep.subr.bf16.mxu0 0
        %7759 = vmatpush1.bf16.msra.mxu0 %v7660
        %7760 = vmatprep.subr.bf16.mxu0 0
        %7761 = vmatpush1.bf16.msra.mxu0 %v7661
        %7762 = vmatprep.subr.bf16.mxu0 0
        %7763 = vmatpush1.bf16.msra.mxu0 %v7662
        %7764 = vmatprep.subr.bf16.mxu0 0
        %7765 = vmatpush1.bf16.msra.mxu0 %v7663
        %7766 = vmatprep.subr.bf16.mxu0 0
        %7767 = vmatpush1.bf16.msra.mxu0 %v7664
        %7768 = vmatprep.subr.bf16.mxu0 0
        %7769 = vmatpush1.bf16.msra.mxu0 %v7665
        %7770 = vmatprep.subr.bf16.mxu0 0
        %7771 = vmatpush1.bf16.msra.mxu0 %v7666
        %7772 = vmatprep.subr.bf16.mxu0 0
        %7773 = vmatpush1.bf16.msra.mxu0 %v7702
        %7774 = vmatprep.subr.bf16.mxu0 0
        %7775 = vmatpush1.bf16.msra.mxu0 0
        %7776 = vmatprep.mubr.bf16.mxu0 %v7699
        %7777 = vmatmul.mubr.bf16.gmra.mrb[0].mxu0 %v7510
        %v7778 = vpop.f32.mrb[0].mxu0
        %v7779 = vadd.f32 %v7739, %v7778
        %v7780 = vpop.f32.mrb[0].mxu0
        %v7781 = vpop.f32.mrb[0].mxu0
        %v7782 = vpop.f32.mrb[0].mxu0
        %7783 = vdwg.mxu0
        %v7784 = vadd.f32 %v7445, %v7779
        %s7785 = scalar_lea.vmem %s10, 3416
        %v7786 = vld [vmem:[%s7785] sm:$0xf]
        %v7787 = vld [vmem:[%s7785 + $0x4] sm:$0xf]
        %v7788 = vld [vmem:[%s7785 + $0x8] sm:$0xf]
        %v7789 = vld [vmem:[%s7785 + $0xc] sm:$0xf]
        %v7790 = vld [vmem:[%s7785 + $0x10] sm:$0xf]
        %v7791 = vld [vmem:[%s7785 + $0x14] sm:$0xf]
        %v7792 = vld [vmem:[%s7785 + $0x18] sm:$0xf]
        %v7793 = vld [vmem:[%s7785 + $0x1c] sm:$0xf]
        %v7794 = vld [vmem:[%s7785 + $0x20] sm:$0xf]
        %v7795 = vld [vmem:[%s7785 + $0x24] sm:$0xf]
        %v7796 = vld [vmem:[%s7785 + $0x28] sm:$0xf]
        %v7797 = vld [vmem:[%s7785 + $0x2c] sm:$0xf]
        %v7798 = vld [vmem:[%s7785 + $0x30] sm:$0xf]
        %v7799 = vld [vmem:[%s7785 + $0x34] sm:$0xf]
        %v7800 = vld [vmem:[%s7785 + $0x38] sm:$0xf]
        %v7801 = vld [vmem:[%s7785 + $0x3c] sm:$0xf]
        %v7802 = vld [vmem:[%s7785 + $0x40] sm:$0xf]
        %v7803 = vld [vmem:[%s7785 + $0x44] sm:$0xf]
        %v7804 = vld [vmem:[%s7785 + $0x48] sm:$0xf]
        %v7805 = vld [vmem:[%s7785 + $0x4c] sm:$0xf]
        %v7806 = vld [vmem:[%s7785 + $0x50] sm:$0xf]
        %v7807 = vld [vmem:[%s7785 + $0x54] sm:$0xf]
        %v7808 = vld [vmem:[%s7785 + $0x58] sm:$0xf]
        %v7809 = vld [vmem:[%s7785 + $0x5c] sm:$0xf]
        %v7810 = vld [vmem:[%s7785 + $0x60] sm:$0xf]
        %v7811 = vld [vmem:[%s7785 + $0x64] sm:$0xf]
        %v7812 = vld [vmem:[%s7785 + $0x68] sm:$0xf]
        %v7813 = vld [vmem:[%s7785 + $0x6c] sm:$0xf]
        %v7814 = vld [vmem:[%s7785 + $0x70] sm:$0xf]
        %v7815 = vld [vmem:[%s7785 + $0x74] sm:$0xf]
        %v7816 = vld [vmem:[%s7785 + $0x78] sm:$0xf]
        %v7817 = vld [vmem:[%s7785 + $0x7c] sm:$0xf]
        %v7818 = vld [vmem:[%s7785 + $0x80] sm:$0xf]
        %v7819 = vld [vmem:[%s7785 + $0x84] sm:$0xf]
        %v7820 = vld [vmem:[%s7785 + $0x88] sm:$0xf]
        %v7821 = vld [vmem:[%s7785 + $0x8c] sm:$0xf]
        %v7822 = vld [vmem:[%s7785 + $0x90] sm:$0xf]
        %v7823 = vld [vmem:[%s7785 + $0x94] sm:$0xf]
        %v7824 = vld [vmem:[%s7785 + $0x98] sm:$0xf]
        %v7825 = vld [vmem:[%s7785 + $0x9c] sm:$0xf]
        %v7826 = vld [vmem:[%s7785 + $0xa0] sm:$0xf]
        %v7827 = vld [vmem:[%s7785 + $0xa4] sm:$0xf]
        %v7828 = vld [vmem:[%s7785 + $0xa8] sm:$0xf]
        %v7829 = vld [vmem:[%s7785 + $0xac] sm:$0xf]
        %v7830 = vld [vmem:[%s7785 + $0xb0] sm:$0xf]
        %v7831 = vld [vmem:[%s7785 + $0xb4] sm:$0xf]
        %v7832 = vld [vmem:[%s7785 + $0xb8] sm:$0xf]
        %v7833 = vld [vmem:[%s7785 + $0xbc] sm:$0xf]
        %v7834 = vld [vmem:[%s7785 + $0xc0] sm:$0xf]
        %v7835 = vld [vmem:[%s7785 + $0xc4] sm:$0xf]
        %v7836 = vld [vmem:[%s7785 + $0xc8] sm:$0xf]
        %v7837 = vld [vmem:[%s7785 + $0xcc] sm:$0xf]
        %v7838 = vld [vmem:[%s7785 + $0xd0] sm:$0xf]
        %v7839 = vld [vmem:[%s7785 + $0xd4] sm:$0xf]
        %v7840 = vld [vmem:[%s7785 + $0xd8] sm:$0xf]
        %v7841 = vld [vmem:[%s7785 + $0xdc] sm:$0xf]
        %v7842 = vld [vmem:[%s7785 + $0xe0] sm:$0xf]
        %v7843 = vld [vmem:[%s7785 + $0xe4] sm:$0xf]
        %v7844 = vld [vmem:[%s7785 + $0xe8] sm:$0xf]
        %v7845 = vld [vmem:[%s7785 + $0xec] sm:$0xf]
        %v7846 = vld [vmem:[%s7785 + $0xf0] sm:$0x3]
        %v7847 = vrot.slane %v3033, 7
        %v7848 = vrot.slane %v3034, 7
        %v7849 = vrot.slane %v3035, 7
        %v7850 = vrot.slane %v3036, 7
        %v7915 = vunpack.c.l.b16 %v7786
        %v7916 = vunpack.c.l.b16 %v7787
        %v7917 = vunpack.c.l.b16 %v7788
        %v7918 = vunpack.c.l.b16 %v7789
        %v7919 = vunpack.c.l.b16 %v7790
        %v7920 = vunpack.c.l.b16 %v7791
        %v7921 = vunpack.c.l.b16 %v7792
        %v7922 = vunpack.c.l.b16 %v7793
        %v7923 = vunpack.c.l.b16 %v7794
        %v7924 = vunpack.c.l.b16 %v7795
        %v7925 = vunpack.c.l.b16 %v7796
        %v7926 = vunpack.c.l.b16 %v7797
        %v7927 = vunpack.c.l.b16 %v7798
        %v7928 = vunpack.c.l.b16 %v7799
        %v7929 = vunpack.c.l.b16 %v7800
        %v7930 = vunpack.c.l.b16 %v7801
        %v7931 = vunpack.c.l.b16 %v7802
        %v7932 = vunpack.c.l.b16 %v7803
        %v7933 = vunpack.c.l.b16 %v7804
        %v7934 = vunpack.c.l.b16 %v7805
        %v7935 = vunpack.c.l.b16 %v7806
        %v7936 = vunpack.c.l.b16 %v7807
        %v7937 = vunpack.c.l.b16 %v7808
        %v7938 = vunpack.c.l.b16 %v7809
        %v7939 = vunpack.c.l.b16 %v7810
        %v7940 = vunpack.c.l.b16 %v7811
        %v7941 = vunpack.c.l.b16 %v7812
        %v7942 = vunpack.c.l.b16 %v7813
        %v7943 = vunpack.c.l.b16 %v7814
        %v7944 = vunpack.c.l.b16 %v7815
        %v7945 = vunpack.c.l.b16 %v7816
        %v7946 = vunpack.c.l.b16 %v7817
        %v7947 = vunpack.c.l.b16 %v7818
        %v7948 = vunpack.c.l.b16 %v7819
        %v7949 = vunpack.c.l.b16 %v7820
        %v7950 = vunpack.c.l.b16 %v7821
        %v7951 = vunpack.c.l.b16 %v7822
        %v7952 = vunpack.c.l.b16 %v7823
        %v7953 = vunpack.c.l.b16 %v7824
        %v7954 = vunpack.c.l.b16 %v7825
        %v7955 = vunpack.c.l.b16 %v7826
        %v7956 = vunpack.c.l.b16 %v7827
        %v7957 = vunpack.c.l.b16 %v7828
        %v7958 = vunpack.c.l.b16 %v7829
        %v7959 = vunpack.c.l.b16 %v7830
        %v7960 = vunpack.c.l.b16 %v7831
        %v7961 = vunpack.c.l.b16 %v7832
        %v7962 = vunpack.c.l.b16 %v7833
        %v7963 = vunpack.c.l.b16 %v7834
        %v7964 = vunpack.c.l.b16 %v7835
        %v7965 = vunpack.c.l.b16 %v7836
        %v7966 = vunpack.c.l.b16 %v7837
        %v7967 = vunpack.c.l.b16 %v7838
        %v7968 = vunpack.c.l.b16 %v7839
        %v7969 = vunpack.c.l.b16 %v7840
        %v7970 = vunpack.c.l.b16 %v7841
        %v7971 = vunpack.c.l.b16 %v7842
        %v7972 = vunpack.c.l.b16 %v7843
        %v7973 = vunpack.c.l.b16 %v7844
        %v7974 = vunpack.c.l.b16 %v7845
        %v7975 = vunpack.c.l.b16 %v7846
        %v7976 = vpack.c.b16 %v7916, %v7915
        %v7977 = vpack.c.b16 %v7918, %v7917
        %v7978 = vpack.c.b16 %v7920, %v7919
        %v7979 = vpack.c.b16 %v7922, %v7921
        %v7980 = vpack.c.b16 %v7924, %v7923
        %v7981 = vpack.c.b16 %v7926, %v7925
        %v7982 = vpack.c.b16 %v7928, %v7927
        %v7983 = vpack.c.b16 %v7930, %v7929
        %v7984 = vpack.c.b16 %v7932, %v7931
        %v7985 = vpack.c.b16 %v7934, %v7933
        %v7986 = vpack.c.b16 %v7936, %v7935
        %v7987 = vpack.c.b16 %v7938, %v7937
        %v7988 = vpack.c.b16 %v7940, %v7939
        %v7989 = vpack.c.b16 %v7942, %v7941
        %v7990 = vpack.c.b16 %v7944, %v7943
        %v7991 = vpack.c.b16 %v7946, %v7945
        %v7992 = vpack.c.b16 %v7948, %v7947
        %v7993 = vpack.c.b16 %v7950, %v7949
        %v7994 = vpack.c.b16 %v7952, %v7951
        %v7995 = vpack.c.b16 %v7954, %v7953
        %v7996 = vpack.c.b16 %v7956, %v7955
        %v7997 = vpack.c.b16 %v7958, %v7957
        %v7998 = vpack.c.b16 %v7960, %v7959
        %v7999 = vpack.c.b16 %v7962, %v7961
        %v8000 = vpack.c.b16 %v7964, %v7963
        %v8001 = vpack.c.b16 %v7966, %v7965
        %v8002 = vpack.c.b16 %v7968, %v7967
        %v8003 = vpack.c.b16 %v7970, %v7969
        %v8004 = vpack.c.b16 %v7972, %v7971
        %v8005 = vpack.c.b16 %v7974, %v7973
        %v8006 = vpack.c.b16 %v7975, %v7975
        %v8038 = vsel %vm3358, %v7850, 0
        %v8041 = vsel %vm506, %v8006, 0
        %8043 = vmatprep.subr.bf16.mxu0 0
        %8044 = vmatpush1.bf16.msra.mxu0 %v7976
        %8045 = vmatprep.subr.bf16.mxu0 0
        %8046 = vmatpush1.bf16.msra.mxu0 %v7977
        %8047 = vmatprep.subr.bf16.mxu0 0
        %8048 = vmatpush1.bf16.msra.mxu0 %v7978
        %8049 = vmatprep.subr.bf16.mxu0 0
        %8050 = vmatpush1.bf16.msra.mxu0 %v7979
        %8051 = vmatprep.subr.bf16.mxu0 0
        %8052 = vmatpush1.bf16.msra.mxu0 %v7980
        %8053 = vmatprep.subr.bf16.mxu0 0
        %8054 = vmatpush1.bf16.msra.mxu0 %v7981
        %8055 = vmatprep.subr.bf16.mxu0 0
        %8056 = vmatpush1.bf16.msra.mxu0 %v7982
        %8057 = vmatprep.subr.bf16.mxu0 0
        %8058 = vmatpush1.bf16.msra.mxu0 %v7983
        %8059 = vmatprep.subr.bf16.mxu0 0
        %8060 = vmatpush1.bf16.msra.mxu0 %v7984
        %8061 = vmatprep.subr.bf16.mxu0 0
        %8062 = vmatpush1.bf16.msra.mxu0 %v7985
        %8063 = vmatprep.subr.bf16.mxu0 0
        %8064 = vmatpush1.bf16.msra.mxu0 %v7986
        %8065 = vmatprep.subr.bf16.mxu0 0
        %8066 = vmatpush1.bf16.msra.mxu0 %v7987
        %8067 = vmatprep.subr.bf16.mxu0 0
        %8068 = vmatpush1.bf16.msra.mxu0 %v7988
        %8069 = vmatprep.subr.bf16.mxu0 0
        %8070 = vmatpush1.bf16.msra.mxu0 %v7989
        %8071 = vmatprep.subr.bf16.mxu0 0
        %8072 = vmatpush1.bf16.msra.mxu0 %v7990
        %8073 = vmatprep.subr.bf16.mxu0 0
        %8074 = vmatpush1.bf16.msra.mxu0 %v7991
        %8075 = vmatprep.mubr.bf16.mxu0 %v7848
        %8076 = vmatmul.mubr.bf16.gmra.mrb[0].mxu0 %v7847
        %v8077 = vpop.f32.mrb[0].mxu0
        %v8078 = vadd.f32 0.0, %v8077
        %v8079 = vpop.f32.mrb[0].mxu0
        %v8080 = vpop.f32.mrb[0].mxu0
        %v8081 = vpop.f32.mrb[0].mxu0
        %8082 = vdwg.mxu0
        %8083 = vmatprep.subr.bf16.mxu0 0
        %8084 = vmatpush1.bf16.msra.mxu0 %v7992
        %8085 = vmatprep.subr.bf16.mxu0 0
        %8086 = vmatpush1.bf16.msra.mxu0 %v7993
        %8087 = vmatprep.subr.bf16.mxu0 0
        %8088 = vmatpush1.bf16.msra.mxu0 %v7994
        %8089 = vmatprep.subr.bf16.mxu0 0
        %8090 = vmatpush1.bf16.msra.mxu0 %v7995
        %8091 = vmatprep.subr.bf16.mxu0 0
        %8092 = vmatpush1.bf16.msra.mxu0 %v7996
        %8093 = vmatprep.subr.bf16.mxu0 0
        %8094 = vmatpush1.bf16.msra.mxu0 %v7997
        %8095 = vmatprep.subr.bf16.mxu0 0
        %8096 = vmatpush1.bf16.msra.mxu0 %v7998
        %8097 = vmatprep.subr.bf16.mxu0 0
        %8098 = vmatpush1.bf16.msra.mxu0 %v7999
        %8099 = vmatprep.subr.bf16.mxu0 0
        %8100 = vmatpush1.bf16.msra.mxu0 %v8000
        %8101 = vmatprep.subr.bf16.mxu0 0
        %8102 = vmatpush1.bf16.msra.mxu0 %v8001
        %8103 = vmatprep.subr.bf16.mxu0 0
        %8104 = vmatpush1.bf16.msra.mxu0 %v8002
        %8105 = vmatprep.subr.bf16.mxu0 0
        %8106 = vmatpush1.bf16.msra.mxu0 %v8003
        %8107 = vmatprep.subr.bf16.mxu0 0
        %8108 = vmatpush1.bf16.msra.mxu0 %v8004
        %8109 = vmatprep.subr.bf16.mxu0 0
        %8110 = vmatpush1.bf16.msra.mxu0 %v8005
        %8111 = vmatprep.subr.bf16.mxu0 0
        %8112 = vmatpush1.bf16.msra.mxu0 %v8041
        %8113 = vmatprep.subr.bf16.mxu0 0
        %8114 = vmatpush1.bf16.msra.mxu0 0
        %8115 = vmatprep.mubr.bf16.mxu0 %v8038
        %8116 = vmatmul.mubr.bf16.gmra.mrb[0].mxu0 %v7849
        %v8117 = vpop.f32.mrb[0].mxu0
        %v8118 = vadd.f32 %v8078, %v8117
        %v8119 = vpop.f32.mrb[0].mxu0
        %v8120 = vpop.f32.mrb[0].mxu0
        %v8121 = vpop.f32.mrb[0].mxu0
        %8122 = vdwg.mxu0
        %v8123 = vadd.f32 %v7784, %v8118
        %s8124 = scalar_lea.vmem %s10, 3660
        %v8125 = vld [vmem:[%s8124] sm:$0xf]
        %v8126 = vld [vmem:[%s8124 + $0x4] sm:$0xf]
        %v8127 = vld [vmem:[%s8124 + $0x8] sm:$0xf]
        %v8128 = vld [vmem:[%s8124 + $0xc] sm:$0xf]
        %v8129 = vld [vmem:[%s8124 + $0x10] sm:$0xf]
        %v8130 = vld [vmem:[%s8124 + $0x14] sm:$0xf]
        %v8131 = vld [vmem:[%s8124 + $0x18] sm:$0xf]
        %v8132 = vld [vmem:[%s8124 + $0x1c] sm:$0xf]
        %v8133 = vld [vmem:[%s8124 + $0x20] sm:$0xf]
        %v8134 = vld [vmem:[%s8124 + $0x24] sm:$0xf]
        %v8135 = vld [vmem:[%s8124 + $0x28] sm:$0xf]
        %v8136 = vld [vmem:[%s8124 + $0x2c] sm:$0xf]
        %v8137 = vld [vmem:[%s8124 + $0x30] sm:$0xf]
        %v8138 = vld [vmem:[%s8124 + $0x34] sm:$0xf]
        %v8139 = vld [vmem:[%s8124 + $0x38] sm:$0xf]
        %v8140 = vld [vmem:[%s8124 + $0x3c] sm:$0xf]
        %v8141 = vld [vmem:[%s8124 + $0x40] sm:$0xf]
        %v8142 = vld [vmem:[%s8124 + $0x44] sm:$0xf]
        %v8143 = vld [vmem:[%s8124 + $0x48] sm:$0xf]
        %v8144 = vld [vmem:[%s8124 + $0x4c] sm:$0xf]
        %v8145 = vld [vmem:[%s8124 + $0x50] sm:$0xf]
        %v8146 = vld [vmem:[%s8124 + $0x54] sm:$0xf]
        %v8147 = vld [vmem:[%s8124 + $0x58] sm:$0xf]
        %v8148 = vld [vmem:[%s8124 + $0x5c] sm:$0xf]
        %v8149 = vld [vmem:[%s8124 + $0x60] sm:$0xf]
        %v8150 = vld [vmem:[%s8124 + $0x64] sm:$0xf]
        %v8151 = vld [vmem:[%s8124 + $0x68] sm:$0xf]
        %v8152 = vld [vmem:[%s8124 + $0x6c] sm:$0xf]
        %v8153 = vld [vmem:[%s8124 + $0x70] sm:$0xf]
        %v8154 = vld [vmem:[%s8124 + $0x74] sm:$0xf]
        %v8155 = vld [vmem:[%s8124 + $0x78] sm:$0xf]
        %v8156 = vld [vmem:[%s8124 + $0x7c] sm:$0xf]
        %v8157 = vld [vmem:[%s8124 + $0x80] sm:$0xf]
        %v8158 = vld [vmem:[%s8124 + $0x84] sm:$0xf]
        %v8159 = vld [vmem:[%s8124 + $0x88] sm:$0xf]
        %v8160 = vld [vmem:[%s8124 + $0x8c] sm:$0xf]
        %v8161 = vld [vmem:[%s8124 + $0x90] sm:$0xf]
        %v8162 = vld [vmem:[%s8124 + $0x94] sm:$0xf]
        %v8163 = vld [vmem:[%s8124 + $0x98] sm:$0xf]
        %v8164 = vld [vmem:[%s8124 + $0x9c] sm:$0xf]
        %v8165 = vld [vmem:[%s8124 + $0xa0] sm:$0xf]
        %v8166 = vld [vmem:[%s8124 + $0xa4] sm:$0xf]
        %v8167 = vld [vmem:[%s8124 + $0xa8] sm:$0xf]
        %v8168 = vld [vmem:[%s8124 + $0xac] sm:$0xf]
        %v8169 = vld [vmem:[%s8124 + $0xb0] sm:$0xf]
        %v8170 = vld [vmem:[%s8124 + $0xb4] sm:$0xf]
        %v8171 = vld [vmem:[%s8124 + $0xb8] sm:$0xf]
        %v8172 = vld [vmem:[%s8124 + $0xbc] sm:$0xf]
        %v8173 = vld [vmem:[%s8124 + $0xc0] sm:$0xf]
        %v8174 = vld [vmem:[%s8124 + $0xc4] sm:$0xf]
        %v8175 = vld [vmem:[%s8124 + $0xc8] sm:$0xf]
        %v8176 = vld [vmem:[%s8124 + $0xcc] sm:$0xf]
        %v8177 = vld [vmem:[%s8124 + $0xd0] sm:$0xf]
        %v8178 = vld [vmem:[%s8124 + $0xd4] sm:$0xf]
        %v8179 = vld [vmem:[%s8124 + $0xd8] sm:$0xf]
        %v8180 = vld [vmem:[%s8124 + $0xdc] sm:$0xf]
        %v8181 = vld [vmem:[%s8124 + $0xe0] sm:$0xf]
        %v8182 = vld [vmem:[%s8124 + $0xe4] sm:$0xf]
        %v8183 = vld [vmem:[%s8124 + $0xe8] sm:$0xf]
        %v8184 = vld [vmem:[%s8124 + $0xec] sm:$0xf]
        %v8185 = vld [vmem:[%s8124 + $0xf0] sm:$0x3]
        %v8186 = vrot.slane %v3161, 7
        %v8187 = vrot.slane %v3164, 7
        %v8188 = vrot.slane %v3167, 7
        %v8189 = vrot.slane %v3170, 7
        %v8254 = vunpack.c.l.b16 %v8125
        %v8255 = vunpack.c.l.b16 %v8126
        %v8256 = vunpack.c.l.b16 %v8127
        %v8257 = vunpack.c.l.b16 %v8128
        %v8258 = vunpack.c.l.b16 %v8129
        %v8259 = vunpack.c.l.b16 %v8130
        %v8260 = vunpack.c.l.b16 %v8131
        %v8261 = vunpack.c.l.b16 %v8132
        %v8262 = vunpack.c.l.b16 %v8133
        %v8263 = vunpack.c.l.b16 %v8134
        %v8264 = vunpack.c.l.b16 %v8135
        %v8265 = vunpack.c.l.b16 %v8136
        %v8266 = vunpack.c.l.b16 %v8137
        %v8267 = vunpack.c.l.b16 %v8138
        %v8268 = vunpack.c.l.b16 %v8139
        %v8269 = vunpack.c.l.b16 %v8140
        %v8270 = vunpack.c.l.b16 %v8141
        %v8271 = vunpack.c.l.b16 %v8142
        %v8272 = vunpack.c.l.b16 %v8143
        %v8273 = vunpack.c.l.b16 %v8144
        %v8274 = vunpack.c.l.b16 %v8145
        %v8275 = vunpack.c.l.b16 %v8146
        %v8276 = vunpack.c.l.b16 %v8147
        %v8277 = vunpack.c.l.b16 %v8148
        %v8278 = vunpack.c.l.b16 %v8149
        %v8279 = vunpack.c.l.b16 %v8150
        %v8280 = vunpack.c.l.b16 %v8151
        %v8281 = vunpack.c.l.b16 %v8152
        %v8282 = vunpack.c.l.b16 %v8153
        %v8283 = vunpack.c.l.b16 %v8154
        %v8284 = vunpack.c.l.b16 %v8155
        %v8285 = vunpack.c.l.b16 %v8156
        %v8286 = vunpack.c.l.b16 %v8157
        %v8287 = vunpack.c.l.b16 %v8158
        %v8288 = vunpack.c.l.b16 %v8159
        %v8289 = vunpack.c.l.b16 %v8160
        %v8290 = vunpack.c.l.b16 %v8161
        %v8291 = vunpack.c.l.b16 %v8162
        %v8292 = vunpack.c.l.b16 %v8163
        %v8293 = vunpack.c.l.b16 %v8164
        %v8294 = vunpack.c.l.b16 %v8165
        %v8295 = vunpack.c.l.b16 %v8166
        %v8296 = vunpack.c.l.b16 %v8167
        %v8297 = vunpack.c.l.b16 %v8168
        %v8298 = vunpack.c.l.b16 %v8169
        %v8299 = vunpack.c.l.b16 %v8170
        %v8300 = vunpack.c.l.b16 %v8171
        %v8301 = vunpack.c.l.b16 %v8172
        %v8302 = vunpack.c.l.b16 %v8173
        %v8303 = vunpack.c.l.b16 %v8174
        %v8304 = vunpack.c.l.b16 %v8175
        %v8305 = vunpack.c.l.b16 %v8176
        %v8306 = vunpack.c.l.b16 %v8177
        %v8307 = vunpack.c.l.b16 %v8178
        %v8308 = vunpack.c.l.b16 %v8179
        %v8309 = vunpack.c.l.b16 %v8180
        %v8310 = vunpack.c.l.b16 %v8181
        %v8311 = vunpack.c.l.b16 %v8182
        %v8312 = vunpack.c.l.b16 %v8183
        %v8313 = vunpack.c.l.b16 %v8184
        %v8314 = vunpack.c.l.b16 %v8185
        %v8315 = vpack.c.b16 %v8255, %v8254
        %v8316 = vpack.c.b16 %v8257, %v8256
        %v8317 = vpack.c.b16 %v8259, %v8258
        %v8318 = vpack.c.b16 %v8261, %v8260
        %v8319 = vpack.c.b16 %v8263, %v8262
        %v8320 = vpack.c.b16 %v8265, %v8264
        %v8321 = vpack.c.b16 %v8267, %v8266
        %v8322 = vpack.c.b16 %v8269, %v8268
        %v8323 = vpack.c.b16 %v8271, %v8270
        %v8324 = vpack.c.b16 %v8273, %v8272
        %v8325 = vpack.c.b16 %v8275, %v8274
        %v8326 = vpack.c.b16 %v8277, %v8276
        %v8327 = vpack.c.b16 %v8279, %v8278
        %v8328 = vpack.c.b16 %v8281, %v8280
        %v8329 = vpack.c.b16 %v8283, %v8282
        %v8330 = vpack.c.b16 %v8285, %v8284
        %v8331 = vpack.c.b16 %v8287, %v8286
        %v8332 = vpack.c.b16 %v8289, %v8288
        %v8333 = vpack.c.b16 %v8291, %v8290
        %v8334 = vpack.c.b16 %v8293, %v8292
        %v8335 = vpack.c.b16 %v8295, %v8294
        %v8336 = vpack.c.b16 %v8297, %v8296
        %v8337 = vpack.c.b16 %v8299, %v8298
        %v8338 = vpack.c.b16 %v8301, %v8300
        %v8339 = vpack.c.b16 %v8303, %v8302
        %v8340 = vpack.c.b16 %v8305, %v8304
        %v8341 = vpack.c.b16 %v8307, %v8306
        %v8342 = vpack.c.b16 %v8309, %v8308
        %v8343 = vpack.c.b16 %v8311, %v8310
        %v8344 = vpack.c.b16 %v8313, %v8312
        %v8345 = vpack.c.b16 %v8314, %v8314
        %v8377 = vsel %vm3358, %v8189, 0
        %v8380 = vsel %vm506, %v8345, 0
        %8382 = vmatprep.subr.bf16.mxu0 0
        %8383 = vmatpush1.bf16.msra.mxu0 %v8315
        %8384 = vmatprep.subr.bf16.mxu0 0
        %8385 = vmatpush1.bf16.msra.mxu0 %v8316
        %8386 = vmatprep.subr.bf16.mxu0 0
        %8387 = vmatpush1.bf16.msra.mxu0 %v8317
        %8388 = vmatprep.subr.bf16.mxu0 0
        %8389 = vmatpush1.bf16.msra.mxu0 %v8318
        %8390 = vmatprep.subr.bf16.mxu0 0
        %8391 = vmatpush1.bf16.msra.mxu0 %v8319
        %8392 = vmatprep.subr.bf16.mxu0 0
        %8393 = vmatpush1.bf16.msra.mxu0 %v8320
        %8394 = vmatprep.subr.bf16.mxu0 0
        %8395 = vmatpush1.bf16.msra.mxu0 %v8321
        %8396 = vmatprep.subr.bf16.mxu0 0
        %8397 = vmatpush1.bf16.msra.mxu0 %v8322
        %8398 = vmatprep.subr.bf16.mxu0 0
        %8399 = vmatpush1.bf16.msra.mxu0 %v8323
        %8400 = vmatprep.subr.bf16.mxu0 0
        %8401 = vmatpush1.bf16.msra.mxu0 %v8324
        %8402 = vmatprep.subr.bf16.mxu0 0
        %8403 = vmatpush1.bf16.msra.mxu0 %v8325
        %8404 = vmatprep.subr.bf16.mxu0 0
        %8405 = vmatpush1.bf16.msra.mxu0 %v8326
        %8406 = vmatprep.subr.bf16.mxu0 0
        %8407 = vmatpush1.bf16.msra.mxu0 %v8327
        %8408 = vmatprep.subr.bf16.mxu0 0
        %8409 = vmatpush1.bf16.msra.mxu0 %v8328
        %8410 = vmatprep.subr.bf16.mxu0 0
        %8411 = vmatpush1.bf16.msra.mxu0 %v8329
        %8412 = vmatprep.subr.bf16.mxu0 0
        %8413 = vmatpush1.bf16.msra.mxu0 %v8330
        %8414 = vmatprep.mubr.bf16.mxu0 %v8187
        %8415 = vmatmul.mubr.bf16.gmra.mrb[0].mxu0 %v8186
        %v8416 = vpop.f32.mrb[0].mxu0
        %v8417 = vadd.f32 0.0, %v8416
        %v8418 = vpop.f32.mrb[0].mxu0
        %v8419 = vpop.f32.mrb[0].mxu0
        %v8420 = vpop.f32.mrb[0].mxu0
        %8421 = vdwg.mxu0
        %8422 = vmatprep.subr.bf16.mxu0 0
        %8423 = vmatpush1.bf16.msra.mxu0 %v8331
        %8424 = vmatprep.subr.bf16.mxu0 0
        %8425 = vmatpush1.bf16.msra.mxu0 %v8332
        %8426 = vmatprep.subr.bf16.mxu0 0
        %8427 = vmatpush1.bf16.msra.mxu0 %v8333
        %8428 = vmatprep.subr.bf16.mxu0 0
        %8429 = vmatpush1.bf16.msra.mxu0 %v8334
        %8430 = vmatprep.subr.bf16.mxu0 0
        %8431 = vmatpush1.bf16.msra.mxu0 %v8335
        %8432 = vmatprep.subr.bf16.mxu0 0
        %8433 = vmatpush1.bf16.msra.mxu0 %v8336
        %8434 = vmatprep.subr.bf16.mxu0 0
        %8435 = vmatpush1.bf16.msra.mxu0 %v8337
        %8436 = vmatprep.subr.bf16.mxu0 0
        %8437 = vmatpush1.bf16.msra.mxu0 %v8338
        %8438 = vmatprep.subr.bf16.mxu0 0
        %8439 = vmatpush1.bf16.msra.mxu0 %v8339
        %8440 = vmatprep.subr.bf16.mxu0 0
        %8441 = vmatpush1.bf16.msra.mxu0 %v8340
        %8442 = vmatprep.subr.bf16.mxu0 0
        %8443 = vmatpush1.bf16.msra.mxu0 %v8341
        %8444 = vmatprep.subr.bf16.mxu0 0
        %8445 = vmatpush1.bf16.msra.mxu0 %v8342
        %8446 = vmatprep.subr.bf16.mxu0 0
        %8447 = vmatpush1.bf16.msra.mxu0 %v8343
        %8448 = vmatprep.subr.bf16.mxu0 0
        %8449 = vmatpush1.bf16.msra.mxu0 %v8344
        %8450 = vmatprep.subr.bf16.mxu0 0
        %8451 = vmatpush1.bf16.msra.mxu0 %v8380
        %8452 = vmatprep.subr.bf16.mxu0 0
        %8453 = vmatpush1.bf16.msra.mxu0 0
        %8454 = vmatprep.mubr.bf16.mxu0 %v8377
        %8455 = vmatmul.mubr.bf16.gmra.mrb[0].mxu0 %v8188
        %v8456 = vpop.f32.mrb[0].mxu0
        %v8457 = vadd.f32 %v8417, %v8456
        %v8458 = vpop.f32.mrb[0].mxu0
        %v8459 = vpop.f32.mrb[0].mxu0
        %v8460 = vpop.f32.mrb[0].mxu0
        %8461 = vdwg.mxu0
        %v8462 = vadd.f32 %v8123, %v8457
        %v8463 = vld [vmem:[%s11] sm:$0x1]
        %v8464 = vadd.f32 %v8462, %v8463
        %v8465 = vmax.f32 %v8464, 0.0
        %v8466 = vpack.c.bf16 %v8465, %v8465
        %v8467 = vld [vmem:[%s12] sm:$0xf]
        %v8468 = vld [vmem:[%s12 + $0x4] sm:$0xf]
        %v8469 = vld [vmem:[%s12 + $0x8] sm:$0xf]
        %v8470 = vld [vmem:[%s12 + $0xc] sm:$0xf]
        %v8471 = vld [vmem:[%s12 + $0x10] sm:$0xf]
        %v8472 = vld [vmem:[%s12 + $0x14] sm:$0xf]
        %v8473 = vld [vmem:[%s12 + $0x18] sm:$0xf]
        %v8474 = vld [vmem:[%s12 + $0x1c] sm:$0xf]
        %v8475 = vld [vmem:[%s12 + $0x20] sm:$0xf]
        %v8476 = vld [vmem:[%s12 + $0x24] sm:$0xf]
        %v8477 = vld [vmem:[%s12 + $0x28] sm:$0xf]
        %v8478 = vld [vmem:[%s12 + $0x2c] sm:$0xf]
        %v8479 = vld [vmem:[%s12 + $0x30] sm:$0xf]
        %v8480 = vld [vmem:[%s12 + $0x34] sm:$0xf]
        %v8481 = vld [vmem:[%s12 + $0x38] sm:$0xf]
        %v8482 = vld [vmem:[%s12 + $0x3c] sm:$0xf]
        %v8483 = vld [vmem:[%s13] sm:$0x1]
        %v8500 = vunpack.c.l.b16 %v8467
        %v8501 = vunpack.c.l.b16 %v8468
        %v8502 = vunpack.c.l.b16 %v8469
        %v8503 = vunpack.c.l.b16 %v8470
        %v8504 = vunpack.c.l.b16 %v8471
        %v8505 = vunpack.c.l.b16 %v8472
        %v8506 = vunpack.c.l.b16 %v8473
        %v8507 = vunpack.c.l.b16 %v8474
        %v8508 = vunpack.c.l.b16 %v8475
        %v8509 = vunpack.c.l.b16 %v8476
        %v8510 = vunpack.c.l.b16 %v8477
        %v8511 = vunpack.c.l.b16 %v8478
        %v8512 = vunpack.c.l.b16 %v8479
        %v8513 = vunpack.c.l.b16 %v8480
        %v8514 = vunpack.c.l.b16 %v8481
        %v8515 = vunpack.c.l.b16 %v8482
        %v8516 = vpack.c.b16 %v8501, %v8500
        %v8517 = vpack.c.b16 %v8503, %v8502
        %v8518 = vpack.c.b16 %v8505, %v8504
        %v8519 = vpack.c.b16 %v8507, %v8506
        %v8520 = vpack.c.b16 %v8509, %v8508
        %v8521 = vpack.c.b16 %v8511, %v8510
        %v8522 = vpack.c.b16 %v8513, %v8512
        %v8523 = vpack.c.b16 %v8515, %v8514
        %8532 = vmatprep.subr.bf16.mxu0 0
        %8533 = vmatpush1.bf16.msra.mxu0 %v8516
        %8534 = vmatprep.subr.bf16.mxu0 0
        %8535 = vmatpush1.bf16.msra.mxu0 %v8517
        %8536 = vmatprep.subr.bf16.mxu0 0
        %8537 = vmatpush1.bf16.msra.mxu0 %v8518
        %8538 = vmatprep.subr.bf16.mxu0 0
        %8539 = vmatpush1.bf16.msra.mxu0 %v8519
        %8540 = vmatprep.subr.bf16.mxu0 0
        %8541 = vmatpush1.bf16.msra.mxu0 %v8520
        %8542 = vmatprep.subr.bf16.mxu0 0
        %8543 = vmatpush1.bf16.msra.mxu0 %v8521
        %8544 = vmatprep.subr.bf16.mxu0 0
        %8545 = vmatpush1.bf16.msra.mxu0 %v8522
        %8546 = vmatprep.subr.bf16.mxu0 0
        %8547 = vmatpush1.bf16.msra.mxu0 %v8523
        %8548 = vmatprep.subr.bf16.mxu0 0
        %8549 = vmatpush1.bf16.msra.mxu0 0
        %8550 = vmatprep.subr.bf16.mxu0 0
        %8551 = vmatpush1.bf16.msra.mxu0 0
        %8552 = vmatprep.subr.bf16.mxu0 0
        %8553 = vmatpush1.bf16.msra.mxu0 0
        %8554 = vmatprep.subr.bf16.mxu0 0
        %8555 = vmatpush1.bf16.msra.mxu0 0
        %8556 = vmatprep.subr.bf16.mxu0 0
        %8557 = vmatpush1.bf16.msra.mxu0 0
        %8558 = vmatprep.subr.bf16.mxu0 0
        %8559 = vmatpush1.bf16.msra.mxu0 0
        %8560 = vmatprep.subr.bf16.mxu0 0
        %8561 = vmatpush1.bf16.msra.mxu0 0
        %8562 = vmatprep.subr.bf16.mxu0 0
        %8563 = vmatpush1.bf16.msra.mxu0 0
        %8564 = vmatprep.mubr.bf16.mxu0 0
        %8565 = vmatmul.mubr.bf16.gmra.mrb[0].mxu0 %v8466
        %v8566 = vpop.f32.mrb[0].mxu0
        %v8567 = vadd.f32 %v8483, %v8566
        %v8568 = vpop.f32.mrb[0].mxu0
        %v8569 = vpop.f32.mrb[0].mxu0
        %v8570 = vpop.f32.mrb[0].mxu0
        %8571 = vdwg.mxu0
        %vm8572 = vcmask 32768
        %8573 = vst.msk [vmem:[%s459] sm:$0x1] %vm8572, %v8567
        %s8574 = sand.u32 %s335, 1
        %s8575 = scalar_lea.sflag [#allocation4], %s8574
        %s8576 = sand.u32 %s335, 1
        %s8577 = scalar_lea.vmem [#allocation3], %s8576
        // Predicated region
        $region77: #{cnn_forward.1} parent=75 // pred_check
          %p8578 = pneg %p345
        $region78: #{cnn_forward.1} parent=75 // pred_check_branch
          %8580 = sbr.rel (%p8578) target = $region80
        $region79: #{cnn_forward.1} parent=75 // pred_region
          %s8582 = ssub.s32 16, 16
          %8583 = vsyncadd %s8575, %s8582
          %s8584 = smul.addr %s28, 16
          %s8585 = scalar_lea.hbm %s14, %s8584
          %s8587 = sshll.u32 %s8577, 4
          %s8588 = int_to_ptr.vmem [resolvable:$true] %s8587
          %8590 = dma.vmem_to_hbm [thread:$0]  %s8588, 16, %s8585, %s8575
        $region80: #{cnn_forward.1} parent=75 // pred_fallthru
          _
      $region76: #{cnn_forward.1} parent=5 // pred_fallthru
        _
      %p8591 = scmp.le.s32.totalorder 2, %s23
      // Predicated region
      $region81: #{cnn_forward.1} parent=5 // pred_check
        %p8592 = pneg %p8591
      $region82: #{cnn_forward.1} parent=5 // pred_check_branch
        %8594 = sbr.rel (%p8592) target = $region84
      $region83: #{cnn_forward.1} parent=5 // pred_region
        %s8595 = ssub.s32 %s23, 2
        // Predicated region
        $region85: #{cnn_forward.1} parent=83 // pred_check
          %p8596 = pneg %p351
        $region86: #{cnn_forward.1} parent=83 // pred_check_branch
          %8598 = sbr.rel (%p8596) target = $region88
        $region87: #{cnn_forward.1} parent=83 // pred_region
          %s8599 = sand.u32 %s336, 1
          %s8600 = scalar_lea.sflag [#allocation4], %s8599
          %s8601 = sand.u32 %s336, 1
          %s8602 = scalar_lea.vmem [#allocation3], %s8601
          %8603 = dma.done %s8600, 16
        $region88: #{cnn_forward.1} parent=83 // pred_fallthru
          _
      $region84: #{cnn_forward.1} parent=5 // pred_fallthru
        _
    $region6: #{cnn_forward.1} parent=1 // loop_footer
      %s27 = sadd.s32 1, %s23
    $region7: #{cnn_forward.1} parent=1 // loop_footer_branch
      %22 = sbr.rel target = $region3
    $region8: #{cnn_forward.1} parent=1 // loop_exit
      _
    %8604 = vsyncpa [#allocation4], 1
    %s8605 = scalar_lea.sflag [#allocation4], 1
    %8606 = vsyncpa %s8605, 1

</llo_original>
